<compile_context>
chip_gen: v7x
topology: tpu7x:2x2x1
jax: 0.10.0
libtpu: 0.0.40
codegen_flags: <defaults>
</compile_context>

<pallas_src>
import functools

import jax
import jax.numpy as jnp
from jax.experimental import pallas as pl
from jax.experimental.pallas import tpu as pltpu

EPS = 1e-5
EXPANSION = 4
LANE = 128                       # lane-dense channel padding target
MAX_TM = 512                     # rows per M tile for the flat matmul stages
_VMEM_LIMIT = 48 * 1024 * 1024   # <= v7x 64 MiB/TC; ample headroom on v5e/v6e


# ----------------------------------------------------------------------------
# Small host-side helpers
# ----------------------------------------------------------------------------
def _round_up(x, m):
    return (x + m - 1) // m * m


def _pad2d(a, rows, cols):
    return jnp.pad(a, ((0, rows - a.shape[0]), (0, cols - a.shape[1])))


def _pad_cols(a, cols):
    return jnp.pad(a, ((0, 0), (0, cols - a.shape[1])))


def _bn_from_sums(s, ss, m_real, gamma, beta):
    """per-channel sums -> BN scale/shift (training-mode, biased variance)."""
    mean = s / m_real
    var = jnp.maximum(ss / m_real - mean * mean, 0.0)
    inv = jax.lax.rsqrt(var + EPS)
    scale = gamma.reshape(-1) * inv            # gamma padded with 0 => scale 0
    shift = beta.reshape(-1) - mean * scale
    return scale.reshape(1, -1), shift.reshape(1, -1)


def _bn_scale_shift(stats, m_real, gamma, beta):
    return _bn_from_sums(jnp.sum(stats[:, 0, :], axis=0),
                         jnp.sum(stats[:, 1, :], axis=0), m_real, gamma, beta)


# ----------------------------------------------------------------------------
# Kernel 1: flat matmul (cast-to-bf16 in-kernel) + per-tile BN partial stats
# ----------------------------------------------------------------------------
def _matmul_stats_kernel(x_ref, w_ref, y_ref, st_ref, *, tm, m_real, mask_rows):
    xb = x_ref[...].astype(jnp.bfloat16)
    y = jnp.dot(xb, w_ref[...], preferred_element_type=jnp.float32)
    if mask_rows:
        row = (jax.lax.broadcasted_iota(jnp.int32, (tm, 1), 0)
               + pl.program_id(0) * tm)
        ym = jnp.where(row < m_real, y, 0.0)
    else:
        ym = y
    st_ref[0] = jnp.concatenate(
        [jnp.sum(ym, axis=0, keepdims=True),
         jnp.sum(ym * ym, axis=0, keepdims=True)], axis=0)
    y_ref[...] = y.astype(jnp.bfloat16)


def matmul_with_stats(x2d, w, tm):
    m, k = x2d.shape
    cp = w.shape[1]
    grid = pl.cdiv(m, tm)
    kern = functools.partial(_matmul_stats_kernel, tm=tm, m_real=m,
                             mask_rows=(m % tm != 0))
    return pl.pallas_call(
        kern,
        grid=(grid,),
        in_specs=[
            pl.BlockSpec((tm, k), lambda i: (i, 0)),
            pl.BlockSpec((k, cp), lambda i: (0, 0)),        # resident weight
        ],
        out_specs=[
            pl.BlockSpec((tm, cp), lambda i: (i, 0)),
            pl.BlockSpec((1, 2, cp), lambda i: (i, 0, 0)),
        ],
        out_shape=[
            jax.ShapeDtypeStruct((m, cp), jnp.bfloat16),
            jax.ShapeDtypeStruct((grid, 2, cp), jnp.float32),
        ],
        compiler_params=pltpu.CompilerParams(
            dimension_semantics=("parallel",), vmem_limit_bytes=_VMEM_LIMIT),
    )(x2d, w)


# ----------------------------------------------------------------------------
# Kernel 2: fused  BN1-affine + ReLU  +  3x3 conv (9 shifted taps, stride 1)
#           + per-image BN2 partial statistics.
# One grid step = one image; the zero-padded activation lives in VMEM scratch
# (data stored at column offset 8 so all scratch accesses are lane/sublane
# aligned at the write and simple static windows at the reads).
# ----------------------------------------------------------------------------
def _conv3x3_stats_kernel(y1_ref, s1_ref, b1_ref, w2_ref, y2_ref, st_ref,
                          pad_ref, *, H, W, OWP, CP):
    # BN1 affine + ReLU in the prologue (h1 never goes to HBM).
    h1 = jnp.maximum(y1_ref[0].astype(jnp.float32) * s1_ref[0] + b1_ref[0], 0.0)

    # Build the spatially zero-padded activation in VMEM.
    pad_ref[...] = jnp.zeros_like(pad_ref)
    pad_ref[1:H + 1, 8:8 + W, :] = h1            # data at rows [1,H+1), cols [8,8+W)

    # 9 shifted taps -> 9 MXU matmuls accumulated in f32.
    acc = jnp.zeros((H * OWP, CP), jnp.float32)
    for t in range(9):
        di, dj = t // 3, t % 3
        win = pad_ref[di:di + H, 7 + dj:7 + dj + OWP, :]        # (H, OWP, CP) f32
        win = win.reshape(H * OWP, CP).astype(jnp.bfloat16)
        acc = acc + jnp.dot(win, w2_ref[t], preferred_element_type=jnp.float32)

    # Columns >= W are width-padding junk: zero them so the statistics and the
    # stored tile only contain real output pixels.
    if OWP != W:
        col = jax.lax.broadcasted_iota(jnp.int32, (H * OWP, 1), 0) % OWP
        acc = jnp.where(col < W, acc, 0.0)

    st_ref[0] = jnp.concatenate(
        [jnp.sum(acc, axis=0, keepdims=True),
         jnp.sum(acc * acc, axis=0, keepdims=True)], axis=0)
    y2_ref[0] = acc.astype(jnp.bfloat16)


def conv3x3_with_stats(y1_4d, s1, sh1, w2, owp):
    n, h, w, cp = y1_4d.shape
    kern = functools.partial(_conv3x3_stats_kernel, H=h, W=w, OWP=owp, CP=cp)
    return pl.pallas_call(
        kern,
        grid=(n,),
        in_specs=[
            pl.BlockSpec((1, h, w, cp), lambda i: (i, 0, 0, 0)),
            pl.BlockSpec((1, cp), lambda i: (0, 0)),
            pl.BlockSpec((1, cp), lambda i: (0, 0)),
            pl.BlockSpec((9, cp, cp), lambda i: (0, 0, 0)),      # resident weight
        ],
        out_specs=[
            pl.BlockSpec((1, h * owp, cp), lambda i: (i, 0, 0)),
            pl.BlockSpec((1, 2, cp), lambda i: (i, 0, 0)),
        ],
        out_shape=[
            jax.ShapeDtypeStruct((n, h * owp, cp), jnp.bfloat16),
            jax.ShapeDtypeStruct((n, 2, cp), jnp.float32),
        ],
        scratch_shapes=[pltpu.VMEM((h + 2, owp + 16, cp), jnp.float32)],
        compiler_params=pltpu.CompilerParams(
            dimension_semantics=("parallel",), vmem_limit_bytes=_VMEM_LIMIT),
    )(y1_4d, s1, sh1, w2)


# ----------------------------------------------------------------------------
# Kernel 3: fused  BN2-affine + ReLU  +  conv3 matmul  (+ shortcut-conv matmul)
#           with BN partial stats for every produced branch.
# ----------------------------------------------------------------------------
def _stage3_short_kernel(y2_ref, s2_ref, b2_ref, xs_ref, w3_ref, wsc_ref,
                         y3_ref, ys_ref, st3_ref, sts_ref,
                         *, tm, m_real, mask_rows):
    h2 = jnp.maximum(y2_ref[...].astype(jnp.float32) * s2_ref[...] + b2_ref[...],
                     0.0)
    y3 = jnp.dot(h2.astype(jnp.bfloat16), w3_ref[...],
                 preferred_element_type=jnp.float32)
    ys = jnp.dot(xs_ref[...].astype(jnp.bfloat16), wsc_ref[...],
                 preferred_element_type=jnp.float32)
    if mask_rows:
        row = (jax.lax.broadcasted_iota(jnp.int32, (tm, 1), 0)
               + pl.program_id(0) * tm)
        keep = row < m_real
        y3m = jnp.where(keep, y3, 0.0)
        ysm = jnp.where(keep, ys, 0.0)
    else:
        y3m, ysm = y3, ys
    st3_ref[0] = jnp.concatenate(
        [jnp.sum(y3m, axis=0, keepdims=True),
         jnp.sum(y3m * y3m, axis=0, keepdims=True)], axis=0)
    sts_ref[0] = jnp.concatenate(
        [jnp.sum(ysm, axis=0, keepdims=True),
         jnp.sum(ysm * ysm, axis=0, keepdims=True)], axis=0)
    y3_ref[...] = y3.astype(jnp.bfloat16)
    ys_ref[...] = ys.astype(jnp.bfloat16)


def stage3_shortcut(y2_flat, s2, sh2, xs, w3, wsc, tm):
    m, cpp = y2_flat.shape
    k2 = xs.shape[1]
    outp = w3.shape[1]
    grid = pl.cdiv(m, tm)
    kern = functools.partial(_stage3_short_kernel, tm=tm, m_real=m,
                             mask_rows=(m % tm != 0))
    return pl.pallas_call(
        kern,
        grid=(grid,),
        in_specs=[
            pl.BlockSpec((tm, cpp), lambda i: (i, 0)),
            pl.BlockSpec((1, cpp), lambda i: (0, 0)),
            pl.BlockSpec((1, cpp), lambda i: (0, 0)),
            pl.BlockSpec((tm, k2), lambda i: (i, 0)),
            pl.BlockSpec((cpp, outp), lambda i: (0, 0)),
            pl.BlockSpec((k2, outp), lambda i: (0, 0)),
        ],
        out_specs=[
            pl.BlockSpec((tm, outp), lambda i: (i, 0)),
            pl.BlockSpec((tm, outp), lambda i: (i, 0)),
            pl.BlockSpec((1, 2, outp), lambda i: (i, 0, 0)),
            pl.BlockSpec((1, 2, outp), lambda i: (i, 0, 0)),
        ],
        out_shape=[
            jax.ShapeDtypeStruct((m, outp), jnp.bfloat16),
            jax.ShapeDtypeStruct((m, outp), jnp.bfloat16),
            jax.ShapeDtypeStruct((grid, 2, outp), jnp.float32),
            jax.ShapeDtypeStruct((grid, 2, outp), jnp.float32),
        ],
        compiler_params=pltpu.CompilerParams(
            dimension_semantics=("parallel",), vmem_limit_bytes=_VMEM_LIMIT),
    )(y2_flat, s2, sh2, xs, w3, wsc)


def _stage3_id_kernel(y2_ref, s2_ref, b2_ref, w3_ref, y3_ref, st3_ref,
                      *, tm, m_real, mask_rows):
    h2 = jnp.maximum(y2_ref[...].astype(jnp.float32) * s2_ref[...] + b2_ref[...],
                     0.0)
    y3 = jnp.dot(h2.astype(jnp.bfloat16), w3_ref[...],
                 preferred_element_type=jnp.float32)
    if mask_rows:
        row = (jax.lax.broadcasted_iota(jnp.int32, (tm, 1), 0)
               + pl.program_id(0) * tm)
        y3m = jnp.where(row < m_real, y3, 0.0)
    else:
        y3m = y3
    st3_ref[0] = jnp.concatenate(
        [jnp.sum(y3m, axis=0, keepdims=True),
         jnp.sum(y3m * y3m, axis=0, keepdims=True)], axis=0)
    y3_ref[...] = y3.astype(jnp.bfloat16)


def stage3_identity(y2_flat, s2, sh2, w3, tm):
    m, cpp = y2_flat.shape
    outp = w3.shape[1]
    grid = pl.cdiv(m, tm)
    kern = functools.partial(_stage3_id_kernel, tm=tm, m_real=m,
                             mask_rows=(m % tm != 0))
    return pl.pallas_call(
        kern,
        grid=(grid,),
        in_specs=[
            pl.BlockSpec((tm, cpp), lambda i: (i, 0)),
            pl.BlockSpec((1, cpp), lambda i: (0, 0)),
            pl.BlockSpec((1, cpp), lambda i: (0, 0)),
            pl.BlockSpec((cpp, outp), lambda i: (0, 0)),
        ],
        out_specs=[
            pl.BlockSpec((tm, outp), lambda i: (i, 0)),
            pl.BlockSpec((1, 2, outp), lambda i: (i, 0, 0)),
        ],
        out_shape=[
            jax.ShapeDtypeStruct((m, outp), jnp.bfloat16),
            jax.ShapeDtypeStruct((grid, 2, outp), jnp.float32),
        ],
        compiler_params=pltpu.CompilerParams(
            dimension_semantics=("parallel",), vmem_limit_bytes=_VMEM_LIMIT),
    )(y2_flat, s2, sh2, w3)


# ----------------------------------------------------------------------------
# Kernel 4: final  BN3-affine + (BNsc-affine'd or identity) residual + ReLU
# ----------------------------------------------------------------------------
def _affine_add_relu_kernel(y3_ref, s3_ref, b3_ref, ys_ref, ssc_ref, bsc_ref,
                            o_ref):
    main = y3_ref[...].astype(jnp.float32) * s3_ref[...] + b3_ref[...]
    res = ys_ref[...].astype(jnp.float32) * ssc_ref[...] + bsc_ref[...]
    o_ref[...] = jnp.maximum(main + res, 0.0)


def affine_add_relu(y3, s3, b3, ys, ssc, bsc, tm):
    m, cp = y3.shape
    grid = pl.cdiv(m, tm)
    return pl.pallas_call(
        _affine_add_relu_kernel,
        grid=(grid,),
        in_specs=[
            pl.BlockSpec((tm, cp), lambda i: (i, 0)),
            pl.BlockSpec((1, cp), lambda i: (0, 0)),
            pl.BlockSpec((1, cp), lambda i: (0, 0)),
            pl.BlockSpec((tm, cp), lambda i: (i, 0)),
            pl.BlockSpec((1, cp), lambda i: (0, 0)),
            pl.BlockSpec((1, cp), lambda i: (0, 0)),
        ],
        out_specs=pl.BlockSpec((tm, cp), lambda i: (i, 0)),
        out_shape=jax.ShapeDtypeStruct((m, cp), jnp.float32),
        compiler_params=pltpu.CompilerParams(
            dimension_semantics=("parallel",), vmem_limit_bytes=_VMEM_LIMIT),
    )(y3, s3, b3, ys, ssc, bsc)


def _affine_addres_relu_kernel(y3_ref, s3_ref, b3_ref, r_ref, o_ref):
    main = y3_ref[...].astype(jnp.float32) * s3_ref[...] + b3_ref[...]
    o_ref[...] = jnp.maximum(main + r_ref[...], 0.0)


def affine_addres_relu(y3, s3, b3, res_f32, tm):
    m, cp = y3.shape
    grid = pl.cdiv(m, tm)
    return pl.pallas_call(
        _affine_addres_relu_kernel,
        grid=(grid,),
        in_specs=[
            pl.BlockSpec((tm, cp), lambda i: (i, 0)),
            pl.BlockSpec((1, cp), lambda i: (0, 0)),
            pl.BlockSpec((1, cp), lambda i: (0, 0)),
            pl.BlockSpec((tm, cp), lambda i: (i, 0)),
        ],
        out_specs=pl.BlockSpec((tm, cp), lambda i: (i, 0)),
        out_shape=jax.ShapeDtypeStruct((m, cp), jnp.float32),
        compiler_params=pltpu.CompilerParams(
            dimension_semantics=("parallel",), vmem_limit_bytes=_VMEM_LIMIT),
    )(y3, s3, b3, res_f32)


# ----------------------------------------------------------------------------
# Parameters (deterministic, synthetic) matching the PyTorch module
# ----------------------------------------------------------------------------
def init_bottleneck_params(key, in_planes, planes, stride):
    out_planes = EXPANSION * planes
    ks = jax.random.split(key, 8)

    def conv_w(k, cin, cout, kh=1, kw=1):
        fan_in = cin * kh * kw
        return ((2.0 / fan_in) ** 0.5) * jax.random.normal(
            k, (kh, kw, cin, cout), jnp.float32)

    def bn(k, c):
        g = 1.0 + 0.1 * jax.random.normal(k, (1, c), jnp.float32)
        b = 0.1 * jax.random.normal(jax.random.fold_in(k, 1), (1, c), jnp.float32)
        return g, b

    p = {
        "w1": conv_w(ks[0], in_planes, planes)[0, 0],          # (Cin, planes)
        "w2": conv_w(ks[2], planes, planes, 3, 3),             # (3,3,planes,planes)
        "w3": conv_w(ks[4], planes, out_planes)[0, 0],         # (planes, 4*planes)
    }
    p["g1"], p["b1"] = bn(ks[1], planes)
    p["g2"], p["b2"] = bn(ks[3], planes)
    p["g3"], p["b3"] = bn(ks[5], out_planes)
    if (stride != 1) or (in_planes != out_planes):
        p["wsc"] = conv_w(ks[6], in_planes, out_planes)[0, 0]
        p["gsc"], p["bsc"] = bn(ks[7], out_planes)
    return p


# ----------------------------------------------------------------------------
# Forward pass (NCHW in / NCHW out, matching the PyTorch module)
# ----------------------------------------------------------------------------
@functools.partial(jax.jit, static_argnums=(2,))
def bottleneck_forward(x_nchw, params, stride):
    x = jnp.transpose(x_nchw, (0, 2, 3, 1)).astype(jnp.float32)   # NCHW -> NHWC
    n, h, w, cin = x.shape
    planes = params["w1"].shape[1]
    out_planes = params["w3"].shape[1]
    has_sc = "wsc" in params

    ho = (h - 1) // stride + 1
    wo = (w - 1) // stride + 1

    pln_p = _round_up(planes, LANE)
    out_p = _round_up(out_planes, LANE)
    owp = _round_up(w, 8)                 # full-resolution conv2 output width

    m1 = n * h * w
    m2 = n * ho * wo
    tm1 = min(MAX_TM, _round_up(m1, 8))
    tm2 = min(MAX_TM, _round_up(m2, 8))

    # Lane-padded bf16 weights and (1, Cp) f32 BN parameters (gamma padded
    # with 0 so padded lanes stay exactly zero through the whole block).
    w1 = _pad2d(params["w1"], cin, pln_p).astype(jnp.bfloat16)
    w2 = jnp.pad(params["w2"],
                 ((0, 0), (0, 0), (0, pln_p - planes), (0, pln_p - planes))
                 ).reshape(9, pln_p, pln_p).astype(jnp.bfloat16)
    w3 = _pad2d(params["w3"], pln_p, out_p).astype(jnp.bfloat16)
    g1 = _pad_cols(params["g1"], pln_p); b1 = _pad_cols(params["b1"], pln_p)
    g2 = _pad_cols(params["g2"], pln_p); b2 = _pad_cols(params["b2"], pln_p)
    g3 = _pad_cols(params["g3"], out_p); b3 = _pad_cols(params["b3"], out_p)

    # ---- stage 1: 1x1 conv (flat matmul), raw bf16 output + BN1 stats -------
    x2d = x.reshape(m1, cin)                       # free reshape, stays f32
    y1, st1 = matmul_with_stats(x2d, w1, tm1)
    s1, sh1 = _bn_scale_shift(st1, m1, g1, b1)

    # ---- stage 2: fused BN1+ReLU + 3x3 conv + BN2 stats (no HBM im2col) -----
    y1_4d = y1.reshape(n, h, w, pln_p)
    y2full, st2 = conv3x3_with_stats(y1_4d, s1, sh1, w2, owp)
    if stride == 1:
        if owp == wo:
            y2_flat = y2full.reshape(m2, pln_p)
        else:
            y2_flat = y2full.reshape(n, h, owp, pln_p)[:, :, :wo, :]
            y2_flat = y2_flat.reshape(m2, pln_p)
        s2, sh2 = _bn_scale_shift(st2, m2, g2, b2)
    else:
        # TODO(synk): fold the stride-s subsample into the conv kernel
        # (strided in-VMEM window reads) instead of this wrapper slice +
        # stats pass over the subsampled output.
        y2s = y2full.reshape(n, h, owp, pln_p)[:, ::stride, 0:stride * wo:stride, :]
        y2_flat = y2s.reshape(m2, pln_p)
        yf = y2s.astype(jnp.float32)
        s2, sh2 = _bn_from_sums(jnp.sum(yf, axis=(0, 1, 2)),
                                jnp.sum(yf * yf, axis=(0, 1, 2)), m2, g2, b2)

    # ---- stage 3: fused BN2+ReLU + conv3 (+ shortcut conv), then finalize ---
    if has_sc:
        wsc = _pad2d(params["wsc"], cin, out_p).astype(jnp.bfloat16)
        gsc = _pad_cols(params["gsc"], out_p)
        bsc = _pad_cols(params["bsc"], out_p)
        if stride == 1:
            xs = x2d                                           # (m2, cin) f32
        else:
            # TODO(synk): express this subsample via the matmul's index_map /
            # strided pl.ds instead of a wrapper gather.
            xs = x[:, ::stride, ::stride, :].reshape(m2, cin)
        y3, ys, st3, sts = stage3_shortcut(y2_flat, s2, sh2, xs, w3, wsc, tm2)
        s3, sh3 = _bn_scale_shift(st3, m2, g3, b3)
        ssc, shsc = _bn_scale_shift(sts, m2, gsc, bsc)
        out2d = affine_add_relu(y3, s3, sh3, ys, ssc, shsc, tm2)
    else:
        # Identity shortcut (stride == 1 and in_planes == 4*planes): the f32
        # input activation is added directly (no bf16 round-trip).
        y3, st3 = stage3_identity(y2_flat, s2, sh2, w3, tm2)
        s3, sh3 = _bn_scale_shift(st3, m2, g3, b3)
        if cin == out_p:
            xres = x
        else:
            xres = jnp.pad(x, ((0, 0), (0, 0), (0, 0), (0, out_p - cin)))
        out2d = affine_addres_relu(y3, s3, sh3, xres.reshape(m2, out_p), tm2)

    out = out2d[:, :out_planes].reshape(n, ho, wo, out_planes)
    return jnp.transpose(out, (0, 3, 1, 2))                       # NHWC -> NCHW


# ----------------------------------------------------------------------------
# Pure-JAX f32 reference (correctness check only)
# ----------------------------------------------------------------------------
def reference_forward(x_nchw, params, stride):
    x = jnp.transpose(x_nchw, (0, 2, 3, 1)).astype(jnp.float32)

    def bn(y, g, b):
        mean = y.mean(axis=(0, 1, 2), keepdims=True)
        var = ((y - mean) ** 2).mean(axis=(0, 1, 2), keepdims=True)
        return ((y - mean) / jnp.sqrt(var + EPS) * g.reshape(1, 1, 1, -1)
                + b.reshape(1, 1, 1, -1))

    h1 = jax.nn.relu(bn(jnp.einsum("nhwc,cd->nhwd", x, params["w1"]),
                        params["g1"], params["b1"]))
    h2 = jax.lax.conv_general_dilated(
        h1, params["w2"], window_strides=(stride, stride),
        padding=((1, 1), (1, 1)),
        dimension_numbers=("NHWC", "HWIO", "NHWC"))
    h2 = jax.nn.relu(bn(h2, params["g2"], params["b2"]))
    h3 = bn(jnp.einsum("nhwc,cd->nhwd", h2, params["w3"]),
            params["g3"], params["b3"])
    if "wsc" in params:
        xs = x[:, ::stride, ::stride, :]
        sc = bn(jnp.einsum("nhwc,cd->nhwd", xs, params["wsc"]),
                params["gsc"], params["bsc"])
    else:
        sc = x
    return jnp.transpose(jax.nn.relu(h3 + sc), (0, 3, 1, 2))


# ----------------------------------------------------------------------------
if __name__ == "__main__":
    key = jax.random.PRNGKey(0)

    # (in_planes, planes, stride, H, W)
    configs = [
        (4, 4, 1, 16, 16),     # conv shortcut (in_planes != 4*planes)
        (16, 4, 1, 16, 16),    # identity shortcut
        (8, 4, 2, 16, 16),     # stride-2 conv shortcut
        (4, 4, 1, 12, 12),     # exercises width padding / junk-column masking
    ]

    for idx, (cin, planes, stride, h, w) in enumerate(configs):
        kx, kp = jax.random.split(jax.random.fold_in(key, idx))
        x = jax.random.normal(kx, (2, cin, h, w), jnp.float32)    # NCHW
        params = init_bottleneck_params(kp, cin, planes, stride)

        out = jax.block_until_ready(bottleneck_forward(x, params, stride))
        ref = jax.block_until_ready(reference_forward(x, params, stride))

        ho = (h - 1) // stride + 1
        wo = (w - 1) // stride + 1
        assert out.shape == (2, EXPANSION * planes, ho, wo), out.shape
        # bf16 matmul operands / bf16 inter-stage tensors vs f32 reference.
        max_err = float(jnp.max(jnp.abs(out - ref)))
        assert jnp.allclose(out, ref, rtol=5e-2, atol=5e-2), (idx, max_err)

    print("KERNEL_OK")
</pallas_src>

<mosaic_0001>
module attributes {stable_mosaic.version = 11 : i64} {
  func.func @_matmul_stats_kernel(%arg0: i32, %arg1: memref<512x4xf32, #tpu.memory_space<vmem>>, %arg2: memref<4x128xbf16, #tpu.memory_space<vmem>>, %arg3: memref<512x128xbf16, #tpu.memory_space<vmem>>, %arg4: memref<1x2x128xf32, #tpu.memory_space<vmem>>) attributes {dimension_semantics = [#tpu.dimension_semantics<parallel>], iteration_bounds = array<i64: 1>, scalar_prefetch = 0 : i64, scratch_operands = 0 : i64, tpu.core_type = #tpu.core_type<tc>, window_params = [{transform_indices = @transform_0, window_bounds = array<i64: 512, 4>}, {pipeline_mode = #tpu.pipeline_mode<synchronous>, transform_indices = @transform_1, window_bounds = array<i64: 4, 128>}, {transform_indices = @transform_2, window_bounds = array<i64: 512, 128>}, {transform_indices = @transform_3, window_bounds = array<i64: 1, 2, 128>}]} {
    %c0 = arith.constant 0 : index
    %c0_0 = arith.constant 0 : index
    %0 = vector.load %arg1[%c0, %c0_0] : memref<512x4xf32, #tpu.memory_space<vmem>>, vector<512x4xf32>
    %1 = arith.truncf %0 : vector<512x4xf32> to vector<512x4xbf16>
    %c0_1 = arith.constant 0 : index
    %c0_2 = arith.constant 0 : index
    %2 = vector.load %arg2[%c0_1, %c0_2] : memref<4x128xbf16, #tpu.memory_space<vmem>>, vector<4x128xbf16>
    %cst = arith.constant dense<0.000000e+00> : vector<512x128xf32>
    %3 = tpu.matmul %1, %2, %cst {dimension_numbers = #tpu.dot_dimension_numbers<[1], [0], [0], [1], [0, 0, 1, 1], [], []>} : vector<512x4xbf16>, vector<4x128xbf16>, vector<512x128xf32> -> vector<512x128xf32>
    %cst_3 = arith.constant dense<0.000000e+00> : vector<128xf32>
    %4 = vector.multi_reduction <add>, %3, %cst_3 [0] : vector<512x128xf32> to vector<128xf32>
    %5 = vector.shape_cast %4 : vector<128xf32> to vector<1x128xf32>
    %6 = arith.mulf %3, %3 : vector<512x128xf32>
    %cst_4 = arith.constant dense<0.000000e+00> : vector<128xf32>
    %7 = vector.multi_reduction <add>, %6, %cst_4 [0] : vector<512x128xf32> to vector<128xf32>
    %8 = vector.shape_cast %7 : vector<128xf32> to vector<1x128xf32>
    %9 = tpu.concatenate %5, %8 in 0 : vector<1x128xf32>, vector<1x128xf32> -> vector<2x128xf32>
    %c0_5 = arith.constant 0 : index
    %c0_6 = arith.constant 0 : index
    %c0_7 = arith.constant 0 : index
    %10 = vector.load %arg4[%c0_5, %c0_6, %c0_7] : memref<1x2x128xf32, #tpu.memory_space<vmem>>, vector<1x2x128xf32>
    %11 = vector.shape_cast %10 : vector<1x2x128xf32> to vector<2x128xf32>
    %12 = vector.shape_cast %9 : vector<2x128xf32> to vector<1x2x128xf32>
    tpu.vector_store %arg4[%c0_5, %c0_6, %c0_7], %12 {strides = array<i32>} : memref<1x2x128xf32, #tpu.memory_space<vmem>>, vector<1x2x128xf32>,
    %13 = arith.truncf %3 : vector<512x128xf32> to vector<512x128xbf16>
    %c0_8 = arith.constant 0 : index
    %c0_9 = arith.constant 0 : index
    %14 = vector.load %arg3[%c0_8, %c0_9] : memref<512x128xbf16, #tpu.memory_space<vmem>>, vector<512x128xbf16>
    tpu.vector_store %arg3[%c0_8, %c0_9], %13 {strides = array<i32>} : memref<512x128xbf16, #tpu.memory_space<vmem>>, vector<512x128xbf16>,
    return
  }
  func.func @transform_0(%arg0: i32) -> (i32, i32) {
    %c0_i32 = arith.constant 0 : i32
    %c0_i32_0 = arith.constant 0 : i32
    return %arg0, %c0_i32 : i32, i32
  }
  func.func @transform_1(%arg0: i32) -> (i32, i32) {
    %c0_i32 = arith.constant 0 : i32
    %c0_i32_0 = arith.constant 0 : i32
    %c0_i32_1 = arith.constant 0 : i32
    return %c0_i32, %c0_i32_0 : i32, i32
  }
  func.func @transform_2(%arg0: i32) -> (i32, i32) {
    %c0_i32 = arith.constant 0 : i32
    %c0_i32_0 = arith.constant 0 : i32
    return %arg0, %c0_i32 : i32, i32
  }
  func.func @transform_3(%arg0: i32) -> (i32, i32, i32) {
    %c0_i32 = arith.constant 0 : i32
    %c0_i32_0 = arith.constant 0 : i32
    %c0_i32_1 = arith.constant 0 : i32
    return %arg0, %c0_i32, %c0_i32_0 : i32, i32, i32
  }
}

module attributes {stable_mosaic.version = 11 : i64} {
  func.func @_stage3_short_kernel(%arg0: i32, %arg1: memref<512x128xbf16, #tpu.memory_space<vmem>>, %arg2: memref<1x128xf32, #tpu.memory_space<vmem>>, %arg3: memref<1x128xf32, #tpu.memory_space<vmem>>, %arg4: memref<512x4xf32, #tpu.memory_space<vmem>>, %arg5: memref<128x128xbf16, #tpu.memory_space<vmem>>, %arg6: memref<4x128xbf16, #tpu.memory_space<vmem>>, %arg7: memref<512x128xbf16, #tpu.memory_space<vmem>>, %arg8: memref<512x128xbf16, #tpu.memory_space<vmem>>, %arg9: memref<1x2x128xf32, #tpu.memory_space<vmem>>, %arg10: memref<1x2x128xf32, #tpu.memory_space<vmem>>) attributes {dimension_semantics = [#tpu.dimension_semantics<parallel>], iteration_bounds = array<i64: 1>, scalar_prefetch = 0 : i64, scratch_operands = 0 : i64, tpu.core_type = #tpu.core_type<tc>, window_params = [{transform_indices = @transform_0, window_bounds = array<i64: 512, 128>}, {pipeline_mode = #tpu.pipeline_mode<synchronous>, transform_indices = @transform_1, window_bounds = array<i64: 1, 128>}, {pipeline_mode = #tpu.pipeline_mode<synchronous>, transform_indices = @transform_2, window_bounds = array<i64: 1, 128>}, {transform_indices = @transform_3, window_bounds = array<i64: 512, 4>}, {pipeline_mode = #tpu.pipeline_mode<synchronous>, transform_indices = @transform_4, window_bounds = array<i64: 128, 128>}, {pipeline_mode = #tpu.pipeline_mode<synchronous>, transform_indices = @transform_5, window_bounds = array<i64: 4, 128>}, {transform_indices = @transform_6, window_bounds = array<i64: 512, 128>}, {transform_indices = @transform_7, window_bounds = array<i64: 512, 128>}, {transform_indices = @transform_8, window_bounds = array<i64: 1, 2, 128>}, {transform_indices = @transform_9, window_bounds = array<i64: 1, 2, 128>}]} {
    %c0 = arith.constant 0 : index
    %c0_0 = arith.constant 0 : index
    %0 = vector.load %arg1[%c0, %c0_0] : memref<512x128xbf16, #tpu.memory_space<vmem>>, vector<512x128xbf16>
    %1 = arith.extf %0 : vector<512x128xbf16> to vector<512x128xf32>
    %c0_1 = arith.constant 0 : index
    %c0_2 = arith.constant 0 : index
    %2 = vector.load %arg2[%c0_1, %c0_2] : memref<1x128xf32, #tpu.memory_space<vmem>>, vector<1x128xf32>
    %3 = vector.broadcast %2 : vector<1x128xf32> to vector<512x128xf32>
    %4 = arith.mulf %1, %3 : vector<512x128xf32>
    %c0_3 = arith.constant 0 : index
    %c0_4 = arith.constant 0 : index
    %5 = vector.load %arg3[%c0_3, %c0_4] : memref<1x128xf32, #tpu.memory_space<vmem>>, vector<1x128xf32>
    %6 = vector.broadcast %5 : vector<1x128xf32> to vector<512x128xf32>
    %7 = arith.addf %4, %6 : vector<512x128xf32>
    %cst = arith.constant 0.000000e+00 : f32
    %8 = vector.broadcast %cst : f32 to vector<512x128xf32>
    %9 = arith.maximumf %7, %8 : vector<512x128xf32>
    %10 = arith.truncf %9 : vector<512x128xf32> to vector<512x128xbf16>
    %c0_5 = arith.constant 0 : index
    %c0_6 = arith.constant 0 : index
    %11 = vector.load %arg5[%c0_5, %c0_6] : memref<128x128xbf16, #tpu.memory_space<vmem>>, vector<128x128xbf16>
    %cst_7 = arith.constant dense<0.000000e+00> : vector<512x128xf32>
    %12 = tpu.matmul %10, %11, %cst_7 {dimension_numbers = #tpu.dot_dimension_numbers<[1], [0], [0], [1], [0, 0, 1, 1], [], []>} : vector<512x128xbf16>, vector<128x128xbf16>, vector<512x128xf32> -> vector<512x128xf32>
    %c0_8 = arith.constant 0 : index
    %c0_9 = arith.constant 0 : index
    %13 = vector.load %arg4[%c0_8, %c0_9] : memref<512x4xf32, #tpu.memory_space<vmem>>, vector<512x4xf32>
    %14 = arith.truncf %13 : vector<512x4xf32> to vector<512x4xbf16>
    %c0_10 = arith.constant 0 : index
    %c0_11 = arith.constant 0 : index
    %15 = vector.load %arg6[%c0_10, %c0_11] : memref<4x128xbf16, #tpu.memory_space<vmem>>, vector<4x128xbf16>
    %cst_12 = arith.constant dense<0.000000e+00> : vector<512x128xf32>
    %16 = tpu.matmul %14, %15, %cst_12 {dimension_numbers = #tpu.dot_dimension_numbers<[1], [0], [0], [1], [0, 0, 1, 1], [], []>} : vector<512x4xbf16>, vector<4x128xbf16>, vector<512x128xf32> -> vector<512x128xf32>
    %cst_13 = arith.constant dense<0.000000e+00> : vector<128xf32>
    %17 = vector.multi_reduction <add>, %12, %cst_13 [0] : vector<512x128xf32> to vector<128xf32>
    %18 = vector.shape_cast %17 : vector<128xf32> to vector<1x128xf32>
    %19 = arith.mulf %12, %12 : vector<512x128xf32>
    %cst_14 = arith.constant dense<0.000000e+00> : vector<128xf32>
    %20 = vector.multi_reduction <add>, %19, %cst_14 [0] : vector<512x128xf32> to vector<128xf32>
    %21 = vector.shape_cast %20 : vector<128xf32> to vector<1x128xf32>
    %22 = tpu.concatenate %18, %21 in 0 : vector<1x128xf32>, vector<1x128xf32> -> vector<2x128xf32>
    %c0_15 = arith.constant 0 : index
    %c0_16 = arith.constant 0 : index
    %c0_17 = arith.constant 0 : index
    %23 = vector.load %arg9[%c0_15, %c0_16, %c0_17] : memref<1x2x128xf32, #tpu.memory_space<vmem>>, vector<1x2x128xf32>
    %24 = vector.shape_cast %23 : vector<1x2x128xf32> to vector<2x128xf32>
    %25 = vector.shape_cast %22 : vector<2x128xf32> to vector<1x2x128xf32>
    tpu.vector_store %arg9[%c0_15, %c0_16, %c0_17], %25 {strides = array<i32>} : memref<1x2x128xf32, #tpu.memory_space<vmem>>, vector<1x2x128xf32>,
    %cst_18 = arith.constant dense<0.000000e+00> : vector<128xf32>
    %26 = vector.multi_reduction <add>, %16, %cst_18 [0] : vector<512x128xf32> to vector<128xf32>
    %27 = vector.shape_cast %26 : vector<128xf32> to vector<1x128xf32>
    %28 = arith.mulf %16, %16 : vector<512x128xf32>
    %cst_19 = arith.constant dense<0.000000e+00> : vector<128xf32>
    %29 = vector.multi_reduction <add>, %28, %cst_19 [0] : vector<512x128xf32> to vector<128xf32>
    %30 = vector.shape_cast %29 : vector<128xf32> to vector<1x128xf32>
    %31 = tpu.concatenate %27, %30 in 0 : vector<1x128xf32>, vector<1x128xf32> -> vector<2x128xf32>
    %c0_20 = arith.constant 0 : index
    %c0_21 = arith.constant 0 : index
    %c0_22 = arith.constant 0 : index
    %32 = vector.load %arg10[%c0_20, %c0_21, %c0_22] : memref<1x2x128xf32, #tpu.memory_space<vmem>>, vector<1x2x128xf32>
    %33 = vector.shape_cast %32 : vector<1x2x128xf32> to vector<2x128xf32>
    %34 = vector.shape_cast %31 : vector<2x128xf32> to vector<1x2x128xf32>
    tpu.vector_store %arg10[%c0_20, %c0_21, %c0_22], %34 {strides = array<i32>} : memref<1x2x128xf32, #tpu.memory_space<vmem>>, vector<1x2x128xf32>,
    %35 = arith.truncf %12 : vector<512x128xf32> to vector<512x128xbf16>
    %c0_23 = arith.constant 0 : index
    %c0_24 = arith.constant 0 : index
    %36 = vector.load %arg7[%c0_23, %c0_24] : memref<512x128xbf16, #tpu.memory_space<vmem>>, vector<512x128xbf16>
    tpu.vector_store %arg7[%c0_23, %c0_24], %35 {strides = array<i32>} : memref<512x128xbf16, #tpu.memory_space<vmem>>, vector<512x128xbf16>,
    %37 = arith.truncf %16 : vector<512x128xf32> to vector<512x128xbf16>
    %c0_25 = arith.constant 0 : index
    %c0_26 = arith.constant 0 : index
    %38 = vector.load %arg8[%c0_25, %c0_26] : memref<512x128xbf16, #tpu.memory_space<vmem>>, vector<512x128xbf16>
    tpu.vector_store %arg8[%c0_25, %c0_26], %37 {strides = array<i32>} : memref<512x128xbf16, #tpu.memory_space<vmem>>, vector<512x128xbf16>,
    return
  }
  func.func @transform_0(%arg0: i32) -> (i32, i32) {
    %c0_i32 = arith.constant 0 : i32
    %c0_i32_0 = arith.constant 0 : i32
    return %arg0, %c0_i32 : i32, i32
  }
  func.func @transform_1(%arg0: i32) -> (i32, i32) {
    %c0_i32 = arith.constant 0 : i32
    %c0_i32_0 = arith.constant 0 : i32
    %c0_i32_1 = arith.constant 0 : i32
    return %c0_i32, %c0_i32_0 : i32, i32
  }
  func.func @transform_2(%arg0: i32) -> (i32, i32) {
    %c0_i32 = arith.constant 0 : i32
    %c0_i32_0 = arith.constant 0 : i32
    %c0_i32_1 = arith.constant 0 : i32
    return %c0_i32, %c0_i32_0 : i32, i32
  }
  func.func @transform_3(%arg0: i32) -> (i32, i32) {
    %c0_i32 = arith.constant 0 : i32
    %c0_i32_0 = arith.constant 0 : i32
    return %arg0, %c0_i32 : i32, i32
  }
  func.func @transform_4(%arg0: i32) -> (i32, i32) {
    %c0_i32 = arith.constant 0 : i32
    %c0_i32_0 = arith.constant 0 : i32
    %c0_i32_1 = arith.constant 0 : i32
    return %c0_i32, %c0_i32_0 : i32, i32
  }
  func.func @transform_5(%arg0: i32) -> (i32, i32) {
    %c0_i32 = arith.constant 0 : i32
    %c0_i32_0 = arith.constant 0 : i32
    %c0_i32_1 = arith.constant 0 : i32
    return %c0_i32, %c0_i32_0 : i32, i32
  }
  func.func @transform_6(%arg0: i32) -> (i32, i32) {
    %c0_i32 = arith.constant 0 : i32
    %c0_i32_0 = arith.constant 0 : i32
    return %arg0, %c0_i32 : i32, i32
  }
  func.func @transform_7(%arg0: i32) -> (i32, i32) {
    %c0_i32 = arith.constant 0 : i32
    %c0_i32_0 = arith.constant 0 : i32
    return %arg0, %c0_i32 : i32, i32
  }
  func.func @transform_8(%arg0: i32) -> (i32, i32, i32) {
    %c0_i32 = arith.constant 0 : i32
    %c0_i32_0 = arith.constant 0 : i32
    %c0_i32_1 = arith.constant 0 : i32
    return %arg0, %c0_i32, %c0_i32_0 : i32, i32, i32
  }
  func.func @transform_9(%arg0: i32) -> (i32, i32, i32) {
    %c0_i32 = arith.constant 0 : i32
    %c0_i32_0 = arith.constant 0 : i32
    %c0_i32_1 = arith.constant 0 : i32
    return %arg0, %c0_i32, %c0_i32_0 : i32, i32, i32
  }
}

module attributes {stable_mosaic.version = 11 : i64} {
  func.func @_conv3x3_stats_kernel(%arg0: i32, %arg1: memref<1x16x16x128xbf16, #tpu.memory_space<vmem>>, %arg2: memref<1x128xf32, #tpu.memory_space<vmem>>, %arg3: memref<1x128xf32, #tpu.memory_space<vmem>>, %arg4: memref<9x128x128xbf16, #tpu.memory_space<vmem>>, %arg5: memref<1x256x128xbf16, #tpu.memory_space<vmem>>, %arg6: memref<1x2x128xf32, #tpu.memory_space<vmem>>, %arg7: memref<18x32x128xf32, #tpu.memory_space<vmem>>) attributes {dimension_semantics = [#tpu.dimension_semantics<parallel>], iteration_bounds = array<i64: 2>, scalar_prefetch = 0 : i64, scratch_operands = 1 : i64, tpu.core_type = #tpu.core_type<tc>, window_params = [{transform_indices = @transform_0, window_bounds = array<i64: 1, 16, 16, 128>}, {pipeline_mode = #tpu.pipeline_mode<synchronous>, transform_indices = @transform_1, window_bounds = array<i64: 1, 128>}, {pipeline_mode = #tpu.pipeline_mode<synchronous>, transform_indices = @transform_2, window_bounds = array<i64: 1, 128>}, {pipeline_mode = #tpu.pipeline_mode<synchronous>, transform_indices = @transform_3, window_bounds = array<i64: 9, 128, 128>}, {transform_indices = @transform_4, window_bounds = array<i64: 1, 256, 128>}, {transform_indices = @transform_5, window_bounds = array<i64: 1, 2, 128>}]} {
    %c0 = arith.constant 0 : index
    %c0_0 = arith.constant 0 : index
    %c0_1 = arith.constant 0 : index
    %c0_2 = arith.constant 0 : index
    %0 = vector.load %arg1[%c0, %c0_0, %c0_1, %c0_2] : memref<1x16x16x128xbf16, #tpu.memory_space<vmem>>, vector<1x16x16x128xbf16>
    %1 = vector.shape_cast %0 : vector<1x16x16x128xbf16> to vector<16x16x128xbf16>
    %2 = arith.extf %1 : vector<16x16x128xbf16> to vector<16x16x128xf32>
    %c0_3 = arith.constant 0 : index
    %c0_4 = arith.constant 0 : index
    %3 = vector.load %arg2[%c0_3, %c0_4] : memref<1x128xf32, #tpu.memory_space<vmem>>, vector<1x128xf32>
    %4 = vector.shape_cast %3 : vector<1x128xf32> to vector<128xf32>
    %5 = vector.shape_cast %4 : vector<128xf32> to vector<1x1x128xf32>
    %6 = vector.broadcast %5 : vector<1x1x128xf32> to vector<16x16x128xf32>
    %7 = arith.mulf %2, %6 : vector<16x16x128xf32>
    %c0_5 = arith.constant 0 : index
    %c0_6 = arith.constant 0 : index
    %8 = vector.load %arg3[%c0_5, %c0_6] : memref<1x128xf32, #tpu.memory_space<vmem>>, vector<1x128xf32>
    %9 = vector.shape_cast %8 : vector<1x128xf32> to vector<128xf32>
    %10 = vector.shape_cast %9 : vector<128xf32> to vector<1x1x128xf32>
    %11 = vector.broadcast %10 : vector<1x1x128xf32> to vector<16x16x128xf32>
    %12 = arith.addf %7, %11 : vector<16x16x128xf32>
    %cst = arith.constant 0.000000e+00 : f32
    %13 = vector.broadcast %cst : f32 to vector<16x16x128xf32>
    %14 = arith.maximumf %12, %13 : vector<16x16x128xf32>
    %cst_7 = arith.constant 0.000000e+00 : f32
    %15 = vector.broadcast %cst_7 : f32 to vector<18x32x128xf32>
    %c0_8 = arith.constant 0 : index
    %c0_9 = arith.constant 0 : index
    %c0_10 = arith.constant 0 : index
    %16 = vector.load %arg7[%c0_8, %c0_9, %c0_10] : memref<18x32x128xf32, #tpu.memory_space<vmem>>, vector<18x32x128xf32>
    tpu.vector_store %arg7[%c0_8, %c0_9, %c0_10], %15 {strides = array<i32>} : memref<18x32x128xf32, #tpu.memory_space<vmem>>, vector<18x32x128xf32>,
    %c1 = arith.constant 1 : index
    %c8 = arith.constant 8 : index
    %c0_11 = arith.constant 0 : index
    %17 = vector.load %arg7[%c1, %c8, %c0_11] : memref<18x32x128xf32, #tpu.memory_space<vmem>>, vector<16x16x128xf32>
    tpu.vector_store %arg7[%c1, %c8, %c0_11], %14 {strides = array<i32>} : memref<18x32x128xf32, #tpu.memory_space<vmem>>, vector<16x16x128xf32>,
    %cst_12 = arith.constant 0.000000e+00 : f32
    %18 = vector.broadcast %cst_12 : f32 to vector<256x128xf32>
    %c0_13 = arith.constant 0 : index
    %c7 = arith.constant 7 : index
    %c0_14 = arith.constant 0 : index
    %19 = vector.load %arg7[%c0_13, %c7, %c0_14] : memref<18x32x128xf32, #tpu.memory_space<vmem>>, vector<16x16x128xf32>
    %20 = vector.shape_cast %19 : vector<16x16x128xf32> to vector<256x128xf32>
    %21 = arith.truncf %20 : vector<256x128xf32> to vector<256x128xbf16>
    %c0_15 = arith.constant 0 : index
    %c0_16 = arith.constant 0 : index
    %c0_17 = arith.constant 0 : index
    %22 = vector.load %arg4[%c0_15, %c0_16, %c0_17] : memref<9x128x128xbf16, #tpu.memory_space<vmem>>, vector<1x128x128xbf16>
    %23 = vector.shape_cast %22 : vector<1x128x128xbf16> to vector<128x128xbf16>
    %cst_18 = arith.constant dense<0.000000e+00> : vector<256x128xf32>
    %24 = tpu.matmul %21, %23, %cst_18 {dimension_numbers = #tpu.dot_dimension_numbers<[1], [0], [0], [1], [0, 0, 1, 1], [], []>} : vector<256x128xbf16>, vector<128x128xbf16>, vector<256x128xf32> -> vector<256x128xf32>
    %25 = arith.addf %18, %24 : vector<256x128xf32>
    %c0_19 = arith.constant 0 : index
    %c8_20 = arith.constant 8 : index
    %c0_21 = arith.constant 0 : index
    %26 = vector.load %arg7[%c0_19, %c8_20, %c0_21] : memref<18x32x128xf32, #tpu.memory_space<vmem>>, vector<16x16x128xf32>
    %27 = vector.shape_cast %26 : vector<16x16x128xf32> to vector<256x128xf32>
    %28 = arith.truncf %27 : vector<256x128xf32> to vector<256x128xbf16>
    %c1_22 = arith.constant 1 : index
    %c0_23 = arith.constant 0 : index
    %c0_24 = arith.constant 0 : index
    %29 = vector.load %arg4[%c1_22, %c0_23, %c0_24] : memref<9x128x128xbf16, #tpu.memory_space<vmem>>, vector<1x128x128xbf16>
    %30 = vector.shape_cast %29 : vector<1x128x128xbf16> to vector<128x128xbf16>
    %cst_25 = arith.constant dense<0.000000e+00> : vector<256x128xf32>
    %31 = tpu.matmul %28, %30, %cst_25 {dimension_numbers = #tpu.dot_dimension_numbers<[1], [0], [0], [1], [0, 0, 1, 1], [], []>} : vector<256x128xbf16>, vector<128x128xbf16>, vector<256x128xf32> -> vector<256x128xf32>
    %32 = arith.addf %25, %31 : vector<256x128xf32>
    %c0_26 = arith.constant 0 : index
    %c9 = arith.constant 9 : index
    %c0_27 = arith.constant 0 : index
    %33 = vector.load %arg7[%c0_26, %c9, %c0_27] : memref<18x32x128xf32, #tpu.memory_space<vmem>>, vector<16x16x128xf32>
    %34 = vector.shape_cast %33 : vector<16x16x128xf32> to vector<256x128xf32>
    %35 = arith.truncf %34 : vector<256x128xf32> to vector<256x128xbf16>
    %c2 = arith.constant 2 : index
    %c0_28 = arith.constant 0 : index
    %c0_29 = arith.constant 0 : index
    %36 = vector.load %arg4[%c2, %c0_28, %c0_29] : memref<9x128x128xbf16, #tpu.memory_space<vmem>>, vector<1x128x128xbf16>
    %37 = vector.shape_cast %36 : vector<1x128x128xbf16> to vector<128x128xbf16>
    %cst_30 = arith.constant dense<0.000000e+00> : vector<256x128xf32>
    %38 = tpu.matmul %35, %37, %cst_30 {dimension_numbers = #tpu.dot_dimension_numbers<[1], [0], [0], [1], [0, 0, 1, 1], [], []>} : vector<256x128xbf16>, vector<128x128xbf16>, vector<256x128xf32> -> vector<256x128xf32>
    %39 = arith.addf %32, %38 : vector<256x128xf32>
    %c1_31 = arith.constant 1 : index
    %c7_32 = arith.constant 7 : index
    %c0_33 = arith.constant 0 : index
    %40 = vector.load %arg7[%c1_31, %c7_32, %c0_33] : memref<18x32x128xf32, #tpu.memory_space<vmem>>, vector<16x16x128xf32>
    %41 = vector.shape_cast %40 : vector<16x16x128xf32> to vector<256x128xf32>
    %42 = arith.truncf %41 : vector<256x128xf32> to vector<256x128xbf16>
    %c3 = arith.constant 3 : index
    %c0_34 = arith.constant 0 : index
    %c0_35 = arith.constant 0 : index
    %43 = vector.load %arg4[%c3, %c0_34, %c0_35] : memref<9x128x128xbf16, #tpu.memory_space<vmem>>, vector<1x128x128xbf16>
    %44 = vector.shape_cast %43 : vector<1x128x128xbf16> to vector<128x128xbf16>
    %cst_36 = arith.constant dense<0.000000e+00> : vector<256x128xf32>
    %45 = tpu.matmul %42, %44, %cst_36 {dimension_numbers = #tpu.dot_dimension_numbers<[1], [0], [0], [1], [0, 0, 1, 1], [], []>} : vector<256x128xbf16>, vector<128x128xbf16>, vector<256x128xf32> -> vector<256x128xf32>
    %46 = arith.addf %39, %45 : vector<256x128xf32>
    %c1_37 = arith.constant 1 : index
    %c8_38 = arith.constant 8 : index
    %c0_39 = arith.constant 0 : index
    %47 = vector.load %arg7[%c1_37, %c8_38, %c0_39] : memref<18x32x128xf32, #tpu.memory_space<vmem>>, vector<16x16x128xf32>
    %48 = vector.shape_cast %47 : vector<16x16x128xf32> to vector<256x128xf32>
    %49 = arith.truncf %48 : vector<256x128xf32> to vector<256x128xbf16>
    %c4 = arith.constant 4 : index
    %c0_40 = arith.constant 0 : index
    %c0_41 = arith.constant 0 : index
    %50 = vector.load %arg4[%c4, %c0_40, %c0_41] : memref<9x128x128xbf16, #tpu.memory_space<vmem>>, vector<1x128x128xbf16>
    %51 = vector.shape_cast %50 : vector<1x128x128xbf16> to vector<128x128xbf16>
    %cst_42 = arith.constant dense<0.000000e+00> : vector<256x128xf32>
    %52 = tpu.matmul %49, %51, %cst_42 {dimension_numbers = #tpu.dot_dimension_numbers<[1], [0], [0], [1], [0, 0, 1, 1], [], []>} : vector<256x128xbf16>, vector<128x128xbf16>, vector<256x128xf32> -> vector<256x128xf32>
    %53 = arith.addf %46, %52 : vector<256x128xf32>
    %c1_43 = arith.constant 1 : index
    %c9_44 = arith.constant 9 : index
    %c0_45 = arith.constant 0 : index
    %54 = vector.load %arg7[%c1_43, %c9_44, %c0_45] : memref<18x32x128xf32, #tpu.memory_space<vmem>>, vector<16x16x128xf32>
    %55 = vector.shape_cast %54 : vector<16x16x128xf32> to vector<256x128xf32>
    %56 = arith.truncf %55 : vector<256x128xf32> to vector<256x128xbf16>
    %c5 = arith.constant 5 : index
    %c0_46 = arith.constant 0 : index
    %c0_47 = arith.constant 0 : index
    %57 = vector.load %arg4[%c5, %c0_46, %c0_47] : memref<9x128x128xbf16, #tpu.memory_space<vmem>>, vector<1x128x128xbf16>
    %58 = vector.shape_cast %57 : vector<1x128x128xbf16> to vector<128x128xbf16>
    %cst_48 = arith.constant dense<0.000000e+00> : vector<256x128xf32>
    %59 = tpu.matmul %56, %58, %cst_48 {dimension_numbers = #tpu.dot_dimension_numbers<[1], [0], [0], [1], [0, 0, 1, 1], [], []>} : vector<256x128xbf16>, vector<128x128xbf16>, vector<256x128xf32> -> vector<256x128xf32>
    %60 = arith.addf %53, %59 : vector<256x128xf32>
    %c2_49 = arith.constant 2 : index
    %c7_50 = arith.constant 7 : index
    %c0_51 = arith.constant 0 : index
    %61 = vector.load %arg7[%c2_49, %c7_50, %c0_51] : memref<18x32x128xf32, #tpu.memory_space<vmem>>, vector<16x16x128xf32>
    %62 = vector.shape_cast %61 : vector<16x16x128xf32> to vector<256x128xf32>
    %63 = arith.truncf %62 : vector<256x128xf32> to vector<256x128xbf16>
    %c6 = arith.constant 6 : index
    %c0_52 = arith.constant 0 : index
    %c0_53 = arith.constant 0 : index
    %64 = vector.load %arg4[%c6, %c0_52, %c0_53] : memref<9x128x128xbf16, #tpu.memory_space<vmem>>, vector<1x128x128xbf16>
    %65 = vector.shape_cast %64 : vector<1x128x128xbf16> to vector<128x128xbf16>
    %cst_54 = arith.constant dense<0.000000e+00> : vector<256x128xf32>
    %66 = tpu.matmul %63, %65, %cst_54 {dimension_numbers = #tpu.dot_dimension_numbers<[1], [0], [0], [1], [0, 0, 1, 1], [], []>} : vector<256x128xbf16>, vector<128x128xbf16>, vector<256x128xf32> -> vector<256x128xf32>
    %67 = arith.addf %60, %66 : vector<256x128xf32>
    %c2_55 = arith.constant 2 : index
    %c8_56 = arith.constant 8 : index
    %c0_57 = arith.constant 0 : index
    %68 = vector.load %arg7[%c2_55, %c8_56, %c0_57] : memref<18x32x128xf32, #tpu.memory_space<vmem>>, vector<16x16x128xf32>
    %69 = vector.shape_cast %68 : vector<16x16x128xf32> to vector<256x128xf32>
    %70 = arith.truncf %69 : vector<256x128xf32> to vector<256x128xbf16>
    %c7_58 = arith.constant 7 : index
    %c0_59 = arith.constant 0 : index
    %c0_60 = arith.constant 0 : index
    %71 = vector.load %arg4[%c7_58, %c0_59, %c0_60] : memref<9x128x128xbf16, #tpu.memory_space<vmem>>, vector<1x128x128xbf16>
    %72 = vector.shape_cast %71 : vector<1x128x128xbf16> to vector<128x128xbf16>
    %cst_61 = arith.constant dense<0.000000e+00> : vector<256x128xf32>
    %73 = tpu.matmul %70, %72, %cst_61 {dimension_numbers = #tpu.dot_dimension_numbers<[1], [0], [0], [1], [0, 0, 1, 1], [], []>} : vector<256x128xbf16>, vector<128x128xbf16>, vector<256x128xf32> -> vector<256x128xf32>
    %74 = arith.addf %67, %73 : vector<256x128xf32>
    %c2_62 = arith.constant 2 : index
    %c9_63 = arith.constant 9 : index
    %c0_64 = arith.constant 0 : index
    %75 = vector.load %arg7[%c2_62, %c9_63, %c0_64] : memref<18x32x128xf32, #tpu.memory_space<vmem>>, vector<16x16x128xf32>
    %76 = vector.shape_cast %75 : vector<16x16x128xf32> to vector<256x128xf32>
    %77 = arith.truncf %76 : vector<256x128xf32> to vector<256x128xbf16>
    %c8_65 = arith.constant 8 : index
    %c0_66 = arith.constant 0 : index
    %c0_67 = arith.constant 0 : index
    %78 = vector.load %arg4[%c8_65, %c0_66, %c0_67] : memref<9x128x128xbf16, #tpu.memory_space<vmem>>, vector<1x128x128xbf16>
    %79 = vector.shape_cast %78 : vector<1x128x128xbf16> to vector<128x128xbf16>
    %cst_68 = arith.constant dense<0.000000e+00> : vector<256x128xf32>
    %80 = tpu.matmul %77, %79, %cst_68 {dimension_numbers = #tpu.dot_dimension_numbers<[1], [0], [0], [1], [0, 0, 1, 1], [], []>} : vector<256x128xbf16>, vector<128x128xbf16>, vector<256x128xf32> -> vector<256x128xf32>
    %81 = arith.addf %74, %80 : vector<256x128xf32>
    %cst_69 = arith.constant dense<0.000000e+00> : vector<128xf32>
    %82 = vector.multi_reduction <add>, %81, %cst_69 [0] : vector<256x128xf32> to vector<128xf32>
    %83 = vector.shape_cast %82 : vector<128xf32> to vector<1x128xf32>
    %84 = arith.mulf %81, %81 : vector<256x128xf32>
    %cst_70 = arith.constant dense<0.000000e+00> : vector<128xf32>
    %85 = vector.multi_reduction <add>, %84, %cst_70 [0] : vector<256x128xf32> to vector<128xf32>
    %86 = vector.shape_cast %85 : vector<128xf32> to vector<1x128xf32>
    %87 = tpu.concatenate %83, %86 in 0 : vector<1x128xf32>, vector<1x128xf32> -> vector<2x128xf32>
    %c0_71 = arith.constant 0 : index
    %c0_72 = arith.constant 0 : index
    %c0_73 = arith.constant 0 : index
    %88 = vector.load %arg6[%c0_71, %c0_72, %c0_73] : memref<1x2x128xf32, #tpu.memory_space<vmem>>, vector<1x2x128xf32>
    %89 = vector.shape_cast %88 : vector<1x2x128xf32> to vector<2x128xf32>
    %90 = vector.shape_cast %87 : vector<2x128xf32> to vector<1x2x128xf32>
    tpu.vector_store %arg6[%c0_71, %c0_72, %c0_73], %90 {strides = array<i32>} : memref<1x2x128xf32, #tpu.memory_space<vmem>>, vector<1x2x128xf32>,
    %91 = arith.truncf %81 : vector<256x128xf32> to vector<256x128xbf16>
    %c0_74 = arith.constant 0 : index
    %c0_75 = arith.constant 0 : index
    %c0_76 = arith.constant 0 : index
    %92 = vector.load %arg5[%c0_74, %c0_75, %c0_76] : memref<1x256x128xbf16, #tpu.memory_space<vmem>>, vector<1x256x128xbf16>
    %93 = vector.shape_cast %92 : vector<1x256x128xbf16> to vector<256x128xbf16>
    %94 = vector.shape_cast %91 : vector<256x128xbf16> to vector<1x256x128xbf16>
    tpu.vector_store %arg5[%c0_74, %c0_75, %c0_76], %94 {strides = array<i32>} : memref<1x256x128xbf16, #tpu.memory_space<vmem>>, vector<1x256x128xbf16>,
    return
  }
  func.func @transform_0(%arg0: i32) -> (i32, i32, i32, i32) {
    %c0_i32 = arith.constant 0 : i32
    %c0_i32_0 = arith.constant 0 : i32
    %c0_i32_1 = arith.constant 0 : i32
    %c0_i32_2 = arith.constant 0 : i32
    return %arg0, %c0_i32, %c0_i32_0, %c0_i32_1 : i32, i32, i32, i32
  }
  func.func @transform_1(%arg0: i32) -> (i32, i32) {
    %c0_i32 = arith.constant 0 : i32
    %c0_i32_0 = arith.constant 0 : i32
    %c0_i32_1 = arith.constant 0 : i32
    return %c0_i32, %c0_i32_0 : i32, i32
  }
  func.func @transform_2(%arg0: i32) -> (i32, i32) {
    %c0_i32 = arith.constant 0 : i32
    %c0_i32_0 = arith.constant 0 : i32
    %c0_i32_1 = arith.constant 0 : i32
    return %c0_i32, %c0_i32_0 : i32, i32
  }
  func.func @transform_3(%arg0: i32) -> (i32, i32, i32) {
    %c0_i32 = arith.constant 0 : i32
    %c0_i32_0 = arith.constant 0 : i32
    %c0_i32_1 = arith.constant 0 : i32
    %c0_i32_2 = arith.constant 0 : i32
    return %c0_i32, %c0_i32_0, %c0_i32_1 : i32, i32, i32
  }
  func.func @transform_4(%arg0: i32) -> (i32, i32, i32) {
    %c0_i32 = arith.constant 0 : i32
    %c0_i32_0 = arith.constant 0 : i32
    %c0_i32_1 = arith.constant 0 : i32
    return %arg0, %c0_i32, %c0_i32_0 : i32, i32, i32
  }
  func.func @transform_5(%arg0: i32) -> (i32, i32, i32) {
    %c0_i32 = arith.constant 0 : i32
    %c0_i32_0 = arith.constant 0 : i32
    %c0_i32_1 = arith.constant 0 : i32
    return %arg0, %c0_i32, %c0_i32_0 : i32, i32, i32
  }
}

module attributes {stable_mosaic.version = 11 : i64} {
  func.func @_affine_add_relu_kernel(%arg0: i32, %arg1: memref<512x128xbf16, #tpu.memory_space<vmem>>, %arg2: memref<1x128xf32, #tpu.memory_space<vmem>>, %arg3: memref<1x128xf32, #tpu.memory_space<vmem>>, %arg4: memref<512x128xbf16, #tpu.memory_space<vmem>>, %arg5: memref<1x128xf32, #tpu.memory_space<vmem>>, %arg6: memref<1x128xf32, #tpu.memory_space<vmem>>, %arg7: memref<512x128xf32, #tpu.memory_space<vmem>>) attributes {dimension_semantics = [#tpu.dimension_semantics<parallel>], iteration_bounds = array<i64: 1>, scalar_prefetch = 0 : i64, scratch_operands = 0 : i64, tpu.core_type = #tpu.core_type<tc>, window_params = [{transform_indices = @transform_0, window_bounds = array<i64: 512, 128>}, {pipeline_mode = #tpu.pipeline_mode<synchronous>, transform_indices = @transform_1, window_bounds = array<i64: 1, 128>}, {pipeline_mode = #tpu.pipeline_mode<synchronous>, transform_indices = @transform_2, window_bounds = array<i64: 1, 128>}, {transform_indices = @transform_3, window_bounds = array<i64: 512, 128>}, {pipeline_mode = #tpu.pipeline_mode<synchronous>, transform_indices = @transform_4, window_bounds = array<i64: 1, 128>}, {pipeline_mode = #tpu.pipeline_mode<synchronous>, transform_indices = @transform_5, window_bounds = array<i64: 1, 128>}, {transform_indices = @transform_6, window_bounds = array<i64: 512, 128>}]} {
    %c0 = arith.constant 0 : index
    %c0_0 = arith.constant 0 : index
    %0 = vector.load %arg1[%c0, %c0_0] : memref<512x128xbf16, #tpu.memory_space<vmem>>, vector<512x128xbf16>
    %1 = arith.extf %0 : vector<512x128xbf16> to vector<512x128xf32>
    %c0_1 = arith.constant 0 : index
    %c0_2 = arith.constant 0 : index
    %2 = vector.load %arg2[%c0_1, %c0_2] : memref<1x128xf32, #tpu.memory_space<vmem>>, vector<1x128xf32>
    %3 = vector.broadcast %2 : vector<1x128xf32> to vector<512x128xf32>
    %4 = arith.mulf %1, %3 : vector<512x128xf32>
    %c0_3 = arith.constant 0 : index
    %c0_4 = arith.constant 0 : index
    %5 = vector.load %arg3[%c0_3, %c0_4] : memref<1x128xf32, #tpu.memory_space<vmem>>, vector<1x128xf32>
    %6 = vector.broadcast %5 : vector<1x128xf32> to vector<512x128xf32>
    %7 = arith.addf %4, %6 : vector<512x128xf32>
    %c0_5 = arith.constant 0 : index
    %c0_6 = arith.constant 0 : index
    %8 = vector.load %arg4[%c0_5, %c0_6] : memref<512x128xbf16, #tpu.memory_space<vmem>>, vector<512x128xbf16>
    %9 = arith.extf %8 : vector<512x128xbf16> to vector<512x128xf32>
    %c0_7 = arith.constant 0 : index
    %c0_8 = arith.constant 0 : index
    %10 = vector.load %arg5[%c0_7, %c0_8] : memref<1x128xf32, #tpu.memory_space<vmem>>, vector<1x128xf32>
    %11 = vector.broadcast %10 : vector<1x128xf32> to vector<512x128xf32>
    %12 = arith.mulf %9, %11 : vector<512x128xf32>
    %c0_9 = arith.constant 0 : index
    %c0_10 = arith.constant 0 : index
    %13 = vector.load %arg6[%c0_9, %c0_10] : memref<1x128xf32, #tpu.memory_space<vmem>>, vector<1x128xf32>
    %14 = vector.broadcast %13 : vector<1x128xf32> to vector<512x128xf32>
    %15 = arith.addf %12, %14 : vector<512x128xf32>
    %16 = arith.addf %7, %15 : vector<512x128xf32>
    %cst = arith.constant 0.000000e+00 : f32
    %17 = vector.broadcast %cst : f32 to vector<512x128xf32>
    %18 = arith.maximumf %16, %17 : vector<512x128xf32>
    %c0_11 = arith.constant 0 : index
    %c0_12 = arith.constant 0 : index
    %19 = vector.load %arg7[%c0_11, %c0_12] : memref<512x128xf32, #tpu.memory_space<vmem>>, vector<512x128xf32>
    tpu.vector_store %arg7[%c0_11, %c0_12], %18 {strides = array<i32>} : memref<512x128xf32, #tpu.memory_space<vmem>>, vector<512x128xf32>,
    return
  }
  func.func @transform_0(%arg0: i32) -> (i32, i32) {
    %c0_i32 = arith.constant 0 : i32
    %c0_i32_0 = arith.constant 0 : i32
    return %arg0, %c0_i32 : i32, i32
  }
  func.func @transform_1(%arg0: i32) -> (i32, i32) {
    %c0_i32 = arith.constant 0 : i32
    %c0_i32_0 = arith.constant 0 : i32
    %c0_i32_1 = arith.constant 0 : i32
    return %c0_i32, %c0_i32_0 : i32, i32
  }
  func.func @transform_2(%arg0: i32) -> (i32, i32) {
    %c0_i32 = arith.constant 0 : i32
    %c0_i32_0 = arith.constant 0 : i32
    %c0_i32_1 = arith.constant 0 : i32
    return %c0_i32, %c0_i32_0 : i32, i32
  }
  func.func @transform_3(%arg0: i32) -> (i32, i32) {
    %c0_i32 = arith.constant 0 : i32
    %c0_i32_0 = arith.constant 0 : i32
    return %arg0, %c0_i32 : i32, i32
  }
  func.func @transform_4(%arg0: i32) -> (i32, i32) {
    %c0_i32 = arith.constant 0 : i32
    %c0_i32_0 = arith.constant 0 : i32
    %c0_i32_1 = arith.constant 0 : i32
    return %c0_i32, %c0_i32_0 : i32, i32
  }
  func.func @transform_5(%arg0: i32) -> (i32, i32) {
    %c0_i32 = arith.constant 0 : i32
    %c0_i32_0 = arith.constant 0 : i32
    %c0_i32_1 = arith.constant 0 : i32
    return %c0_i32, %c0_i32_0 : i32, i32
  }
  func.func @transform_6(%arg0: i32) -> (i32, i32) {
    %c0_i32 = arith.constant 0 : i32
    %c0_i32_0 = arith.constant 0 : i32
    return %arg0, %c0_i32 : i32, i32
  }
}

</mosaic_0001>

<llo_original>
// kernel: bottleneck_forward.4
$region0: #{bottleneck_forward.4}
  #allocation0 [shape = 'u32[]', space=smem, size = 0x4, offset = 0x4, fixed_abs, tag = 'smem constant byte address 0x4 - core index']
  #allocation1 [shape = 'u32[144,128]{1,0:T(1,128)}', space=vmem, size = 0x12000, scoped, tag = 'internal scratch']
  %s0 = inlined_call_operand.vmem [shape: f32[512,4], index: 0, kind: input, shape index: {}]
  %s1 = inlined_call_operand.vmem [shape: bf16[4,128], index: 1, kind: input, shape index: {}]
  %s2 = inlined_call_operand.vmem [shape: bf16[512,128], index: 2, kind: output, shape index: {0}]
  %s3 = inlined_call_operand.vmem [shape: f32[1,2,128], index: 3, kind: output, shape index: {1}]
  %4 = xla_tuple %s2, %s3
  %s5 = sld [smem:[#allocation0]]
  $region26: #{bottleneck_forward.4} parent=0
    _
  %s7 = ssub.s32 1, %s5
  %s8 = scalar_select 0, %s7, %s5
  // Predicated region
  $region2: #{bottleneck_forward.4} parent=0 // pred_check
    _
  $region3: #{bottleneck_forward.4} parent=0 // pred_check_branch
    %10 = sbr.rel (0) target = $region5
  $region4: #{bottleneck_forward.4} parent=0 // pred_region
    _
  $region5: #{bottleneck_forward.4} parent=0 // pred_fallthru
    _
  // Predicated region
  $region6: #{bottleneck_forward.4} parent=0 // pred_check
    _
  $region7: #{bottleneck_forward.4} parent=0 // pred_check_branch
    %12 = sbr.rel (0) target = $region9
  $region8: #{bottleneck_forward.4} parent=0 // pred_region
    _
  $region9: #{bottleneck_forward.4} parent=0 // pred_fallthru
    _
  %v14 = vld [vmem:[%s0] sm:$0xff]
  %v15 = vld [vmem:[%s0 + $0x8] sm:$0xff]
  %v16 = vld [vmem:[%s0 + $0x10] sm:$0xff]
  %v17 = vld [vmem:[%s0 + $0x18] sm:$0xff]
  %v18 = vld [vmem:[%s0 + $0x20] sm:$0xff]
  %v19 = vld [vmem:[%s0 + $0x28] sm:$0xff]
  %v20 = vld [vmem:[%s0 + $0x30] sm:$0xff]
  %v21 = vld [vmem:[%s0 + $0x38] sm:$0xff]
  %v22 = vld [vmem:[%s0 + $0x40] sm:$0xff]
  %v23 = vld [vmem:[%s0 + $0x48] sm:$0xff]
  %v24 = vld [vmem:[%s0 + $0x50] sm:$0xff]
  %v25 = vld [vmem:[%s0 + $0x58] sm:$0xff]
  %v26 = vld [vmem:[%s0 + $0x60] sm:$0xff]
  %v27 = vld [vmem:[%s0 + $0x68] sm:$0xff]
  %v28 = vld [vmem:[%s0 + $0x70] sm:$0xff]
  %v29 = vld [vmem:[%s0 + $0x78] sm:$0xff]
  %v30 = vld [vmem:[%s0 + $0x80] sm:$0xff]
  %v31 = vld [vmem:[%s0 + $0x88] sm:$0xff]
  %v32 = vld [vmem:[%s0 + $0x90] sm:$0xff]
  %v33 = vld [vmem:[%s0 + $0x98] sm:$0xff]
  %v34 = vld [vmem:[%s0 + $0xa0] sm:$0xff]
  %v35 = vld [vmem:[%s0 + $0xa8] sm:$0xff]
  %v36 = vld [vmem:[%s0 + $0xb0] sm:$0xff]
  %v37 = vld [vmem:[%s0 + $0xb8] sm:$0xff]
  %v38 = vld [vmem:[%s0 + $0xc0] sm:$0xff]
  %v39 = vld [vmem:[%s0 + $0xc8] sm:$0xff]
  %v40 = vld [vmem:[%s0 + $0xd0] sm:$0xff]
  %v41 = vld [vmem:[%s0 + $0xd8] sm:$0xff]
  %v42 = vld [vmem:[%s0 + $0xe0] sm:$0xff]
  %v43 = vld [vmem:[%s0 + $0xe8] sm:$0xff]
  %v44 = vld [vmem:[%s0 + $0xf0] sm:$0xff]
  %v45 = vld [vmem:[%s0 + $0xf8] sm:$0xff]
  %v46 = vld [vmem:[%s0 + $0x100] sm:$0xff]
  %v47 = vld [vmem:[%s0 + $0x108] sm:$0xff]
  %v48 = vld [vmem:[%s0 + $0x110] sm:$0xff]
  %v49 = vld [vmem:[%s0 + $0x118] sm:$0xff]
  %v50 = vld [vmem:[%s0 + $0x120] sm:$0xff]
  %v51 = vld [vmem:[%s0 + $0x128] sm:$0xff]
  %v52 = vld [vmem:[%s0 + $0x130] sm:$0xff]
  %v53 = vld [vmem:[%s0 + $0x138] sm:$0xff]
  %v54 = vld [vmem:[%s0 + $0x140] sm:$0xff]
  %v55 = vld [vmem:[%s0 + $0x148] sm:$0xff]
  %v56 = vld [vmem:[%s0 + $0x150] sm:$0xff]
  %v57 = vld [vmem:[%s0 + $0x158] sm:$0xff]
  %v58 = vld [vmem:[%s0 + $0x160] sm:$0xff]
  %v59 = vld [vmem:[%s0 + $0x168] sm:$0xff]
  %v60 = vld [vmem:[%s0 + $0x170] sm:$0xff]
  %v61 = vld [vmem:[%s0 + $0x178] sm:$0xff]
  %v62 = vld [vmem:[%s0 + $0x180] sm:$0xff]
  %v63 = vld [vmem:[%s0 + $0x188] sm:$0xff]
  %v64 = vld [vmem:[%s0 + $0x190] sm:$0xff]
  %v65 = vld [vmem:[%s0 + $0x198] sm:$0xff]
  %v66 = vld [vmem:[%s0 + $0x1a0] sm:$0xff]
  %v67 = vld [vmem:[%s0 + $0x1a8] sm:$0xff]
  %v68 = vld [vmem:[%s0 + $0x1b0] sm:$0xff]
  %v69 = vld [vmem:[%s0 + $0x1b8] sm:$0xff]
  %v70 = vld [vmem:[%s0 + $0x1c0] sm:$0xff]
  %v71 = vld [vmem:[%s0 + $0x1c8] sm:$0xff]
  %v72 = vld [vmem:[%s0 + $0x1d0] sm:$0xff]
  %v73 = vld [vmem:[%s0 + $0x1d8] sm:$0xff]
  %v74 = vld [vmem:[%s0 + $0x1e0] sm:$0xff]
  %v75 = vld [vmem:[%s0 + $0x1e8] sm:$0xff]
  %v76 = vld [vmem:[%s0 + $0x1f0] sm:$0xff]
  %v77 = vld [vmem:[%s0 + $0x1f8] sm:$0xff]
  %v78 = vpack.c.bf16 %v15, %v14
  %v79 = vpack.c.bf16 %v17, %v16
  %v80 = vpack.c.bf16 %v19, %v18
  %v81 = vpack.c.bf16 %v21, %v20
  %v82 = vpack.c.bf16 %v23, %v22
  %v83 = vpack.c.bf16 %v25, %v24
  %v84 = vpack.c.bf16 %v27, %v26
  %v85 = vpack.c.bf16 %v29, %v28
  %v86 = vpack.c.bf16 %v31, %v30
  %v87 = vpack.c.bf16 %v33, %v32
  %v88 = vpack.c.bf16 %v35, %v34
  %v89 = vpack.c.bf16 %v37, %v36
  %v90 = vpack.c.bf16 %v39, %v38
  %v91 = vpack.c.bf16 %v41, %v40
  %v92 = vpack.c.bf16 %v43, %v42
  %v93 = vpack.c.bf16 %v45, %v44
  %v94 = vpack.c.bf16 %v47, %v46
  %v95 = vpack.c.bf16 %v49, %v48
  %v96 = vpack.c.bf16 %v51, %v50
  %v97 = vpack.c.bf16 %v53, %v52
  %v98 = vpack.c.bf16 %v55, %v54
  %v99 = vpack.c.bf16 %v57, %v56
  %v100 = vpack.c.bf16 %v59, %v58
  %v101 = vpack.c.bf16 %v61, %v60
  %v102 = vpack.c.bf16 %v63, %v62
  %v103 = vpack.c.bf16 %v65, %v64
  %v104 = vpack.c.bf16 %v67, %v66
  %v105 = vpack.c.bf16 %v69, %v68
  %v106 = vpack.c.bf16 %v71, %v70
  %v107 = vpack.c.bf16 %v73, %v72
  %v108 = vpack.c.bf16 %v75, %v74
  %v109 = vpack.c.bf16 %v77, %v76
  %v110 = vld [vmem:[%s1] sm:$0x3]
  %vm111 = vcmask 31744
  %v113 = vsel %vm111, %v78, 0
  %v116 = vsel %vm111, %v79, 0
  %v119 = vsel %vm111, %v80, 0
  %v122 = vsel %vm111, %v81, 0
  %v125 = vsel %vm111, %v82, 0
  %v128 = vsel %vm111, %v83, 0
  %v131 = vsel %vm111, %v84, 0
  %v134 = vsel %vm111, %v85, 0
  %v137 = vsel %vm111, %v86, 0
  %v140 = vsel %vm111, %v87, 0
  %v143 = vsel %vm111, %v88, 0
  %v146 = vsel %vm111, %v89, 0
  %v149 = vsel %vm111, %v90, 0
  %v152 = vsel %vm111, %v91, 0
  %v155 = vsel %vm111, %v92, 0
  %v158 = vsel %vm111, %v93, 0
  %v161 = vsel %vm111, %v94, 0
  %v164 = vsel %vm111, %v95, 0
  %v167 = vsel %vm111, %v96, 0
  %v170 = vsel %vm111, %v97, 0
  %v173 = vsel %vm111, %v98, 0
  %v176 = vsel %vm111, %v99, 0
  %v179 = vsel %vm111, %v100, 0
  %v182 = vsel %vm111, %v101, 0
  %v185 = vsel %vm111, %v102, 0
  %v188 = vsel %vm111, %v103, 0
  %v191 = vsel %vm111, %v104, 0
  %v194 = vsel %vm111, %v105, 0
  %v197 = vsel %vm111, %v106, 0
  %v200 = vsel %vm111, %v107, 0
  %v203 = vsel %vm111, %v108, 0
  %v206 = vsel %vm111, %v109, 0
  %vm208 = vcmask 1041408
  %v210 = vsel %vm208, %v110, 0
  %212 = vmatprep.subr.bf16.mxu0 0
  %213 = vmatpush1.bf16.msra.mxu0 %v210
  %214 = vmatprep.subr.bf16.mxu0 0
  %215 = vmatpush1.bf16.msra.mxu0 0
  %216 = vmatprep.subr.bf16.mxu0 0
  %217 = vmatpush1.bf16.msra.mxu0 0
  %218 = vmatprep.subr.bf16.mxu0 0
  %219 = vmatpush1.bf16.msra.mxu0 0
  %220 = vmatprep.subr.bf16.mxu0 0
  %221 = vmatpush1.bf16.msra.mxu0 0
  %222 = vmatprep.subr.bf16.mxu0 0
  %223 = vmatpush1.bf16.msra.mxu0 0
  %224 = vmatprep.subr.bf16.mxu0 0
  %225 = vmatpush1.bf16.msra.mxu0 0
  %226 = vmatprep.subr.bf16.mxu0 0
  %227 = vmatpush1.bf16.msra.mxu0 0
  %228 = vmatprep.subr.bf16.mxu0 0
  %229 = vmatpush1.bf16.msra.mxu0 0
  %230 = vmatprep.subr.bf16.mxu0 0
  %231 = vmatpush1.bf16.msra.mxu0 0
  %232 = vmatprep.subr.bf16.mxu0 0
  %233 = vmatpush1.bf16.msra.mxu0 0
  %234 = vmatprep.subr.bf16.mxu0 0
  %235 = vmatpush1.bf16.msra.mxu0 0
  %236 = vmatprep.subr.bf16.mxu0 0
  %237 = vmatpush1.bf16.msra.mxu0 0
  %238 = vmatprep.subr.bf16.mxu0 0
  %239 = vmatpush1.bf16.msra.mxu0 0
  %240 = vmatprep.subr.bf16.mxu0 0
  %241 = vmatpush1.bf16.msra.mxu0 0
  %242 = vmatprep.subr.bf16.mxu0 0
  %243 = vmatpush1.bf16.msra.mxu0 0
  %244 = vmatprep.mubr.bf16.mxu0 0
  %245 = vmatmul.mubr.bf16.gmra.mrb[0].mxu0 %v113
  %v246 = vpop.f32.mrb[0].mxu0
  %v247 = vadd.f32 0.0, %v246
  %v248 = vpop.f32.mrb[0].mxu0
  %v249 = vpop.f32.mrb[0].mxu0
  %v250 = vadd.f32 0.0, %v249
  %v251 = vpop.f32.mrb[0].mxu0
  %252 = vmatprep.mubr.bf16.mxu0 0
  %253 = vmatmul.mubr.bf16.gmra.mrb[0].mxu0 %v116
  %v254 = vpop.f32.mrb[0].mxu0
  %v255 = vadd.f32 0.0, %v254
  %v256 = vpop.f32.mrb[0].mxu0
  %v257 = vpop.f32.mrb[0].mxu0
  %v258 = vadd.f32 0.0, %v257
  %v259 = vpop.f32.mrb[0].mxu0
  %260 = vmatprep.mubr.bf16.mxu0 0
  %261 = vmatmul.mubr.bf16.gmra.mrb[0].mxu0 %v119
  %v262 = vpop.f32.mrb[0].mxu0
  %v263 = vadd.f32 0.0, %v262
  %v264 = vpop.f32.mrb[0].mxu0
  %v265 = vpop.f32.mrb[0].mxu0
  %v266 = vadd.f32 0.0, %v265
  %v267 = vpop.f32.mrb[0].mxu0
  %268 = vmatprep.mubr.bf16.mxu0 0
  %269 = vmatmul.mubr.bf16.gmra.mrb[0].mxu0 %v122
  %v270 = vpop.f32.mrb[0].mxu0
  %v271 = vadd.f32 0.0, %v270
  %v272 = vpop.f32.mrb[0].mxu0
  %v273 = vpop.f32.mrb[0].mxu0
  %v274 = vadd.f32 0.0, %v273
  %v275 = vpop.f32.mrb[0].mxu0
  %276 = vmatprep.mubr.bf16.mxu0 0
  %277 = vmatmul.mubr.bf16.gmra.mrb[0].mxu0 %v125
  %v278 = vpop.f32.mrb[0].mxu0
  %v279 = vadd.f32 0.0, %v278
  %v280 = vpop.f32.mrb[0].mxu0
  %v281 = vpop.f32.mrb[0].mxu0
  %v282 = vadd.f32 0.0, %v281
  %v283 = vpop.f32.mrb[0].mxu0
  %284 = vmatprep.mubr.bf16.mxu0 0
  %285 = vmatmul.mubr.bf16.gmra.mrb[0].mxu0 %v128
  %v286 = vpop.f32.mrb[0].mxu0
  %v287 = vadd.f32 0.0, %v286
  %v288 = vpop.f32.mrb[0].mxu0
  %v289 = vpop.f32.mrb[0].mxu0
  %v290 = vadd.f32 0.0, %v289
  %v291 = vpop.f32.mrb[0].mxu0
  %292 = vmatprep.mubr.bf16.mxu0 0
  %293 = vmatmul.mubr.bf16.gmra.mrb[0].mxu0 %v131
  %v294 = vpop.f32.mrb[0].mxu0
  %v295 = vadd.f32 0.0, %v294
  %v296 = vpop.f32.mrb[0].mxu0
  %v297 = vpop.f32.mrb[0].mxu0
  %v298 = vadd.f32 0.0, %v297
  %v299 = vpop.f32.mrb[0].mxu0
  %300 = vmatprep.mubr.bf16.mxu0 0
  %301 = vmatmul.mubr.bf16.gmra.mrb[0].mxu0 %v134
  %v302 = vpop.f32.mrb[0].mxu0
  %v303 = vadd.f32 0.0, %v302
  %v304 = vpop.f32.mrb[0].mxu0
  %v305 = vpop.f32.mrb[0].mxu0
  %v306 = vadd.f32 0.0, %v305
  %v307 = vpop.f32.mrb[0].mxu0
  %308 = vmatprep.mubr.bf16.mxu0 0
  %309 = vmatmul.mubr.bf16.gmra.mrb[0].mxu0 %v137
  %v310 = vpop.f32.mrb[0].mxu0
  %v311 = vadd.f32 0.0, %v310
  %v312 = vpop.f32.mrb[0].mxu0
  %v313 = vpop.f32.mrb[0].mxu0
  %v314 = vadd.f32 0.0, %v313
  %v315 = vpop.f32.mrb[0].mxu0
  %316 = vmatprep.mubr.bf16.mxu0 0
  %317 = vmatmul.mubr.bf16.gmra.mrb[0].mxu0 %v140
  %v318 = vpop.f32.mrb[0].mxu0
  %v319 = vadd.f32 0.0, %v318
  %v320 = vpop.f32.mrb[0].mxu0
  %v321 = vpop.f32.mrb[0].mxu0
  %v322 = vadd.f32 0.0, %v321
  %v323 = vpop.f32.mrb[0].mxu0
  %324 = vmatprep.mubr.bf16.mxu0 0
  %325 = vmatmul.mubr.bf16.gmra.mrb[0].mxu0 %v143
  %v326 = vpop.f32.mrb[0].mxu0
  %v327 = vadd.f32 0.0, %v326
  %v328 = vpop.f32.mrb[0].mxu0
  %v329 = vpop.f32.mrb[0].mxu0
  %v330 = vadd.f32 0.0, %v329
  %v331 = vpop.f32.mrb[0].mxu0
  %332 = vmatprep.mubr.bf16.mxu0 0
  %333 = vmatmul.mubr.bf16.gmra.mrb[0].mxu0 %v146
  %v334 = vpop.f32.mrb[0].mxu0
  %v335 = vadd.f32 0.0, %v334
  %v336 = vpop.f32.mrb[0].mxu0
  %v337 = vpop.f32.mrb[0].mxu0
  %v338 = vadd.f32 0.0, %v337
  %v339 = vpop.f32.mrb[0].mxu0
  %340 = vmatprep.mubr.bf16.mxu0 0
  %341 = vmatmul.mubr.bf16.gmra.mrb[0].mxu0 %v149
  %v342 = vpop.f32.mrb[0].mxu0
  %v343 = vadd.f32 0.0, %v342
  %v344 = vpop.f32.mrb[0].mxu0
  %v345 = vpop.f32.mrb[0].mxu0
  %v346 = vadd.f32 0.0, %v345
  %v347 = vpop.f32.mrb[0].mxu0
  %348 = vmatprep.mubr.bf16.mxu0 0
  %349 = vmatmul.mubr.bf16.gmra.mrb[0].mxu0 %v152
  %v350 = vpop.f32.mrb[0].mxu0
  %v351 = vadd.f32 0.0, %v350
  %v352 = vpop.f32.mrb[0].mxu0
  %v353 = vpop.f32.mrb[0].mxu0
  %v354 = vadd.f32 0.0, %v353
  %v355 = vpop.f32.mrb[0].mxu0
  %356 = vmatprep.mubr.bf16.mxu0 0
  %357 = vmatmul.mubr.bf16.gmra.mrb[0].mxu0 %v155
  %v358 = vpop.f32.mrb[0].mxu0
  %v359 = vadd.f32 0.0, %v358
  %v360 = vpop.f32.mrb[0].mxu0
  %v361 = vpop.f32.mrb[0].mxu0
  %v362 = vadd.f32 0.0, %v361
  %v363 = vpop.f32.mrb[0].mxu0
  %364 = vmatprep.mubr.bf16.mxu0 0
  %365 = vmatmul.mubr.bf16.gmra.mrb[0].mxu0 %v158
  %v366 = vpop.f32.mrb[0].mxu0
  %v367 = vadd.f32 0.0, %v366
  %v368 = vpop.f32.mrb[0].mxu0
  %v369 = vpop.f32.mrb[0].mxu0
  %v370 = vadd.f32 0.0, %v369
  %v371 = vpop.f32.mrb[0].mxu0
  %372 = vmatprep.mubr.bf16.mxu0 0
  %373 = vmatmul.mubr.bf16.gmra.mrb[0].mxu0 %v161
  %v374 = vpop.f32.mrb[0].mxu0
  %v375 = vadd.f32 0.0, %v374
  %v376 = vpop.f32.mrb[0].mxu0
  %v377 = vpop.f32.mrb[0].mxu0
  %v378 = vadd.f32 0.0, %v377
  %v379 = vpop.f32.mrb[0].mxu0
  %380 = vmatprep.mubr.bf16.mxu0 0
  %381 = vmatmul.mubr.bf16.gmra.mrb[0].mxu0 %v164
  %v382 = vpop.f32.mrb[0].mxu0
  %v383 = vadd.f32 0.0, %v382
  %v384 = vpop.f32.mrb[0].mxu0
  %v385 = vpop.f32.mrb[0].mxu0
  %v386 = vadd.f32 0.0, %v385
  %v387 = vpop.f32.mrb[0].mxu0
  %388 = vmatprep.mubr.bf16.mxu0 0
  %389 = vmatmul.mubr.bf16.gmra.mrb[0].mxu0 %v167
  %v390 = vpop.f32.mrb[0].mxu0
  %v391 = vadd.f32 0.0, %v390
  %v392 = vpop.f32.mrb[0].mxu0
  %v393 = vpop.f32.mrb[0].mxu0
  %v394 = vadd.f32 0.0, %v393
  %v395 = vpop.f32.mrb[0].mxu0
  %396 = vmatprep.mubr.bf16.mxu0 0
  %397 = vmatmul.mubr.bf16.gmra.mrb[0].mxu0 %v170
  %v398 = vpop.f32.mrb[0].mxu0
  %v399 = vadd.f32 0.0, %v398
  %v400 = vpop.f32.mrb[0].mxu0
  %v401 = vpop.f32.mrb[0].mxu0
  %v402 = vadd.f32 0.0, %v401
  %v403 = vpop.f32.mrb[0].mxu0
  %404 = vmatprep.mubr.bf16.mxu0 0
  %405 = vmatmul.mubr.bf16.gmra.mrb[0].mxu0 %v173
  %v406 = vpop.f32.mrb[0].mxu0
  %v407 = vadd.f32 0.0, %v406
  %v408 = vpop.f32.mrb[0].mxu0
  %v409 = vpop.f32.mrb[0].mxu0
  %v410 = vadd.f32 0.0, %v409
  %v411 = vpop.f32.mrb[0].mxu0
  %412 = vmatprep.mubr.bf16.mxu0 0
  %413 = vmatmul.mubr.bf16.gmra.mrb[0].mxu0 %v176
  %v414 = vpop.f32.mrb[0].mxu0
  %v415 = vadd.f32 0.0, %v414
  %v416 = vpop.f32.mrb[0].mxu0
  %v417 = vpop.f32.mrb[0].mxu0
  %v418 = vadd.f32 0.0, %v417
  %v419 = vpop.f32.mrb[0].mxu0
  %420 = vmatprep.mubr.bf16.mxu0 0
  %421 = vmatmul.mubr.bf16.gmra.mrb[0].mxu0 %v179
  %v422 = vpop.f32.mrb[0].mxu0
  %v423 = vadd.f32 0.0, %v422
  %v424 = vpop.f32.mrb[0].mxu0
  %v425 = vpop.f32.mrb[0].mxu0
  %v426 = vadd.f32 0.0, %v425
  %v427 = vpop.f32.mrb[0].mxu0
  %428 = vmatprep.mubr.bf16.mxu0 0
  %429 = vmatmul.mubr.bf16.gmra.mrb[0].mxu0 %v182
  %v430 = vpop.f32.mrb[0].mxu0
  %v431 = vadd.f32 0.0, %v430
  %v432 = vpop.f32.mrb[0].mxu0
  %v433 = vpop.f32.mrb[0].mxu0
  %v434 = vadd.f32 0.0, %v433
  %v435 = vpop.f32.mrb[0].mxu0
  %436 = vmatprep.mubr.bf16.mxu0 0
  %437 = vmatmul.mubr.bf16.gmra.mrb[0].mxu0 %v185
  %v438 = vpop.f32.mrb[0].mxu0
  %v439 = vadd.f32 0.0, %v438
  %v440 = vpop.f32.mrb[0].mxu0
  %v441 = vpop.f32.mrb[0].mxu0
  %v442 = vadd.f32 0.0, %v441
  %v443 = vpop.f32.mrb[0].mxu0
  %444 = vmatprep.mubr.bf16.mxu0 0
  %445 = vmatmul.mubr.bf16.gmra.mrb[0].mxu0 %v188
  %v446 = vpop.f32.mrb[0].mxu0
  %v447 = vadd.f32 0.0, %v446
  %v448 = vpop.f32.mrb[0].mxu0
  %v449 = vpop.f32.mrb[0].mxu0
  %v450 = vadd.f32 0.0, %v449
  %v451 = vpop.f32.mrb[0].mxu0
  %452 = vmatprep.mubr.bf16.mxu0 0
  %453 = vmatmul.mubr.bf16.gmra.mrb[0].mxu0 %v191
  %v454 = vpop.f32.mrb[0].mxu0
  %v455 = vadd.f32 0.0, %v454
  %v456 = vpop.f32.mrb[0].mxu0
  %v457 = vpop.f32.mrb[0].mxu0
  %v458 = vadd.f32 0.0, %v457
  %v459 = vpop.f32.mrb[0].mxu0
  %460 = vmatprep.mubr.bf16.mxu0 0
  %461 = vmatmul.mubr.bf16.gmra.mrb[0].mxu0 %v194
  %v462 = vpop.f32.mrb[0].mxu0
  %v463 = vadd.f32 0.0, %v462
  %v464 = vpop.f32.mrb[0].mxu0
  %v465 = vpop.f32.mrb[0].mxu0
  %v466 = vadd.f32 0.0, %v465
  %v467 = vpop.f32.mrb[0].mxu0
  %468 = vmatprep.mubr.bf16.mxu0 0
  %469 = vmatmul.mubr.bf16.gmra.mrb[0].mxu0 %v197
  %v470 = vpop.f32.mrb[0].mxu0
  %v471 = vadd.f32 0.0, %v470
  %v472 = vpop.f32.mrb[0].mxu0
  %v473 = vpop.f32.mrb[0].mxu0
  %v474 = vadd.f32 0.0, %v473
  %v475 = vpop.f32.mrb[0].mxu0
  %476 = vmatprep.mubr.bf16.mxu0 0
  %477 = vmatmul.mubr.bf16.gmra.mrb[0].mxu0 %v200
  %v478 = vpop.f32.mrb[0].mxu0
  %v479 = vadd.f32 0.0, %v478
  %v480 = vpop.f32.mrb[0].mxu0
  %v481 = vpop.f32.mrb[0].mxu0
  %v482 = vadd.f32 0.0, %v481
  %v483 = vpop.f32.mrb[0].mxu0
  %484 = vmatprep.mubr.bf16.mxu0 0
  %485 = vmatmul.mubr.bf16.gmra.mrb[0].mxu0 %v203
  %v486 = vpop.f32.mrb[0].mxu0
  %v487 = vadd.f32 0.0, %v486
  %v488 = vpop.f32.mrb[0].mxu0
  %v489 = vpop.f32.mrb[0].mxu0
  %v490 = vadd.f32 0.0, %v489
  %v491 = vpop.f32.mrb[0].mxu0
  %492 = vmatprep.mubr.bf16.mxu0 0
  %493 = vmatmul.mubr.bf16.gmra.mrb[0].mxu0 %v206
  %v494 = vpop.f32.mrb[0].mxu0
  %v495 = vadd.f32 0.0, %v494
  %v496 = vpop.f32.mrb[0].mxu0
  %v497 = vpop.f32.mrb[0].mxu0
  %v498 = vadd.f32 0.0, %v497
  %v499 = vpop.f32.mrb[0].mxu0
  %500 = vdwg.mxu0
  %v501 = vadd.f32 %v247, %v250
  %v502 = vadd.f32 %v501, %v255
  %v503 = vadd.f32 %v502, %v258
  %v504 = vadd.f32 %v503, %v263
  %v505 = vadd.f32 %v504, %v266
  %v506 = vadd.f32 %v505, %v271
  %v507 = vadd.f32 %v506, %v274
  %v508 = vadd.f32 %v507, %v279
  %v509 = vadd.f32 %v508, %v282
  %v510 = vadd.f32 %v509, %v287
  %v511 = vadd.f32 %v510, %v290
  %v512 = vadd.f32 %v511, %v295
  %v513 = vadd.f32 %v512, %v298
  %v514 = vadd.f32 %v513, %v303
  %v515 = vadd.f32 %v514, %v306
  %v516 = vadd.f32 %v515, %v311
  %v517 = vadd.f32 %v516, %v314
  %v518 = vadd.f32 %v517, %v319
  %v519 = vadd.f32 %v518, %v322
  %v520 = vadd.f32 %v519, %v327
  %v521 = vadd.f32 %v520, %v330
  %v522 = vadd.f32 %v521, %v335
  %v523 = vadd.f32 %v522, %v338
  %v524 = vadd.f32 %v523, %v343
  %v525 = vadd.f32 %v524, %v346
  %v526 = vadd.f32 %v525, %v351
  %v527 = vadd.f32 %v526, %v354
  %v528 = vadd.f32 %v527, %v359
  %v529 = vadd.f32 %v528, %v362
  %v530 = vadd.f32 %v529, %v367
  %v531 = vadd.f32 %v530, %v370
  %v532 = vadd.f32 %v531, %v375
  %v533 = vadd.f32 %v532, %v378
  %v534 = vadd.f32 %v533, %v383
  %v535 = vadd.f32 %v534, %v386
  %v536 = vadd.f32 %v535, %v391
  %v537 = vadd.f32 %v536, %v394
  %v538 = vadd.f32 %v537, %v399
  %v539 = vadd.f32 %v538, %v402
  %v540 = vadd.f32 %v539, %v407
  %v541 = vadd.f32 %v540, %v410
  %v542 = vadd.f32 %v541, %v415
  %v543 = vadd.f32 %v542, %v418
  %v544 = vadd.f32 %v543, %v423
  %v545 = vadd.f32 %v544, %v426
  %v546 = vadd.f32 %v545, %v431
  %v547 = vadd.f32 %v546, %v434
  %v548 = vadd.f32 %v547, %v439
  %v549 = vadd.f32 %v548, %v442
  %v550 = vadd.f32 %v549, %v447
  %v551 = vadd.f32 %v550, %v450
  %v552 = vadd.f32 %v551, %v455
  %v553 = vadd.f32 %v552, %v458
  %v554 = vadd.f32 %v553, %v463
  %v555 = vadd.f32 %v554, %v466
  %v556 = vadd.f32 %v555, %v471
  %v557 = vadd.f32 %v556, %v474
  %v558 = vadd.f32 %v557, %v479
  %v559 = vadd.f32 %v558, %v482
  %v560 = vadd.f32 %v559, %v487
  %v561 = vadd.f32 %v560, %v490
  %v562 = vadd.f32 %v561, %v495
  %v563 = vadd.f32 %v562, %v498
  %v564 = vrot.slane %v563, 4
  %v565 = vadd.f32 %v563, %v564
  %v566 = vrot.slane %v565, 2
  %v567 = vadd.f32 %v565, %v566
  %v568 = vrot.slane %v567, 1
  %v569 = vadd.f32 %v567, %v568
  %v570 = vmul.f32 %v247, %v247
  %v571 = vmul.f32 %v250, %v250
  %v572 = vmul.f32 %v255, %v255
  %v573 = vmul.f32 %v258, %v258
  %v574 = vmul.f32 %v263, %v263
  %v575 = vmul.f32 %v266, %v266
  %v576 = vmul.f32 %v271, %v271
  %v577 = vmul.f32 %v274, %v274
  %v578 = vmul.f32 %v279, %v279
  %v579 = vmul.f32 %v282, %v282
  %v580 = vmul.f32 %v287, %v287
  %v581 = vmul.f32 %v290, %v290
  %v582 = vmul.f32 %v295, %v295
  %v583 = vmul.f32 %v298, %v298
  %v584 = vmul.f32 %v303, %v303
  %v585 = vmul.f32 %v306, %v306
  %v586 = vmul.f32 %v311, %v311
  %v587 = vmul.f32 %v314, %v314
  %v588 = vmul.f32 %v319, %v319
  %v589 = vmul.f32 %v322, %v322
  %v590 = vmul.f32 %v327, %v327
  %v591 = vmul.f32 %v330, %v330
  %v592 = vmul.f32 %v335, %v335
  %v593 = vmul.f32 %v338, %v338
  %v594 = vmul.f32 %v343, %v343
  %v595 = vmul.f32 %v346, %v346
  %v596 = vmul.f32 %v351, %v351
  %v597 = vmul.f32 %v354, %v354
  %v598 = vmul.f32 %v359, %v359
  %v599 = vmul.f32 %v362, %v362
  %v600 = vmul.f32 %v367, %v367
  %v601 = vmul.f32 %v370, %v370
  %v602 = vmul.f32 %v375, %v375
  %v603 = vmul.f32 %v378, %v378
  %v604 = vmul.f32 %v383, %v383
  %v605 = vmul.f32 %v386, %v386
  %v606 = vmul.f32 %v391, %v391
  %v607 = vmul.f32 %v394, %v394
  %v608 = vmul.f32 %v399, %v399
  %v609 = vmul.f32 %v402, %v402
  %v610 = vmul.f32 %v407, %v407
  %v611 = vmul.f32 %v410, %v410
  %v612 = vmul.f32 %v415, %v415
  %v613 = vmul.f32 %v418, %v418
  %v614 = vmul.f32 %v423, %v423
  %v615 = vmul.f32 %v426, %v426
  %v616 = vmul.f32 %v431, %v431
  %v617 = vmul.f32 %v434, %v434
  %v618 = vmul.f32 %v439, %v439
  %v619 = vmul.f32 %v442, %v442
  %v620 = vmul.f32 %v447, %v447
  %v621 = vmul.f32 %v450, %v450
  %v622 = vmul.f32 %v455, %v455
  %v623 = vmul.f32 %v458, %v458
  %v624 = vmul.f32 %v463, %v463
  %v625 = vmul.f32 %v466, %v466
  %v626 = vmul.f32 %v471, %v471
  %v627 = vmul.f32 %v474, %v474
  %v628 = vmul.f32 %v479, %v479
  %v629 = vmul.f32 %v482, %v482
  %v630 = vmul.f32 %v487, %v487
  %v631 = vmul.f32 %v490, %v490
  %v632 = vmul.f32 %v495, %v495
  %v633 = vmul.f32 %v498, %v498
  %v634 = vadd.f32 %v570, %v571
  %v635 = vadd.f32 %v634, %v572
  %v636 = vadd.f32 %v635, %v573
  %v637 = vadd.f32 %v636, %v574
  %v638 = vadd.f32 %v637, %v575
  %v639 = vadd.f32 %v638, %v576
  %v640 = vadd.f32 %v639, %v577
  %v641 = vadd.f32 %v640, %v578
  %v642 = vadd.f32 %v641, %v579
  %v643 = vadd.f32 %v642, %v580
  %v644 = vadd.f32 %v643, %v581
  %v645 = vadd.f32 %v644, %v582
  %v646 = vadd.f32 %v645, %v583
  %v647 = vadd.f32 %v646, %v584
  %v648 = vadd.f32 %v647, %v585
  %v649 = vadd.f32 %v648, %v586
  %v650 = vadd.f32 %v649, %v587
  %v651 = vadd.f32 %v650, %v588
  %v652 = vadd.f32 %v651, %v589
  %v653 = vadd.f32 %v652, %v590
  %v654 = vadd.f32 %v653, %v591
  %v655 = vadd.f32 %v654, %v592
  %v656 = vadd.f32 %v655, %v593
  %v657 = vadd.f32 %v656, %v594
  %v658 = vadd.f32 %v657, %v595
  %v659 = vadd.f32 %v658, %v596
  %v660 = vadd.f32 %v659, %v597
  %v661 = vadd.f32 %v660, %v598
  %v662 = vadd.f32 %v661, %v599
  %v663 = vadd.f32 %v662, %v600
  %v664 = vadd.f32 %v663, %v601
  %v665 = vadd.f32 %v664, %v602
  %v666 = vadd.f32 %v665, %v603
  %v667 = vadd.f32 %v666, %v604
  %v668 = vadd.f32 %v667, %v605
  %v669 = vadd.f32 %v668, %v606
  %v670 = vadd.f32 %v669, %v607
  %v671 = vadd.f32 %v670, %v608
  %v672 = vadd.f32 %v671, %v609
  %v673 = vadd.f32 %v672, %v610
  %v674 = vadd.f32 %v673, %v611
  %v675 = vadd.f32 %v674, %v612
  %v676 = vadd.f32 %v675, %v613
  %v677 = vadd.f32 %v676, %v614
  %v678 = vadd.f32 %v677, %v615
  %v679 = vadd.f32 %v678, %v616
  %v680 = vadd.f32 %v679, %v617
  %v681 = vadd.f32 %v680, %v618
  %v682 = vadd.f32 %v681, %v619
  %v683 = vadd.f32 %v682, %v620
  %v684 = vadd.f32 %v683, %v621
  %v685 = vadd.f32 %v684, %v622
  %v686 = vadd.f32 %v685, %v623
  %v687 = vadd.f32 %v686, %v624
  %v688 = vadd.f32 %v687, %v625
  %v689 = vadd.f32 %v688, %v626
  %v690 = vadd.f32 %v689, %v627
  %v691 = vadd.f32 %v690, %v628
  %v692 = vadd.f32 %v691, %v629
  %v693 = vadd.f32 %v692, %v630
  %v694 = vadd.f32 %v693, %v631
  %v695 = vadd.f32 %v694, %v632
  %v696 = vadd.f32 %v695, %v633
  %v697 = vrot.slane %v696, 4
  %v698 = vadd.f32 %v696, %v697
  %v699 = vrot.slane %v698, 2
  %v700 = vadd.f32 %v698, %v699
  %v701 = vrot.slane %v700, 1
  %v702 = vadd.f32 %v700, %v701
  %vm703 = vcmask 1040384
  %v704 = vsel %vm703, %v569, %v702
  %705 = vst [vmem:[%s3] sm:$0x3] %v704
  %v706 = vpack.c.bf16 %v250, %v247
  %v707 = vpack.c.bf16 %v258, %v255
  %v708 = vpack.c.bf16 %v266, %v263
  %v709 = vpack.c.bf16 %v274, %v271
  %v710 = vpack.c.bf16 %v282, %v279
  %v711 = vpack.c.bf16 %v290, %v287
  %v712 = vpack.c.bf16 %v298, %v295
  %v713 = vpack.c.bf16 %v306, %v303
  %v714 = vpack.c.bf16 %v314, %v311
  %v715 = vpack.c.bf16 %v322, %v319
  %v716 = vpack.c.bf16 %v330, %v327
  %v717 = vpack.c.bf16 %v338, %v335
  %v718 = vpack.c.bf16 %v346, %v343
  %v719 = vpack.c.bf16 %v354, %v351
  %v720 = vpack.c.bf16 %v362, %v359
  %v721 = vpack.c.bf16 %v370, %v367
  %v722 = vpack.c.bf16 %v378, %v375
  %v723 = vpack.c.bf16 %v386, %v383
  %v724 = vpack.c.bf16 %v394, %v391
  %v725 = vpack.c.bf16 %v402, %v399
  %v726 = vpack.c.bf16 %v410, %v407
  %v727 = vpack.c.bf16 %v418, %v415
  %v728 = vpack.c.bf16 %v426, %v423
  %v729 = vpack.c.bf16 %v434, %v431
  %v730 = vpack.c.bf16 %v442, %v439
  %v731 = vpack.c.bf16 %v450, %v447
  %v732 = vpack.c.bf16 %v458, %v455
  %v733 = vpack.c.bf16 %v466, %v463
  %v734 = vpack.c.bf16 %v474, %v471
  %v735 = vpack.c.bf16 %v482, %v479
  %v736 = vpack.c.bf16 %v490, %v487
  %v737 = vpack.c.bf16 %v498, %v495
  %v770 = vunpack.c.l.b16 %v706
  %v771 = vunpack.c.h.b16 %v706
  %v772 = vunpack.c.l.b16 %v707
  %v773 = vunpack.c.h.b16 %v707
  %v774 = vunpack.c.l.b16 %v708
  %v775 = vunpack.c.h.b16 %v708
  %v776 = vunpack.c.l.b16 %v709
  %v777 = vunpack.c.h.b16 %v709
  %v778 = vunpack.c.l.b16 %v710
  %v779 = vunpack.c.h.b16 %v710
  %v780 = vunpack.c.l.b16 %v711
  %v781 = vunpack.c.h.b16 %v711
  %v782 = vunpack.c.l.b16 %v712
  %v783 = vunpack.c.h.b16 %v712
  %v784 = vunpack.c.l.b16 %v713
  %v785 = vunpack.c.h.b16 %v713
  %v786 = vunpack.c.l.b16 %v714
  %v787 = vunpack.c.h.b16 %v714
  %v788 = vunpack.c.l.b16 %v715
  %v789 = vunpack.c.h.b16 %v715
  %v790 = vunpack.c.l.b16 %v716
  %v791 = vunpack.c.h.b16 %v716
  %v792 = vunpack.c.l.b16 %v717
  %v793 = vunpack.c.h.b16 %v717
  %v794 = vunpack.c.l.b16 %v718
  %v795 = vunpack.c.h.b16 %v718
  %v796 = vunpack.c.l.b16 %v719
  %v797 = vunpack.c.h.b16 %v719
  %v798 = vunpack.c.l.b16 %v720
  %v799 = vunpack.c.h.b16 %v720
  %v800 = vunpack.c.l.b16 %v721
  %v801 = vunpack.c.h.b16 %v721
  %v802 = vunpack.c.l.b16 %v722
  %v803 = vunpack.c.h.b16 %v722
  %v804 = vunpack.c.l.b16 %v723
  %v805 = vunpack.c.h.b16 %v723
  %v806 = vunpack.c.l.b16 %v724
  %v807 = vunpack.c.h.b16 %v724
  %v808 = vunpack.c.l.b16 %v725
  %v809 = vunpack.c.h.b16 %v725
  %v810 = vunpack.c.l.b16 %v726
  %v811 = vunpack.c.h.b16 %v726
  %v812 = vunpack.c.l.b16 %v727
  %v813 = vunpack.c.h.b16 %v727
  %v814 = vunpack.c.l.b16 %v728
  %v815 = vunpack.c.h.b16 %v728
  %v816 = vunpack.c.l.b16 %v729
  %v817 = vunpack.c.h.b16 %v729
  %v818 = vunpack.c.l.b16 %v730
  %v819 = vunpack.c.h.b16 %v730
  %v820 = vunpack.c.l.b16 %v731
  %v821 = vunpack.c.h.b16 %v731
  %v822 = vunpack.c.l.b16 %v732
  %v823 = vunpack.c.h.b16 %v732
  %v824 = vunpack.c.l.b16 %v733
  %v825 = vunpack.c.h.b16 %v733
  %v826 = vunpack.c.l.b16 %v734
  %v827 = vunpack.c.h.b16 %v734
  %v828 = vunpack.c.l.b16 %v735
  %v829 = vunpack.c.h.b16 %v735
  %v830 = vunpack.c.l.b16 %v736
  %v831 = vunpack.c.h.b16 %v736
  %v832 = vunpack.c.l.b16 %v737
  %v833 = vunpack.c.h.b16 %v737
  %v834 = vpack.c.b16 %v770, %v770
  %v835 = vpack.c.b16 %v771, %v771
  %v836 = vpack.c.b16 %v772, %v772
  %v837 = vpack.c.b16 %v773, %v773
  %v838 = vpack.c.b16 %v774, %v774
  %v839 = vpack.c.b16 %v775, %v775
  %v840 = vpack.c.b16 %v776, %v776
  %v841 = vpack.c.b16 %v777, %v777
  %v842 = vpack.c.b16 %v778, %v778
  %v843 = vpack.c.b16 %v779, %v779
  %v844 = vpack.c.b16 %v780, %v780
  %v845 = vpack.c.b16 %v781, %v781
  %v846 = vpack.c.b16 %v782, %v782
  %v847 = vpack.c.b16 %v783, %v783
  %v848 = vpack.c.b16 %v784, %v784
  %v849 = vpack.c.b16 %v785, %v785
  %v850 = vpack.c.b16 %v786, %v786
  %v851 = vpack.c.b16 %v787, %v787
  %v852 = vpack.c.b16 %v788, %v788
  %v853 = vpack.c.b16 %v789, %v789
  %v854 = vpack.c.b16 %v790, %v790
  %v855 = vpack.c.b16 %v791, %v791
  %v856 = vpack.c.b16 %v792, %v792
  %v857 = vpack.c.b16 %v793, %v793
  %v858 = vpack.c.b16 %v794, %v794
  %v859 = vpack.c.b16 %v795, %v795
  %v860 = vpack.c.b16 %v796, %v796
  %v861 = vpack.c.b16 %v797, %v797
  %v862 = vpack.c.b16 %v798, %v798
  %v863 = vpack.c.b16 %v799, %v799
  %v864 = vpack.c.b16 %v800, %v800
  %v865 = vpack.c.b16 %v801, %v801
  %v866 = vpack.c.b16 %v802, %v802
  %v867 = vpack.c.b16 %v803, %v803
  %v868 = vpack.c.b16 %v804, %v804
  %v869 = vpack.c.b16 %v805, %v805
  %v870 = vpack.c.b16 %v806, %v806
  %v871 = vpack.c.b16 %v807, %v807
  %v872 = vpack.c.b16 %v808, %v808
  %v873 = vpack.c.b16 %v809, %v809
  %v874 = vpack.c.b16 %v810, %v810
  %v875 = vpack.c.b16 %v811, %v811
  %v876 = vpack.c.b16 %v812, %v812
  %v877 = vpack.c.b16 %v813, %v813
  %v878 = vpack.c.b16 %v814, %v814
  %v879 = vpack.c.b16 %v815, %v815
  %v880 = vpack.c.b16 %v816, %v816
  %v881 = vpack.c.b16 %v817, %v817
  %v882 = vpack.c.b16 %v818, %v818
  %v883 = vpack.c.b16 %v819, %v819
  %v884 = vpack.c.b16 %v820, %v820
  %v885 = vpack.c.b16 %v821, %v821
  %v886 = vpack.c.b16 %v822, %v822
  %v887 = vpack.c.b16 %v823, %v823
  %v888 = vpack.c.b16 %v824, %v824
  %v889 = vpack.c.b16 %v825, %v825
  %v890 = vpack.c.b16 %v826, %v826
  %v891 = vpack.c.b16 %v827, %v827
  %v892 = vpack.c.b16 %v828, %v828
  %v893 = vpack.c.b16 %v829, %v829
  %v894 = vpack.c.b16 %v830, %v830
  %v895 = vpack.c.b16 %v831, %v831
  %v896 = vpack.c.b16 %v832, %v832
  %v897 = vpack.c.b16 %v833, %v833
  %962 = vst [vmem:[%s2] sm:$0xf] %v834
  %963 = vst [vmem:[%s2 + $0x4] sm:$0xf] %v835
  %964 = vst [vmem:[%s2 + $0x8] sm:$0xf] %v836
  %965 = vst [vmem:[%s2 + $0xc] sm:$0xf] %v837
  %966 = vst [vmem:[%s2 + $0x10] sm:$0xf] %v838
  %967 = vst [vmem:[%s2 + $0x14] sm:$0xf] %v839
  %968 = vst [vmem:[%s2 + $0x18] sm:$0xf] %v840
  %969 = vst [vmem:[%s2 + $0x1c] sm:$0xf] %v841
  %970 = vst [vmem:[%s2 + $0x20] sm:$0xf] %v842
  %971 = vst [vmem:[%s2 + $0x24] sm:$0xf] %v843
  %972 = vst [vmem:[%s2 + $0x28] sm:$0xf] %v844
  %973 = vst [vmem:[%s2 + $0x2c] sm:$0xf] %v845
  %974 = vst [vmem:[%s2 + $0x30] sm:$0xf] %v846
  %975 = vst [vmem:[%s2 + $0x34] sm:$0xf] %v847
  %976 = vst [vmem:[%s2 + $0x38] sm:$0xf] %v848
  %977 = vst [vmem:[%s2 + $0x3c] sm:$0xf] %v849
  %978 = vst [vmem:[%s2 + $0x40] sm:$0xf] %v850
  %979 = vst [vmem:[%s2 + $0x44] sm:$0xf] %v851
  %980 = vst [vmem:[%s2 + $0x48] sm:$0xf] %v852
  %981 = vst [vmem:[%s2 + $0x4c] sm:$0xf] %v853
  %982 = vst [vmem:[%s2 + $0x50] sm:$0xf] %v854
  %983 = vst [vmem:[%s2 + $0x54] sm:$0xf] %v855
  %984 = vst [vmem:[%s2 + $0x58] sm:$0xf] %v856
  %985 = vst [vmem:[%s2 + $0x5c] sm:$0xf] %v857
  %986 = vst [vmem:[%s2 + $0x60] sm:$0xf] %v858
  %987 = vst [vmem:[%s2 + $0x64] sm:$0xf] %v859
  %988 = vst [vmem:[%s2 + $0x68] sm:$0xf] %v860
  %989 = vst [vmem:[%s2 + $0x6c] sm:$0xf] %v861
  %990 = vst [vmem:[%s2 + $0x70] sm:$0xf] %v862
  %991 = vst [vmem:[%s2 + $0x74] sm:$0xf] %v863
  %992 = vst [vmem:[%s2 + $0x78] sm:$0xf] %v864
  %993 = vst [vmem:[%s2 + $0x7c] sm:$0xf] %v865
  %994 = vst [vmem:[%s2 + $0x80] sm:$0xf] %v866
  %995 = vst [vmem:[%s2 + $0x84] sm:$0xf] %v867
  %996 = vst [vmem:[%s2 + $0x88] sm:$0xf] %v868
  %997 = vst [vmem:[%s2 + $0x8c] sm:$0xf] %v869
  %998 = vst [vmem:[%s2 + $0x90] sm:$0xf] %v870
  %999 = vst [vmem:[%s2 + $0x94] sm:$0xf] %v871
  %1000 = vst [vmem:[%s2 + $0x98] sm:$0xf] %v872
  %1001 = vst [vmem:[%s2 + $0x9c] sm:$0xf] %v873
  %1002 = vst [vmem:[%s2 + $0xa0] sm:$0xf] %v874
  %1003 = vst [vmem:[%s2 + $0xa4] sm:$0xf] %v875
  %1004 = vst [vmem:[%s2 + $0xa8] sm:$0xf] %v876
  %1005 = vst [vmem:[%s2 + $0xac] sm:$0xf] %v877
  %1006 = vst [vmem:[%s2 + $0xb0] sm:$0xf] %v878
  %1007 = vst [vmem:[%s2 + $0xb4] sm:$0xf] %v879
  %1008 = vst [vmem:[%s2 + $0xb8] sm:$0xf] %v880
  %1009 = vst [vmem:[%s2 + $0xbc] sm:$0xf] %v881
  %1010 = vst [vmem:[%s2 + $0xc0] sm:$0xf] %v882
  %1011 = vst [vmem:[%s2 + $0xc4] sm:$0xf] %v883
  %1012 = vst [vmem:[%s2 + $0xc8] sm:$0xf] %v884
  %1013 = vst [vmem:[%s2 + $0xcc] sm:$0xf] %v885
  %1014 = vst [vmem:[%s2 + $0xd0] sm:$0xf] %v886
  %1015 = vst [vmem:[%s2 + $0xd4] sm:$0xf] %v887
  %1016 = vst [vmem:[%s2 + $0xd8] sm:$0xf] %v888
  %1017 = vst [vmem:[%s2 + $0xdc] sm:$0xf] %v889
  %1018 = vst [vmem:[%s2 + $0xe0] sm:$0xf] %v890
  %1019 = vst [vmem:[%s2 + $0xe4] sm:$0xf] %v891
  %1020 = vst [vmem:[%s2 + $0xe8] sm:$0xf] %v892
  %1021 = vst [vmem:[%s2 + $0xec] sm:$0xf] %v893
  %1022 = vst [vmem:[%s2 + $0xf0] sm:$0xf] %v894
  %1023 = vst [vmem:[%s2 + $0xf4] sm:$0xf] %v895
  %1024 = vst [vmem:[%s2 + $0xf8] sm:$0xf] %v896
  %1025 = vst [vmem:[%s2 + $0xfc] sm:$0xf] %v897
  // Predicated region
  $region10: #{bottleneck_forward.4} parent=0 // pred_check
    _
  $region11: #{bottleneck_forward.4} parent=0 // pred_check_branch
    %1027 = sbr.rel (0) target = $region13
  $region12: #{bottleneck_forward.4} parent=0 // pred_region
    _
  $region13: #{bottleneck_forward.4} parent=0 // pred_fallthru
    _
  // Predicated region
  $region14: #{bottleneck_forward.4} parent=0 // pred_check
    _
  $region15: #{bottleneck_forward.4} parent=0 // pred_check_branch
    %1029 = sbr.rel (0) target = $region17
  $region16: #{bottleneck_forward.4} parent=0 // pred_region
    _
  $region17: #{bottleneck_forward.4} parent=0 // pred_fallthru
    _
  // Predicated region
  $region18: #{bottleneck_forward.4} parent=0 // pred_check
    _
  $region19: #{bottleneck_forward.4} parent=0 // pred_check_branch
    %1031 = sbr.rel (0) target = $region21
  $region20: #{bottleneck_forward.4} parent=0 // pred_region
    _
  $region21: #{bottleneck_forward.4} parent=0 // pred_fallthru
    _
  // Predicated region
  $region22: #{bottleneck_forward.4} parent=0 // pred_check
    _
  $region23: #{bottleneck_forward.4} parent=0 // pred_check_branch
    %1033 = sbr.rel (0) target = $region25
  $region24: #{bottleneck_forward.4} parent=0 // pred_region
    _
  $region25: #{bottleneck_forward.4} parent=0 // pred_fallthru
    _

// kernel: bottleneck_forward.7
$region0: #{bottleneck_forward.7}
  #allocation0 [shape = 'u32[]', space=smem, size = 0x4, offset = 0x4, fixed_abs, tag = 'smem constant byte address 0x4 - core index']
  #allocation1 [shape = 'u32[144,128]{1,0:T(1,128)}', space=vmem, size = 0x12000, scoped, tag = 'internal scratch']
  %s0 = inlined_call_operand.vmem [shape: bf16[512,128], index: 0, kind: input, shape index: {}]
  %s1 = inlined_call_operand.vmem [shape: f32[1,128], index: 1, kind: input, shape index: {}]
  %s2 = inlined_call_operand.vmem [shape: f32[1,128], index: 2, kind: input, shape index: {}]
  %s3 = inlined_call_operand.vmem [shape: bf16[512,128], index: 3, kind: input, shape index: {}]
  %s4 = inlined_call_operand.vmem [shape: f32[1,128], index: 4, kind: input, shape index: {}]
  %s5 = inlined_call_operand.vmem [shape: f32[1,128], index: 5, kind: input, shape index: {}]
  %s6 = inlined_call_operand.vmem [shape: f32[512,128], index: 6, kind: output, shape index: {}]
  %s7 = sld [smem:[#allocation0]]
  $region34: #{bottleneck_forward.7} parent=0
    _
  %s9 = ssub.s32 1, %s7
  %s10 = scalar_select 0, %s9, %s7
  // Predicated region
  $region2: #{bottleneck_forward.7} parent=0 // pred_check
    _
  $region3: #{bottleneck_forward.7} parent=0 // pred_check_branch
    %12 = sbr.rel (0) target = $region5
  $region4: #{bottleneck_forward.7} parent=0 // pred_region
    _
  $region5: #{bottleneck_forward.7} parent=0 // pred_fallthru
    _
  // Predicated region
  $region6: #{bottleneck_forward.7} parent=0 // pred_check
    _
  $region7: #{bottleneck_forward.7} parent=0 // pred_check_branch
    %14 = sbr.rel (0) target = $region9
  $region8: #{bottleneck_forward.7} parent=0 // pred_region
    _
  $region9: #{bottleneck_forward.7} parent=0 // pred_fallthru
    _
  // Predicated region
  $region10: #{bottleneck_forward.7} parent=0 // pred_check
    _
  $region11: #{bottleneck_forward.7} parent=0 // pred_check_branch
    %16 = sbr.rel (0) target = $region13
  $region12: #{bottleneck_forward.7} parent=0 // pred_region
    _
  $region13: #{bottleneck_forward.7} parent=0 // pred_fallthru
    _
  // Predicated region
  $region14: #{bottleneck_forward.7} parent=0 // pred_check
    _
  $region15: #{bottleneck_forward.7} parent=0 // pred_check_branch
    %18 = sbr.rel (0) target = $region17
  $region16: #{bottleneck_forward.7} parent=0 // pred_region
    _
  $region17: #{bottleneck_forward.7} parent=0 // pred_fallthru
    _
  // Predicated region
  $region18: #{bottleneck_forward.7} parent=0 // pred_check
    _
  $region19: #{bottleneck_forward.7} parent=0 // pred_check_branch
    %20 = sbr.rel (0) target = $region21
  $region20: #{bottleneck_forward.7} parent=0 // pred_region
    _
  $region21: #{bottleneck_forward.7} parent=0 // pred_fallthru
    _
  // Predicated region
  $region22: #{bottleneck_forward.7} parent=0 // pred_check
    _
  $region23: #{bottleneck_forward.7} parent=0 // pred_check_branch
    %22 = sbr.rel (0) target = $region25
  $region24: #{bottleneck_forward.7} parent=0 // pred_region
    _
  $region25: #{bottleneck_forward.7} parent=0 // pred_fallthru
    _
  %v23 = vld [vmem:[%s0] sm:$0xf]
  %v24 = vld [vmem:[%s0 + $0x4] sm:$0xf]
  %v25 = vld [vmem:[%s0 + $0x8] sm:$0xf]
  %v26 = vld [vmem:[%s0 + $0xc] sm:$0xf]
  %v27 = vld [vmem:[%s0 + $0x10] sm:$0xf]
  %v28 = vld [vmem:[%s0 + $0x14] sm:$0xf]
  %v29 = vld [vmem:[%s0 + $0x18] sm:$0xf]
  %v30 = vld [vmem:[%s0 + $0x1c] sm:$0xf]
  %v31 = vld [vmem:[%s0 + $0x20] sm:$0xf]
  %v32 = vld [vmem:[%s0 + $0x24] sm:$0xf]
  %v33 = vld [vmem:[%s0 + $0x28] sm:$0xf]
  %v34 = vld [vmem:[%s0 + $0x2c] sm:$0xf]
  %v35 = vld [vmem:[%s0 + $0x30] sm:$0xf]
  %v36 = vld [vmem:[%s0 + $0x34] sm:$0xf]
  %v37 = vld [vmem:[%s0 + $0x38] sm:$0xf]
  %v38 = vld [vmem:[%s0 + $0x3c] sm:$0xf]
  %v39 = vld [vmem:[%s0 + $0x40] sm:$0xf]
  %v40 = vld [vmem:[%s0 + $0x44] sm:$0xf]
  %v41 = vld [vmem:[%s0 + $0x48] sm:$0xf]
  %v42 = vld [vmem:[%s0 + $0x4c] sm:$0xf]
  %v43 = vld [vmem:[%s0 + $0x50] sm:$0xf]
  %v44 = vld [vmem:[%s0 + $0x54] sm:$0xf]
  %v45 = vld [vmem:[%s0 + $0x58] sm:$0xf]
  %v46 = vld [vmem:[%s0 + $0x5c] sm:$0xf]
  %v47 = vld [vmem:[%s0 + $0x60] sm:$0xf]
  %v48 = vld [vmem:[%s0 + $0x64] sm:$0xf]
  %v49 = vld [vmem:[%s0 + $0x68] sm:$0xf]
  %v50 = vld [vmem:[%s0 + $0x6c] sm:$0xf]
  %v51 = vld [vmem:[%s0 + $0x70] sm:$0xf]
  %v52 = vld [vmem:[%s0 + $0x74] sm:$0xf]
  %v53 = vld [vmem:[%s0 + $0x78] sm:$0xf]
  %v54 = vld [vmem:[%s0 + $0x7c] sm:$0xf]
  %v55 = vld [vmem:[%s0 + $0x80] sm:$0xf]
  %v56 = vld [vmem:[%s0 + $0x84] sm:$0xf]
  %v57 = vld [vmem:[%s0 + $0x88] sm:$0xf]
  %v58 = vld [vmem:[%s0 + $0x8c] sm:$0xf]
  %v59 = vld [vmem:[%s0 + $0x90] sm:$0xf]
  %v60 = vld [vmem:[%s0 + $0x94] sm:$0xf]
  %v61 = vld [vmem:[%s0 + $0x98] sm:$0xf]
  %v62 = vld [vmem:[%s0 + $0x9c] sm:$0xf]
  %v63 = vld [vmem:[%s0 + $0xa0] sm:$0xf]
  %v64 = vld [vmem:[%s0 + $0xa4] sm:$0xf]
  %v65 = vld [vmem:[%s0 + $0xa8] sm:$0xf]
  %v66 = vld [vmem:[%s0 + $0xac] sm:$0xf]
  %v67 = vld [vmem:[%s0 + $0xb0] sm:$0xf]
  %v68 = vld [vmem:[%s0 + $0xb4] sm:$0xf]
  %v69 = vld [vmem:[%s0 + $0xb8] sm:$0xf]
  %v70 = vld [vmem:[%s0 + $0xbc] sm:$0xf]
  %v71 = vld [vmem:[%s0 + $0xc0] sm:$0xf]
  %v72 = vld [vmem:[%s0 + $0xc4] sm:$0xf]
  %v73 = vld [vmem:[%s0 + $0xc8] sm:$0xf]
  %v74 = vld [vmem:[%s0 + $0xcc] sm:$0xf]
  %v75 = vld [vmem:[%s0 + $0xd0] sm:$0xf]
  %v76 = vld [vmem:[%s0 + $0xd4] sm:$0xf]
  %v77 = vld [vmem:[%s0 + $0xd8] sm:$0xf]
  %v78 = vld [vmem:[%s0 + $0xdc] sm:$0xf]
  %v79 = vld [vmem:[%s0 + $0xe0] sm:$0xf]
  %v80 = vld [vmem:[%s0 + $0xe4] sm:$0xf]
  %v81 = vld [vmem:[%s0 + $0xe8] sm:$0xf]
  %v82 = vld [vmem:[%s0 + $0xec] sm:$0xf]
  %v83 = vld [vmem:[%s0 + $0xf0] sm:$0xf]
  %v84 = vld [vmem:[%s0 + $0xf4] sm:$0xf]
  %v85 = vld [vmem:[%s0 + $0xf8] sm:$0xf]
  %v86 = vld [vmem:[%s0 + $0xfc] sm:$0xf]
  %v87 = vunpack.c.l.bf16 %v23
  %v88 = vunpack.c.l.bf16 %v24
  %v89 = vunpack.c.l.bf16 %v25
  %v90 = vunpack.c.l.bf16 %v26
  %v91 = vunpack.c.l.bf16 %v27
  %v92 = vunpack.c.l.bf16 %v28
  %v93 = vunpack.c.l.bf16 %v29
  %v94 = vunpack.c.l.bf16 %v30
  %v95 = vunpack.c.l.bf16 %v31
  %v96 = vunpack.c.l.bf16 %v32
  %v97 = vunpack.c.l.bf16 %v33
  %v98 = vunpack.c.l.bf16 %v34
  %v99 = vunpack.c.l.bf16 %v35
  %v100 = vunpack.c.l.bf16 %v36
  %v101 = vunpack.c.l.bf16 %v37
  %v102 = vunpack.c.l.bf16 %v38
  %v103 = vunpack.c.l.bf16 %v39
  %v104 = vunpack.c.l.bf16 %v40
  %v105 = vunpack.c.l.bf16 %v41
  %v106 = vunpack.c.l.bf16 %v42
  %v107 = vunpack.c.l.bf16 %v43
  %v108 = vunpack.c.l.bf16 %v44
  %v109 = vunpack.c.l.bf16 %v45
  %v110 = vunpack.c.l.bf16 %v46
  %v111 = vunpack.c.l.bf16 %v47
  %v112 = vunpack.c.l.bf16 %v48
  %v113 = vunpack.c.l.bf16 %v49
  %v114 = vunpack.c.l.bf16 %v50
  %v115 = vunpack.c.l.bf16 %v51
  %v116 = vunpack.c.l.bf16 %v52
  %v117 = vunpack.c.l.bf16 %v53
  %v118 = vunpack.c.l.bf16 %v54
  %v119 = vunpack.c.l.bf16 %v55
  %v120 = vunpack.c.l.bf16 %v56
  %v121 = vunpack.c.l.bf16 %v57
  %v122 = vunpack.c.l.bf16 %v58
  %v123 = vunpack.c.l.bf16 %v59
  %v124 = vunpack.c.l.bf16 %v60
  %v125 = vunpack.c.l.bf16 %v61
  %v126 = vunpack.c.l.bf16 %v62
  %v127 = vunpack.c.l.bf16 %v63
  %v128 = vunpack.c.l.bf16 %v64
  %v129 = vunpack.c.l.bf16 %v65
  %v130 = vunpack.c.l.bf16 %v66
  %v131 = vunpack.c.l.bf16 %v67
  %v132 = vunpack.c.l.bf16 %v68
  %v133 = vunpack.c.l.bf16 %v69
  %v134 = vunpack.c.l.bf16 %v70
  %v135 = vunpack.c.l.bf16 %v71
  %v136 = vunpack.c.l.bf16 %v72
  %v137 = vunpack.c.l.bf16 %v73
  %v138 = vunpack.c.l.bf16 %v74
  %v139 = vunpack.c.l.bf16 %v75
  %v140 = vunpack.c.l.bf16 %v76
  %v141 = vunpack.c.l.bf16 %v77
  %v142 = vunpack.c.l.bf16 %v78
  %v143 = vunpack.c.l.bf16 %v79
  %v144 = vunpack.c.l.bf16 %v80
  %v145 = vunpack.c.l.bf16 %v81
  %v146 = vunpack.c.l.bf16 %v82
  %v147 = vunpack.c.l.bf16 %v83
  %v148 = vunpack.c.l.bf16 %v84
  %v149 = vunpack.c.l.bf16 %v85
  %v150 = vunpack.c.l.bf16 %v86
  %v151 = vld [vmem:[%s1] sm:$0x1]
  %v153 = vlaneseq
  %v154 = vshrl.u32 %v153, 7
  %v155 = vsub.s32 0, %v154
  %v156 = vrot.slane %v151, %v155
  %v158 = vmul.f32 %v87, %v156
  %v159 = vmul.f32 %v88, %v156
  %v160 = vmul.f32 %v89, %v156
  %v161 = vmul.f32 %v90, %v156
  %v162 = vmul.f32 %v91, %v156
  %v163 = vmul.f32 %v92, %v156
  %v164 = vmul.f32 %v93, %v156
  %v165 = vmul.f32 %v94, %v156
  %v166 = vmul.f32 %v95, %v156
  %v167 = vmul.f32 %v96, %v156
  %v168 = vmul.f32 %v97, %v156
  %v169 = vmul.f32 %v98, %v156
  %v170 = vmul.f32 %v99, %v156
  %v171 = vmul.f32 %v100, %v156
  %v172 = vmul.f32 %v101, %v156
  %v173 = vmul.f32 %v102, %v156
  %v174 = vmul.f32 %v103, %v156
  %v175 = vmul.f32 %v104, %v156
  %v176 = vmul.f32 %v105, %v156
  %v177 = vmul.f32 %v106, %v156
  %v178 = vmul.f32 %v107, %v156
  %v179 = vmul.f32 %v108, %v156
  %v180 = vmul.f32 %v109, %v156
  %v181 = vmul.f32 %v110, %v156
  %v182 = vmul.f32 %v111, %v156
  %v183 = vmul.f32 %v112, %v156
  %v184 = vmul.f32 %v113, %v156
  %v185 = vmul.f32 %v114, %v156
  %v186 = vmul.f32 %v115, %v156
  %v187 = vmul.f32 %v116, %v156
  %v188 = vmul.f32 %v117, %v156
  %v189 = vmul.f32 %v118, %v156
  %v190 = vmul.f32 %v119, %v156
  %v191 = vmul.f32 %v120, %v156
  %v192 = vmul.f32 %v121, %v156
  %v193 = vmul.f32 %v122, %v156
  %v194 = vmul.f32 %v123, %v156
  %v195 = vmul.f32 %v124, %v156
  %v196 = vmul.f32 %v125, %v156
  %v197 = vmul.f32 %v126, %v156
  %v198 = vmul.f32 %v127, %v156
  %v199 = vmul.f32 %v128, %v156
  %v200 = vmul.f32 %v129, %v156
  %v201 = vmul.f32 %v130, %v156
  %v202 = vmul.f32 %v131, %v156
  %v203 = vmul.f32 %v132, %v156
  %v204 = vmul.f32 %v133, %v156
  %v205 = vmul.f32 %v134, %v156
  %v206 = vmul.f32 %v135, %v156
  %v207 = vmul.f32 %v136, %v156
  %v208 = vmul.f32 %v137, %v156
  %v209 = vmul.f32 %v138, %v156
  %v210 = vmul.f32 %v139, %v156
  %v211 = vmul.f32 %v140, %v156
  %v212 = vmul.f32 %v141, %v156
  %v213 = vmul.f32 %v142, %v156
  %v214 = vmul.f32 %v143, %v156
  %v215 = vmul.f32 %v144, %v156
  %v216 = vmul.f32 %v145, %v156
  %v217 = vmul.f32 %v146, %v156
  %v218 = vmul.f32 %v147, %v156
  %v219 = vmul.f32 %v148, %v156
  %v220 = vmul.f32 %v149, %v156
  %v221 = vmul.f32 %v150, %v156
  %v222 = vld [vmem:[%s2] sm:$0x1]
  %v224 = vlaneseq
  %v225 = vshrl.u32 %v224, 7
  %v226 = vsub.s32 0, %v225
  %v227 = vrot.slane %v222, %v226
  %v229 = vadd.f32 %v158, %v227
  %v230 = vadd.f32 %v159, %v227
  %v231 = vadd.f32 %v160, %v227
  %v232 = vadd.f32 %v161, %v227
  %v233 = vadd.f32 %v162, %v227
  %v234 = vadd.f32 %v163, %v227
  %v235 = vadd.f32 %v164, %v227
  %v236 = vadd.f32 %v165, %v227
  %v237 = vadd.f32 %v166, %v227
  %v238 = vadd.f32 %v167, %v227
  %v239 = vadd.f32 %v168, %v227
  %v240 = vadd.f32 %v169, %v227
  %v241 = vadd.f32 %v170, %v227
  %v242 = vadd.f32 %v171, %v227
  %v243 = vadd.f32 %v172, %v227
  %v244 = vadd.f32 %v173, %v227
  %v245 = vadd.f32 %v174, %v227
  %v246 = vadd.f32 %v175, %v227
  %v247 = vadd.f32 %v176, %v227
  %v248 = vadd.f32 %v177, %v227
  %v249 = vadd.f32 %v178, %v227
  %v250 = vadd.f32 %v179, %v227
  %v251 = vadd.f32 %v180, %v227
  %v252 = vadd.f32 %v181, %v227
  %v253 = vadd.f32 %v182, %v227
  %v254 = vadd.f32 %v183, %v227
  %v255 = vadd.f32 %v184, %v227
  %v256 = vadd.f32 %v185, %v227
  %v257 = vadd.f32 %v186, %v227
  %v258 = vadd.f32 %v187, %v227
  %v259 = vadd.f32 %v188, %v227
  %v260 = vadd.f32 %v189, %v227
  %v261 = vadd.f32 %v190, %v227
  %v262 = vadd.f32 %v191, %v227
  %v263 = vadd.f32 %v192, %v227
  %v264 = vadd.f32 %v193, %v227
  %v265 = vadd.f32 %v194, %v227
  %v266 = vadd.f32 %v195, %v227
  %v267 = vadd.f32 %v196, %v227
  %v268 = vadd.f32 %v197, %v227
  %v269 = vadd.f32 %v198, %v227
  %v270 = vadd.f32 %v199, %v227
  %v271 = vadd.f32 %v200, %v227
  %v272 = vadd.f32 %v201, %v227
  %v273 = vadd.f32 %v202, %v227
  %v274 = vadd.f32 %v203, %v227
  %v275 = vadd.f32 %v204, %v227
  %v276 = vadd.f32 %v205, %v227
  %v277 = vadd.f32 %v206, %v227
  %v278 = vadd.f32 %v207, %v227
  %v279 = vadd.f32 %v208, %v227
  %v280 = vadd.f32 %v209, %v227
  %v281 = vadd.f32 %v210, %v227
  %v282 = vadd.f32 %v211, %v227
  %v283 = vadd.f32 %v212, %v227
  %v284 = vadd.f32 %v213, %v227
  %v285 = vadd.f32 %v214, %v227
  %v286 = vadd.f32 %v215, %v227
  %v287 = vadd.f32 %v216, %v227
  %v288 = vadd.f32 %v217, %v227
  %v289 = vadd.f32 %v218, %v227
  %v290 = vadd.f32 %v219, %v227
  %v291 = vadd.f32 %v220, %v227
  %v292 = vadd.f32 %v221, %v227
  %v293 = vld [vmem:[%s3] sm:$0xf]
  %v294 = vld [vmem:[%s3 + $0x4] sm:$0xf]
  %v295 = vld [vmem:[%s3 + $0x8] sm:$0xf]
  %v296 = vld [vmem:[%s3 + $0xc] sm:$0xf]
  %v297 = vld [vmem:[%s3 + $0x10] sm:$0xf]
  %v298 = vld [vmem:[%s3 + $0x14] sm:$0xf]
  %v299 = vld [vmem:[%s3 + $0x18] sm:$0xf]
  %v300 = vld [vmem:[%s3 + $0x1c] sm:$0xf]
  %v301 = vld [vmem:[%s3 + $0x20] sm:$0xf]
  %v302 = vld [vmem:[%s3 + $0x24] sm:$0xf]
  %v303 = vld [vmem:[%s3 + $0x28] sm:$0xf]
  %v304 = vld [vmem:[%s3 + $0x2c] sm:$0xf]
  %v305 = vld [vmem:[%s3 + $0x30] sm:$0xf]
  %v306 = vld [vmem:[%s3 + $0x34] sm:$0xf]
  %v307 = vld [vmem:[%s3 + $0x38] sm:$0xf]
  %v308 = vld [vmem:[%s3 + $0x3c] sm:$0xf]
  %v309 = vld [vmem:[%s3 + $0x40] sm:$0xf]
  %v310 = vld [vmem:[%s3 + $0x44] sm:$0xf]
  %v311 = vld [vmem:[%s3 + $0x48] sm:$0xf]
  %v312 = vld [vmem:[%s3 + $0x4c] sm:$0xf]
  %v313 = vld [vmem:[%s3 + $0x50] sm:$0xf]
  %v314 = vld [vmem:[%s3 + $0x54] sm:$0xf]
  %v315 = vld [vmem:[%s3 + $0x58] sm:$0xf]
  %v316 = vld [vmem:[%s3 + $0x5c] sm:$0xf]
  %v317 = vld [vmem:[%s3 + $0x60] sm:$0xf]
  %v318 = vld [vmem:[%s3 + $0x64] sm:$0xf]
  %v319 = vld [vmem:[%s3 + $0x68] sm:$0xf]
  %v320 = vld [vmem:[%s3 + $0x6c] sm:$0xf]
  %v321 = vld [vmem:[%s3 + $0x70] sm:$0xf]
  %v322 = vld [vmem:[%s3 + $0x74] sm:$0xf]
  %v323 = vld [vmem:[%s3 + $0x78] sm:$0xf]
  %v324 = vld [vmem:[%s3 + $0x7c] sm:$0xf]
  %v325 = vld [vmem:[%s3 + $0x80] sm:$0xf]
  %v326 = vld [vmem:[%s3 + $0x84] sm:$0xf]
  %v327 = vld [vmem:[%s3 + $0x88] sm:$0xf]
  %v328 = vld [vmem:[%s3 + $0x8c] sm:$0xf]
  %v329 = vld [vmem:[%s3 + $0x90] sm:$0xf]
  %v330 = vld [vmem:[%s3 + $0x94] sm:$0xf]
  %v331 = vld [vmem:[%s3 + $0x98] sm:$0xf]
  %v332 = vld [vmem:[%s3 + $0x9c] sm:$0xf]
  %v333 = vld [vmem:[%s3 + $0xa0] sm:$0xf]
  %v334 = vld [vmem:[%s3 + $0xa4] sm:$0xf]
  %v335 = vld [vmem:[%s3 + $0xa8] sm:$0xf]
  %v336 = vld [vmem:[%s3 + $0xac] sm:$0xf]
  %v337 = vld [vmem:[%s3 + $0xb0] sm:$0xf]
  %v338 = vld [vmem:[%s3 + $0xb4] sm:$0xf]
  %v339 = vld [vmem:[%s3 + $0xb8] sm:$0xf]
  %v340 = vld [vmem:[%s3 + $0xbc] sm:$0xf]
  %v341 = vld [vmem:[%s3 + $0xc0] sm:$0xf]
  %v342 = vld [vmem:[%s3 + $0xc4] sm:$0xf]
  %v343 = vld [vmem:[%s3 + $0xc8] sm:$0xf]
  %v344 = vld [vmem:[%s3 + $0xcc] sm:$0xf]
  %v345 = vld [vmem:[%s3 + $0xd0] sm:$0xf]
  %v346 = vld [vmem:[%s3 + $0xd4] sm:$0xf]
  %v347 = vld [vmem:[%s3 + $0xd8] sm:$0xf]
  %v348 = vld [vmem:[%s3 + $0xdc] sm:$0xf]
  %v349 = vld [vmem:[%s3 + $0xe0] sm:$0xf]
  %v350 = vld [vmem:[%s3 + $0xe4] sm:$0xf]
  %v351 = vld [vmem:[%s3 + $0xe8] sm:$0xf]
  %v352 = vld [vmem:[%s3 + $0xec] sm:$0xf]
  %v353 = vld [vmem:[%s3 + $0xf0] sm:$0xf]
  %v354 = vld [vmem:[%s3 + $0xf4] sm:$0xf]
  %v355 = vld [vmem:[%s3 + $0xf8] sm:$0xf]
  %v356 = vld [vmem:[%s3 + $0xfc] sm:$0xf]
  %v357 = vunpack.c.l.bf16 %v293
  %v358 = vunpack.c.l.bf16 %v294
  %v359 = vunpack.c.l.bf16 %v295
  %v360 = vunpack.c.l.bf16 %v296
  %v361 = vunpack.c.l.bf16 %v297
  %v362 = vunpack.c.l.bf16 %v298
  %v363 = vunpack.c.l.bf16 %v299
  %v364 = vunpack.c.l.bf16 %v300
  %v365 = vunpack.c.l.bf16 %v301
  %v366 = vunpack.c.l.bf16 %v302
  %v367 = vunpack.c.l.bf16 %v303
  %v368 = vunpack.c.l.bf16 %v304
  %v369 = vunpack.c.l.bf16 %v305
  %v370 = vunpack.c.l.bf16 %v306
  %v371 = vunpack.c.l.bf16 %v307
  %v372 = vunpack.c.l.bf16 %v308
  %v373 = vunpack.c.l.bf16 %v309
  %v374 = vunpack.c.l.bf16 %v310
  %v375 = vunpack.c.l.bf16 %v311
  %v376 = vunpack.c.l.bf16 %v312
  %v377 = vunpack.c.l.bf16 %v313
  %v378 = vunpack.c.l.bf16 %v314
  %v379 = vunpack.c.l.bf16 %v315
  %v380 = vunpack.c.l.bf16 %v316
  %v381 = vunpack.c.l.bf16 %v317
  %v382 = vunpack.c.l.bf16 %v318
  %v383 = vunpack.c.l.bf16 %v319
  %v384 = vunpack.c.l.bf16 %v320
  %v385 = vunpack.c.l.bf16 %v321
  %v386 = vunpack.c.l.bf16 %v322
  %v387 = vunpack.c.l.bf16 %v323
  %v388 = vunpack.c.l.bf16 %v324
  %v389 = vunpack.c.l.bf16 %v325
  %v390 = vunpack.c.l.bf16 %v326
  %v391 = vunpack.c.l.bf16 %v327
  %v392 = vunpack.c.l.bf16 %v328
  %v393 = vunpack.c.l.bf16 %v329
  %v394 = vunpack.c.l.bf16 %v330
  %v395 = vunpack.c.l.bf16 %v331
  %v396 = vunpack.c.l.bf16 %v332
  %v397 = vunpack.c.l.bf16 %v333
  %v398 = vunpack.c.l.bf16 %v334
  %v399 = vunpack.c.l.bf16 %v335
  %v400 = vunpack.c.l.bf16 %v336
  %v401 = vunpack.c.l.bf16 %v337
  %v402 = vunpack.c.l.bf16 %v338
  %v403 = vunpack.c.l.bf16 %v339
  %v404 = vunpack.c.l.bf16 %v340
  %v405 = vunpack.c.l.bf16 %v341
  %v406 = vunpack.c.l.bf16 %v342
  %v407 = vunpack.c.l.bf16 %v343
  %v408 = vunpack.c.l.bf16 %v344
  %v409 = vunpack.c.l.bf16 %v345
  %v410 = vunpack.c.l.bf16 %v346
  %v411 = vunpack.c.l.bf16 %v347
  %v412 = vunpack.c.l.bf16 %v348
  %v413 = vunpack.c.l.bf16 %v349
  %v414 = vunpack.c.l.bf16 %v350
  %v415 = vunpack.c.l.bf16 %v351
  %v416 = vunpack.c.l.bf16 %v352
  %v417 = vunpack.c.l.bf16 %v353
  %v418 = vunpack.c.l.bf16 %v354
  %v419 = vunpack.c.l.bf16 %v355
  %v420 = vunpack.c.l.bf16 %v356
  %v421 = vld [vmem:[%s4] sm:$0x1]
  %v423 = vlaneseq
  %v424 = vshrl.u32 %v423, 7
  %v425 = vsub.s32 0, %v424
  %v426 = vrot.slane %v421, %v425
  %v428 = vmul.f32 %v357, %v426
  %v429 = vmul.f32 %v358, %v426
  %v430 = vmul.f32 %v359, %v426
  %v431 = vmul.f32 %v360, %v426
  %v432 = vmul.f32 %v361, %v426
  %v433 = vmul.f32 %v362, %v426
  %v434 = vmul.f32 %v363, %v426
  %v435 = vmul.f32 %v364, %v426
  %v436 = vmul.f32 %v365, %v426
  %v437 = vmul.f32 %v366, %v426
  %v438 = vmul.f32 %v367, %v426
  %v439 = vmul.f32 %v368, %v426
  %v440 = vmul.f32 %v369, %v426
  %v441 = vmul.f32 %v370, %v426
  %v442 = vmul.f32 %v371, %v426
  %v443 = vmul.f32 %v372, %v426
  %v444 = vmul.f32 %v373, %v426
  %v445 = vmul.f32 %v374, %v426
  %v446 = vmul.f32 %v375, %v426
  %v447 = vmul.f32 %v376, %v426
  %v448 = vmul.f32 %v377, %v426
  %v449 = vmul.f32 %v378, %v426
  %v450 = vmul.f32 %v379, %v426
  %v451 = vmul.f32 %v380, %v426
  %v452 = vmul.f32 %v381, %v426
  %v453 = vmul.f32 %v382, %v426
  %v454 = vmul.f32 %v383, %v426
  %v455 = vmul.f32 %v384, %v426
  %v456 = vmul.f32 %v385, %v426
  %v457 = vmul.f32 %v386, %v426
  %v458 = vmul.f32 %v387, %v426
  %v459 = vmul.f32 %v388, %v426
  %v460 = vmul.f32 %v389, %v426
  %v461 = vmul.f32 %v390, %v426
  %v462 = vmul.f32 %v391, %v426
  %v463 = vmul.f32 %v392, %v426
  %v464 = vmul.f32 %v393, %v426
  %v465 = vmul.f32 %v394, %v426
  %v466 = vmul.f32 %v395, %v426
  %v467 = vmul.f32 %v396, %v426
  %v468 = vmul.f32 %v397, %v426
  %v469 = vmul.f32 %v398, %v426
  %v470 = vmul.f32 %v399, %v426
  %v471 = vmul.f32 %v400, %v426
  %v472 = vmul.f32 %v401, %v426
  %v473 = vmul.f32 %v402, %v426
  %v474 = vmul.f32 %v403, %v426
  %v475 = vmul.f32 %v404, %v426
  %v476 = vmul.f32 %v405, %v426
  %v477 = vmul.f32 %v406, %v426
  %v478 = vmul.f32 %v407, %v426
  %v479 = vmul.f32 %v408, %v426
  %v480 = vmul.f32 %v409, %v426
  %v481 = vmul.f32 %v410, %v426
  %v482 = vmul.f32 %v411, %v426
  %v483 = vmul.f32 %v412, %v426
  %v484 = vmul.f32 %v413, %v426
  %v485 = vmul.f32 %v414, %v426
  %v486 = vmul.f32 %v415, %v426
  %v487 = vmul.f32 %v416, %v426
  %v488 = vmul.f32 %v417, %v426
  %v489 = vmul.f32 %v418, %v426
  %v490 = vmul.f32 %v419, %v426
  %v491 = vmul.f32 %v420, %v426
  %v492 = vld [vmem:[%s5] sm:$0x1]
  %v494 = vlaneseq
  %v495 = vshrl.u32 %v494, 7
  %v496 = vsub.s32 0, %v495
  %v497 = vrot.slane %v492, %v496
  %v499 = vadd.f32 %v428, %v497
  %v500 = vadd.f32 %v429, %v497
  %v501 = vadd.f32 %v430, %v497
  %v502 = vadd.f32 %v431, %v497
  %v503 = vadd.f32 %v432, %v497
  %v504 = vadd.f32 %v433, %v497
  %v505 = vadd.f32 %v434, %v497
  %v506 = vadd.f32 %v435, %v497
  %v507 = vadd.f32 %v436, %v497
  %v508 = vadd.f32 %v437, %v497
  %v509 = vadd.f32 %v438, %v497
  %v510 = vadd.f32 %v439, %v497
  %v511 = vadd.f32 %v440, %v497
  %v512 = vadd.f32 %v441, %v497
  %v513 = vadd.f32 %v442, %v497
  %v514 = vadd.f32 %v443, %v497
  %v515 = vadd.f32 %v444, %v497
  %v516 = vadd.f32 %v445, %v497
  %v517 = vadd.f32 %v446, %v497
  %v518 = vadd.f32 %v447, %v497
  %v519 = vadd.f32 %v448, %v497
  %v520 = vadd.f32 %v449, %v497
  %v521 = vadd.f32 %v450, %v497
  %v522 = vadd.f32 %v451, %v497
  %v523 = vadd.f32 %v452, %v497
  %v524 = vadd.f32 %v453, %v497
  %v525 = vadd.f32 %v454, %v497
  %v526 = vadd.f32 %v455, %v497
  %v527 = vadd.f32 %v456, %v497
  %v528 = vadd.f32 %v457, %v497
  %v529 = vadd.f32 %v458, %v497
  %v530 = vadd.f32 %v459, %v497
  %v531 = vadd.f32 %v460, %v497
  %v532 = vadd.f32 %v461, %v497
  %v533 = vadd.f32 %v462, %v497
  %v534 = vadd.f32 %v463, %v497
  %v535 = vadd.f32 %v464, %v497
  %v536 = vadd.f32 %v465, %v497
  %v537 = vadd.f32 %v466, %v497
  %v538 = vadd.f32 %v467, %v497
  %v539 = vadd.f32 %v468, %v497
  %v540 = vadd.f32 %v469, %v497
  %v541 = vadd.f32 %v470, %v497
  %v542 = vadd.f32 %v471, %v497
  %v543 = vadd.f32 %v472, %v497
  %v544 = vadd.f32 %v473, %v497
  %v545 = vadd.f32 %v474, %v497
  %v546 = vadd.f32 %v475, %v497
  %v547 = vadd.f32 %v476, %v497
  %v548 = vadd.f32 %v477, %v497
  %v549 = vadd.f32 %v478, %v497
  %v550 = vadd.f32 %v479, %v497
  %v551 = vadd.f32 %v480, %v497
  %v552 = vadd.f32 %v481, %v497
  %v553 = vadd.f32 %v482, %v497
  %v554 = vadd.f32 %v483, %v497
  %v555 = vadd.f32 %v484, %v497
  %v556 = vadd.f32 %v485, %v497
  %v557 = vadd.f32 %v486, %v497
  %v558 = vadd.f32 %v487, %v497
  %v559 = vadd.f32 %v488, %v497
  %v560 = vadd.f32 %v489, %v497
  %v561 = vadd.f32 %v490, %v497
  %v562 = vadd.f32 %v491, %v497
  %v563 = vadd.f32 %v229, %v499
  %v564 = vadd.f32 %v230, %v500
  %v565 = vadd.f32 %v231, %v501
  %v566 = vadd.f32 %v232, %v502
  %v567 = vadd.f32 %v233, %v503
  %v568 = vadd.f32 %v234, %v504
  %v569 = vadd.f32 %v235, %v505
  %v570 = vadd.f32 %v236, %v506
  %v571 = vadd.f32 %v237, %v507
  %v572 = vadd.f32 %v238, %v508
  %v573 = vadd.f32 %v239, %v509
  %v574 = vadd.f32 %v240, %v510
  %v575 = vadd.f32 %v241, %v511
  %v576 = vadd.f32 %v242, %v512
  %v577 = vadd.f32 %v243, %v513
  %v578 = vadd.f32 %v244, %v514
  %v579 = vadd.f32 %v245, %v515
  %v580 = vadd.f32 %v246, %v516
  %v581 = vadd.f32 %v247, %v517
  %v582 = vadd.f32 %v248, %v518
  %v583 = vadd.f32 %v249, %v519
  %v584 = vadd.f32 %v250, %v520
  %v585 = vadd.f32 %v251, %v521
  %v586 = vadd.f32 %v252, %v522
  %v587 = vadd.f32 %v253, %v523
  %v588 = vadd.f32 %v254, %v524
  %v589 = vadd.f32 %v255, %v525
  %v590 = vadd.f32 %v256, %v526
  %v591 = vadd.f32 %v257, %v527
  %v592 = vadd.f32 %v258, %v528
  %v593 = vadd.f32 %v259, %v529
  %v594 = vadd.f32 %v260, %v530
  %v595 = vadd.f32 %v261, %v531
  %v596 = vadd.f32 %v262, %v532
  %v597 = vadd.f32 %v263, %v533
  %v598 = vadd.f32 %v264, %v534
  %v599 = vadd.f32 %v265, %v535
  %v600 = vadd.f32 %v266, %v536
  %v601 = vadd.f32 %v267, %v537
  %v602 = vadd.f32 %v268, %v538
  %v603 = vadd.f32 %v269, %v539
  %v604 = vadd.f32 %v270, %v540
  %v605 = vadd.f32 %v271, %v541
  %v606 = vadd.f32 %v272, %v542
  %v607 = vadd.f32 %v273, %v543
  %v608 = vadd.f32 %v274, %v544
  %v609 = vadd.f32 %v275, %v545
  %v610 = vadd.f32 %v276, %v546
  %v611 = vadd.f32 %v277, %v547
  %v612 = vadd.f32 %v278, %v548
  %v613 = vadd.f32 %v279, %v549
  %v614 = vadd.f32 %v280, %v550
  %v615 = vadd.f32 %v281, %v551
  %v616 = vadd.f32 %v282, %v552
  %v617 = vadd.f32 %v283, %v553
  %v618 = vadd.f32 %v284, %v554
  %v619 = vadd.f32 %v285, %v555
  %v620 = vadd.f32 %v286, %v556
  %v621 = vadd.f32 %v287, %v557
  %v622 = vadd.f32 %v288, %v558
  %v623 = vadd.f32 %v289, %v559
  %v624 = vadd.f32 %v290, %v560
  %v625 = vadd.f32 %v291, %v561
  %v626 = vadd.f32 %v292, %v562
  %v627 = vmax.f32 %v563, 0.0
  %v628 = vmax.f32 %v564, 0.0
  %v629 = vmax.f32 %v565, 0.0
  %v630 = vmax.f32 %v566, 0.0
  %v631 = vmax.f32 %v567, 0.0
  %v632 = vmax.f32 %v568, 0.0
  %v633 = vmax.f32 %v569, 0.0
  %v634 = vmax.f32 %v570, 0.0
  %v635 = vmax.f32 %v571, 0.0
  %v636 = vmax.f32 %v572, 0.0
  %v637 = vmax.f32 %v573, 0.0
  %v638 = vmax.f32 %v574, 0.0
  %v639 = vmax.f32 %v575, 0.0
  %v640 = vmax.f32 %v576, 0.0
  %v641 = vmax.f32 %v577, 0.0
  %v642 = vmax.f32 %v578, 0.0
  %v643 = vmax.f32 %v579, 0.0
  %v644 = vmax.f32 %v580, 0.0
  %v645 = vmax.f32 %v581, 0.0
  %v646 = vmax.f32 %v582, 0.0
  %v647 = vmax.f32 %v583, 0.0
  %v648 = vmax.f32 %v584, 0.0
  %v649 = vmax.f32 %v585, 0.0
  %v650 = vmax.f32 %v586, 0.0
  %v651 = vmax.f32 %v587, 0.0
  %v652 = vmax.f32 %v588, 0.0
  %v653 = vmax.f32 %v589, 0.0
  %v654 = vmax.f32 %v590, 0.0
  %v655 = vmax.f32 %v591, 0.0
  %v656 = vmax.f32 %v592, 0.0
  %v657 = vmax.f32 %v593, 0.0
  %v658 = vmax.f32 %v594, 0.0
  %v659 = vmax.f32 %v595, 0.0
  %v660 = vmax.f32 %v596, 0.0
  %v661 = vmax.f32 %v597, 0.0
  %v662 = vmax.f32 %v598, 0.0
  %v663 = vmax.f32 %v599, 0.0
  %v664 = vmax.f32 %v600, 0.0
  %v665 = vmax.f32 %v601, 0.0
  %v666 = vmax.f32 %v602, 0.0
  %v667 = vmax.f32 %v603, 0.0
  %v668 = vmax.f32 %v604, 0.0
  %v669 = vmax.f32 %v605, 0.0
  %v670 = vmax.f32 %v606, 0.0
  %v671 = vmax.f32 %v607, 0.0
  %v672 = vmax.f32 %v608, 0.0
  %v673 = vmax.f32 %v609, 0.0
  %v674 = vmax.f32 %v610, 0.0
  %v675 = vmax.f32 %v611, 0.0
  %v676 = vmax.f32 %v612, 0.0
  %v677 = vmax.f32 %v613, 0.0
  %v678 = vmax.f32 %v614, 0.0
  %v679 = vmax.f32 %v615, 0.0
  %v680 = vmax.f32 %v616, 0.0
  %v681 = vmax.f32 %v617, 0.0
  %v682 = vmax.f32 %v618, 0.0
  %v683 = vmax.f32 %v619, 0.0
  %v684 = vmax.f32 %v620, 0.0
  %v685 = vmax.f32 %v621, 0.0
  %v686 = vmax.f32 %v622, 0.0
  %v687 = vmax.f32 %v623, 0.0
  %v688 = vmax.f32 %v624, 0.0
  %v689 = vmax.f32 %v625, 0.0
  %v690 = vmax.f32 %v626, 0.0
  %691 = vst [vmem:[%s6] sm:$0xff] %v627
  %692 = vst [vmem:[%s6 + $0x8] sm:$0xff] %v628
  %693 = vst [vmem:[%s6 + $0x10] sm:$0xff] %v629
  %694 = vst [vmem:[%s6 + $0x18] sm:$0xff] %v630
  %695 = vst [vmem:[%s6 + $0x20] sm:$0xff] %v631
  %696 = vst [vmem:[%s6 + $0x28] sm:$0xff] %v632
  %697 = vst [vmem:[%s6 + $0x30] sm:$0xff] %v633
  %698 = vst [vmem:[%s6 + $0x38] sm:$0xff] %v634
  %699 = vst [vmem:[%s6 + $0x40] sm:$0xff] %v635
  %700 = vst [vmem:[%s6 + $0x48] sm:$0xff] %v636
  %701 = vst [vmem:[%s6 + $0x50] sm:$0xff] %v637
  %702 = vst [vmem:[%s6 + $0x58] sm:$0xff] %v638
  %703 = vst [vmem:[%s6 + $0x60] sm:$0xff] %v639
  %704 = vst [vmem:[%s6 + $0x68] sm:$0xff] %v640
  %705 = vst [vmem:[%s6 + $0x70] sm:$0xff] %v641
  %706 = vst [vmem:[%s6 + $0x78] sm:$0xff] %v642
  %707 = vst [vmem:[%s6 + $0x80] sm:$0xff] %v643
  %708 = vst [vmem:[%s6 + $0x88] sm:$0xff] %v644
  %709 = vst [vmem:[%s6 + $0x90] sm:$0xff] %v645
  %710 = vst [vmem:[%s6 + $0x98] sm:$0xff] %v646
  %711 = vst [vmem:[%s6 + $0xa0] sm:$0xff] %v647
  %712 = vst [vmem:[%s6 + $0xa8] sm:$0xff] %v648
  %713 = vst [vmem:[%s6 + $0xb0] sm:$0xff] %v649
  %714 = vst [vmem:[%s6 + $0xb8] sm:$0xff] %v650
  %715 = vst [vmem:[%s6 + $0xc0] sm:$0xff] %v651
  %716 = vst [vmem:[%s6 + $0xc8] sm:$0xff] %v652
  %717 = vst [vmem:[%s6 + $0xd0] sm:$0xff] %v653
  %718 = vst [vmem:[%s6 + $0xd8] sm:$0xff] %v654
  %719 = vst [vmem:[%s6 + $0xe0] sm:$0xff] %v655
  %720 = vst [vmem:[%s6 + $0xe8] sm:$0xff] %v656
  %721 = vst [vmem:[%s6 + $0xf0] sm:$0xff] %v657
  %722 = vst [vmem:[%s6 + $0xf8] sm:$0xff] %v658
  %723 = vst [vmem:[%s6 + $0x100] sm:$0xff] %v659
  %724 = vst [vmem:[%s6 + $0x108] sm:$0xff] %v660
  %725 = vst [vmem:[%s6 + $0x110] sm:$0xff] %v661
  %726 = vst [vmem:[%s6 + $0x118] sm:$0xff] %v662
  %727 = vst [vmem:[%s6 + $0x120] sm:$0xff] %v663
  %728 = vst [vmem:[%s6 + $0x128] sm:$0xff] %v664
  %729 = vst [vmem:[%s6 + $0x130] sm:$0xff] %v665
  %730 = vst [vmem:[%s6 + $0x138] sm:$0xff] %v666
  %731 = vst [vmem:[%s6 + $0x140] sm:$0xff] %v667
  %732 = vst [vmem:[%s6 + $0x148] sm:$0xff] %v668
  %733 = vst [vmem:[%s6 + $0x150] sm:$0xff] %v669
  %734 = vst [vmem:[%s6 + $0x158] sm:$0xff] %v670
  %735 = vst [vmem:[%s6 + $0x160] sm:$0xff] %v671
  %736 = vst [vmem:[%s6 + $0x168] sm:$0xff] %v672
  %737 = vst [vmem:[%s6 + $0x170] sm:$0xff] %v673
  %738 = vst [vmem:[%s6 + $0x178] sm:$0xff] %v674
  %739 = vst [vmem:[%s6 + $0x180] sm:$0xff] %v675
  %740 = vst [vmem:[%s6 + $0x188] sm:$0xff] %v676
  %741 = vst [vmem:[%s6 + $0x190] sm:$0xff] %v677
  %742 = vst [vmem:[%s6 + $0x198] sm:$0xff] %v678
  %743 = vst [vmem:[%s6 + $0x1a0] sm:$0xff] %v679
  %744 = vst [vmem:[%s6 + $0x1a8] sm:$0xff] %v680
  %745 = vst [vmem:[%s6 + $0x1b0] sm:$0xff] %v681
  %746 = vst [vmem:[%s6 + $0x1b8] sm:$0xff] %v682
  %747 = vst [vmem:[%s6 + $0x1c0] sm:$0xff] %v683
  %748 = vst [vmem:[%s6 + $0x1c8] sm:$0xff] %v684
  %749 = vst [vmem:[%s6 + $0x1d0] sm:$0xff] %v685
  %750 = vst [vmem:[%s6 + $0x1d8] sm:$0xff] %v686
  %751 = vst [vmem:[%s6 + $0x1e0] sm:$0xff] %v687
  %752 = vst [vmem:[%s6 + $0x1e8] sm:$0xff] %v688
  %753 = vst [vmem:[%s6 + $0x1f0] sm:$0xff] %v689
  %754 = vst [vmem:[%s6 + $0x1f8] sm:$0xff] %v690
  // Predicated region
  $region26: #{bottleneck_forward.7} parent=0 // pred_check
    _
  $region27: #{bottleneck_forward.7} parent=0 // pred_check_branch
    %756 = sbr.rel (0) target = $region29
  $region28: #{bottleneck_forward.7} parent=0 // pred_region
    _
  $region29: #{bottleneck_forward.7} parent=0 // pred_fallthru
    _
  // Predicated region
  $region30: #{bottleneck_forward.7} parent=0 // pred_check
    _
  $region31: #{bottleneck_forward.7} parent=0 // pred_check_branch
    %758 = sbr.rel (0) target = $region33
  $region32: #{bottleneck_forward.7} parent=0 // pred_region
    _
  $region33: #{bottleneck_forward.7} parent=0 // pred_fallthru
    _

// kernel: bottleneck_forward.6
$region0: #{bottleneck_forward.6}
  #allocation0 [shape = 'u32[]', space=smem, size = 0x4, offset = 0x4, fixed_abs, tag = 'smem constant byte address 0x4 - core index']
  #allocation1 [shape = 'u32[144,128]{1,0:T(1,128)}', space=vmem, size = 0x12000, scoped, tag = 'internal scratch']
  %s0 = inlined_call_operand.vmem [shape: bf16[512,128], index: 0, kind: input, shape index: {}]
  %s1 = inlined_call_operand.vmem [shape: f32[1,128], index: 1, kind: input, shape index: {}]
  %s2 = inlined_call_operand.vmem [shape: f32[1,128], index: 2, kind: input, shape index: {}]
  %s3 = inlined_call_operand.vmem [shape: f32[512,4], index: 3, kind: input, shape index: {}]
  %s4 = inlined_call_operand.vmem [shape: bf16[128,128], index: 4, kind: input, shape index: {}]
  %s5 = inlined_call_operand.vmem [shape: bf16[4,128], index: 5, kind: input, shape index: {}]
  %s6 = inlined_call_operand.vmem [shape: bf16[512,128], index: 6, kind: output, shape index: {0}]
  %s7 = inlined_call_operand.vmem [shape: bf16[512,128], index: 7, kind: output, shape index: {1}]
  %s8 = inlined_call_operand.vmem [shape: f32[1,2,128], index: 8, kind: output, shape index: {2}]
  %s9 = inlined_call_operand.vmem [shape: f32[1,2,128], index: 9, kind: output, shape index: {3}]
  %10 = xla_tuple %s6, %s7, %s8, %s9
  %s11 = sld [smem:[#allocation0]]
  $region58: #{bottleneck_forward.6} parent=0
    _
  %s13 = ssub.s32 1, %s11
  %s14 = scalar_select 0, %s13, %s11
  // Predicated region
  $region2: #{bottleneck_forward.6} parent=0 // pred_check
    _
  $region3: #{bottleneck_forward.6} parent=0 // pred_check_branch
    %16 = sbr.rel (0) target = $region5
  $region4: #{bottleneck_forward.6} parent=0 // pred_region
    _
  $region5: #{bottleneck_forward.6} parent=0 // pred_fallthru
    _
  // Predicated region
  $region6: #{bottleneck_forward.6} parent=0 // pred_check
    _
  $region7: #{bottleneck_forward.6} parent=0 // pred_check_branch
    %18 = sbr.rel (0) target = $region9
  $region8: #{bottleneck_forward.6} parent=0 // pred_region
    _
  $region9: #{bottleneck_forward.6} parent=0 // pred_fallthru
    _
  // Predicated region
  $region10: #{bottleneck_forward.6} parent=0 // pred_check
    _
  $region11: #{bottleneck_forward.6} parent=0 // pred_check_branch
    %20 = sbr.rel (0) target = $region13
  $region12: #{bottleneck_forward.6} parent=0 // pred_region
    _
  $region13: #{bottleneck_forward.6} parent=0 // pred_fallthru
    _
  // Predicated region
  $region14: #{bottleneck_forward.6} parent=0 // pred_check
    _
  $region15: #{bottleneck_forward.6} parent=0 // pred_check_branch
    %22 = sbr.rel (0) target = $region17
  $region16: #{bottleneck_forward.6} parent=0 // pred_region
    _
  $region17: #{bottleneck_forward.6} parent=0 // pred_fallthru
    _
  // Predicated region
  $region18: #{bottleneck_forward.6} parent=0 // pred_check
    _
  $region19: #{bottleneck_forward.6} parent=0 // pred_check_branch
    %24 = sbr.rel (0) target = $region21
  $region20: #{bottleneck_forward.6} parent=0 // pred_region
    _
  $region21: #{bottleneck_forward.6} parent=0 // pred_fallthru
    _
  // Predicated region
  $region22: #{bottleneck_forward.6} parent=0 // pred_check
    _
  $region23: #{bottleneck_forward.6} parent=0 // pred_check_branch
    %26 = sbr.rel (0) target = $region25
  $region24: #{bottleneck_forward.6} parent=0 // pred_region
    _
  $region25: #{bottleneck_forward.6} parent=0 // pred_fallthru
    _
  %v28 = vld [vmem:[%s0] sm:$0xf]
  %v29 = vld [vmem:[%s0 + $0x4] sm:$0xf]
  %v30 = vld [vmem:[%s0 + $0x8] sm:$0xf]
  %v31 = vld [vmem:[%s0 + $0xc] sm:$0xf]
  %v32 = vld [vmem:[%s0 + $0x10] sm:$0xf]
  %v33 = vld [vmem:[%s0 + $0x14] sm:$0xf]
  %v34 = vld [vmem:[%s0 + $0x18] sm:$0xf]
  %v35 = vld [vmem:[%s0 + $0x1c] sm:$0xf]
  %v36 = vld [vmem:[%s0 + $0x20] sm:$0xf]
  %v37 = vld [vmem:[%s0 + $0x24] sm:$0xf]
  %v38 = vld [vmem:[%s0 + $0x28] sm:$0xf]
  %v39 = vld [vmem:[%s0 + $0x2c] sm:$0xf]
  %v40 = vld [vmem:[%s0 + $0x30] sm:$0xf]
  %v41 = vld [vmem:[%s0 + $0x34] sm:$0xf]
  %v42 = vld [vmem:[%s0 + $0x38] sm:$0xf]
  %v43 = vld [vmem:[%s0 + $0x3c] sm:$0xf]
  %v44 = vld [vmem:[%s0 + $0x40] sm:$0xf]
  %v45 = vld [vmem:[%s0 + $0x44] sm:$0xf]
  %v46 = vld [vmem:[%s0 + $0x48] sm:$0xf]
  %v47 = vld [vmem:[%s0 + $0x4c] sm:$0xf]
  %v48 = vld [vmem:[%s0 + $0x50] sm:$0xf]
  %v49 = vld [vmem:[%s0 + $0x54] sm:$0xf]
  %v50 = vld [vmem:[%s0 + $0x58] sm:$0xf]
  %v51 = vld [vmem:[%s0 + $0x5c] sm:$0xf]
  %v52 = vld [vmem:[%s0 + $0x60] sm:$0xf]
  %v53 = vld [vmem:[%s0 + $0x64] sm:$0xf]
  %v54 = vld [vmem:[%s0 + $0x68] sm:$0xf]
  %v55 = vld [vmem:[%s0 + $0x6c] sm:$0xf]
  %v56 = vld [vmem:[%s0 + $0x70] sm:$0xf]
  %v57 = vld [vmem:[%s0 + $0x74] sm:$0xf]
  %v58 = vld [vmem:[%s0 + $0x78] sm:$0xf]
  %v59 = vld [vmem:[%s0 + $0x7c] sm:$0xf]
  %v60 = vld [vmem:[%s0 + $0x80] sm:$0xf]
  %v61 = vld [vmem:[%s0 + $0x84] sm:$0xf]
  %v62 = vld [vmem:[%s0 + $0x88] sm:$0xf]
  %v63 = vld [vmem:[%s0 + $0x8c] sm:$0xf]
  %v64 = vld [vmem:[%s0 + $0x90] sm:$0xf]
  %v65 = vld [vmem:[%s0 + $0x94] sm:$0xf]
  %v66 = vld [vmem:[%s0 + $0x98] sm:$0xf]
  %v67 = vld [vmem:[%s0 + $0x9c] sm:$0xf]
  %v68 = vld [vmem:[%s0 + $0xa0] sm:$0xf]
  %v69 = vld [vmem:[%s0 + $0xa4] sm:$0xf]
  %v70 = vld [vmem:[%s0 + $0xa8] sm:$0xf]
  %v71 = vld [vmem:[%s0 + $0xac] sm:$0xf]
  %v72 = vld [vmem:[%s0 + $0xb0] sm:$0xf]
  %v73 = vld [vmem:[%s0 + $0xb4] sm:$0xf]
  %v74 = vld [vmem:[%s0 + $0xb8] sm:$0xf]
  %v75 = vld [vmem:[%s0 + $0xbc] sm:$0xf]
  %v76 = vld [vmem:[%s0 + $0xc0] sm:$0xf]
  %v77 = vld [vmem:[%s0 + $0xc4] sm:$0xf]
  %v78 = vld [vmem:[%s0 + $0xc8] sm:$0xf]
  %v79 = vld [vmem:[%s0 + $0xcc] sm:$0xf]
  %v80 = vld [vmem:[%s0 + $0xd0] sm:$0xf]
  %v81 = vld [vmem:[%s0 + $0xd4] sm:$0xf]
  %v82 = vld [vmem:[%s0 + $0xd8] sm:$0xf]
  %v83 = vld [vmem:[%s0 + $0xdc] sm:$0xf]
  %v84 = vld [vmem:[%s0 + $0xe0] sm:$0xf]
  %v85 = vld [vmem:[%s0 + $0xe4] sm:$0xf]
  %v86 = vld [vmem:[%s0 + $0xe8] sm:$0xf]
  %v87 = vld [vmem:[%s0 + $0xec] sm:$0xf]
  %v88 = vld [vmem:[%s0 + $0xf0] sm:$0xf]
  %v89 = vld [vmem:[%s0 + $0xf4] sm:$0xf]
  %v90 = vld [vmem:[%s0 + $0xf8] sm:$0xf]
  %v91 = vld [vmem:[%s0 + $0xfc] sm:$0xf]
  %v92 = vunpack.c.l.bf16 %v28
  %v93 = vunpack.c.l.bf16 %v29
  %v94 = vunpack.c.l.bf16 %v30
  %v95 = vunpack.c.l.bf16 %v31
  %v96 = vunpack.c.l.bf16 %v32
  %v97 = vunpack.c.l.bf16 %v33
  %v98 = vunpack.c.l.bf16 %v34
  %v99 = vunpack.c.l.bf16 %v35
  %v100 = vunpack.c.l.bf16 %v36
  %v101 = vunpack.c.l.bf16 %v37
  %v102 = vunpack.c.l.bf16 %v38
  %v103 = vunpack.c.l.bf16 %v39
  %v104 = vunpack.c.l.bf16 %v40
  %v105 = vunpack.c.l.bf16 %v41
  %v106 = vunpack.c.l.bf16 %v42
  %v107 = vunpack.c.l.bf16 %v43
  %v108 = vunpack.c.l.bf16 %v44
  %v109 = vunpack.c.l.bf16 %v45
  %v110 = vunpack.c.l.bf16 %v46
  %v111 = vunpack.c.l.bf16 %v47
  %v112 = vunpack.c.l.bf16 %v48
  %v113 = vunpack.c.l.bf16 %v49
  %v114 = vunpack.c.l.bf16 %v50
  %v115 = vunpack.c.l.bf16 %v51
  %v116 = vunpack.c.l.bf16 %v52
  %v117 = vunpack.c.l.bf16 %v53
  %v118 = vunpack.c.l.bf16 %v54
  %v119 = vunpack.c.l.bf16 %v55
  %v120 = vunpack.c.l.bf16 %v56
  %v121 = vunpack.c.l.bf16 %v57
  %v122 = vunpack.c.l.bf16 %v58
  %v123 = vunpack.c.l.bf16 %v59
  %v124 = vunpack.c.l.bf16 %v60
  %v125 = vunpack.c.l.bf16 %v61
  %v126 = vunpack.c.l.bf16 %v62
  %v127 = vunpack.c.l.bf16 %v63
  %v128 = vunpack.c.l.bf16 %v64
  %v129 = vunpack.c.l.bf16 %v65
  %v130 = vunpack.c.l.bf16 %v66
  %v131 = vunpack.c.l.bf16 %v67
  %v132 = vunpack.c.l.bf16 %v68
  %v133 = vunpack.c.l.bf16 %v69
  %v134 = vunpack.c.l.bf16 %v70
  %v135 = vunpack.c.l.bf16 %v71
  %v136 = vunpack.c.l.bf16 %v72
  %v137 = vunpack.c.l.bf16 %v73
  %v138 = vunpack.c.l.bf16 %v74
  %v139 = vunpack.c.l.bf16 %v75
  %v140 = vunpack.c.l.bf16 %v76
  %v141 = vunpack.c.l.bf16 %v77
  %v142 = vunpack.c.l.bf16 %v78
  %v143 = vunpack.c.l.bf16 %v79
  %v144 = vunpack.c.l.bf16 %v80
  %v145 = vunpack.c.l.bf16 %v81
  %v146 = vunpack.c.l.bf16 %v82
  %v147 = vunpack.c.l.bf16 %v83
  %v148 = vunpack.c.l.bf16 %v84
  %v149 = vunpack.c.l.bf16 %v85
  %v150 = vunpack.c.l.bf16 %v86
  %v151 = vunpack.c.l.bf16 %v87
  %v152 = vunpack.c.l.bf16 %v88
  %v153 = vunpack.c.l.bf16 %v89
  %v154 = vunpack.c.l.bf16 %v90
  %v155 = vunpack.c.l.bf16 %v91
  %v156 = vld [vmem:[%s1] sm:$0x1]
  %v158 = vlaneseq
  %v159 = vshrl.u32 %v158, 7
  %v160 = vsub.s32 0, %v159
  %v161 = vrot.slane %v156, %v160
  %v163 = vmul.f32 %v92, %v161
  %v164 = vmul.f32 %v93, %v161
  %v165 = vmul.f32 %v94, %v161
  %v166 = vmul.f32 %v95, %v161
  %v167 = vmul.f32 %v96, %v161
  %v168 = vmul.f32 %v97, %v161
  %v169 = vmul.f32 %v98, %v161
  %v170 = vmul.f32 %v99, %v161
  %v171 = vmul.f32 %v100, %v161
  %v172 = vmul.f32 %v101, %v161
  %v173 = vmul.f32 %v102, %v161
  %v174 = vmul.f32 %v103, %v161
  %v175 = vmul.f32 %v104, %v161
  %v176 = vmul.f32 %v105, %v161
  %v177 = vmul.f32 %v106, %v161
  %v178 = vmul.f32 %v107, %v161
  %v179 = vmul.f32 %v108, %v161
  %v180 = vmul.f32 %v109, %v161
  %v181 = vmul.f32 %v110, %v161
  %v182 = vmul.f32 %v111, %v161
  %v183 = vmul.f32 %v112, %v161
  %v184 = vmul.f32 %v113, %v161
  %v185 = vmul.f32 %v114, %v161
  %v186 = vmul.f32 %v115, %v161
  %v187 = vmul.f32 %v116, %v161
  %v188 = vmul.f32 %v117, %v161
  %v189 = vmul.f32 %v118, %v161
  %v190 = vmul.f32 %v119, %v161
  %v191 = vmul.f32 %v120, %v161
  %v192 = vmul.f32 %v121, %v161
  %v193 = vmul.f32 %v122, %v161
  %v194 = vmul.f32 %v123, %v161
  %v195 = vmul.f32 %v124, %v161
  %v196 = vmul.f32 %v125, %v161
  %v197 = vmul.f32 %v126, %v161
  %v198 = vmul.f32 %v127, %v161
  %v199 = vmul.f32 %v128, %v161
  %v200 = vmul.f32 %v129, %v161
  %v201 = vmul.f32 %v130, %v161
  %v202 = vmul.f32 %v131, %v161
  %v203 = vmul.f32 %v132, %v161
  %v204 = vmul.f32 %v133, %v161
  %v205 = vmul.f32 %v134, %v161
  %v206 = vmul.f32 %v135, %v161
  %v207 = vmul.f32 %v136, %v161
  %v208 = vmul.f32 %v137, %v161
  %v209 = vmul.f32 %v138, %v161
  %v210 = vmul.f32 %v139, %v161
  %v211 = vmul.f32 %v140, %v161
  %v212 = vmul.f32 %v141, %v161
  %v213 = vmul.f32 %v142, %v161
  %v214 = vmul.f32 %v143, %v161
  %v215 = vmul.f32 %v144, %v161
  %v216 = vmul.f32 %v145, %v161
  %v217 = vmul.f32 %v146, %v161
  %v218 = vmul.f32 %v147, %v161
  %v219 = vmul.f32 %v148, %v161
  %v220 = vmul.f32 %v149, %v161
  %v221 = vmul.f32 %v150, %v161
  %v222 = vmul.f32 %v151, %v161
  %v223 = vmul.f32 %v152, %v161
  %v224 = vmul.f32 %v153, %v161
  %v225 = vmul.f32 %v154, %v161
  %v226 = vmul.f32 %v155, %v161
  %v227 = vld [vmem:[%s2] sm:$0x1]
  %v229 = vlaneseq
  %v230 = vshrl.u32 %v229, 7
  %v231 = vsub.s32 0, %v230
  %v232 = vrot.slane %v227, %v231
  %v234 = vadd.f32 %v163, %v232
  %v235 = vadd.f32 %v164, %v232
  %v236 = vadd.f32 %v165, %v232
  %v237 = vadd.f32 %v166, %v232
  %v238 = vadd.f32 %v167, %v232
  %v239 = vadd.f32 %v168, %v232
  %v240 = vadd.f32 %v169, %v232
  %v241 = vadd.f32 %v170, %v232
  %v242 = vadd.f32 %v171, %v232
  %v243 = vadd.f32 %v172, %v232
  %v244 = vadd.f32 %v173, %v232
  %v245 = vadd.f32 %v174, %v232
  %v246 = vadd.f32 %v175, %v232
  %v247 = vadd.f32 %v176, %v232
  %v248 = vadd.f32 %v177, %v232
  %v249 = vadd.f32 %v178, %v232
  %v250 = vadd.f32 %v179, %v232
  %v251 = vadd.f32 %v180, %v232
  %v252 = vadd.f32 %v181, %v232
  %v253 = vadd.f32 %v182, %v232
  %v254 = vadd.f32 %v183, %v232
  %v255 = vadd.f32 %v184, %v232
  %v256 = vadd.f32 %v185, %v232
  %v257 = vadd.f32 %v186, %v232
  %v258 = vadd.f32 %v187, %v232
  %v259 = vadd.f32 %v188, %v232
  %v260 = vadd.f32 %v189, %v232
  %v261 = vadd.f32 %v190, %v232
  %v262 = vadd.f32 %v191, %v232
  %v263 = vadd.f32 %v192, %v232
  %v264 = vadd.f32 %v193, %v232
  %v265 = vadd.f32 %v194, %v232
  %v266 = vadd.f32 %v195, %v232
  %v267 = vadd.f32 %v196, %v232
  %v268 = vadd.f32 %v197, %v232
  %v269 = vadd.f32 %v198, %v232
  %v270 = vadd.f32 %v199, %v232
  %v271 = vadd.f32 %v200, %v232
  %v272 = vadd.f32 %v201, %v232
  %v273 = vadd.f32 %v202, %v232
  %v274 = vadd.f32 %v203, %v232
  %v275 = vadd.f32 %v204, %v232
  %v276 = vadd.f32 %v205, %v232
  %v277 = vadd.f32 %v206, %v232
  %v278 = vadd.f32 %v207, %v232
  %v279 = vadd.f32 %v208, %v232
  %v280 = vadd.f32 %v209, %v232
  %v281 = vadd.f32 %v210, %v232
  %v282 = vadd.f32 %v211, %v232
  %v283 = vadd.f32 %v212, %v232
  %v284 = vadd.f32 %v213, %v232
  %v285 = vadd.f32 %v214, %v232
  %v286 = vadd.f32 %v215, %v232
  %v287 = vadd.f32 %v216, %v232
  %v288 = vadd.f32 %v217, %v232
  %v289 = vadd.f32 %v218, %v232
  %v290 = vadd.f32 %v219, %v232
  %v291 = vadd.f32 %v220, %v232
  %v292 = vadd.f32 %v221, %v232
  %v293 = vadd.f32 %v222, %v232
  %v294 = vadd.f32 %v223, %v232
  %v295 = vadd.f32 %v224, %v232
  %v296 = vadd.f32 %v225, %v232
  %v297 = vadd.f32 %v226, %v232
  %v298 = vmax.f32 %v234, 0.0
  %v299 = vmax.f32 %v235, 0.0
  %v300 = vmax.f32 %v236, 0.0
  %v301 = vmax.f32 %v237, 0.0
  %v302 = vmax.f32 %v238, 0.0
  %v303 = vmax.f32 %v239, 0.0
  %v304 = vmax.f32 %v240, 0.0
  %v305 = vmax.f32 %v241, 0.0
  %v306 = vmax.f32 %v242, 0.0
  %v307 = vmax.f32 %v243, 0.0
  %v308 = vmax.f32 %v244, 0.0
  %v309 = vmax.f32 %v245, 0.0
  %v310 = vmax.f32 %v246, 0.0
  %v311 = vmax.f32 %v247, 0.0
  %v312 = vmax.f32 %v248, 0.0
  %v313 = vmax.f32 %v249, 0.0
  %v314 = vmax.f32 %v250, 0.0
  %v315 = vmax.f32 %v251, 0.0
  %v316 = vmax.f32 %v252, 0.0
  %v317 = vmax.f32 %v253, 0.0
  %v318 = vmax.f32 %v254, 0.0
  %v319 = vmax.f32 %v255, 0.0
  %v320 = vmax.f32 %v256, 0.0
  %v321 = vmax.f32 %v257, 0.0
  %v322 = vmax.f32 %v258, 0.0
  %v323 = vmax.f32 %v259, 0.0
  %v324 = vmax.f32 %v260, 0.0
  %v325 = vmax.f32 %v261, 0.0
  %v326 = vmax.f32 %v262, 0.0
  %v327 = vmax.f32 %v263, 0.0
  %v328 = vmax.f32 %v264, 0.0
  %v329 = vmax.f32 %v265, 0.0
  %v330 = vmax.f32 %v266, 0.0
  %v331 = vmax.f32 %v267, 0.0
  %v332 = vmax.f32 %v268, 0.0
  %v333 = vmax.f32 %v269, 0.0
  %v334 = vmax.f32 %v270, 0.0
  %v335 = vmax.f32 %v271, 0.0
  %v336 = vmax.f32 %v272, 0.0
  %v337 = vmax.f32 %v273, 0.0
  %v338 = vmax.f32 %v274, 0.0
  %v339 = vmax.f32 %v275, 0.0
  %v340 = vmax.f32 %v276, 0.0
  %v341 = vmax.f32 %v277, 0.0
  %v342 = vmax.f32 %v278, 0.0
  %v343 = vmax.f32 %v279, 0.0
  %v344 = vmax.f32 %v280, 0.0
  %v345 = vmax.f32 %v281, 0.0
  %v346 = vmax.f32 %v282, 0.0
  %v347 = vmax.f32 %v283, 0.0
  %v348 = vmax.f32 %v284, 0.0
  %v349 = vmax.f32 %v285, 0.0
  %v350 = vmax.f32 %v286, 0.0
  %v351 = vmax.f32 %v287, 0.0
  %v352 = vmax.f32 %v288, 0.0
  %v353 = vmax.f32 %v289, 0.0
  %v354 = vmax.f32 %v290, 0.0
  %v355 = vmax.f32 %v291, 0.0
  %v356 = vmax.f32 %v292, 0.0
  %v357 = vmax.f32 %v293, 0.0
  %v358 = vmax.f32 %v294, 0.0
  %v359 = vmax.f32 %v295, 0.0
  %v360 = vmax.f32 %v296, 0.0
  %v361 = vmax.f32 %v297, 0.0
  %v362 = vpack.c.bf16 %v299, %v298
  %v363 = vpack.c.bf16 %v301, %v300
  %v364 = vpack.c.bf16 %v303, %v302
  %v365 = vpack.c.bf16 %v305, %v304
  %v366 = vpack.c.bf16 %v307, %v306
  %v367 = vpack.c.bf16 %v309, %v308
  %v368 = vpack.c.bf16 %v311, %v310
  %v369 = vpack.c.bf16 %v313, %v312
  %v370 = vpack.c.bf16 %v315, %v314
  %v371 = vpack.c.bf16 %v317, %v316
  %v372 = vpack.c.bf16 %v319, %v318
  %v373 = vpack.c.bf16 %v321, %v320
  %v374 = vpack.c.bf16 %v323, %v322
  %v375 = vpack.c.bf16 %v325, %v324
  %v376 = vpack.c.bf16 %v327, %v326
  %v377 = vpack.c.bf16 %v329, %v328
  %v378 = vpack.c.bf16 %v331, %v330
  %v379 = vpack.c.bf16 %v333, %v332
  %v380 = vpack.c.bf16 %v335, %v334
  %v381 = vpack.c.bf16 %v337, %v336
  %v382 = vpack.c.bf16 %v339, %v338
  %v383 = vpack.c.bf16 %v341, %v340
  %v384 = vpack.c.bf16 %v343, %v342
  %v385 = vpack.c.bf16 %v345, %v344
  %v386 = vpack.c.bf16 %v347, %v346
  %v387 = vpack.c.bf16 %v349, %v348
  %v388 = vpack.c.bf16 %v351, %v350
  %v389 = vpack.c.bf16 %v353, %v352
  %v390 = vpack.c.bf16 %v355, %v354
  %v391 = vpack.c.bf16 %v357, %v356
  %v392 = vpack.c.bf16 %v359, %v358
  %v393 = vpack.c.bf16 %v361, %v360
  %v394 = vld [vmem:[%s4] sm:$0xf]
  %v395 = vld [vmem:[%s4 + $0x4] sm:$0xf]
  %v396 = vld [vmem:[%s4 + $0x8] sm:$0xf]
  %v397 = vld [vmem:[%s4 + $0xc] sm:$0xf]
  %v398 = vld [vmem:[%s4 + $0x10] sm:$0xf]
  %v399 = vld [vmem:[%s4 + $0x14] sm:$0xf]
  %v400 = vld [vmem:[%s4 + $0x18] sm:$0xf]
  %v401 = vld [vmem:[%s4 + $0x1c] sm:$0xf]
  %v402 = vld [vmem:[%s4 + $0x20] sm:$0xf]
  %v403 = vld [vmem:[%s4 + $0x24] sm:$0xf]
  %v404 = vld [vmem:[%s4 + $0x28] sm:$0xf]
  %v405 = vld [vmem:[%s4 + $0x2c] sm:$0xf]
  %v406 = vld [vmem:[%s4 + $0x30] sm:$0xf]
  %v407 = vld [vmem:[%s4 + $0x34] sm:$0xf]
  %v408 = vld [vmem:[%s4 + $0x38] sm:$0xf]
  %v409 = vld [vmem:[%s4 + $0x3c] sm:$0xf]
  %v426 = vunpack.c.l.b16 %v394
  %v427 = vunpack.c.l.b16 %v395
  %v428 = vunpack.c.l.b16 %v396
  %v429 = vunpack.c.l.b16 %v397
  %v430 = vunpack.c.l.b16 %v398
  %v431 = vunpack.c.l.b16 %v399
  %v432 = vunpack.c.l.b16 %v400
  %v433 = vunpack.c.l.b16 %v401
  %v434 = vunpack.c.l.b16 %v402
  %v435 = vunpack.c.l.b16 %v403
  %v436 = vunpack.c.l.b16 %v404
  %v437 = vunpack.c.l.b16 %v405
  %v438 = vunpack.c.l.b16 %v406
  %v439 = vunpack.c.l.b16 %v407
  %v440 = vunpack.c.l.b16 %v408
  %v441 = vunpack.c.l.b16 %v409
  %v442 = vpack.c.b16 %v427, %v426
  %v443 = vpack.c.b16 %v429, %v428
  %v444 = vpack.c.b16 %v431, %v430
  %v445 = vpack.c.b16 %v433, %v432
  %v446 = vpack.c.b16 %v435, %v434
  %v447 = vpack.c.b16 %v437, %v436
  %v448 = vpack.c.b16 %v439, %v438
  %v449 = vpack.c.b16 %v441, %v440
  %458 = vmatprep.subr.bf16.mxu0 0
  %459 = vmatpush1.bf16.msra.mxu0 %v442
  %460 = vmatprep.subr.bf16.mxu0 0
  %461 = vmatpush1.bf16.msra.mxu0 %v443
  %462 = vmatprep.subr.bf16.mxu0 0
  %463 = vmatpush1.bf16.msra.mxu0 %v444
  %464 = vmatprep.subr.bf16.mxu0 0
  %465 = vmatpush1.bf16.msra.mxu0 %v445
  %466 = vmatprep.subr.bf16.mxu0 0
  %467 = vmatpush1.bf16.msra.mxu0 %v446
  %468 = vmatprep.subr.bf16.mxu0 0
  %469 = vmatpush1.bf16.msra.mxu0 %v447
  %470 = vmatprep.subr.bf16.mxu0 0
  %471 = vmatpush1.bf16.msra.mxu0 %v448
  %472 = vmatprep.subr.bf16.mxu0 0
  %473 = vmatpush1.bf16.msra.mxu0 %v449
  %474 = vmatprep.subr.bf16.mxu0 0
  %475 = vmatpush1.bf16.msra.mxu0 0
  %476 = vmatprep.subr.bf16.mxu0 0
  %477 = vmatpush1.bf16.msra.mxu0 0
  %478 = vmatprep.subr.bf16.mxu0 0
  %479 = vmatpush1.bf16.msra.mxu0 0
  %480 = vmatprep.subr.bf16.mxu0 0
  %481 = vmatpush1.bf16.msra.mxu0 0
  %482 = vmatprep.subr.bf16.mxu0 0
  %483 = vmatpush1.bf16.msra.mxu0 0
  %484 = vmatprep.subr.bf16.mxu0 0
  %485 = vmatpush1.bf16.msra.mxu0 0
  %486 = vmatprep.subr.bf16.mxu0 0
  %487 = vmatpush1.bf16.msra.mxu0 0
  %488 = vmatprep.subr.bf16.mxu0 0
  %489 = vmatpush1.bf16.msra.mxu0 0
  %490 = vmatprep.mubr.bf16.mxu0 0
  %491 = vmatmul.mubr.bf16.gmra.mrb[0].mxu0 %v362
  %v492 = vpop.f32.mrb[0].mxu0
  %v493 = vadd.f32 0.0, %v492
  %v494 = vpop.f32.mrb[0].mxu0
  %v495 = vpop.f32.mrb[0].mxu0
  %v496 = vadd.f32 0.0, %v495
  %v497 = vpop.f32.mrb[0].mxu0
  %498 = vmatprep.mubr.bf16.mxu0 0
  %499 = vmatmul.mubr.bf16.gmra.mrb[0].mxu0 %v363
  %v500 = vpop.f32.mrb[0].mxu0
  %v501 = vadd.f32 0.0, %v500
  %v502 = vpop.f32.mrb[0].mxu0
  %v503 = vpop.f32.mrb[0].mxu0
  %v504 = vadd.f32 0.0, %v503
  %v505 = vpop.f32.mrb[0].mxu0
  %506 = vmatprep.mubr.bf16.mxu0 0
  %507 = vmatmul.mubr.bf16.gmra.mrb[0].mxu0 %v364
  %v508 = vpop.f32.mrb[0].mxu0
  %v509 = vadd.f32 0.0, %v508
  %v510 = vpop.f32.mrb[0].mxu0
  %v511 = vpop.f32.mrb[0].mxu0
  %v512 = vadd.f32 0.0, %v511
  %v513 = vpop.f32.mrb[0].mxu0
  %514 = vmatprep.mubr.bf16.mxu0 0
  %515 = vmatmul.mubr.bf16.gmra.mrb[0].mxu0 %v365
  %v516 = vpop.f32.mrb[0].mxu0
  %v517 = vadd.f32 0.0, %v516
  %v518 = vpop.f32.mrb[0].mxu0
  %v519 = vpop.f32.mrb[0].mxu0
  %v520 = vadd.f32 0.0, %v519
  %v521 = vpop.f32.mrb[0].mxu0
  %522 = vmatprep.mubr.bf16.mxu0 0
  %523 = vmatmul.mubr.bf16.gmra.mrb[0].mxu0 %v366
  %v524 = vpop.f32.mrb[0].mxu0
  %v525 = vadd.f32 0.0, %v524
  %v526 = vpop.f32.mrb[0].mxu0
  %v527 = vpop.f32.mrb[0].mxu0
  %v528 = vadd.f32 0.0, %v527
  %v529 = vpop.f32.mrb[0].mxu0
  %530 = vmatprep.mubr.bf16.mxu0 0
  %531 = vmatmul.mubr.bf16.gmra.mrb[0].mxu0 %v367
  %v532 = vpop.f32.mrb[0].mxu0
  %v533 = vadd.f32 0.0, %v532
  %v534 = vpop.f32.mrb[0].mxu0
  %v535 = vpop.f32.mrb[0].mxu0
  %v536 = vadd.f32 0.0, %v535
  %v537 = vpop.f32.mrb[0].mxu0
  %538 = vmatprep.mubr.bf16.mxu0 0
  %539 = vmatmul.mubr.bf16.gmra.mrb[0].mxu0 %v368
  %v540 = vpop.f32.mrb[0].mxu0
  %v541 = vadd.f32 0.0, %v540
  %v542 = vpop.f32.mrb[0].mxu0
  %v543 = vpop.f32.mrb[0].mxu0
  %v544 = vadd.f32 0.0, %v543
  %v545 = vpop.f32.mrb[0].mxu0
  %546 = vmatprep.mubr.bf16.mxu0 0
  %547 = vmatmul.mubr.bf16.gmra.mrb[0].mxu0 %v369
  %v548 = vpop.f32.mrb[0].mxu0
  %v549 = vadd.f32 0.0, %v548
  %v550 = vpop.f32.mrb[0].mxu0
  %v551 = vpop.f32.mrb[0].mxu0
  %v552 = vadd.f32 0.0, %v551
  %v553 = vpop.f32.mrb[0].mxu0
  %554 = vmatprep.mubr.bf16.mxu0 0
  %555 = vmatmul.mubr.bf16.gmra.mrb[0].mxu0 %v370
  %v556 = vpop.f32.mrb[0].mxu0
  %v557 = vadd.f32 0.0, %v556
  %v558 = vpop.f32.mrb[0].mxu0
  %v559 = vpop.f32.mrb[0].mxu0
  %v560 = vadd.f32 0.0, %v559
  %v561 = vpop.f32.mrb[0].mxu0
  %562 = vmatprep.mubr.bf16.mxu0 0
  %563 = vmatmul.mubr.bf16.gmra.mrb[0].mxu0 %v371
  %v564 = vpop.f32.mrb[0].mxu0
  %v565 = vadd.f32 0.0, %v564
  %v566 = vpop.f32.mrb[0].mxu0
  %v567 = vpop.f32.mrb[0].mxu0
  %v568 = vadd.f32 0.0, %v567
  %v569 = vpop.f32.mrb[0].mxu0
  %570 = vmatprep.mubr.bf16.mxu0 0
  %571 = vmatmul.mubr.bf16.gmra.mrb[0].mxu0 %v372
  %v572 = vpop.f32.mrb[0].mxu0
  %v573 = vadd.f32 0.0, %v572
  %v574 = vpop.f32.mrb[0].mxu0
  %v575 = vpop.f32.mrb[0].mxu0
  %v576 = vadd.f32 0.0, %v575
  %v577 = vpop.f32.mrb[0].mxu0
  %578 = vmatprep.mubr.bf16.mxu0 0
  %579 = vmatmul.mubr.bf16.gmra.mrb[0].mxu0 %v373
  %v580 = vpop.f32.mrb[0].mxu0
  %v581 = vadd.f32 0.0, %v580
  %v582 = vpop.f32.mrb[0].mxu0
  %v583 = vpop.f32.mrb[0].mxu0
  %v584 = vadd.f32 0.0, %v583
  %v585 = vpop.f32.mrb[0].mxu0
  %586 = vmatprep.mubr.bf16.mxu0 0
  %587 = vmatmul.mubr.bf16.gmra.mrb[0].mxu0 %v374
  %v588 = vpop.f32.mrb[0].mxu0
  %v589 = vadd.f32 0.0, %v588
  %v590 = vpop.f32.mrb[0].mxu0
  %v591 = vpop.f32.mrb[0].mxu0
  %v592 = vadd.f32 0.0, %v591
  %v593 = vpop.f32.mrb[0].mxu0
  %594 = vmatprep.mubr.bf16.mxu0 0
  %595 = vmatmul.mubr.bf16.gmra.mrb[0].mxu0 %v375
  %v596 = vpop.f32.mrb[0].mxu0
  %v597 = vadd.f32 0.0, %v596
  %v598 = vpop.f32.mrb[0].mxu0
  %v599 = vpop.f32.mrb[0].mxu0
  %v600 = vadd.f32 0.0, %v599
  %v601 = vpop.f32.mrb[0].mxu0
  %602 = vmatprep.mubr.bf16.mxu0 0
  %603 = vmatmul.mubr.bf16.gmra.mrb[0].mxu0 %v376
  %v604 = vpop.f32.mrb[0].mxu0
  %v605 = vadd.f32 0.0, %v604
  %v606 = vpop.f32.mrb[0].mxu0
  %v607 = vpop.f32.mrb[0].mxu0
  %v608 = vadd.f32 0.0, %v607
  %v609 = vpop.f32.mrb[0].mxu0
  %610 = vmatprep.mubr.bf16.mxu0 0
  %611 = vmatmul.mubr.bf16.gmra.mrb[0].mxu0 %v377
  %v612 = vpop.f32.mrb[0].mxu0
  %v613 = vadd.f32 0.0, %v612
  %v614 = vpop.f32.mrb[0].mxu0
  %v615 = vpop.f32.mrb[0].mxu0
  %v616 = vadd.f32 0.0, %v615
  %v617 = vpop.f32.mrb[0].mxu0
  %618 = vmatprep.mubr.bf16.mxu0 0
  %619 = vmatmul.mubr.bf16.gmra.mrb[0].mxu0 %v378
  %v620 = vpop.f32.mrb[0].mxu0
  %v621 = vadd.f32 0.0, %v620
  %v622 = vpop.f32.mrb[0].mxu0
  %v623 = vpop.f32.mrb[0].mxu0
  %v624 = vadd.f32 0.0, %v623
  %v625 = vpop.f32.mrb[0].mxu0
  %626 = vmatprep.mubr.bf16.mxu0 0
  %627 = vmatmul.mubr.bf16.gmra.mrb[0].mxu0 %v379
  %v628 = vpop.f32.mrb[0].mxu0
  %v629 = vadd.f32 0.0, %v628
  %v630 = vpop.f32.mrb[0].mxu0
  %v631 = vpop.f32.mrb[0].mxu0
  %v632 = vadd.f32 0.0, %v631
  %v633 = vpop.f32.mrb[0].mxu0
  %634 = vmatprep.mubr.bf16.mxu0 0
  %635 = vmatmul.mubr.bf16.gmra.mrb[0].mxu0 %v380
  %v636 = vpop.f32.mrb[0].mxu0
  %v637 = vadd.f32 0.0, %v636
  %v638 = vpop.f32.mrb[0].mxu0
  %v639 = vpop.f32.mrb[0].mxu0
  %v640 = vadd.f32 0.0, %v639
  %v641 = vpop.f32.mrb[0].mxu0
  %642 = vmatprep.mubr.bf16.mxu0 0
  %643 = vmatmul.mubr.bf16.gmra.mrb[0].mxu0 %v381
  %v644 = vpop.f32.mrb[0].mxu0
  %v645 = vadd.f32 0.0, %v644
  %v646 = vpop.f32.mrb[0].mxu0
  %v647 = vpop.f32.mrb[0].mxu0
  %v648 = vadd.f32 0.0, %v647
  %v649 = vpop.f32.mrb[0].mxu0
  %650 = vmatprep.mubr.bf16.mxu0 0
  %651 = vmatmul.mubr.bf16.gmra.mrb[0].mxu0 %v382
  %v652 = vpop.f32.mrb[0].mxu0
  %v653 = vadd.f32 0.0, %v652
  %v654 = vpop.f32.mrb[0].mxu0
  %v655 = vpop.f32.mrb[0].mxu0
  %v656 = vadd.f32 0.0, %v655
  %v657 = vpop.f32.mrb[0].mxu0
  %658 = vmatprep.mubr.bf16.mxu0 0
  %659 = vmatmul.mubr.bf16.gmra.mrb[0].mxu0 %v383
  %v660 = vpop.f32.mrb[0].mxu0
  %v661 = vadd.f32 0.0, %v660
  %v662 = vpop.f32.mrb[0].mxu0
  %v663 = vpop.f32.mrb[0].mxu0
  %v664 = vadd.f32 0.0, %v663
  %v665 = vpop.f32.mrb[0].mxu0
  %666 = vmatprep.mubr.bf16.mxu0 0
  %667 = vmatmul.mubr.bf16.gmra.mrb[0].mxu0 %v384
  %v668 = vpop.f32.mrb[0].mxu0
  %v669 = vadd.f32 0.0, %v668
  %v670 = vpop.f32.mrb[0].mxu0
  %v671 = vpop.f32.mrb[0].mxu0
  %v672 = vadd.f32 0.0, %v671
  %v673 = vpop.f32.mrb[0].mxu0
  %674 = vmatprep.mubr.bf16.mxu0 0
  %675 = vmatmul.mubr.bf16.gmra.mrb[0].mxu0 %v385
  %v676 = vpop.f32.mrb[0].mxu0
  %v677 = vadd.f32 0.0, %v676
  %v678 = vpop.f32.mrb[0].mxu0
  %v679 = vpop.f32.mrb[0].mxu0
  %v680 = vadd.f32 0.0, %v679
  %v681 = vpop.f32.mrb[0].mxu0
  %682 = vmatprep.mubr.bf16.mxu0 0
  %683 = vmatmul.mubr.bf16.gmra.mrb[0].mxu0 %v386
  %v684 = vpop.f32.mrb[0].mxu0
  %v685 = vadd.f32 0.0, %v684
  %v686 = vpop.f32.mrb[0].mxu0
  %v687 = vpop.f32.mrb[0].mxu0
  %v688 = vadd.f32 0.0, %v687
  %v689 = vpop.f32.mrb[0].mxu0
  %690 = vmatprep.mubr.bf16.mxu0 0
  %691 = vmatmul.mubr.bf16.gmra.mrb[0].mxu0 %v387
  %v692 = vpop.f32.mrb[0].mxu0
  %v693 = vadd.f32 0.0, %v692
  %v694 = vpop.f32.mrb[0].mxu0
  %v695 = vpop.f32.mrb[0].mxu0
  %v696 = vadd.f32 0.0, %v695
  %v697 = vpop.f32.mrb[0].mxu0
  %698 = vmatprep.mubr.bf16.mxu0 0
  %699 = vmatmul.mubr.bf16.gmra.mrb[0].mxu0 %v388
  %v700 = vpop.f32.mrb[0].mxu0
  %v701 = vadd.f32 0.0, %v700
  %v702 = vpop.f32.mrb[0].mxu0
  %v703 = vpop.f32.mrb[0].mxu0
  %v704 = vadd.f32 0.0, %v703
  %v705 = vpop.f32.mrb[0].mxu0
  %706 = vmatprep.mubr.bf16.mxu0 0
  %707 = vmatmul.mubr.bf16.gmra.mrb[0].mxu0 %v389
  %v708 = vpop.f32.mrb[0].mxu0
  %v709 = vadd.f32 0.0, %v708
  %v710 = vpop.f32.mrb[0].mxu0
  %v711 = vpop.f32.mrb[0].mxu0
  %v712 = vadd.f32 0.0, %v711
  %v713 = vpop.f32.mrb[0].mxu0
  %714 = vmatprep.mubr.bf16.mxu0 0
  %715 = vmatmul.mubr.bf16.gmra.mrb[0].mxu0 %v390
  %v716 = vpop.f32.mrb[0].mxu0
  %v717 = vadd.f32 0.0, %v716
  %v718 = vpop.f32.mrb[0].mxu0
  %v719 = vpop.f32.mrb[0].mxu0
  %v720 = vadd.f32 0.0, %v719
  %v721 = vpop.f32.mrb[0].mxu0
  %722 = vmatprep.mubr.bf16.mxu0 0
  %723 = vmatmul.mubr.bf16.gmra.mrb[0].mxu0 %v391
  %v724 = vpop.f32.mrb[0].mxu0
  %v725 = vadd.f32 0.0, %v724
  %v726 = vpop.f32.mrb[0].mxu0
  %v727 = vpop.f32.mrb[0].mxu0
  %v728 = vadd.f32 0.0, %v727
  %v729 = vpop.f32.mrb[0].mxu0
  %730 = vmatprep.mubr.bf16.mxu0 0
  %731 = vmatmul.mubr.bf16.gmra.mrb[0].mxu0 %v392
  %v732 = vpop.f32.mrb[0].mxu0
  %v733 = vadd.f32 0.0, %v732
  %v734 = vpop.f32.mrb[0].mxu0
  %v735 = vpop.f32.mrb[0].mxu0
  %v736 = vadd.f32 0.0, %v735
  %v737 = vpop.f32.mrb[0].mxu0
  %738 = vmatprep.mubr.bf16.mxu0 0
  %739 = vmatmul.mubr.bf16.gmra.mrb[0].mxu0 %v393
  %v740 = vpop.f32.mrb[0].mxu0
  %v741 = vadd.f32 0.0, %v740
  %v742 = vpop.f32.mrb[0].mxu0
  %v743 = vpop.f32.mrb[0].mxu0
  %v744 = vadd.f32 0.0, %v743
  %v745 = vpop.f32.mrb[0].mxu0
  %746 = vdwg.mxu0
  %v747 = vld [vmem:[%s3] sm:$0xff]
  %v748 = vld [vmem:[%s3 + $0x8] sm:$0xff]
  %v749 = vld [vmem:[%s3 + $0x10] sm:$0xff]
  %v750 = vld [vmem:[%s3 + $0x18] sm:$0xff]
  %v751 = vld [vmem:[%s3 + $0x20] sm:$0xff]
  %v752 = vld [vmem:[%s3 + $0x28] sm:$0xff]
  %v753 = vld [vmem:[%s3 + $0x30] sm:$0xff]
  %v754 = vld [vmem:[%s3 + $0x38] sm:$0xff]
  %v755 = vld [vmem:[%s3 + $0x40] sm:$0xff]
  %v756 = vld [vmem:[%s3 + $0x48] sm:$0xff]
  %v757 = vld [vmem:[%s3 + $0x50] sm:$0xff]
  %v758 = vld [vmem:[%s3 + $0x58] sm:$0xff]
  %v759 = vld [vmem:[%s3 + $0x60] sm:$0xff]
  %v760 = vld [vmem:[%s3 + $0x68] sm:$0xff]
  %v761 = vld [vmem:[%s3 + $0x70] sm:$0xff]
  %v762 = vld [vmem:[%s3 + $0x78] sm:$0xff]
  %v763 = vld [vmem:[%s3 + $0x80] sm:$0xff]
  %v764 = vld [vmem:[%s3 + $0x88] sm:$0xff]
  %v765 = vld [vmem:[%s3 + $0x90] sm:$0xff]
  %v766 = vld [vmem:[%s3 + $0x98] sm:$0xff]
  %v767 = vld [vmem:[%s3 + $0xa0] sm:$0xff]
  %v768 = vld [vmem:[%s3 + $0xa8] sm:$0xff]
  %v769 = vld [vmem:[%s3 + $0xb0] sm:$0xff]
  %v770 = vld [vmem:[%s3 + $0xb8] sm:$0xff]
  %v771 = vld [vmem:[%s3 + $0xc0] sm:$0xff]
  %v772 = vld [vmem:[%s3 + $0xc8] sm:$0xff]
  %v773 = vld [vmem:[%s3 + $0xd0] sm:$0xff]
  %v774 = vld [vmem:[%s3 + $0xd8] sm:$0xff]
  %v775 = vld [vmem:[%s3 + $0xe0] sm:$0xff]
  %v776 = vld [vmem:[%s3 + $0xe8] sm:$0xff]
  %v777 = vld [vmem:[%s3 + $0xf0] sm:$0xff]
  %v778 = vld [vmem:[%s3 + $0xf8] sm:$0xff]
  %v779 = vld [vmem:[%s3 + $0x100] sm:$0xff]
  %v780 = vld [vmem:[%s3 + $0x108] sm:$0xff]
  %v781 = vld [vmem:[%s3 + $0x110] sm:$0xff]
  %v782 = vld [vmem:[%s3 + $0x118] sm:$0xff]
  %v783 = vld [vmem:[%s3 + $0x120] sm:$0xff]
  %v784 = vld [vmem:[%s3 + $0x128] sm:$0xff]
  %v785 = vld [vmem:[%s3 + $0x130] sm:$0xff]
  %v786 = vld [vmem:[%s3 + $0x138] sm:$0xff]
  %v787 = vld [vmem:[%s3 + $0x140] sm:$0xff]
  %v788 = vld [vmem:[%s3 + $0x148] sm:$0xff]
  %v789 = vld [vmem:[%s3 + $0x150] sm:$0xff]
  %v790 = vld [vmem:[%s3 + $0x158] sm:$0xff]
  %v791 = vld [vmem:[%s3 + $0x160] sm:$0xff]
  %v792 = vld [vmem:[%s3 + $0x168] sm:$0xff]
  %v793 = vld [vmem:[%s3 + $0x170] sm:$0xff]
  %v794 = vld [vmem:[%s3 + $0x178] sm:$0xff]
  %v795 = vld [vmem:[%s3 + $0x180] sm:$0xff]
  %v796 = vld [vmem:[%s3 + $0x188] sm:$0xff]
  %v797 = vld [vmem:[%s3 + $0x190] sm:$0xff]
  %v798 = vld [vmem:[%s3 + $0x198] sm:$0xff]
  %v799 = vld [vmem:[%s3 + $0x1a0] sm:$0xff]
  %v800 = vld [vmem:[%s3 + $0x1a8] sm:$0xff]
  %v801 = vld [vmem:[%s3 + $0x1b0] sm:$0xff]
  %v802 = vld [vmem:[%s3 + $0x1b8] sm:$0xff]
  %v803 = vld [vmem:[%s3 + $0x1c0] sm:$0xff]
  %v804 = vld [vmem:[%s3 + $0x1c8] sm:$0xff]
  %v805 = vld [vmem:[%s3 + $0x1d0] sm:$0xff]
  %v806 = vld [vmem:[%s3 + $0x1d8] sm:$0xff]
  %v807 = vld [vmem:[%s3 + $0x1e0] sm:$0xff]
  %v808 = vld [vmem:[%s3 + $0x1e8] sm:$0xff]
  %v809 = vld [vmem:[%s3 + $0x1f0] sm:$0xff]
  %v810 = vld [vmem:[%s3 + $0x1f8] sm:$0xff]
  %v811 = vpack.c.bf16 %v748, %v747
  %v812 = vpack.c.bf16 %v750, %v749
  %v813 = vpack.c.bf16 %v752, %v751
  %v814 = vpack.c.bf16 %v754, %v753
  %v815 = vpack.c.bf16 %v756, %v755
  %v816 = vpack.c.bf16 %v758, %v757
  %v817 = vpack.c.bf16 %v760, %v759
  %v818 = vpack.c.bf16 %v762, %v761
  %v819 = vpack.c.bf16 %v764, %v763
  %v820 = vpack.c.bf16 %v766, %v765
  %v821 = vpack.c.bf16 %v768, %v767
  %v822 = vpack.c.bf16 %v770, %v769
  %v823 = vpack.c.bf16 %v772, %v771
  %v824 = vpack.c.bf16 %v774, %v773
  %v825 = vpack.c.bf16 %v776, %v775
  %v826 = vpack.c.bf16 %v778, %v777
  %v827 = vpack.c.bf16 %v780, %v779
  %v828 = vpack.c.bf16 %v782, %v781
  %v829 = vpack.c.bf16 %v784, %v783
  %v830 = vpack.c.bf16 %v786, %v785
  %v831 = vpack.c.bf16 %v788, %v787
  %v832 = vpack.c.bf16 %v790, %v789
  %v833 = vpack.c.bf16 %v792, %v791
  %v834 = vpack.c.bf16 %v794, %v793
  %v835 = vpack.c.bf16 %v796, %v795
  %v836 = vpack.c.bf16 %v798, %v797
  %v837 = vpack.c.bf16 %v800, %v799
  %v838 = vpack.c.bf16 %v802, %v801
  %v839 = vpack.c.bf16 %v804, %v803
  %v840 = vpack.c.bf16 %v806, %v805
  %v841 = vpack.c.bf16 %v808, %v807
  %v842 = vpack.c.bf16 %v810, %v809
  %v843 = vld [vmem:[%s5] sm:$0x3]
  %vm844 = vcmask 31744
  %v846 = vsel %vm844, %v811, 0
  %v849 = vsel %vm844, %v812, 0
  %v852 = vsel %vm844, %v813, 0
  %v855 = vsel %vm844, %v814, 0
  %v858 = vsel %vm844, %v815, 0
  %v861 = vsel %vm844, %v816, 0
  %v864 = vsel %vm844, %v817, 0
  %v867 = vsel %vm844, %v818, 0
  %v870 = vsel %vm844, %v819, 0
  %v873 = vsel %vm844, %v820, 0
  %v876 = vsel %vm844, %v821, 0
  %v879 = vsel %vm844, %v822, 0
  %v882 = vsel %vm844, %v823, 0
  %v885 = vsel %vm844, %v824, 0
  %v888 = vsel %vm844, %v825, 0
  %v891 = vsel %vm844, %v826, 0
  %v894 = vsel %vm844, %v827, 0
  %v897 = vsel %vm844, %v828, 0
  %v900 = vsel %vm844, %v829, 0
  %v903 = vsel %vm844, %v830, 0
  %v906 = vsel %vm844, %v831, 0
  %v909 = vsel %vm844, %v832, 0
  %v912 = vsel %vm844, %v833, 0
  %v915 = vsel %vm844, %v834, 0
  %v918 = vsel %vm844, %v835, 0
  %v921 = vsel %vm844, %v836, 0
  %v924 = vsel %vm844, %v837, 0
  %v927 = vsel %vm844, %v838, 0
  %v930 = vsel %vm844, %v839, 0
  %v933 = vsel %vm844, %v840, 0
  %v936 = vsel %vm844, %v841, 0
  %v939 = vsel %vm844, %v842, 0
  %vm941 = vcmask 1041408
  %v943 = vsel %vm941, %v843, 0
  %945 = vmatprep.subr.bf16.mxu0 0
  %946 = vmatpush1.bf16.msra.mxu0 %v943
  %947 = vmatprep.subr.bf16.mxu0 0
  %948 = vmatpush1.bf16.msra.mxu0 0
  %949 = vmatprep.subr.bf16.mxu0 0
  %950 = vmatpush1.bf16.msra.mxu0 0
  %951 = vmatprep.subr.bf16.mxu0 0
  %952 = vmatpush1.bf16.msra.mxu0 0
  %953 = vmatprep.subr.bf16.mxu0 0
  %954 = vmatpush1.bf16.msra.mxu0 0
  %955 = vmatprep.subr.bf16.mxu0 0
  %956 = vmatpush1.bf16.msra.mxu0 0
  %957 = vmatprep.subr.bf16.mxu0 0
  %958 = vmatpush1.bf16.msra.mxu0 0
  %959 = vmatprep.subr.bf16.mxu0 0
  %960 = vmatpush1.bf16.msra.mxu0 0
  %961 = vmatprep.subr.bf16.mxu0 0
  %962 = vmatpush1.bf16.msra.mxu0 0
  %963 = vmatprep.subr.bf16.mxu0 0
  %964 = vmatpush1.bf16.msra.mxu0 0
  %965 = vmatprep.subr.bf16.mxu0 0
  %966 = vmatpush1.bf16.msra.mxu0 0
  %967 = vmatprep.subr.bf16.mxu0 0
  %968 = vmatpush1.bf16.msra.mxu0 0
  %969 = vmatprep.subr.bf16.mxu0 0
  %970 = vmatpush1.bf16.msra.mxu0 0
  %971 = vmatprep.subr.bf16.mxu0 0
  %972 = vmatpush1.bf16.msra.mxu0 0
  %973 = vmatprep.subr.bf16.mxu0 0
  %974 = vmatpush1.bf16.msra.mxu0 0
  %975 = vmatprep.subr.bf16.mxu0 0
  %976 = vmatpush1.bf16.msra.mxu0 0
  %977 = vmatprep.mubr.bf16.mxu0 0
  %978 = vmatmul.mubr.bf16.gmra.mrb[0].mxu0 %v846
  %v979 = vpop.f32.mrb[0].mxu0
  %v980 = vadd.f32 0.0, %v979
  %v981 = vpop.f32.mrb[0].mxu0
  %v982 = vpop.f32.mrb[0].mxu0
  %v983 = vadd.f32 0.0, %v982
  %v984 = vpop.f32.mrb[0].mxu0
  %985 = vmatprep.mubr.bf16.mxu0 0
  %986 = vmatmul.mubr.bf16.gmra.mrb[0].mxu0 %v849
  %v987 = vpop.f32.mrb[0].mxu0
  %v988 = vadd.f32 0.0, %v987
  %v989 = vpop.f32.mrb[0].mxu0
  %v990 = vpop.f32.mrb[0].mxu0
  %v991 = vadd.f32 0.0, %v990
  %v992 = vpop.f32.mrb[0].mxu0
  %993 = vmatprep.mubr.bf16.mxu0 0
  %994 = vmatmul.mubr.bf16.gmra.mrb[0].mxu0 %v852
  %v995 = vpop.f32.mrb[0].mxu0
  %v996 = vadd.f32 0.0, %v995
  %v997 = vpop.f32.mrb[0].mxu0
  %v998 = vpop.f32.mrb[0].mxu0
  %v999 = vadd.f32 0.0, %v998
  %v1000 = vpop.f32.mrb[0].mxu0
  %1001 = vmatprep.mubr.bf16.mxu0 0
  %1002 = vmatmul.mubr.bf16.gmra.mrb[0].mxu0 %v855
  %v1003 = vpop.f32.mrb[0].mxu0
  %v1004 = vadd.f32 0.0, %v1003
  %v1005 = vpop.f32.mrb[0].mxu0
  %v1006 = vpop.f32.mrb[0].mxu0
  %v1007 = vadd.f32 0.0, %v1006
  %v1008 = vpop.f32.mrb[0].mxu0
  %1009 = vmatprep.mubr.bf16.mxu0 0
  %1010 = vmatmul.mubr.bf16.gmra.mrb[0].mxu0 %v858
  %v1011 = vpop.f32.mrb[0].mxu0
  %v1012 = vadd.f32 0.0, %v1011
  %v1013 = vpop.f32.mrb[0].mxu0
  %v1014 = vpop.f32.mrb[0].mxu0
  %v1015 = vadd.f32 0.0, %v1014
  %v1016 = vpop.f32.mrb[0].mxu0
  %1017 = vmatprep.mubr.bf16.mxu0 0
  %1018 = vmatmul.mubr.bf16.gmra.mrb[0].mxu0 %v861
  %v1019 = vpop.f32.mrb[0].mxu0
  %v1020 = vadd.f32 0.0, %v1019
  %v1021 = vpop.f32.mrb[0].mxu0
  %v1022 = vpop.f32.mrb[0].mxu0
  %v1023 = vadd.f32 0.0, %v1022
  %v1024 = vpop.f32.mrb[0].mxu0
  %1025 = vmatprep.mubr.bf16.mxu0 0
  %1026 = vmatmul.mubr.bf16.gmra.mrb[0].mxu0 %v864
  %v1027 = vpop.f32.mrb[0].mxu0
  %v1028 = vadd.f32 0.0, %v1027
  %v1029 = vpop.f32.mrb[0].mxu0
  %v1030 = vpop.f32.mrb[0].mxu0
  %v1031 = vadd.f32 0.0, %v1030
  %v1032 = vpop.f32.mrb[0].mxu0
  %1033 = vmatprep.mubr.bf16.mxu0 0
  %1034 = vmatmul.mubr.bf16.gmra.mrb[0].mxu0 %v867
  %v1035 = vpop.f32.mrb[0].mxu0
  %v1036 = vadd.f32 0.0, %v1035
  %v1037 = vpop.f32.mrb[0].mxu0
  %v1038 = vpop.f32.mrb[0].mxu0
  %v1039 = vadd.f32 0.0, %v1038
  %v1040 = vpop.f32.mrb[0].mxu0
  %1041 = vmatprep.mubr.bf16.mxu0 0
  %1042 = vmatmul.mubr.bf16.gmra.mrb[0].mxu0 %v870
  %v1043 = vpop.f32.mrb[0].mxu0
  %v1044 = vadd.f32 0.0, %v1043
  %v1045 = vpop.f32.mrb[0].mxu0
  %v1046 = vpop.f32.mrb[0].mxu0
  %v1047 = vadd.f32 0.0, %v1046
  %v1048 = vpop.f32.mrb[0].mxu0
  %1049 = vmatprep.mubr.bf16.mxu0 0
  %1050 = vmatmul.mubr.bf16.gmra.mrb[0].mxu0 %v873
  %v1051 = vpop.f32.mrb[0].mxu0
  %v1052 = vadd.f32 0.0, %v1051
  %v1053 = vpop.f32.mrb[0].mxu0
  %v1054 = vpop.f32.mrb[0].mxu0
  %v1055 = vadd.f32 0.0, %v1054
  %v1056 = vpop.f32.mrb[0].mxu0
  %1057 = vmatprep.mubr.bf16.mxu0 0
  %1058 = vmatmul.mubr.bf16.gmra.mrb[0].mxu0 %v876
  %v1059 = vpop.f32.mrb[0].mxu0
  %v1060 = vadd.f32 0.0, %v1059
  %v1061 = vpop.f32.mrb[0].mxu0
  %v1062 = vpop.f32.mrb[0].mxu0
  %v1063 = vadd.f32 0.0, %v1062
  %v1064 = vpop.f32.mrb[0].mxu0
  %1065 = vmatprep.mubr.bf16.mxu0 0
  %1066 = vmatmul.mubr.bf16.gmra.mrb[0].mxu0 %v879
  %v1067 = vpop.f32.mrb[0].mxu0
  %v1068 = vadd.f32 0.0, %v1067
  %v1069 = vpop.f32.mrb[0].mxu0
  %v1070 = vpop.f32.mrb[0].mxu0
  %v1071 = vadd.f32 0.0, %v1070
  %v1072 = vpop.f32.mrb[0].mxu0
  %1073 = vmatprep.mubr.bf16.mxu0 0
  %1074 = vmatmul.mubr.bf16.gmra.mrb[0].mxu0 %v882
  %v1075 = vpop.f32.mrb[0].mxu0
  %v1076 = vadd.f32 0.0, %v1075
  %v1077 = vpop.f32.mrb[0].mxu0
  %v1078 = vpop.f32.mrb[0].mxu0
  %v1079 = vadd.f32 0.0, %v1078
  %v1080 = vpop.f32.mrb[0].mxu0
  %1081 = vmatprep.mubr.bf16.mxu0 0
  %1082 = vmatmul.mubr.bf16.gmra.mrb[0].mxu0 %v885
  %v1083 = vpop.f32.mrb[0].mxu0
  %v1084 = vadd.f32 0.0, %v1083
  %v1085 = vpop.f32.mrb[0].mxu0
  %v1086 = vpop.f32.mrb[0].mxu0
  %v1087 = vadd.f32 0.0, %v1086
  %v1088 = vpop.f32.mrb[0].mxu0
  %1089 = vmatprep.mubr.bf16.mxu0 0
  %1090 = vmatmul.mubr.bf16.gmra.mrb[0].mxu0 %v888
  %v1091 = vpop.f32.mrb[0].mxu0
  %v1092 = vadd.f32 0.0, %v1091
  %v1093 = vpop.f32.mrb[0].mxu0
  %v1094 = vpop.f32.mrb[0].mxu0
  %v1095 = vadd.f32 0.0, %v1094
  %v1096 = vpop.f32.mrb[0].mxu0
  %1097 = vmatprep.mubr.bf16.mxu0 0
  %1098 = vmatmul.mubr.bf16.gmra.mrb[0].mxu0 %v891
  %v1099 = vpop.f32.mrb[0].mxu0
  %v1100 = vadd.f32 0.0, %v1099
  %v1101 = vpop.f32.mrb[0].mxu0
  %v1102 = vpop.f32.mrb[0].mxu0
  %v1103 = vadd.f32 0.0, %v1102
  %v1104 = vpop.f32.mrb[0].mxu0
  %1105 = vmatprep.mubr.bf16.mxu0 0
  %1106 = vmatmul.mubr.bf16.gmra.mrb[0].mxu0 %v894
  %v1107 = vpop.f32.mrb[0].mxu0
  %v1108 = vadd.f32 0.0, %v1107
  %v1109 = vpop.f32.mrb[0].mxu0
  %v1110 = vpop.f32.mrb[0].mxu0
  %v1111 = vadd.f32 0.0, %v1110
  %v1112 = vpop.f32.mrb[0].mxu0
  %1113 = vmatprep.mubr.bf16.mxu0 0
  %1114 = vmatmul.mubr.bf16.gmra.mrb[0].mxu0 %v897
  %v1115 = vpop.f32.mrb[0].mxu0
  %v1116 = vadd.f32 0.0, %v1115
  %v1117 = vpop.f32.mrb[0].mxu0
  %v1118 = vpop.f32.mrb[0].mxu0
  %v1119 = vadd.f32 0.0, %v1118
  %v1120 = vpop.f32.mrb[0].mxu0
  %1121 = vmatprep.mubr.bf16.mxu0 0
  %1122 = vmatmul.mubr.bf16.gmra.mrb[0].mxu0 %v900
  %v1123 = vpop.f32.mrb[0].mxu0
  %v1124 = vadd.f32 0.0, %v1123
  %v1125 = vpop.f32.mrb[0].mxu0
  %v1126 = vpop.f32.mrb[0].mxu0
  %v1127 = vadd.f32 0.0, %v1126
  %v1128 = vpop.f32.mrb[0].mxu0
  %1129 = vmatprep.mubr.bf16.mxu0 0
  %1130 = vmatmul.mubr.bf16.gmra.mrb[0].mxu0 %v903
  %v1131 = vpop.f32.mrb[0].mxu0
  %v1132 = vadd.f32 0.0, %v1131
  %v1133 = vpop.f32.mrb[0].mxu0
  %v1134 = vpop.f32.mrb[0].mxu0
  %v1135 = vadd.f32 0.0, %v1134
  %v1136 = vpop.f32.mrb[0].mxu0
  %1137 = vmatprep.mubr.bf16.mxu0 0
  %1138 = vmatmul.mubr.bf16.gmra.mrb[0].mxu0 %v906
  %v1139 = vpop.f32.mrb[0].mxu0
  %v1140 = vadd.f32 0.0, %v1139
  %v1141 = vpop.f32.mrb[0].mxu0
  %v1142 = vpop.f32.mrb[0].mxu0
  %v1143 = vadd.f32 0.0, %v1142
  %v1144 = vpop.f32.mrb[0].mxu0
  %1145 = vmatprep.mubr.bf16.mxu0 0
  %1146 = vmatmul.mubr.bf16.gmra.mrb[0].mxu0 %v909
  %v1147 = vpop.f32.mrb[0].mxu0
  %v1148 = vadd.f32 0.0, %v1147
  %v1149 = vpop.f32.mrb[0].mxu0
  %v1150 = vpop.f32.mrb[0].mxu0
  %v1151 = vadd.f32 0.0, %v1150
  %v1152 = vpop.f32.mrb[0].mxu0
  %1153 = vmatprep.mubr.bf16.mxu0 0
  %1154 = vmatmul.mubr.bf16.gmra.mrb[0].mxu0 %v912
  %v1155 = vpop.f32.mrb[0].mxu0
  %v1156 = vadd.f32 0.0, %v1155
  %v1157 = vpop.f32.mrb[0].mxu0
  %v1158 = vpop.f32.mrb[0].mxu0
  %v1159 = vadd.f32 0.0, %v1158
  %v1160 = vpop.f32.mrb[0].mxu0
  %1161 = vmatprep.mubr.bf16.mxu0 0
  %1162 = vmatmul.mubr.bf16.gmra.mrb[0].mxu0 %v915
  %v1163 = vpop.f32.mrb[0].mxu0
  %v1164 = vadd.f32 0.0, %v1163
  %v1165 = vpop.f32.mrb[0].mxu0
  %v1166 = vpop.f32.mrb[0].mxu0
  %v1167 = vadd.f32 0.0, %v1166
  %v1168 = vpop.f32.mrb[0].mxu0
  %1169 = vmatprep.mubr.bf16.mxu0 0
  %1170 = vmatmul.mubr.bf16.gmra.mrb[0].mxu0 %v918
  %v1171 = vpop.f32.mrb[0].mxu0
  %v1172 = vadd.f32 0.0, %v1171
  %v1173 = vpop.f32.mrb[0].mxu0
  %v1174 = vpop.f32.mrb[0].mxu0
  %v1175 = vadd.f32 0.0, %v1174
  %v1176 = vpop.f32.mrb[0].mxu0
  %1177 = vmatprep.mubr.bf16.mxu0 0
  %1178 = vmatmul.mubr.bf16.gmra.mrb[0].mxu0 %v921
  %v1179 = vpop.f32.mrb[0].mxu0
  %v1180 = vadd.f32 0.0, %v1179
  %v1181 = vpop.f32.mrb[0].mxu0
  %v1182 = vpop.f32.mrb[0].mxu0
  %v1183 = vadd.f32 0.0, %v1182
  %v1184 = vpop.f32.mrb[0].mxu0
  %1185 = vmatprep.mubr.bf16.mxu0 0
  %1186 = vmatmul.mubr.bf16.gmra.mrb[0].mxu0 %v924
  %v1187 = vpop.f32.mrb[0].mxu0
  %v1188 = vadd.f32 0.0, %v1187
  %v1189 = vpop.f32.mrb[0].mxu0
  %v1190 = vpop.f32.mrb[0].mxu0
  %v1191 = vadd.f32 0.0, %v1190
  %v1192 = vpop.f32.mrb[0].mxu0
  %1193 = vmatprep.mubr.bf16.mxu0 0
  %1194 = vmatmul.mubr.bf16.gmra.mrb[0].mxu0 %v927
  %v1195 = vpop.f32.mrb[0].mxu0
  %v1196 = vadd.f32 0.0, %v1195
  %v1197 = vpop.f32.mrb[0].mxu0
  %v1198 = vpop.f32.mrb[0].mxu0
  %v1199 = vadd.f32 0.0, %v1198
  %v1200 = vpop.f32.mrb[0].mxu0
  %1201 = vmatprep.mubr.bf16.mxu0 0
  %1202 = vmatmul.mubr.bf16.gmra.mrb[0].mxu0 %v930
  %v1203 = vpop.f32.mrb[0].mxu0
  %v1204 = vadd.f32 0.0, %v1203
  %v1205 = vpop.f32.mrb[0].mxu0
  %v1206 = vpop.f32.mrb[0].mxu0
  %v1207 = vadd.f32 0.0, %v1206
  %v1208 = vpop.f32.mrb[0].mxu0
  %1209 = vmatprep.mubr.bf16.mxu0 0
  %1210 = vmatmul.mubr.bf16.gmra.mrb[0].mxu0 %v933
  %v1211 = vpop.f32.mrb[0].mxu0
  %v1212 = vadd.f32 0.0, %v1211
  %v1213 = vpop.f32.mrb[0].mxu0
  %v1214 = vpop.f32.mrb[0].mxu0
  %v1215 = vadd.f32 0.0, %v1214
  %v1216 = vpop.f32.mrb[0].mxu0
  %1217 = vmatprep.mubr.bf16.mxu0 0
  %1218 = vmatmul.mubr.bf16.gmra.mrb[0].mxu0 %v936
  %v1219 = vpop.f32.mrb[0].mxu0
  %v1220 = vadd.f32 0.0, %v1219
  %v1221 = vpop.f32.mrb[0].mxu0
  %v1222 = vpop.f32.mrb[0].mxu0
  %v1223 = vadd.f32 0.0, %v1222
  %v1224 = vpop.f32.mrb[0].mxu0
  %1225 = vmatprep.mubr.bf16.mxu0 0
  %1226 = vmatmul.mubr.bf16.gmra.mrb[0].mxu0 %v939
  %v1227 = vpop.f32.mrb[0].mxu0
  %v1228 = vadd.f32 0.0, %v1227
  %v1229 = vpop.f32.mrb[0].mxu0
  %v1230 = vpop.f32.mrb[0].mxu0
  %v1231 = vadd.f32 0.0, %v1230
  %v1232 = vpop.f32.mrb[0].mxu0
  %1233 = vdwg.mxu0
  %v1234 = vadd.f32 %v493, %v496
  %v1235 = vadd.f32 %v1234, %v501
  %v1236 = vadd.f32 %v1235, %v504
  %v1237 = vadd.f32 %v1236, %v509
  %v1238 = vadd.f32 %v1237, %v512
  %v1239 = vadd.f32 %v1238, %v517
  %v1240 = vadd.f32 %v1239, %v520
  %v1241 = vadd.f32 %v1240, %v525
  %v1242 = vadd.f32 %v1241, %v528
  %v1243 = vadd.f32 %v1242, %v533
  %v1244 = vadd.f32 %v1243, %v536
  %v1245 = vadd.f32 %v1244, %v541
  %v1246 = vadd.f32 %v1245, %v544
  %v1247 = vadd.f32 %v1246, %v549
  %v1248 = vadd.f32 %v1247, %v552
  %v1249 = vadd.f32 %v1248, %v557
  %v1250 = vadd.f32 %v1249, %v560
  %v1251 = vadd.f32 %v1250, %v565
  %v1252 = vadd.f32 %v1251, %v568
  %v1253 = vadd.f32 %v1252, %v573
  %v1254 = vadd.f32 %v1253, %v576
  %v1255 = vadd.f32 %v1254, %v581
  %v1256 = vadd.f32 %v1255, %v584
  %v1257 = vadd.f32 %v1256, %v589
  %v1258 = vadd.f32 %v1257, %v592
  %v1259 = vadd.f32 %v1258, %v597
  %v1260 = vadd.f32 %v1259, %v600
  %v1261 = vadd.f32 %v1260, %v605
  %v1262 = vadd.f32 %v1261, %v608
  %v1263 = vadd.f32 %v1262, %v613
  %v1264 = vadd.f32 %v1263, %v616
  %v1265 = vadd.f32 %v1264, %v621
  %v1266 = vadd.f32 %v1265, %v624
  %v1267 = vadd.f32 %v1266, %v629
  %v1268 = vadd.f32 %v1267, %v632
  %v1269 = vadd.f32 %v1268, %v637
  %v1270 = vadd.f32 %v1269, %v640
  %v1271 = vadd.f32 %v1270, %v645
  %v1272 = vadd.f32 %v1271, %v648
  %v1273 = vadd.f32 %v1272, %v653
  %v1274 = vadd.f32 %v1273, %v656
  %v1275 = vadd.f32 %v1274, %v661
  %v1276 = vadd.f32 %v1275, %v664
  %v1277 = vadd.f32 %v1276, %v669
  %v1278 = vadd.f32 %v1277, %v672
  %v1279 = vadd.f32 %v1278, %v677
  %v1280 = vadd.f32 %v1279, %v680
  %v1281 = vadd.f32 %v1280, %v685
  %v1282 = vadd.f32 %v1281, %v688
  %v1283 = vadd.f32 %v1282, %v693
  %v1284 = vadd.f32 %v1283, %v696
  %v1285 = vadd.f32 %v1284, %v701
  %v1286 = vadd.f32 %v1285, %v704
  %v1287 = vadd.f32 %v1286, %v709
  %v1288 = vadd.f32 %v1287, %v712
  %v1289 = vadd.f32 %v1288, %v717
  %v1290 = vadd.f32 %v1289, %v720
  %v1291 = vadd.f32 %v1290, %v725
  %v1292 = vadd.f32 %v1291, %v728
  %v1293 = vadd.f32 %v1292, %v733
  %v1294 = vadd.f32 %v1293, %v736
  %v1295 = vadd.f32 %v1294, %v741
  %v1296 = vadd.f32 %v1295, %v744
  %v1297 = vrot.slane %v1296, 4
  %v1298 = vadd.f32 %v1296, %v1297
  %v1299 = vrot.slane %v1298, 2
  %v1300 = vadd.f32 %v1298, %v1299
  %v1301 = vrot.slane %v1300, 1
  %v1302 = vadd.f32 %v1300, %v1301
  %v1303 = vmul.f32 %v493, %v493
  %v1304 = vmul.f32 %v496, %v496
  %v1305 = vmul.f32 %v501, %v501
  %v1306 = vmul.f32 %v504, %v504
  %v1307 = vmul.f32 %v509, %v509
  %v1308 = vmul.f32 %v512, %v512
  %v1309 = vmul.f32 %v517, %v517
  %v1310 = vmul.f32 %v520, %v520
  %v1311 = vmul.f32 %v525, %v525
  %v1312 = vmul.f32 %v528, %v528
  %v1313 = vmul.f32 %v533, %v533
  %v1314 = vmul.f32 %v536, %v536
  %v1315 = vmul.f32 %v541, %v541
  %v1316 = vmul.f32 %v544, %v544
  %v1317 = vmul.f32 %v549, %v549
  %v1318 = vmul.f32 %v552, %v552
  %v1319 = vmul.f32 %v557, %v557
  %v1320 = vmul.f32 %v560, %v560
  %v1321 = vmul.f32 %v565, %v565
  %v1322 = vmul.f32 %v568, %v568
  %v1323 = vmul.f32 %v573, %v573
  %v1324 = vmul.f32 %v576, %v576
  %v1325 = vmul.f32 %v581, %v581
  %v1326 = vmul.f32 %v584, %v584
  %v1327 = vmul.f32 %v589, %v589
  %v1328 = vmul.f32 %v592, %v592
  %v1329 = vmul.f32 %v597, %v597
  %v1330 = vmul.f32 %v600, %v600
  %v1331 = vmul.f32 %v605, %v605
  %v1332 = vmul.f32 %v608, %v608
  %v1333 = vmul.f32 %v613, %v613
  %v1334 = vmul.f32 %v616, %v616
  %v1335 = vmul.f32 %v621, %v621
  %v1336 = vmul.f32 %v624, %v624
  %v1337 = vmul.f32 %v629, %v629
  %v1338 = vmul.f32 %v632, %v632
  %v1339 = vmul.f32 %v637, %v637
  %v1340 = vmul.f32 %v640, %v640
  %v1341 = vmul.f32 %v645, %v645
  %v1342 = vmul.f32 %v648, %v648
  %v1343 = vmul.f32 %v653, %v653
  %v1344 = vmul.f32 %v656, %v656
  %v1345 = vmul.f32 %v661, %v661
  %v1346 = vmul.f32 %v664, %v664
  %v1347 = vmul.f32 %v669, %v669
  %v1348 = vmul.f32 %v672, %v672
  %v1349 = vmul.f32 %v677, %v677
  %v1350 = vmul.f32 %v680, %v680
  %v1351 = vmul.f32 %v685, %v685
  %v1352 = vmul.f32 %v688, %v688
  %v1353 = vmul.f32 %v693, %v693
  %v1354 = vmul.f32 %v696, %v696
  %v1355 = vmul.f32 %v701, %v701
  %v1356 = vmul.f32 %v704, %v704
  %v1357 = vmul.f32 %v709, %v709
  %v1358 = vmul.f32 %v712, %v712
  %v1359 = vmul.f32 %v717, %v717
  %v1360 = vmul.f32 %v720, %v720
  %v1361 = vmul.f32 %v725, %v725
  %v1362 = vmul.f32 %v728, %v728
  %v1363 = vmul.f32 %v733, %v733
  %v1364 = vmul.f32 %v736, %v736
  %v1365 = vmul.f32 %v741, %v741
  %v1366 = vmul.f32 %v744, %v744
  %v1367 = vadd.f32 %v1303, %v1304
  %v1368 = vadd.f32 %v1367, %v1305
  %v1369 = vadd.f32 %v1368, %v1306
  %v1370 = vadd.f32 %v1369, %v1307
  %v1371 = vadd.f32 %v1370, %v1308
  %v1372 = vadd.f32 %v1371, %v1309
  %v1373 = vadd.f32 %v1372, %v1310
  %v1374 = vadd.f32 %v1373, %v1311
  %v1375 = vadd.f32 %v1374, %v1312
  %v1376 = vadd.f32 %v1375, %v1313
  %v1377 = vadd.f32 %v1376, %v1314
  %v1378 = vadd.f32 %v1377, %v1315
  %v1379 = vadd.f32 %v1378, %v1316
  %v1380 = vadd.f32 %v1379, %v1317
  %v1381 = vadd.f32 %v1380, %v1318
  %v1382 = vadd.f32 %v1381, %v1319
  %v1383 = vadd.f32 %v1382, %v1320
  %v1384 = vadd.f32 %v1383, %v1321
  %v1385 = vadd.f32 %v1384, %v1322
  %v1386 = vadd.f32 %v1385, %v1323
  %v1387 = vadd.f32 %v1386, %v1324
  %v1388 = vadd.f32 %v1387, %v1325
  %v1389 = vadd.f32 %v1388, %v1326
  %v1390 = vadd.f32 %v1389, %v1327
  %v1391 = vadd.f32 %v1390, %v1328
  %v1392 = vadd.f32 %v1391, %v1329
  %v1393 = vadd.f32 %v1392, %v1330
  %v1394 = vadd.f32 %v1393, %v1331
  %v1395 = vadd.f32 %v1394, %v1332
  %v1396 = vadd.f32 %v1395, %v1333
  %v1397 = vadd.f32 %v1396, %v1334
  %v1398 = vadd.f32 %v1397, %v1335
  %v1399 = vadd.f32 %v1398, %v1336
  %v1400 = vadd.f32 %v1399, %v1337
  %v1401 = vadd.f32 %v1400, %v1338
  %v1402 = vadd.f32 %v1401, %v1339
  %v1403 = vadd.f32 %v1402, %v1340
  %v1404 = vadd.f32 %v1403, %v1341
  %v1405 = vadd.f32 %v1404, %v1342
  %v1406 = vadd.f32 %v1405, %v1343
  %v1407 = vadd.f32 %v1406, %v1344
  %v1408 = vadd.f32 %v1407, %v1345
  %v1409 = vadd.f32 %v1408, %v1346
  %v1410 = vadd.f32 %v1409, %v1347
  %v1411 = vadd.f32 %v1410, %v1348
  %v1412 = vadd.f32 %v1411, %v1349
  %v1413 = vadd.f32 %v1412, %v1350
  %v1414 = vadd.f32 %v1413, %v1351
  %v1415 = vadd.f32 %v1414, %v1352
  %v1416 = vadd.f32 %v1415, %v1353
  %v1417 = vadd.f32 %v1416, %v1354
  %v1418 = vadd.f32 %v1417, %v1355
  %v1419 = vadd.f32 %v1418, %v1356
  %v1420 = vadd.f32 %v1419, %v1357
  %v1421 = vadd.f32 %v1420, %v1358
  %v1422 = vadd.f32 %v1421, %v1359
  %v1423 = vadd.f32 %v1422, %v1360
  %v1424 = vadd.f32 %v1423, %v1361
  %v1425 = vadd.f32 %v1424, %v1362
  %v1426 = vadd.f32 %v1425, %v1363
  %v1427 = vadd.f32 %v1426, %v1364
  %v1428 = vadd.f32 %v1427, %v1365
  %v1429 = vadd.f32 %v1428, %v1366
  %v1430 = vrot.slane %v1429, 4
  %v1431 = vadd.f32 %v1429, %v1430
  %v1432 = vrot.slane %v1431, 2
  %v1433 = vadd.f32 %v1431, %v1432
  %v1434 = vrot.slane %v1433, 1
  %v1435 = vadd.f32 %v1433, %v1434
  %vm1436 = vcmask 1040384
  %v1437 = vsel %vm1436, %v1302, %v1435
  %1438 = vst [vmem:[%s8] sm:$0x3] %v1437
  %v1439 = vadd.f32 %v980, %v983
  %v1440 = vadd.f32 %v1439, %v988
  %v1441 = vadd.f32 %v1440, %v991
  %v1442 = vadd.f32 %v1441, %v996
  %v1443 = vadd.f32 %v1442, %v999
  %v1444 = vadd.f32 %v1443, %v1004
  %v1445 = vadd.f32 %v1444, %v1007
  %v1446 = vadd.f32 %v1445, %v1012
  %v1447 = vadd.f32 %v1446, %v1015
  %v1448 = vadd.f32 %v1447, %v1020
  %v1449 = vadd.f32 %v1448, %v1023
  %v1450 = vadd.f32 %v1449, %v1028
  %v1451 = vadd.f32 %v1450, %v1031
  %v1452 = vadd.f32 %v1451, %v1036
  %v1453 = vadd.f32 %v1452, %v1039
  %v1454 = vadd.f32 %v1453, %v1044
  %v1455 = vadd.f32 %v1454, %v1047
  %v1456 = vadd.f32 %v1455, %v1052
  %v1457 = vadd.f32 %v1456, %v1055
  %v1458 = vadd.f32 %v1457, %v1060
  %v1459 = vadd.f32 %v1458, %v1063
  %v1460 = vadd.f32 %v1459, %v1068
  %v1461 = vadd.f32 %v1460, %v1071
  %v1462 = vadd.f32 %v1461, %v1076
  %v1463 = vadd.f32 %v1462, %v1079
  %v1464 = vadd.f32 %v1463, %v1084
  %v1465 = vadd.f32 %v1464, %v1087
  %v1466 = vadd.f32 %v1465, %v1092
  %v1467 = vadd.f32 %v1466, %v1095
  %v1468 = vadd.f32 %v1467, %v1100
  %v1469 = vadd.f32 %v1468, %v1103
  %v1470 = vadd.f32 %v1469, %v1108
  %v1471 = vadd.f32 %v1470, %v1111
  %v1472 = vadd.f32 %v1471, %v1116
  %v1473 = vadd.f32 %v1472, %v1119
  %v1474 = vadd.f32 %v1473, %v1124
  %v1475 = vadd.f32 %v1474, %v1127
  %v1476 = vadd.f32 %v1475, %v1132
  %v1477 = vadd.f32 %v1476, %v1135
  %v1478 = vadd.f32 %v1477, %v1140
  %v1479 = vadd.f32 %v1478, %v1143
  %v1480 = vadd.f32 %v1479, %v1148
  %v1481 = vadd.f32 %v1480, %v1151
  %v1482 = vadd.f32 %v1481, %v1156
  %v1483 = vadd.f32 %v1482, %v1159
  %v1484 = vadd.f32 %v1483, %v1164
  %v1485 = vadd.f32 %v1484, %v1167
  %v1486 = vadd.f32 %v1485, %v1172
  %v1487 = vadd.f32 %v1486, %v1175
  %v1488 = vadd.f32 %v1487, %v1180
  %v1489 = vadd.f32 %v1488, %v1183
  %v1490 = vadd.f32 %v1489, %v1188
  %v1491 = vadd.f32 %v1490, %v1191
  %v1492 = vadd.f32 %v1491, %v1196
  %v1493 = vadd.f32 %v1492, %v1199
  %v1494 = vadd.f32 %v1493, %v1204
  %v1495 = vadd.f32 %v1494, %v1207
  %v1496 = vadd.f32 %v1495, %v1212
  %v1497 = vadd.f32 %v1496, %v1215
  %v1498 = vadd.f32 %v1497, %v1220
  %v1499 = vadd.f32 %v1498, %v1223
  %v1500 = vadd.f32 %v1499, %v1228
  %v1501 = vadd.f32 %v1500, %v1231
  %v1502 = vrot.slane %v1501, 4
  %v1503 = vadd.f32 %v1501, %v1502
  %v1504 = vrot.slane %v1503, 2
  %v1505 = vadd.f32 %v1503, %v1504
  %v1506 = vrot.slane %v1505, 1
  %v1507 = vadd.f32 %v1505, %v1506
  %v1508 = vmul.f32 %v980, %v980
  %v1509 = vmul.f32 %v983, %v983
  %v1510 = vmul.f32 %v988, %v988
  %v1511 = vmul.f32 %v991, %v991
  %v1512 = vmul.f32 %v996, %v996
  %v1513 = vmul.f32 %v999, %v999
  %v1514 = vmul.f32 %v1004, %v1004
  %v1515 = vmul.f32 %v1007, %v1007
  %v1516 = vmul.f32 %v1012, %v1012
  %v1517 = vmul.f32 %v1015, %v1015
  %v1518 = vmul.f32 %v1020, %v1020
  %v1519 = vmul.f32 %v1023, %v1023
  %v1520 = vmul.f32 %v1028, %v1028
  %v1521 = vmul.f32 %v1031, %v1031
  %v1522 = vmul.f32 %v1036, %v1036
  %v1523 = vmul.f32 %v1039, %v1039
  %v1524 = vmul.f32 %v1044, %v1044
  %v1525 = vmul.f32 %v1047, %v1047
  %v1526 = vmul.f32 %v1052, %v1052
  %v1527 = vmul.f32 %v1055, %v1055
  %v1528 = vmul.f32 %v1060, %v1060
  %v1529 = vmul.f32 %v1063, %v1063
  %v1530 = vmul.f32 %v1068, %v1068
  %v1531 = vmul.f32 %v1071, %v1071
  %v1532 = vmul.f32 %v1076, %v1076
  %v1533 = vmul.f32 %v1079, %v1079
  %v1534 = vmul.f32 %v1084, %v1084
  %v1535 = vmul.f32 %v1087, %v1087
  %v1536 = vmul.f32 %v1092, %v1092
  %v1537 = vmul.f32 %v1095, %v1095
  %v1538 = vmul.f32 %v1100, %v1100
  %v1539 = vmul.f32 %v1103, %v1103
  %v1540 = vmul.f32 %v1108, %v1108
  %v1541 = vmul.f32 %v1111, %v1111
  %v1542 = vmul.f32 %v1116, %v1116
  %v1543 = vmul.f32 %v1119, %v1119
  %v1544 = vmul.f32 %v1124, %v1124
  %v1545 = vmul.f32 %v1127, %v1127
  %v1546 = vmul.f32 %v1132, %v1132
  %v1547 = vmul.f32 %v1135, %v1135
  %v1548 = vmul.f32 %v1140, %v1140
  %v1549 = vmul.f32 %v1143, %v1143
  %v1550 = vmul.f32 %v1148, %v1148
  %v1551 = vmul.f32 %v1151, %v1151
  %v1552 = vmul.f32 %v1156, %v1156
  %v1553 = vmul.f32 %v1159, %v1159
  %v1554 = vmul.f32 %v1164, %v1164
  %v1555 = vmul.f32 %v1167, %v1167
  %v1556 = vmul.f32 %v1172, %v1172
  %v1557 = vmul.f32 %v1175, %v1175
  %v1558 = vmul.f32 %v1180, %v1180
  %v1559 = vmul.f32 %v1183, %v1183
  %v1560 = vmul.f32 %v1188, %v1188
  %v1561 = vmul.f32 %v1191, %v1191
  %v1562 = vmul.f32 %v1196, %v1196
  %v1563 = vmul.f32 %v1199, %v1199
  %v1564 = vmul.f32 %v1204, %v1204
  %v1565 = vmul.f32 %v1207, %v1207
  %v1566 = vmul.f32 %v1212, %v1212
  %v1567 = vmul.f32 %v1215, %v1215
  %v1568 = vmul.f32 %v1220, %v1220
  %v1569 = vmul.f32 %v1223, %v1223
  %v1570 = vmul.f32 %v1228, %v1228
  %v1571 = vmul.f32 %v1231, %v1231
  %v1572 = vadd.f32 %v1508, %v1509
  %v1573 = vadd.f32 %v1572, %v1510
  %v1574 = vadd.f32 %v1573, %v1511
  %v1575 = vadd.f32 %v1574, %v1512
  %v1576 = vadd.f32 %v1575, %v1513
  %v1577 = vadd.f32 %v1576, %v1514
  %v1578 = vadd.f32 %v1577, %v1515
  %v1579 = vadd.f32 %v1578, %v1516
  %v1580 = vadd.f32 %v1579, %v1517
  %v1581 = vadd.f32 %v1580, %v1518
  %v1582 = vadd.f32 %v1581, %v1519
  %v1583 = vadd.f32 %v1582, %v1520
  %v1584 = vadd.f32 %v1583, %v1521
  %v1585 = vadd.f32 %v1584, %v1522
  %v1586 = vadd.f32 %v1585, %v1523
  %v1587 = vadd.f32 %v1586, %v1524
  %v1588 = vadd.f32 %v1587, %v1525
  %v1589 = vadd.f32 %v1588, %v1526
  %v1590 = vadd.f32 %v1589, %v1527
  %v1591 = vadd.f32 %v1590, %v1528
  %v1592 = vadd.f32 %v1591, %v1529
  %v1593 = vadd.f32 %v1592, %v1530
  %v1594 = vadd.f32 %v1593, %v1531
  %v1595 = vadd.f32 %v1594, %v1532
  %v1596 = vadd.f32 %v1595, %v1533
  %v1597 = vadd.f32 %v1596, %v1534
  %v1598 = vadd.f32 %v1597, %v1535
  %v1599 = vadd.f32 %v1598, %v1536
  %v1600 = vadd.f32 %v1599, %v1537
  %v1601 = vadd.f32 %v1600, %v1538
  %v1602 = vadd.f32 %v1601, %v1539
  %v1603 = vadd.f32 %v1602, %v1540
  %v1604 = vadd.f32 %v1603, %v1541
  %v1605 = vadd.f32 %v1604, %v1542
  %v1606 = vadd.f32 %v1605, %v1543
  %v1607 = vadd.f32 %v1606, %v1544
  %v1608 = vadd.f32 %v1607, %v1545
  %v1609 = vadd.f32 %v1608, %v1546
  %v1610 = vadd.f32 %v1609, %v1547
  %v1611 = vadd.f32 %v1610, %v1548
  %v1612 = vadd.f32 %v1611, %v1549
  %v1613 = vadd.f32 %v1612, %v1550
  %v1614 = vadd.f32 %v1613, %v1551
  %v1615 = vadd.f32 %v1614, %v1552
  %v1616 = vadd.f32 %v1615, %v1553
  %v1617 = vadd.f32 %v1616, %v1554
  %v1618 = vadd.f32 %v1617, %v1555
  %v1619 = vadd.f32 %v1618, %v1556
  %v1620 = vadd.f32 %v1619, %v1557
  %v1621 = vadd.f32 %v1620, %v1558
  %v1622 = vadd.f32 %v1621, %v1559
  %v1623 = vadd.f32 %v1622, %v1560
  %v1624 = vadd.f32 %v1623, %v1561
  %v1625 = vadd.f32 %v1624, %v1562
  %v1626 = vadd.f32 %v1625, %v1563
  %v1627 = vadd.f32 %v1626, %v1564
  %v1628 = vadd.f32 %v1627, %v1565
  %v1629 = vadd.f32 %v1628, %v1566
  %v1630 = vadd.f32 %v1629, %v1567
  %v1631 = vadd.f32 %v1630, %v1568
  %v1632 = vadd.f32 %v1631, %v1569
  %v1633 = vadd.f32 %v1632, %v1570
  %v1634 = vadd.f32 %v1633, %v1571
  %v1635 = vrot.slane %v1634, 4
  %v1636 = vadd.f32 %v1634, %v1635
  %v1637 = vrot.slane %v1636, 2
  %v1638 = vadd.f32 %v1636, %v1637
  %v1639 = vrot.slane %v1638, 1
  %v1640 = vadd.f32 %v1638, %v1639
  %v1641 = vsel %vm1436, %v1507, %v1640
  %1642 = vst [vmem:[%s9] sm:$0x3] %v1641
  %v1643 = vpack.c.bf16 %v496, %v493
  %v1644 = vpack.c.bf16 %v504, %v501
  %v1645 = vpack.c.bf16 %v512, %v509
  %v1646 = vpack.c.bf16 %v520, %v517
  %v1647 = vpack.c.bf16 %v528, %v525
  %v1648 = vpack.c.bf16 %v536, %v533
  %v1649 = vpack.c.bf16 %v544, %v541
  %v1650 = vpack.c.bf16 %v552, %v549
  %v1651 = vpack.c.bf16 %v560, %v557
  %v1652 = vpack.c.bf16 %v568, %v565
  %v1653 = vpack.c.bf16 %v576, %v573
  %v1654 = vpack.c.bf16 %v584, %v581
  %v1655 = vpack.c.bf16 %v592, %v589
  %v1656 = vpack.c.bf16 %v600, %v597
  %v1657 = vpack.c.bf16 %v608, %v605
  %v1658 = vpack.c.bf16 %v616, %v613
  %v1659 = vpack.c.bf16 %v624, %v621
  %v1660 = vpack.c.bf16 %v632, %v629
  %v1661 = vpack.c.bf16 %v640, %v637
  %v1662 = vpack.c.bf16 %v648, %v645
  %v1663 = vpack.c.bf16 %v656, %v653
  %v1664 = vpack.c.bf16 %v664, %v661
  %v1665 = vpack.c.bf16 %v672, %v669
  %v1666 = vpack.c.bf16 %v680, %v677
  %v1667 = vpack.c.bf16 %v688, %v685
  %v1668 = vpack.c.bf16 %v696, %v693
  %v1669 = vpack.c.bf16 %v704, %v701
  %v1670 = vpack.c.bf16 %v712, %v709
  %v1671 = vpack.c.bf16 %v720, %v717
  %v1672 = vpack.c.bf16 %v728, %v725
  %v1673 = vpack.c.bf16 %v736, %v733
  %v1674 = vpack.c.bf16 %v744, %v741
  %v1707 = vunpack.c.l.b16 %v1643
  %v1708 = vunpack.c.h.b16 %v1643
  %v1709 = vunpack.c.l.b16 %v1644
  %v1710 = vunpack.c.h.b16 %v1644
  %v1711 = vunpack.c.l.b16 %v1645
  %v1712 = vunpack.c.h.b16 %v1645
  %v1713 = vunpack.c.l.b16 %v1646
  %v1714 = vunpack.c.h.b16 %v1646
  %v1715 = vunpack.c.l.b16 %v1647
  %v1716 = vunpack.c.h.b16 %v1647
  %v1717 = vunpack.c.l.b16 %v1648
  %v1718 = vunpack.c.h.b16 %v1648
  %v1719 = vunpack.c.l.b16 %v1649
  %v1720 = vunpack.c.h.b16 %v1649
  %v1721 = vunpack.c.l.b16 %v1650
  %v1722 = vunpack.c.h.b16 %v1650
  %v1723 = vunpack.c.l.b16 %v1651
  %v1724 = vunpack.c.h.b16 %v1651
  %v1725 = vunpack.c.l.b16 %v1652
  %v1726 = vunpack.c.h.b16 %v1652
  %v1727 = vunpack.c.l.b16 %v1653
  %v1728 = vunpack.c.h.b16 %v1653
  %v1729 = vunpack.c.l.b16 %v1654
  %v1730 = vunpack.c.h.b16 %v1654
  %v1731 = vunpack.c.l.b16 %v1655
  %v1732 = vunpack.c.h.b16 %v1655
  %v1733 = vunpack.c.l.b16 %v1656
  %v1734 = vunpack.c.h.b16 %v1656
  %v1735 = vunpack.c.l.b16 %v1657
  %v1736 = vunpack.c.h.b16 %v1657
  %v1737 = vunpack.c.l.b16 %v1658
  %v1738 = vunpack.c.h.b16 %v1658
  %v1739 = vunpack.c.l.b16 %v1659
  %v1740 = vunpack.c.h.b16 %v1659
  %v1741 = vunpack.c.l.b16 %v1660
  %v1742 = vunpack.c.h.b16 %v1660
  %v1743 = vunpack.c.l.b16 %v1661
  %v1744 = vunpack.c.h.b16 %v1661
  %v1745 = vunpack.c.l.b16 %v1662
  %v1746 = vunpack.c.h.b16 %v1662
  %v1747 = vunpack.c.l.b16 %v1663
  %v1748 = vunpack.c.h.b16 %v1663
  %v1749 = vunpack.c.l.b16 %v1664
  %v1750 = vunpack.c.h.b16 %v1664
  %v1751 = vunpack.c.l.b16 %v1665
  %v1752 = vunpack.c.h.b16 %v1665
  %v1753 = vunpack.c.l.b16 %v1666
  %v1754 = vunpack.c.h.b16 %v1666
  %v1755 = vunpack.c.l.b16 %v1667
  %v1756 = vunpack.c.h.b16 %v1667
  %v1757 = vunpack.c.l.b16 %v1668
  %v1758 = vunpack.c.h.b16 %v1668
  %v1759 = vunpack.c.l.b16 %v1669
  %v1760 = vunpack.c.h.b16 %v1669
  %v1761 = vunpack.c.l.b16 %v1670
  %v1762 = vunpack.c.h.b16 %v1670
  %v1763 = vunpack.c.l.b16 %v1671
  %v1764 = vunpack.c.h.b16 %v1671
  %v1765 = vunpack.c.l.b16 %v1672
  %v1766 = vunpack.c.h.b16 %v1672
  %v1767 = vunpack.c.l.b16 %v1673
  %v1768 = vunpack.c.h.b16 %v1673
  %v1769 = vunpack.c.l.b16 %v1674
  %v1770 = vunpack.c.h.b16 %v1674
  %v1771 = vpack.c.b16 %v1707, %v1707
  %v1772 = vpack.c.b16 %v1708, %v1708
  %v1773 = vpack.c.b16 %v1709, %v1709
  %v1774 = vpack.c.b16 %v1710, %v1710
  %v1775 = vpack.c.b16 %v1711, %v1711
  %v1776 = vpack.c.b16 %v1712, %v1712
  %v1777 = vpack.c.b16 %v1713, %v1713
  %v1778 = vpack.c.b16 %v1714, %v1714
  %v1779 = vpack.c.b16 %v1715, %v1715
  %v1780 = vpack.c.b16 %v1716, %v1716
  %v1781 = vpack.c.b16 %v1717, %v1717
  %v1782 = vpack.c.b16 %v1718, %v1718
  %v1783 = vpack.c.b16 %v1719, %v1719
  %v1784 = vpack.c.b16 %v1720, %v1720
  %v1785 = vpack.c.b16 %v1721, %v1721
  %v1786 = vpack.c.b16 %v1722, %v1722
  %v1787 = vpack.c.b16 %v1723, %v1723
  %v1788 = vpack.c.b16 %v1724, %v1724
  %v1789 = vpack.c.b16 %v1725, %v1725
  %v1790 = vpack.c.b16 %v1726, %v1726
  %v1791 = vpack.c.b16 %v1727, %v1727
  %v1792 = vpack.c.b16 %v1728, %v1728
  %v1793 = vpack.c.b16 %v1729, %v1729
  %v1794 = vpack.c.b16 %v1730, %v1730
  %v1795 = vpack.c.b16 %v1731, %v1731
  %v1796 = vpack.c.b16 %v1732, %v1732
  %v1797 = vpack.c.b16 %v1733, %v1733
  %v1798 = vpack.c.b16 %v1734, %v1734
  %v1799 = vpack.c.b16 %v1735, %v1735
  %v1800 = vpack.c.b16 %v1736, %v1736
  %v1801 = vpack.c.b16 %v1737, %v1737
  %v1802 = vpack.c.b16 %v1738, %v1738
  %v1803 = vpack.c.b16 %v1739, %v1739
  %v1804 = vpack.c.b16 %v1740, %v1740
  %v1805 = vpack.c.b16 %v1741, %v1741
  %v1806 = vpack.c.b16 %v1742, %v1742
  %v1807 = vpack.c.b16 %v1743, %v1743
  %v1808 = vpack.c.b16 %v1744, %v1744
  %v1809 = vpack.c.b16 %v1745, %v1745
  %v1810 = vpack.c.b16 %v1746, %v1746
  %v1811 = vpack.c.b16 %v1747, %v1747
  %v1812 = vpack.c.b16 %v1748, %v1748
  %v1813 = vpack.c.b16 %v1749, %v1749
  %v1814 = vpack.c.b16 %v1750, %v1750
  %v1815 = vpack.c.b16 %v1751, %v1751
  %v1816 = vpack.c.b16 %v1752, %v1752
  %v1817 = vpack.c.b16 %v1753, %v1753
  %v1818 = vpack.c.b16 %v1754, %v1754
  %v1819 = vpack.c.b16 %v1755, %v1755
  %v1820 = vpack.c.b16 %v1756, %v1756
  %v1821 = vpack.c.b16 %v1757, %v1757
  %v1822 = vpack.c.b16 %v1758, %v1758
  %v1823 = vpack.c.b16 %v1759, %v1759
  %v1824 = vpack.c.b16 %v1760, %v1760
  %v1825 = vpack.c.b16 %v1761, %v1761
  %v1826 = vpack.c.b16 %v1762, %v1762
  %v1827 = vpack.c.b16 %v1763, %v1763
  %v1828 = vpack.c.b16 %v1764, %v1764
  %v1829 = vpack.c.b16 %v1765, %v1765
  %v1830 = vpack.c.b16 %v1766, %v1766
  %v1831 = vpack.c.b16 %v1767, %v1767
  %v1832 = vpack.c.b16 %v1768, %v1768
  %v1833 = vpack.c.b16 %v1769, %v1769
  %v1834 = vpack.c.b16 %v1770, %v1770
  %1899 = vst [vmem:[%s6] sm:$0xf] %v1771
  %1900 = vst [vmem:[%s6 + $0x4] sm:$0xf] %v1772
  %1901 = vst [vmem:[%s6 + $0x8] sm:$0xf] %v1773
  %1902 = vst [vmem:[%s6 + $0xc] sm:$0xf] %v1774
  %1903 = vst [vmem:[%s6 + $0x10] sm:$0xf] %v1775
  %1904 = vst [vmem:[%s6 + $0x14] sm:$0xf] %v1776
  %1905 = vst [vmem:[%s6 + $0x18] sm:$0xf] %v1777
  %1906 = vst [vmem:[%s6 + $0x1c] sm:$0xf] %v1778
  %1907 = vst [vmem:[%s6 + $0x20] sm:$0xf] %v1779
  %1908 = vst [vmem:[%s6 + $0x24] sm:$0xf] %v1780
  %1909 = vst [vmem:[%s6 + $0x28] sm:$0xf] %v1781
  %1910 = vst [vmem:[%s6 + $0x2c] sm:$0xf] %v1782
  %1911 = vst [vmem:[%s6 + $0x30] sm:$0xf] %v1783
  %1912 = vst [vmem:[%s6 + $0x34] sm:$0xf] %v1784
  %1913 = vst [vmem:[%s6 + $0x38] sm:$0xf] %v1785
  %1914 = vst [vmem:[%s6 + $0x3c] sm:$0xf] %v1786
  %1915 = vst [vmem:[%s6 + $0x40] sm:$0xf] %v1787
  %1916 = vst [vmem:[%s6 + $0x44] sm:$0xf] %v1788
  %1917 = vst [vmem:[%s6 + $0x48] sm:$0xf] %v1789
  %1918 = vst [vmem:[%s6 + $0x4c] sm:$0xf] %v1790
  %1919 = vst [vmem:[%s6 + $0x50] sm:$0xf] %v1791
  %1920 = vst [vmem:[%s6 + $0x54] sm:$0xf] %v1792
  %1921 = vst [vmem:[%s6 + $0x58] sm:$0xf] %v1793
  %1922 = vst [vmem:[%s6 + $0x5c] sm:$0xf] %v1794
  %1923 = vst [vmem:[%s6 + $0x60] sm:$0xf] %v1795
  %1924 = vst [vmem:[%s6 + $0x64] sm:$0xf] %v1796
  %1925 = vst [vmem:[%s6 + $0x68] sm:$0xf] %v1797
  %1926 = vst [vmem:[%s6 + $0x6c] sm:$0xf] %v1798
  %1927 = vst [vmem:[%s6 + $0x70] sm:$0xf] %v1799
  %1928 = vst [vmem:[%s6 + $0x74] sm:$0xf] %v1800
  %1929 = vst [vmem:[%s6 + $0x78] sm:$0xf] %v1801
  %1930 = vst [vmem:[%s6 + $0x7c] sm:$0xf] %v1802
  %1931 = vst [vmem:[%s6 + $0x80] sm:$0xf] %v1803
  %1932 = vst [vmem:[%s6 + $0x84] sm:$0xf] %v1804
  %1933 = vst [vmem:[%s6 + $0x88] sm:$0xf] %v1805
  %1934 = vst [vmem:[%s6 + $0x8c] sm:$0xf] %v1806
  %1935 = vst [vmem:[%s6 + $0x90] sm:$0xf] %v1807
  %1936 = vst [vmem:[%s6 + $0x94] sm:$0xf] %v1808
  %1937 = vst [vmem:[%s6 + $0x98] sm:$0xf] %v1809
  %1938 = vst [vmem:[%s6 + $0x9c] sm:$0xf] %v1810
  %1939 = vst [vmem:[%s6 + $0xa0] sm:$0xf] %v1811
  %1940 = vst [vmem:[%s6 + $0xa4] sm:$0xf] %v1812
  %1941 = vst [vmem:[%s6 + $0xa8] sm:$0xf] %v1813
  %1942 = vst [vmem:[%s6 + $0xac] sm:$0xf] %v1814
  %1943 = vst [vmem:[%s6 + $0xb0] sm:$0xf] %v1815
  %1944 = vst [vmem:[%s6 + $0xb4] sm:$0xf] %v1816
  %1945 = vst [vmem:[%s6 + $0xb8] sm:$0xf] %v1817
  %1946 = vst [vmem:[%s6 + $0xbc] sm:$0xf] %v1818
  %1947 = vst [vmem:[%s6 + $0xc0] sm:$0xf] %v1819
  %1948 = vst [vmem:[%s6 + $0xc4] sm:$0xf] %v1820
  %1949 = vst [vmem:[%s6 + $0xc8] sm:$0xf] %v1821
  %1950 = vst [vmem:[%s6 + $0xcc] sm:$0xf] %v1822
  %1951 = vst [vmem:[%s6 + $0xd0] sm:$0xf] %v1823
  %1952 = vst [vmem:[%s6 + $0xd4] sm:$0xf] %v1824
  %1953 = vst [vmem:[%s6 + $0xd8] sm:$0xf] %v1825
  %1954 = vst [vmem:[%s6 + $0xdc] sm:$0xf] %v1826
  %1955 = vst [vmem:[%s6 + $0xe0] sm:$0xf] %v1827
  %1956 = vst [vmem:[%s6 + $0xe4] sm:$0xf] %v1828
  %1957 = vst [vmem:[%s6 + $0xe8] sm:$0xf] %v1829
  %1958 = vst [vmem:[%s6 + $0xec] sm:$0xf] %v1830
  %1959 = vst [vmem:[%s6 + $0xf0] sm:$0xf] %v1831
  %1960 = vst [vmem:[%s6 + $0xf4] sm:$0xf] %v1832
  %1961 = vst [vmem:[%s6 + $0xf8] sm:$0xf] %v1833
  %1962 = vst [vmem:[%s6 + $0xfc] sm:$0xf] %v1834
  %v1963 = vpack.c.bf16 %v983, %v980
  %v1964 = vpack.c.bf16 %v991, %v988
  %v1965 = vpack.c.bf16 %v999, %v996
  %v1966 = vpack.c.bf16 %v1007, %v1004
  %v1967 = vpack.c.bf16 %v1015, %v1012
  %v1968 = vpack.c.bf16 %v1023, %v1020
  %v1969 = vpack.c.bf16 %v1031, %v1028
  %v1970 = vpack.c.bf16 %v1039, %v1036
  %v1971 = vpack.c.bf16 %v1047, %v1044
  %v1972 = vpack.c.bf16 %v1055, %v1052
  %v1973 = vpack.c.bf16 %v1063, %v1060
  %v1974 = vpack.c.bf16 %v1071, %v1068
  %v1975 = vpack.c.bf16 %v1079, %v1076
  %v1976 = vpack.c.bf16 %v1087, %v1084
  %v1977 = vpack.c.bf16 %v1095, %v1092
  %v1978 = vpack.c.bf16 %v1103, %v1100
  %v1979 = vpack.c.bf16 %v1111, %v1108
  %v1980 = vpack.c.bf16 %v1119, %v1116
  %v1981 = vpack.c.bf16 %v1127, %v1124
  %v1982 = vpack.c.bf16 %v1135, %v1132
  %v1983 = vpack.c.bf16 %v1143, %v1140
  %v1984 = vpack.c.bf16 %v1151, %v1148
  %v1985 = vpack.c.bf16 %v1159, %v1156
  %v1986 = vpack.c.bf16 %v1167, %v1164
  %v1987 = vpack.c.bf16 %v1175, %v1172
  %v1988 = vpack.c.bf16 %v1183, %v1180
  %v1989 = vpack.c.bf16 %v1191, %v1188
  %v1990 = vpack.c.bf16 %v1199, %v1196
  %v1991 = vpack.c.bf16 %v1207, %v1204
  %v1992 = vpack.c.bf16 %v1215, %v1212
  %v1993 = vpack.c.bf16 %v1223, %v1220
  %v1994 = vpack.c.bf16 %v1231, %v1228
  %v2027 = vunpack.c.l.b16 %v1963
  %v2028 = vunpack.c.h.b16 %v1963
  %v2029 = vunpack.c.l.b16 %v1964
  %v2030 = vunpack.c.h.b16 %v1964
  %v2031 = vunpack.c.l.b16 %v1965
  %v2032 = vunpack.c.h.b16 %v1965
  %v2033 = vunpack.c.l.b16 %v1966
  %v2034 = vunpack.c.h.b16 %v1966
  %v2035 = vunpack.c.l.b16 %v1967
  %v2036 = vunpack.c.h.b16 %v1967
  %v2037 = vunpack.c.l.b16 %v1968
  %v2038 = vunpack.c.h.b16 %v1968
  %v2039 = vunpack.c.l.b16 %v1969
  %v2040 = vunpack.c.h.b16 %v1969
  %v2041 = vunpack.c.l.b16 %v1970
  %v2042 = vunpack.c.h.b16 %v1970
  %v2043 = vunpack.c.l.b16 %v1971
  %v2044 = vunpack.c.h.b16 %v1971
  %v2045 = vunpack.c.l.b16 %v1972
  %v2046 = vunpack.c.h.b16 %v1972
  %v2047 = vunpack.c.l.b16 %v1973
  %v2048 = vunpack.c.h.b16 %v1973
  %v2049 = vunpack.c.l.b16 %v1974
  %v2050 = vunpack.c.h.b16 %v1974
  %v2051 = vunpack.c.l.b16 %v1975
  %v2052 = vunpack.c.h.b16 %v1975
  %v2053 = vunpack.c.l.b16 %v1976
  %v2054 = vunpack.c.h.b16 %v1976
  %v2055 = vunpack.c.l.b16 %v1977
  %v2056 = vunpack.c.h.b16 %v1977
  %v2057 = vunpack.c.l.b16 %v1978
  %v2058 = vunpack.c.h.b16 %v1978
  %v2059 = vunpack.c.l.b16 %v1979
  %v2060 = vunpack.c.h.b16 %v1979
  %v2061 = vunpack.c.l.b16 %v1980
  %v2062 = vunpack.c.h.b16 %v1980
  %v2063 = vunpack.c.l.b16 %v1981
  %v2064 = vunpack.c.h.b16 %v1981
  %v2065 = vunpack.c.l.b16 %v1982
  %v2066 = vunpack.c.h.b16 %v1982
  %v2067 = vunpack.c.l.b16 %v1983
  %v2068 = vunpack.c.h.b16 %v1983
  %v2069 = vunpack.c.l.b16 %v1984
  %v2070 = vunpack.c.h.b16 %v1984
  %v2071 = vunpack.c.l.b16 %v1985
  %v2072 = vunpack.c.h.b16 %v1985
  %v2073 = vunpack.c.l.b16 %v1986
  %v2074 = vunpack.c.h.b16 %v1986
  %v2075 = vunpack.c.l.b16 %v1987
  %v2076 = vunpack.c.h.b16 %v1987
  %v2077 = vunpack.c.l.b16 %v1988
  %v2078 = vunpack.c.h.b16 %v1988
  %v2079 = vunpack.c.l.b16 %v1989
  %v2080 = vunpack.c.h.b16 %v1989
  %v2081 = vunpack.c.l.b16 %v1990
  %v2082 = vunpack.c.h.b16 %v1990
  %v2083 = vunpack.c.l.b16 %v1991
  %v2084 = vunpack.c.h.b16 %v1991
  %v2085 = vunpack.c.l.b16 %v1992
  %v2086 = vunpack.c.h.b16 %v1992
  %v2087 = vunpack.c.l.b16 %v1993
  %v2088 = vunpack.c.h.b16 %v1993
  %v2089 = vunpack.c.l.b16 %v1994
  %v2090 = vunpack.c.h.b16 %v1994
  %v2091 = vpack.c.b16 %v2027, %v2027
  %v2092 = vpack.c.b16 %v2028, %v2028
  %v2093 = vpack.c.b16 %v2029, %v2029
  %v2094 = vpack.c.b16 %v2030, %v2030
  %v2095 = vpack.c.b16 %v2031, %v2031
  %v2096 = vpack.c.b16 %v2032, %v2032
  %v2097 = vpack.c.b16 %v2033, %v2033
  %v2098 = vpack.c.b16 %v2034, %v2034
  %v2099 = vpack.c.b16 %v2035, %v2035
  %v2100 = vpack.c.b16 %v2036, %v2036
  %v2101 = vpack.c.b16 %v2037, %v2037
  %v2102 = vpack.c.b16 %v2038, %v2038
  %v2103 = vpack.c.b16 %v2039, %v2039
  %v2104 = vpack.c.b16 %v2040, %v2040
  %v2105 = vpack.c.b16 %v2041, %v2041
  %v2106 = vpack.c.b16 %v2042, %v2042
  %v2107 = vpack.c.b16 %v2043, %v2043
  %v2108 = vpack.c.b16 %v2044, %v2044
  %v2109 = vpack.c.b16 %v2045, %v2045
  %v2110 = vpack.c.b16 %v2046, %v2046
  %v2111 = vpack.c.b16 %v2047, %v2047
  %v2112 = vpack.c.b16 %v2048, %v2048
  %v2113 = vpack.c.b16 %v2049, %v2049
  %v2114 = vpack.c.b16 %v2050, %v2050
  %v2115 = vpack.c.b16 %v2051, %v2051
  %v2116 = vpack.c.b16 %v2052, %v2052
  %v2117 = vpack.c.b16 %v2053, %v2053
  %v2118 = vpack.c.b16 %v2054, %v2054
  %v2119 = vpack.c.b16 %v2055, %v2055
  %v2120 = vpack.c.b16 %v2056, %v2056
  %v2121 = vpack.c.b16 %v2057, %v2057
  %v2122 = vpack.c.b16 %v2058, %v2058
  %v2123 = vpack.c.b16 %v2059, %v2059
  %v2124 = vpack.c.b16 %v2060, %v2060
  %v2125 = vpack.c.b16 %v2061, %v2061
  %v2126 = vpack.c.b16 %v2062, %v2062
  %v2127 = vpack.c.b16 %v2063, %v2063
  %v2128 = vpack.c.b16 %v2064, %v2064
  %v2129 = vpack.c.b16 %v2065, %v2065
  %v2130 = vpack.c.b16 %v2066, %v2066
  %v2131 = vpack.c.b16 %v2067, %v2067
  %v2132 = vpack.c.b16 %v2068, %v2068
  %v2133 = vpack.c.b16 %v2069, %v2069
  %v2134 = vpack.c.b16 %v2070, %v2070
  %v2135 = vpack.c.b16 %v2071, %v2071
  %v2136 = vpack.c.b16 %v2072, %v2072
  %v2137 = vpack.c.b16 %v2073, %v2073
  %v2138 = vpack.c.b16 %v2074, %v2074
  %v2139 = vpack.c.b16 %v2075, %v2075
  %v2140 = vpack.c.b16 %v2076, %v2076
  %v2141 = vpack.c.b16 %v2077, %v2077
  %v2142 = vpack.c.b16 %v2078, %v2078
  %v2143 = vpack.c.b16 %v2079, %v2079
  %v2144 = vpack.c.b16 %v2080, %v2080
  %v2145 = vpack.c.b16 %v2081, %v2081
  %v2146 = vpack.c.b16 %v2082, %v2082
  %v2147 = vpack.c.b16 %v2083, %v2083
  %v2148 = vpack.c.b16 %v2084, %v2084
  %v2149 = vpack.c.b16 %v2085, %v2085
  %v2150 = vpack.c.b16 %v2086, %v2086
  %v2151 = vpack.c.b16 %v2087, %v2087
  %v2152 = vpack.c.b16 %v2088, %v2088
  %v2153 = vpack.c.b16 %v2089, %v2089
  %v2154 = vpack.c.b16 %v2090, %v2090
  %2219 = vst [vmem:[%s7] sm:$0xf] %v2091
  %2220 = vst [vmem:[%s7 + $0x4] sm:$0xf] %v2092
  %2221 = vst [vmem:[%s7 + $0x8] sm:$0xf] %v2093
  %2222 = vst [vmem:[%s7 + $0xc] sm:$0xf] %v2094
  %2223 = vst [vmem:[%s7 + $0x10] sm:$0xf] %v2095
  %2224 = vst [vmem:[%s7 + $0x14] sm:$0xf] %v2096
  %2225 = vst [vmem:[%s7 + $0x18] sm:$0xf] %v2097
  %2226 = vst [vmem:[%s7 + $0x1c] sm:$0xf] %v2098
  %2227 = vst [vmem:[%s7 + $0x20] sm:$0xf] %v2099
  %2228 = vst [vmem:[%s7 + $0x24] sm:$0xf] %v2100
  %2229 = vst [vmem:[%s7 + $0x28] sm:$0xf] %v2101
  %2230 = vst [vmem:[%s7 + $0x2c] sm:$0xf] %v2102
  %2231 = vst [vmem:[%s7 + $0x30] sm:$0xf] %v2103
  %2232 = vst [vmem:[%s7 + $0x34] sm:$0xf] %v2104
  %2233 = vst [vmem:[%s7 + $0x38] sm:$0xf] %v2105
  %2234 = vst [vmem:[%s7 + $0x3c] sm:$0xf] %v2106
  %2235 = vst [vmem:[%s7 + $0x40] sm:$0xf] %v2107
  %2236 = vst [vmem:[%s7 + $0x44] sm:$0xf] %v2108
  %2237 = vst [vmem:[%s7 + $0x48] sm:$0xf] %v2109
  %2238 = vst [vmem:[%s7 + $0x4c] sm:$0xf] %v2110
  %2239 = vst [vmem:[%s7 + $0x50] sm:$0xf] %v2111
  %2240 = vst [vmem:[%s7 + $0x54] sm:$0xf] %v2112
  %2241 = vst [vmem:[%s7 + $0x58] sm:$0xf] %v2113
  %2242 = vst [vmem:[%s7 + $0x5c] sm:$0xf] %v2114
  %2243 = vst [vmem:[%s7 + $0x60] sm:$0xf] %v2115
  %2244 = vst [vmem:[%s7 + $0x64] sm:$0xf] %v2116
  %2245 = vst [vmem:[%s7 + $0x68] sm:$0xf] %v2117
  %2246 = vst [vmem:[%s7 + $0x6c] sm:$0xf] %v2118
  %2247 = vst [vmem:[%s7 + $0x70] sm:$0xf] %v2119
  %2248 = vst [vmem:[%s7 + $0x74] sm:$0xf] %v2120
  %2249 = vst [vmem:[%s7 + $0x78] sm:$0xf] %v2121
  %2250 = vst [vmem:[%s7 + $0x7c] sm:$0xf] %v2122
  %2251 = vst [vmem:[%s7 + $0x80] sm:$0xf] %v2123
  %2252 = vst [vmem:[%s7 + $0x84] sm:$0xf] %v2124
  %2253 = vst [vmem:[%s7 + $0x88] sm:$0xf] %v2125
  %2254 = vst [vmem:[%s7 + $0x8c] sm:$0xf] %v2126
  %2255 = vst [vmem:[%s7 + $0x90] sm:$0xf] %v2127
  %2256 = vst [vmem:[%s7 + $0x94] sm:$0xf] %v2128
  %2257 = vst [vmem:[%s7 + $0x98] sm:$0xf] %v2129
  %2258 = vst [vmem:[%s7 + $0x9c] sm:$0xf] %v2130
  %2259 = vst [vmem:[%s7 + $0xa0] sm:$0xf] %v2131
  %2260 = vst [vmem:[%s7 + $0xa4] sm:$0xf] %v2132
  %2261 = vst [vmem:[%s7 + $0xa8] sm:$0xf] %v2133
  %2262 = vst [vmem:[%s7 + $0xac] sm:$0xf] %v2134
  %2263 = vst [vmem:[%s7 + $0xb0] sm:$0xf] %v2135
  %2264 = vst [vmem:[%s7 + $0xb4] sm:$0xf] %v2136
  %2265 = vst [vmem:[%s7 + $0xb8] sm:$0xf] %v2137
  %2266 = vst [vmem:[%s7 + $0xbc] sm:$0xf] %v2138
  %2267 = vst [vmem:[%s7 + $0xc0] sm:$0xf] %v2139
  %2268 = vst [vmem:[%s7 + $0xc4] sm:$0xf] %v2140
  %2269 = vst [vmem:[%s7 + $0xc8] sm:$0xf] %v2141
  %2270 = vst [vmem:[%s7 + $0xcc] sm:$0xf] %v2142
  %2271 = vst [vmem:[%s7 + $0xd0] sm:$0xf] %v2143
  %2272 = vst [vmem:[%s7 + $0xd4] sm:$0xf] %v2144
  %2273 = vst [vmem:[%s7 + $0xd8] sm:$0xf] %v2145
  %2274 = vst [vmem:[%s7 + $0xdc] sm:$0xf] %v2146
  %2275 = vst [vmem:[%s7 + $0xe0] sm:$0xf] %v2147
  %2276 = vst [vmem:[%s7 + $0xe4] sm:$0xf] %v2148
  %2277 = vst [vmem:[%s7 + $0xe8] sm:$0xf] %v2149
  %2278 = vst [vmem:[%s7 + $0xec] sm:$0xf] %v2150
  %2279 = vst [vmem:[%s7 + $0xf0] sm:$0xf] %v2151
  %2280 = vst [vmem:[%s7 + $0xf4] sm:$0xf] %v2152
  %2281 = vst [vmem:[%s7 + $0xf8] sm:$0xf] %v2153
  %2282 = vst [vmem:[%s7 + $0xfc] sm:$0xf] %v2154
  // Predicated region
  $region26: #{bottleneck_forward.6} parent=0 // pred_check
    _
  $region27: #{bottleneck_forward.6} parent=0 // pred_check_branch
    %2284 = sbr.rel (0) target = $region29
  $region28: #{bottleneck_forward.6} parent=0 // pred_region
    _
  $region29: #{bottleneck_forward.6} parent=0 // pred_fallthru
    _
  // Predicated region
  $region30: #{bottleneck_forward.6} parent=0 // pred_check
    _
  $region31: #{bottleneck_forward.6} parent=0 // pred_check_branch
    %2286 = sbr.rel (0) target = $region33
  $region32: #{bottleneck_forward.6} parent=0 // pred_region
    _
  $region33: #{bottleneck_forward.6} parent=0 // pred_fallthru
    _
  // Predicated region
  $region34: #{bottleneck_forward.6} parent=0 // pred_check
    _
  $region35: #{bottleneck_forward.6} parent=0 // pred_check_branch
    %2288 = sbr.rel (0) target = $region37
  $region36: #{bottleneck_forward.6} parent=0 // pred_region
    _
  $region37: #{bottleneck_forward.6} parent=0 // pred_fallthru
    _
  // Predicated region
  $region38: #{bottleneck_forward.6} parent=0 // pred_check
    _
  $region39: #{bottleneck_forward.6} parent=0 // pred_check_branch
    %2290 = sbr.rel (0) target = $region41
  $region40: #{bottleneck_forward.6} parent=0 // pred_region
    _
  $region41: #{bottleneck_forward.6} parent=0 // pred_fallthru
    _
  // Predicated region
  $region42: #{bottleneck_forward.6} parent=0 // pred_check
    _
  $region43: #{bottleneck_forward.6} parent=0 // pred_check_branch
    %2292 = sbr.rel (0) target = $region45
  $region44: #{bottleneck_forward.6} parent=0 // pred_region
    _
  $region45: #{bottleneck_forward.6} parent=0 // pred_fallthru
    _
  // Predicated region
  $region46: #{bottleneck_forward.6} parent=0 // pred_check
    _
  $region47: #{bottleneck_forward.6} parent=0 // pred_check_branch
    %2294 = sbr.rel (0) target = $region49
  $region48: #{bottleneck_forward.6} parent=0 // pred_region
    _
  $region49: #{bottleneck_forward.6} parent=0 // pred_fallthru
    _
  // Predicated region
  $region50: #{bottleneck_forward.6} parent=0 // pred_check
    _
  $region51: #{bottleneck_forward.6} parent=0 // pred_check_branch
    %2296 = sbr.rel (0) target = $region53
  $region52: #{bottleneck_forward.6} parent=0 // pred_region
    _
  $region53: #{bottleneck_forward.6} parent=0 // pred_fallthru
    _
  // Predicated region
  $region54: #{bottleneck_forward.6} parent=0 // pred_check
    _
  $region55: #{bottleneck_forward.6} parent=0 // pred_check_branch
    %2298 = sbr.rel (0) target = $region57
  $region56: #{bottleneck_forward.6} parent=0 // pred_region
    _
  $region57: #{bottleneck_forward.6} parent=0 // pred_fallthru
    _

// kernel: bottleneck_forward.5
$region0: #{bottleneck_forward.5}
  #allocation0 [shape = 'u32[]', space=smem, size = 0x4, offset = 0x4, fixed_abs, tag = 'smem constant byte address 0x4 - core index']
  #allocation1 [shape = 'u32[144,128]{1,0:T(1,128)}', space=vmem, size = 0x12000, scoped, tag = 'internal scratch']
  #allocation2 [shape = 'f32[18,32,128]{2,1,0:T(8,128)}', space=vmem, size = 0x48000, scoped, tag = 'scratch operand']
  %s0 = inlined_call_operand.vmem [shape: bf16[2,16,16,128], index: 0, kind: input, shape index: {}]
  %s1 = inlined_call_operand.vmem [shape: f32[1,128], index: 1, kind: input, shape index: {}]
  %s2 = inlined_call_operand.vmem [shape: f32[1,128], index: 2, kind: input, shape index: {}]
  %s3 = inlined_call_operand.vmem [shape: bf16[9,128,128], index: 3, kind: input, shape index: {}]
  %s4 = inlined_call_operand.vmem [shape: bf16[2,256,128], index: 4, kind: output, shape index: {0}]
  %s5 = inlined_call_operand.vmem [shape: f32[2,2,128], index: 5, kind: output, shape index: {1}]
  %6 = xla_tuple %s4, %s5
  %s7 = sld [smem:[#allocation0]]
  $region57: #{bottleneck_forward.5} parent=0
    _
  %s9 = ssub.s32 1, %s7
  %s10 = scalar_select 0, %s9, %s7
  loop: start=0, step=1, limit=4
  $region2: #{bottleneck_forward.5} parent=0 // loop_pre_header
    _
  $region3: #{bottleneck_forward.5} parent=0 // loop_header
    %s12 = sphi 0, %s16
    %p13 = scmp.ge.s32.totalorder %s12, 4
    %s22 = sphi 0, %s24
    %s25 = sphi 0, %s22
    %s26 = sphi 0, %s25
    %s42 = sphi 0, %s26
    %s46 = sphi 0, %s46
    %s48 = sphi 0, %s46
    %s49 = sphi 0, %s48
    %s63 = sphi 0, %s49
    %s67 = sphi 0, %s67
    %s69 = sphi 0, %s67
    %s70 = sphi 0, %s69
    %s84 = sphi 0, %s70
    %s88 = sphi 0, %s88
    %s90 = sphi 0, %s88
    %s91 = sphi 0, %s90
    %s105 = sphi 0, %s91
    %s111 = sphi 0, %s113
    %s114 = sphi 0, %s111
    %s115 = sphi 0, %s114
    %s131 = sphi 0, %s115
    %s137 = sphi 0, %s139
    %s140 = sphi 0, %s137
    %s141 = sphi 0, %s140
    %s157 = sphi 0, %s141
  $region4: #{bottleneck_forward.5} parent=0 // loop_header_branch
    %15 = sbr.rel (%p13) target = $region8
  $region5: #{bottleneck_forward.5} parent=0 // loop_body
    %s17 = ssub.s32 %s12, 1
    %s18 = ssub.s32 %s12, 2
    %s19 = sadd.s32 %s12, 1
    %s20 = ssub.s32 %s12, %s19
    %p21 = scmp.eq.s32.totalorder %s20, 0
    %s23 = sadd.s32 %s22, 1
    %s24 = scalar_select %p21, %s22, %s23
    %p27 = pneg %p21
    %p28 = scmp.eq.s32.totalorder %s12, 1
    %p29 = por %p27, %p28
    %p30 = scmp.ne.s32.totalorder %s22, %s25
    %p31 = scmp.eq.s32.totalorder %s12, 0
    %p32 = por %p30, %p31
    %p33 = scmp.ne.s32.totalorder %s22, %s25
    %p34 = scmp.eq.s32.totalorder %s17, 1
    %p35 = por %p33, %p34
    %p36 = scmp.ne.s32.totalorder %s25, %s26
    %p37 = scmp.eq.s32.totalorder %s17, 0
    %p38 = por %p36, %p37
    %p39 = scmp.ne.s32.totalorder %s25, %s26
    %p40 = scmp.eq.s32.totalorder %s18, 1
    %p41 = por %p39, %p40
    %p43 = scmp.ne.s32.totalorder %s26, %s42
    %p44 = scmp.eq.s32.totalorder %s18, 0
    %p45 = por %p43, %p44
    %s47 = sadd.s32 %s46, 1
    %p50 = scmp.eq.s32.totalorder %s12, 1
    %p51 = scmp.ne.s32.totalorder %s46, %s48
    %p52 = scmp.eq.s32.totalorder %s12, 0
    %p53 = por %p51, %p52
    %p54 = scmp.ne.s32.totalorder %s46, %s48
    %p55 = scmp.eq.s32.totalorder %s17, 1
    %p56 = por %p54, %p55
    %p57 = scmp.ne.s32.totalorder %s48, %s49
    %p58 = scmp.eq.s32.totalorder %s17, 0
    %p59 = por %p57, %p58
    %p60 = scmp.ne.s32.totalorder %s48, %s49
    %p61 = scmp.eq.s32.totalorder %s18, 1
    %p62 = por %p60, %p61
    %p64 = scmp.ne.s32.totalorder %s49, %s63
    %p65 = scmp.eq.s32.totalorder %s18, 0
    %p66 = por %p64, %p65
    %s68 = sadd.s32 %s67, 1
    %p71 = scmp.eq.s32.totalorder %s12, 1
    %p72 = scmp.ne.s32.totalorder %s67, %s69
    %p73 = scmp.eq.s32.totalorder %s12, 0
    %p74 = por %p72, %p73
    %p75 = scmp.ne.s32.totalorder %s67, %s69
    %p76 = scmp.eq.s32.totalorder %s17, 1
    %p77 = por %p75, %p76
    %p78 = scmp.ne.s32.totalorder %s69, %s70
    %p79 = scmp.eq.s32.totalorder %s17, 0
    %p80 = por %p78, %p79
    %p81 = scmp.ne.s32.totalorder %s69, %s70
    %p82 = scmp.eq.s32.totalorder %s18, 1
    %p83 = por %p81, %p82
    %p85 = scmp.ne.s32.totalorder %s70, %s84
    %p86 = scmp.eq.s32.totalorder %s18, 0
    %p87 = por %p85, %p86
    %s89 = sadd.s32 %s88, 1
    %p92 = scmp.eq.s32.totalorder %s12, 1
    %p93 = scmp.ne.s32.totalorder %s88, %s90
    %p94 = scmp.eq.s32.totalorder %s12, 0
    %p95 = por %p93, %p94
    %p96 = scmp.ne.s32.totalorder %s88, %s90
    %p97 = scmp.eq.s32.totalorder %s17, 1
    %p98 = por %p96, %p97
    %p99 = scmp.ne.s32.totalorder %s90, %s91
    %p100 = scmp.eq.s32.totalorder %s17, 0
    %p101 = por %p99, %p100
    %p102 = scmp.ne.s32.totalorder %s90, %s91
    %p103 = scmp.eq.s32.totalorder %s18, 1
    %p104 = por %p102, %p103
    %p106 = scmp.ne.s32.totalorder %s91, %s105
    %p107 = scmp.eq.s32.totalorder %s18, 0
    %p108 = por %p106, %p107
    %s109 = ssub.s32 %s12, %s19
    %p110 = scmp.eq.s32.totalorder %s109, 0
    %s112 = sadd.s32 %s111, 1
    %s113 = scalar_select %p110, %s111, %s112
    %p116 = pneg %p110
    %p117 = scmp.eq.s32.totalorder %s12, 1
    %p118 = por %p116, %p117
    %p119 = scmp.ne.s32.totalorder %s111, %s114
    %p120 = scmp.eq.s32.totalorder %s12, 0
    %p121 = por %p119, %p120
    %p122 = scmp.ne.s32.totalorder %s111, %s114
    %p123 = scmp.eq.s32.totalorder %s17, 1
    %p124 = por %p122, %p123
    %p125 = scmp.ne.s32.totalorder %s114, %s115
    %p126 = scmp.eq.s32.totalorder %s17, 0
    %p127 = por %p125, %p126
    %p128 = scmp.ne.s32.totalorder %s114, %s115
    %p129 = scmp.eq.s32.totalorder %s18, 1
    %p130 = por %p128, %p129
    %p132 = scmp.ne.s32.totalorder %s115, %s131
    %p133 = scmp.eq.s32.totalorder %s18, 0
    %p134 = por %p132, %p133
    %s135 = ssub.s32 %s12, %s19
    %p136 = scmp.eq.s32.totalorder %s135, 0
    %s138 = sadd.s32 %s137, 1
    %s139 = scalar_select %p136, %s137, %s138
    %p142 = pneg %p136
    %p143 = scmp.eq.s32.totalorder %s12, 1
    %p144 = por %p142, %p143
    %p145 = scmp.ne.s32.totalorder %s137, %s140
    %p146 = scmp.eq.s32.totalorder %s12, 0
    %p147 = por %p145, %p146
    %p148 = scmp.ne.s32.totalorder %s137, %s140
    %p149 = scmp.eq.s32.totalorder %s17, 1
    %p150 = por %p148, %p149
    %p151 = scmp.ne.s32.totalorder %s140, %s141
    %p152 = scmp.eq.s32.totalorder %s17, 0
    %p153 = por %p151, %p152
    %p154 = scmp.ne.s32.totalorder %s140, %s141
    %p155 = scmp.eq.s32.totalorder %s18, 1
    %p156 = por %p154, %p155
    %p158 = scmp.ne.s32.totalorder %s141, %s157
    %p159 = scmp.eq.s32.totalorder %s18, 0
    %p160 = por %p158, %p159
    %p161 = scmp.le.s32.totalorder 1, %s12
    %p162 = scmp.lt.s32.totalorder %s12, 3
    %p163 = pnand %p161, %p162
    %p164 = pneg %p163
    // Predicated region
    $region9: #{bottleneck_forward.5} parent=5 // pred_check
      _
    $region10: #{bottleneck_forward.5} parent=5 // pred_check_branch
      %166 = sbr.rel (%p163) target = $region12
    $region11: #{bottleneck_forward.5} parent=5 // pred_region
      %s167 = ssub.s32 %s12, 1
      // Predicated region
      $region13: #{bottleneck_forward.5} parent=11 // pred_check
        %p168 = pneg %p59
      $region14: #{bottleneck_forward.5} parent=11 // pred_check_branch
        %170 = sbr.rel (%p168) target = $region16
      $region15: #{bottleneck_forward.5} parent=11 // pred_region
        _
      $region16: #{bottleneck_forward.5} parent=11 // pred_fallthru
        _
      // Predicated region
      $region17: #{bottleneck_forward.5} parent=11 // pred_check
        %p171 = pneg %p80
      $region18: #{bottleneck_forward.5} parent=11 // pred_check_branch
        %173 = sbr.rel (%p171) target = $region20
      $region19: #{bottleneck_forward.5} parent=11 // pred_region
        _
      $region20: #{bottleneck_forward.5} parent=11 // pred_fallthru
        _
      // Predicated region
      $region21: #{bottleneck_forward.5} parent=11 // pred_check
        %p174 = pneg %p101
      $region22: #{bottleneck_forward.5} parent=11 // pred_check_branch
        %176 = sbr.rel (%p174) target = $region24
      $region23: #{bottleneck_forward.5} parent=11 // pred_region
        _
      $region24: #{bottleneck_forward.5} parent=11 // pred_fallthru
        _
    $region12: #{bottleneck_forward.5} parent=5 // pred_fallthru
      _
    %p177 = scmp.lt.s32.totalorder %s12, 2
    // Predicated region
    $region25: #{bottleneck_forward.5} parent=5 // pred_check
      %p178 = pneg %p177
    $region26: #{bottleneck_forward.5} parent=5 // pred_check_branch
      %180 = sbr.rel (%p178) target = $region28
    $region27: #{bottleneck_forward.5} parent=5 // pred_region
      // Predicated region
      $region29: #{bottleneck_forward.5} parent=27 // pred_check
        %p181 = pneg %p32
      $region30: #{bottleneck_forward.5} parent=27 // pred_check_branch
        %183 = sbr.rel (%p181) target = $region32
      $region31: #{bottleneck_forward.5} parent=27 // pred_region
        %p184 = scmp.lt.s32.totalorder %s12, 1
        %s185 = scalar_select %p184, %s12, 1
        %s186 = smul.addr %s185, 32
        %s187 = smul.addr %s186, 4
        %s188 = scalar_lea.vmem %s0, %s187
      $region32: #{bottleneck_forward.5} parent=27 // pred_fallthru
        _
    $region28: #{bottleneck_forward.5} parent=5 // pred_fallthru
      _
    %p189 = scmp.le.s32.totalorder 1, %s12
    %p190 = scmp.lt.s32.totalorder %s12, 3
    %p191 = pnand %p189, %p190
    %p192 = pneg %p191
    // Predicated region
    $region33: #{bottleneck_forward.5} parent=5 // pred_check
      _
    $region34: #{bottleneck_forward.5} parent=5 // pred_check_branch
      %194 = sbr.rel (%p191) target = $region36
    $region35: #{bottleneck_forward.5} parent=5 // pred_region
      %s195 = ssub.s32 %s12, 1
      %p196 = scmp.lt.s32.totalorder %s17, 1
      %s197 = scalar_select %p196, %s17, 1
      %s198 = smul.addr %s197, 32
      %s199 = smul.addr %s198, 4
      %s200 = scalar_lea.vmem %s0, %s199
      %p201 = pneg %p38
      %p202 = pneg %p35
      %p203 = pneg %p59
      %p204 = pneg %p56
      %p205 = pneg %p80
      %p206 = pneg %p77
      %p207 = pneg %p101
      %p208 = pneg %p98
      %p209 = pneg %p127
      %p210 = pneg %p124
      %p211 = scmp.lt.s32.totalorder %s17, 1
      %s212 = scalar_select %p211, %s17, 1
      %s213 = smul.addr %s212, 32
      %s214 = smul.addr %s213, 4
      %s215 = scalar_lea.vmem %s4, %s214
      %p216 = pneg %p153
      %p217 = pneg %p150
      %p218 = scmp.lt.s32.totalorder %s17, 1
      %s219 = scalar_select %p218, %s17, 1
      %s220 = smul.addr %s219, 2
      %s221 = scalar_lea.vmem %s5, %s220
      %p222 = scmp.lt.s32.totalorder %s17, 1
      %s223 = scalar_select %p222, %s17, 1
      %s224 = smul.addr %s223, 32
      %s225 = smul.addr %s224, 4
      %s226 = scalar_lea.vmem %s0, %s225
      %p227 = scmp.lt.s32.totalorder %s17, 1
      %s228 = scalar_select %p227, %s17, 1
      %s229 = smul.addr %s228, 32
      %s230 = smul.addr %s229, 4
      %s231 = scalar_lea.vmem %s4, %s230
      %p232 = scmp.lt.s32.totalorder %s17, 1
      %s233 = scalar_select %p232, %s17, 1
      %s234 = smul.addr %s233, 2
      %s235 = scalar_lea.vmem %s5, %s234
      %v237 = vld [vmem:[%s226] sm:$0xf]
      %v238 = vld [vmem:[%s226 + $0x4] sm:$0xf]
      %v239 = vld [vmem:[%s226 + $0x8] sm:$0xf]
      %v240 = vld [vmem:[%s226 + $0xc] sm:$0xf]
      %v241 = vld [vmem:[%s226 + $0x10] sm:$0xf]
      %v242 = vld [vmem:[%s226 + $0x14] sm:$0xf]
      %v243 = vld [vmem:[%s226 + $0x18] sm:$0xf]
      %v244 = vld [vmem:[%s226 + $0x1c] sm:$0xf]
      %v245 = vld [vmem:[%s226 + $0x20] sm:$0xf]
      %v246 = vld [vmem:[%s226 + $0x24] sm:$0xf]
      %v247 = vld [vmem:[%s226 + $0x28] sm:$0xf]
      %v248 = vld [vmem:[%s226 + $0x2c] sm:$0xf]
      %v249 = vld [vmem:[%s226 + $0x30] sm:$0xf]
      %v250 = vld [vmem:[%s226 + $0x34] sm:$0xf]
      %v251 = vld [vmem:[%s226 + $0x38] sm:$0xf]
      %v252 = vld [vmem:[%s226 + $0x3c] sm:$0xf]
      %v253 = vld [vmem:[%s226 + $0x40] sm:$0xf]
      %v254 = vld [vmem:[%s226 + $0x44] sm:$0xf]
      %v255 = vld [vmem:[%s226 + $0x48] sm:$0xf]
      %v256 = vld [vmem:[%s226 + $0x4c] sm:$0xf]
      %v257 = vld [vmem:[%s226 + $0x50] sm:$0xf]
      %v258 = vld [vmem:[%s226 + $0x54] sm:$0xf]
      %v259 = vld [vmem:[%s226 + $0x58] sm:$0xf]
      %v260 = vld [vmem:[%s226 + $0x5c] sm:$0xf]
      %v261 = vld [vmem:[%s226 + $0x60] sm:$0xf]
      %v262 = vld [vmem:[%s226 + $0x64] sm:$0xf]
      %v263 = vld [vmem:[%s226 + $0x68] sm:$0xf]
      %v264 = vld [vmem:[%s226 + $0x6c] sm:$0xf]
      %v265 = vld [vmem:[%s226 + $0x70] sm:$0xf]
      %v266 = vld [vmem:[%s226 + $0x74] sm:$0xf]
      %v267 = vld [vmem:[%s226 + $0x78] sm:$0xf]
      %v268 = vld [vmem:[%s226 + $0x7c] sm:$0xf]
      %v269 = vunpack.c.l.bf16 %v237
      %v270 = vunpack.c.l.bf16 %v238
      %v271 = vunpack.c.l.bf16 %v239
      %v272 = vunpack.c.l.bf16 %v240
      %v273 = vunpack.c.l.bf16 %v241
      %v274 = vunpack.c.l.bf16 %v242
      %v275 = vunpack.c.l.bf16 %v243
      %v276 = vunpack.c.l.bf16 %v244
      %v277 = vunpack.c.l.bf16 %v245
      %v278 = vunpack.c.l.bf16 %v246
      %v279 = vunpack.c.l.bf16 %v247
      %v280 = vunpack.c.l.bf16 %v248
      %v281 = vunpack.c.l.bf16 %v249
      %v282 = vunpack.c.l.bf16 %v250
      %v283 = vunpack.c.l.bf16 %v251
      %v284 = vunpack.c.l.bf16 %v252
      %v285 = vunpack.c.l.bf16 %v253
      %v286 = vunpack.c.l.bf16 %v254
      %v287 = vunpack.c.l.bf16 %v255
      %v288 = vunpack.c.l.bf16 %v256
      %v289 = vunpack.c.l.bf16 %v257
      %v290 = vunpack.c.l.bf16 %v258
      %v291 = vunpack.c.l.bf16 %v259
      %v292 = vunpack.c.l.bf16 %v260
      %v293 = vunpack.c.l.bf16 %v261
      %v294 = vunpack.c.l.bf16 %v262
      %v295 = vunpack.c.l.bf16 %v263
      %v296 = vunpack.c.l.bf16 %v264
      %v297 = vunpack.c.l.bf16 %v265
      %v298 = vunpack.c.l.bf16 %v266
      %v299 = vunpack.c.l.bf16 %v267
      %v300 = vunpack.c.l.bf16 %v268
      %v301 = vld [vmem:[%s1] sm:$0x1]
      %v303 = vlaneseq
      %v304 = vshrl.u32 %v303, 7
      %v305 = vsub.s32 0, %v304
      %v306 = vrot.slane %v301, %v305
      %v308 = vmul.f32 %v269, %v306
      %v309 = vmul.f32 %v270, %v306
      %v310 = vmul.f32 %v271, %v306
      %v311 = vmul.f32 %v272, %v306
      %v312 = vmul.f32 %v273, %v306
      %v313 = vmul.f32 %v274, %v306
      %v314 = vmul.f32 %v275, %v306
      %v315 = vmul.f32 %v276, %v306
      %v316 = vmul.f32 %v277, %v306
      %v317 = vmul.f32 %v278, %v306
      %v318 = vmul.f32 %v279, %v306
      %v319 = vmul.f32 %v280, %v306
      %v320 = vmul.f32 %v281, %v306
      %v321 = vmul.f32 %v282, %v306
      %v322 = vmul.f32 %v283, %v306
      %v323 = vmul.f32 %v284, %v306
      %v324 = vmul.f32 %v285, %v306
      %v325 = vmul.f32 %v286, %v306
      %v326 = vmul.f32 %v287, %v306
      %v327 = vmul.f32 %v288, %v306
      %v328 = vmul.f32 %v289, %v306
      %v329 = vmul.f32 %v290, %v306
      %v330 = vmul.f32 %v291, %v306
      %v331 = vmul.f32 %v292, %v306
      %v332 = vmul.f32 %v293, %v306
      %v333 = vmul.f32 %v294, %v306
      %v334 = vmul.f32 %v295, %v306
      %v335 = vmul.f32 %v296, %v306
      %v336 = vmul.f32 %v297, %v306
      %v337 = vmul.f32 %v298, %v306
      %v338 = vmul.f32 %v299, %v306
      %v339 = vmul.f32 %v300, %v306
      %v340 = vld [vmem:[%s2] sm:$0x1]
      %v342 = vlaneseq
      %v343 = vshrl.u32 %v342, 7
      %v344 = vsub.s32 0, %v343
      %v345 = vrot.slane %v340, %v344
      %v347 = vadd.f32 %v308, %v345
      %v348 = vadd.f32 %v309, %v345
      %v349 = vadd.f32 %v310, %v345
      %v350 = vadd.f32 %v311, %v345
      %v351 = vadd.f32 %v312, %v345
      %v352 = vadd.f32 %v313, %v345
      %v353 = vadd.f32 %v314, %v345
      %v354 = vadd.f32 %v315, %v345
      %v355 = vadd.f32 %v316, %v345
      %v356 = vadd.f32 %v317, %v345
      %v357 = vadd.f32 %v318, %v345
      %v358 = vadd.f32 %v319, %v345
      %v359 = vadd.f32 %v320, %v345
      %v360 = vadd.f32 %v321, %v345
      %v361 = vadd.f32 %v322, %v345
      %v362 = vadd.f32 %v323, %v345
      %v363 = vadd.f32 %v324, %v345
      %v364 = vadd.f32 %v325, %v345
      %v365 = vadd.f32 %v326, %v345
      %v366 = vadd.f32 %v327, %v345
      %v367 = vadd.f32 %v328, %v345
      %v368 = vadd.f32 %v329, %v345
      %v369 = vadd.f32 %v330, %v345
      %v370 = vadd.f32 %v331, %v345
      %v371 = vadd.f32 %v332, %v345
      %v372 = vadd.f32 %v333, %v345
      %v373 = vadd.f32 %v334, %v345
      %v374 = vadd.f32 %v335, %v345
      %v375 = vadd.f32 %v336, %v345
      %v376 = vadd.f32 %v337, %v345
      %v377 = vadd.f32 %v338, %v345
      %v378 = vadd.f32 %v339, %v345
      %v379 = vmax.f32 %v347, 0.0
      %v380 = vmax.f32 %v348, 0.0
      %v381 = vmax.f32 %v349, 0.0
      %v382 = vmax.f32 %v350, 0.0
      %v383 = vmax.f32 %v351, 0.0
      %v384 = vmax.f32 %v352, 0.0
      %v385 = vmax.f32 %v353, 0.0
      %v386 = vmax.f32 %v354, 0.0
      %v387 = vmax.f32 %v355, 0.0
      %v388 = vmax.f32 %v356, 0.0
      %v389 = vmax.f32 %v357, 0.0
      %v390 = vmax.f32 %v358, 0.0
      %v391 = vmax.f32 %v359, 0.0
      %v392 = vmax.f32 %v360, 0.0
      %v393 = vmax.f32 %v361, 0.0
      %v394 = vmax.f32 %v362, 0.0
      %v395 = vmax.f32 %v363, 0.0
      %v396 = vmax.f32 %v364, 0.0
      %v397 = vmax.f32 %v365, 0.0
      %v398 = vmax.f32 %v366, 0.0
      %v399 = vmax.f32 %v367, 0.0
      %v400 = vmax.f32 %v368, 0.0
      %v401 = vmax.f32 %v369, 0.0
      %v402 = vmax.f32 %v370, 0.0
      %v403 = vmax.f32 %v371, 0.0
      %v404 = vmax.f32 %v372, 0.0
      %v405 = vmax.f32 %v373, 0.0
      %v406 = vmax.f32 %v374, 0.0
      %v407 = vmax.f32 %v375, 0.0
      %v408 = vmax.f32 %v376, 0.0
      %v409 = vmax.f32 %v377, 0.0
      %v410 = vmax.f32 %v378, 0.0
      %411 = vst [vmem:[#allocation2] sm:$0xff] 0.0
      %412 = vst [vmem:[#allocation2 + $0x8] sm:$0xff] 0.0
      %413 = vst [vmem:[#allocation2 + $0x10] sm:$0xff] 0.0
      %414 = vst [vmem:[#allocation2 + $0x18] sm:$0xff] 0.0
      %415 = vst [vmem:[#allocation2 + $0x20] sm:$0xff] 0.0
      %416 = vst [vmem:[#allocation2 + $0x28] sm:$0xff] 0.0
      %417 = vst [vmem:[#allocation2 + $0x30] sm:$0xff] 0.0
      %418 = vst [vmem:[#allocation2 + $0x38] sm:$0xff] 0.0
      %419 = vst [vmem:[#allocation2 + $0x40] sm:$0xff] 0.0
      %420 = vst [vmem:[#allocation2 + $0x48] sm:$0xff] 0.0
      %421 = vst [vmem:[#allocation2 + $0x50] sm:$0xff] 0.0
      %422 = vst [vmem:[#allocation2 + $0x58] sm:$0xff] 0.0
      %423 = vst [vmem:[#allocation2 + $0x60] sm:$0xff] 0.0
      %424 = vst [vmem:[#allocation2 + $0x68] sm:$0xff] 0.0
      %425 = vst [vmem:[#allocation2 + $0x70] sm:$0xff] 0.0
      %426 = vst [vmem:[#allocation2 + $0x78] sm:$0xff] 0.0
      %427 = vst [vmem:[#allocation2 + $0x80] sm:$0xff] 0.0
      %428 = vst [vmem:[#allocation2 + $0x88] sm:$0xff] 0.0
      %429 = vst [vmem:[#allocation2 + $0x90] sm:$0xff] 0.0
      %430 = vst [vmem:[#allocation2 + $0x98] sm:$0xff] 0.0
      %431 = vst [vmem:[#allocation2 + $0xa0] sm:$0xff] 0.0
      %432 = vst [vmem:[#allocation2 + $0xa8] sm:$0xff] 0.0
      %433 = vst [vmem:[#allocation2 + $0xb0] sm:$0xff] 0.0
      %434 = vst [vmem:[#allocation2 + $0xb8] sm:$0xff] 0.0
      %435 = vst [vmem:[#allocation2 + $0xc0] sm:$0xff] 0.0
      %436 = vst [vmem:[#allocation2 + $0xc8] sm:$0xff] 0.0
      %437 = vst [vmem:[#allocation2 + $0xd0] sm:$0xff] 0.0
      %438 = vst [vmem:[#allocation2 + $0xd8] sm:$0xff] 0.0
      %439 = vst [vmem:[#allocation2 + $0xe0] sm:$0xff] 0.0
      %440 = vst [vmem:[#allocation2 + $0xe8] sm:$0xff] 0.0
      %441 = vst [vmem:[#allocation2 + $0xf0] sm:$0xff] 0.0
      %442 = vst [vmem:[#allocation2 + $0xf8] sm:$0xff] 0.0
      %443 = vst [vmem:[#allocation2 + $0x100] sm:$0xff] 0.0
      %444 = vst [vmem:[#allocation2 + $0x108] sm:$0xff] 0.0
      %445 = vst [vmem:[#allocation2 + $0x110] sm:$0xff] 0.0
      %446 = vst [vmem:[#allocation2 + $0x118] sm:$0xff] 0.0
      %447 = vst [vmem:[#allocation2 + $0x120] sm:$0xff] 0.0
      %448 = vst [vmem:[#allocation2 + $0x128] sm:$0xff] 0.0
      %449 = vst [vmem:[#allocation2 + $0x130] sm:$0xff] 0.0
      %450 = vst [vmem:[#allocation2 + $0x138] sm:$0xff] 0.0
      %451 = vst [vmem:[#allocation2 + $0x140] sm:$0xff] 0.0
      %452 = vst [vmem:[#allocation2 + $0x148] sm:$0xff] 0.0
      %453 = vst [vmem:[#allocation2 + $0x150] sm:$0xff] 0.0
      %454 = vst [vmem:[#allocation2 + $0x158] sm:$0xff] 0.0
      %455 = vst [vmem:[#allocation2 + $0x160] sm:$0xff] 0.0
      %456 = vst [vmem:[#allocation2 + $0x168] sm:$0xff] 0.0
      %457 = vst [vmem:[#allocation2 + $0x170] sm:$0xff] 0.0
      %458 = vst [vmem:[#allocation2 + $0x178] sm:$0xff] 0.0
      %459 = vst [vmem:[#allocation2 + $0x180] sm:$0xff] 0.0
      %460 = vst [vmem:[#allocation2 + $0x188] sm:$0xff] 0.0
      %461 = vst [vmem:[#allocation2 + $0x190] sm:$0xff] 0.0
      %462 = vst [vmem:[#allocation2 + $0x198] sm:$0xff] 0.0
      %463 = vst [vmem:[#allocation2 + $0x1a0] sm:$0xff] 0.0
      %464 = vst [vmem:[#allocation2 + $0x1a8] sm:$0xff] 0.0
      %465 = vst [vmem:[#allocation2 + $0x1b0] sm:$0xff] 0.0
      %466 = vst [vmem:[#allocation2 + $0x1b8] sm:$0xff] 0.0
      %467 = vst [vmem:[#allocation2 + $0x1c0] sm:$0xff] 0.0
      %468 = vst [vmem:[#allocation2 + $0x1c8] sm:$0xff] 0.0
      %469 = vst [vmem:[#allocation2 + $0x1d0] sm:$0xff] 0.0
      %470 = vst [vmem:[#allocation2 + $0x1d8] sm:$0xff] 0.0
      %471 = vst [vmem:[#allocation2 + $0x1e0] sm:$0xff] 0.0
      %472 = vst [vmem:[#allocation2 + $0x1e8] sm:$0xff] 0.0
      %473 = vst [vmem:[#allocation2 + $0x1f0] sm:$0xff] 0.0
      %474 = vst [vmem:[#allocation2 + $0x1f8] sm:$0xff] 0.0
      %475 = vst [vmem:[#allocation2 + $0x200] sm:$0xff] 0.0
      %476 = vst [vmem:[#allocation2 + $0x208] sm:$0xff] 0.0
      %477 = vst [vmem:[#allocation2 + $0x210] sm:$0xff] 0.0
      %478 = vst [vmem:[#allocation2 + $0x218] sm:$0xff] 0.0
      %479 = vst [vmem:[#allocation2 + $0x220] sm:$0xff] 0.0
      %480 = vst [vmem:[#allocation2 + $0x228] sm:$0xff] 0.0
      %481 = vst [vmem:[#allocation2 + $0x230] sm:$0xff] 0.0
      %482 = vst [vmem:[#allocation2 + $0x238] sm:$0xff] 0.0
      %s483 = scalar_lea.vmem [#allocation2], 32
      %484 = vst [vmem:[%s483 + $0x8] sm:$0xff] %v379
      %485 = vst [vmem:[%s483 + $0x10] sm:$0xff] %v380
      %486 = vst [vmem:[%s483 + $0x28] sm:$0xff] %v381
      %487 = vst [vmem:[%s483 + $0x30] sm:$0xff] %v382
      %488 = vst [vmem:[%s483 + $0x48] sm:$0xff] %v383
      %489 = vst [vmem:[%s483 + $0x50] sm:$0xff] %v384
      %490 = vst [vmem:[%s483 + $0x68] sm:$0xff] %v385
      %491 = vst [vmem:[%s483 + $0x70] sm:$0xff] %v386
      %492 = vst [vmem:[%s483 + $0x88] sm:$0xff] %v387
      %493 = vst [vmem:[%s483 + $0x90] sm:$0xff] %v388
      %494 = vst [vmem:[%s483 + $0xa8] sm:$0xff] %v389
      %495 = vst [vmem:[%s483 + $0xb0] sm:$0xff] %v390
      %496 = vst [vmem:[%s483 + $0xc8] sm:$0xff] %v391
      %497 = vst [vmem:[%s483 + $0xd0] sm:$0xff] %v392
      %498 = vst [vmem:[%s483 + $0xe8] sm:$0xff] %v393
      %499 = vst [vmem:[%s483 + $0xf0] sm:$0xff] %v394
      %500 = vst [vmem:[%s483 + $0x108] sm:$0xff] %v395
      %501 = vst [vmem:[%s483 + $0x110] sm:$0xff] %v396
      %502 = vst [vmem:[%s483 + $0x128] sm:$0xff] %v397
      %503 = vst [vmem:[%s483 + $0x130] sm:$0xff] %v398
      %504 = vst [vmem:[%s483 + $0x148] sm:$0xff] %v399
      %505 = vst [vmem:[%s483 + $0x150] sm:$0xff] %v400
      %506 = vst [vmem:[%s483 + $0x168] sm:$0xff] %v401
      %507 = vst [vmem:[%s483 + $0x170] sm:$0xff] %v402
      %508 = vst [vmem:[%s483 + $0x188] sm:$0xff] %v403
      %509 = vst [vmem:[%s483 + $0x190] sm:$0xff] %v404
      %510 = vst [vmem:[%s483 + $0x1a8] sm:$0xff] %v405
      %511 = vst [vmem:[%s483 + $0x1b0] sm:$0xff] %v406
      %512 = vst [vmem:[%s483 + $0x1c8] sm:$0xff] %v407
      %513 = vst [vmem:[%s483 + $0x1d0] sm:$0xff] %v408
      %514 = vst [vmem:[%s483 + $0x1e8] sm:$0xff] %v409
      %515 = vst [vmem:[%s483 + $0x1f0] sm:$0xff] %v410
      %v516 = vld [vmem:[#allocation2 + $0x7] sm:$0xff]
      %v517 = vld [vmem:[#allocation2 + $0xf] sm:$0xff]
      %v518 = vld [vmem:[#allocation2 + $0x27] sm:$0xff]
      %v519 = vld [vmem:[#allocation2 + $0x2f] sm:$0xff]
      %v520 = vld [vmem:[#allocation2 + $0x47] sm:$0xff]
      %v521 = vld [vmem:[#allocation2 + $0x4f] sm:$0xff]
      %v522 = vld [vmem:[#allocation2 + $0x67] sm:$0xff]
      %v523 = vld [vmem:[#allocation2 + $0x6f] sm:$0xff]
      %v524 = vld [vmem:[#allocation2 + $0x87] sm:$0xff]
      %v525 = vld [vmem:[#allocation2 + $0x8f] sm:$0xff]
      %v526 = vld [vmem:[#allocation2 + $0xa7] sm:$0xff]
      %v527 = vld [vmem:[#allocation2 + $0xaf] sm:$0xff]
      %v528 = vld [vmem:[#allocation2 + $0xc7] sm:$0xff]
      %v529 = vld [vmem:[#allocation2 + $0xcf] sm:$0xff]
      %v530 = vld [vmem:[#allocation2 + $0xe7] sm:$0xff]
      %v531 = vld [vmem:[#allocation2 + $0xef] sm:$0xff]
      %v532 = vld [vmem:[#allocation2 + $0x107] sm:$0xff]
      %v533 = vld [vmem:[#allocation2 + $0x10f] sm:$0xff]
      %v534 = vld [vmem:[#allocation2 + $0x127] sm:$0xff]
      %v535 = vld [vmem:[#allocation2 + $0x12f] sm:$0xff]
      %v536 = vld [vmem:[#allocation2 + $0x147] sm:$0xff]
      %v537 = vld [vmem:[#allocation2 + $0x14f] sm:$0xff]
      %v538 = vld [vmem:[#allocation2 + $0x167] sm:$0xff]
      %v539 = vld [vmem:[#allocation2 + $0x16f] sm:$0xff]
      %v540 = vld [vmem:[#allocation2 + $0x187] sm:$0xff]
      %v541 = vld [vmem:[#allocation2 + $0x18f] sm:$0xff]
      %v542 = vld [vmem:[#allocation2 + $0x1a7] sm:$0xff]
      %v543 = vld [vmem:[#allocation2 + $0x1af] sm:$0xff]
      %v544 = vld [vmem:[#allocation2 + $0x1c7] sm:$0xff]
      %v545 = vld [vmem:[#allocation2 + $0x1cf] sm:$0xff]
      %v546 = vld [vmem:[#allocation2 + $0x1e7] sm:$0xff]
      %v547 = vld [vmem:[#allocation2 + $0x1ef] sm:$0xff]
      %v548 = vpack.c.bf16 %v517, %v516
      %v549 = vpack.c.bf16 %v519, %v518
      %v550 = vpack.c.bf16 %v521, %v520
      %v551 = vpack.c.bf16 %v523, %v522
      %v552 = vpack.c.bf16 %v525, %v524
      %v553 = vpack.c.bf16 %v527, %v526
      %v554 = vpack.c.bf16 %v529, %v528
      %v555 = vpack.c.bf16 %v531, %v530
      %v556 = vpack.c.bf16 %v533, %v532
      %v557 = vpack.c.bf16 %v535, %v534
      %v558 = vpack.c.bf16 %v537, %v536
      %v559 = vpack.c.bf16 %v539, %v538
      %v560 = vpack.c.bf16 %v541, %v540
      %v561 = vpack.c.bf16 %v543, %v542
      %v562 = vpack.c.bf16 %v545, %v544
      %v563 = vpack.c.bf16 %v547, %v546
      %v564 = vld [vmem:[%s3] sm:$0xf]
      %v565 = vld [vmem:[%s3 + $0x4] sm:$0xf]
      %v566 = vld [vmem:[%s3 + $0x8] sm:$0xf]
      %v567 = vld [vmem:[%s3 + $0xc] sm:$0xf]
      %v568 = vld [vmem:[%s3 + $0x10] sm:$0xf]
      %v569 = vld [vmem:[%s3 + $0x14] sm:$0xf]
      %v570 = vld [vmem:[%s3 + $0x18] sm:$0xf]
      %v571 = vld [vmem:[%s3 + $0x1c] sm:$0xf]
      %v572 = vld [vmem:[%s3 + $0x20] sm:$0xf]
      %v573 = vld [vmem:[%s3 + $0x24] sm:$0xf]
      %v574 = vld [vmem:[%s3 + $0x28] sm:$0xf]
      %v575 = vld [vmem:[%s3 + $0x2c] sm:$0xf]
      %v576 = vld [vmem:[%s3 + $0x30] sm:$0xf]
      %v577 = vld [vmem:[%s3 + $0x34] sm:$0xf]
      %v578 = vld [vmem:[%s3 + $0x38] sm:$0xf]
      %v579 = vld [vmem:[%s3 + $0x3c] sm:$0xf]
      %v580 = vld [vmem:[#allocation2 + $0x8] sm:$0xff]
      %v581 = vld [vmem:[#allocation2 + $0x10] sm:$0xff]
      %v582 = vld [vmem:[#allocation2 + $0x28] sm:$0xff]
      %v583 = vld [vmem:[#allocation2 + $0x30] sm:$0xff]
      %v584 = vld [vmem:[#allocation2 + $0x48] sm:$0xff]
      %v585 = vld [vmem:[#allocation2 + $0x50] sm:$0xff]
      %v586 = vld [vmem:[#allocation2 + $0x68] sm:$0xff]
      %v587 = vld [vmem:[#allocation2 + $0x70] sm:$0xff]
      %v588 = vld [vmem:[#allocation2 + $0x88] sm:$0xff]
      %v589 = vld [vmem:[#allocation2 + $0x90] sm:$0xff]
      %v590 = vld [vmem:[#allocation2 + $0xa8] sm:$0xff]
      %v591 = vld [vmem:[#allocation2 + $0xb0] sm:$0xff]
      %v592 = vld [vmem:[#allocation2 + $0xc8] sm:$0xff]
      %v593 = vld [vmem:[#allocation2 + $0xd0] sm:$0xff]
      %v594 = vld [vmem:[#allocation2 + $0xe8] sm:$0xff]
      %v595 = vld [vmem:[#allocation2 + $0xf0] sm:$0xff]
      %v596 = vld [vmem:[#allocation2 + $0x108] sm:$0xff]
      %v597 = vld [vmem:[#allocation2 + $0x110] sm:$0xff]
      %v598 = vld [vmem:[#allocation2 + $0x128] sm:$0xff]
      %v599 = vld [vmem:[#allocation2 + $0x130] sm:$0xff]
      %v600 = vld [vmem:[#allocation2 + $0x148] sm:$0xff]
      %v601 = vld [vmem:[#allocation2 + $0x150] sm:$0xff]
      %v602 = vld [vmem:[#allocation2 + $0x168] sm:$0xff]
      %v603 = vld [vmem:[#allocation2 + $0x170] sm:$0xff]
      %v604 = vld [vmem:[#allocation2 + $0x188] sm:$0xff]
      %v605 = vld [vmem:[#allocation2 + $0x190] sm:$0xff]
      %v606 = vld [vmem:[#allocation2 + $0x1a8] sm:$0xff]
      %v607 = vld [vmem:[#allocation2 + $0x1b0] sm:$0xff]
      %v608 = vld [vmem:[#allocation2 + $0x1c8] sm:$0xff]
      %v609 = vld [vmem:[#allocation2 + $0x1d0] sm:$0xff]
      %v610 = vld [vmem:[#allocation2 + $0x1e8] sm:$0xff]
      %v611 = vld [vmem:[#allocation2 + $0x1f0] sm:$0xff]
      %v612 = vpack.c.bf16 %v581, %v580
      %v613 = vpack.c.bf16 %v583, %v582
      %v614 = vpack.c.bf16 %v585, %v584
      %v615 = vpack.c.bf16 %v587, %v586
      %v616 = vpack.c.bf16 %v589, %v588
      %v617 = vpack.c.bf16 %v591, %v590
      %v618 = vpack.c.bf16 %v593, %v592
      %v619 = vpack.c.bf16 %v595, %v594
      %v620 = vpack.c.bf16 %v597, %v596
      %v621 = vpack.c.bf16 %v599, %v598
      %v622 = vpack.c.bf16 %v601, %v600
      %v623 = vpack.c.bf16 %v603, %v602
      %v624 = vpack.c.bf16 %v605, %v604
      %v625 = vpack.c.bf16 %v607, %v606
      %v626 = vpack.c.bf16 %v609, %v608
      %v627 = vpack.c.bf16 %v611, %v610
      %s628 = scalar_lea.vmem %s3, 64
      %v629 = vld [vmem:[%s628] sm:$0xf]
      %v630 = vld [vmem:[%s628 + $0x4] sm:$0xf]
      %v631 = vld [vmem:[%s628 + $0x8] sm:$0xf]
      %v632 = vld [vmem:[%s628 + $0xc] sm:$0xf]
      %v633 = vld [vmem:[%s628 + $0x10] sm:$0xf]
      %v634 = vld [vmem:[%s628 + $0x14] sm:$0xf]
      %v635 = vld [vmem:[%s628 + $0x18] sm:$0xf]
      %v636 = vld [vmem:[%s628 + $0x1c] sm:$0xf]
      %v637 = vld [vmem:[%s628 + $0x20] sm:$0xf]
      %v638 = vld [vmem:[%s628 + $0x24] sm:$0xf]
      %v639 = vld [vmem:[%s628 + $0x28] sm:$0xf]
      %v640 = vld [vmem:[%s628 + $0x2c] sm:$0xf]
      %v641 = vld [vmem:[%s628 + $0x30] sm:$0xf]
      %v642 = vld [vmem:[%s628 + $0x34] sm:$0xf]
      %v643 = vld [vmem:[%s628 + $0x38] sm:$0xf]
      %v644 = vld [vmem:[%s628 + $0x3c] sm:$0xf]
      %v661 = vunpack.c.l.b16 %v629
      %v662 = vunpack.c.l.b16 %v630
      %v663 = vunpack.c.l.b16 %v631
      %v664 = vunpack.c.l.b16 %v632
      %v665 = vunpack.c.l.b16 %v633
      %v666 = vunpack.c.l.b16 %v634
      %v667 = vunpack.c.l.b16 %v635
      %v668 = vunpack.c.l.b16 %v636
      %v669 = vunpack.c.l.b16 %v637
      %v670 = vunpack.c.l.b16 %v638
      %v671 = vunpack.c.l.b16 %v639
      %v672 = vunpack.c.l.b16 %v640
      %v673 = vunpack.c.l.b16 %v641
      %v674 = vunpack.c.l.b16 %v642
      %v675 = vunpack.c.l.b16 %v643
      %v676 = vunpack.c.l.b16 %v644
      %v677 = vpack.c.b16 %v662, %v661
      %v678 = vpack.c.b16 %v664, %v663
      %v679 = vpack.c.b16 %v666, %v665
      %v680 = vpack.c.b16 %v668, %v667
      %v681 = vpack.c.b16 %v670, %v669
      %v682 = vpack.c.b16 %v672, %v671
      %v683 = vpack.c.b16 %v674, %v673
      %v684 = vpack.c.b16 %v676, %v675
      %693 = vmatprep.subr.bf16.mxu0 0
      %694 = vmatpush1.bf16.msra.mxu0 %v677
      %695 = vmatprep.subr.bf16.mxu0 0
      %696 = vmatpush1.bf16.msra.mxu0 %v678
      %697 = vmatprep.subr.bf16.mxu0 0
      %698 = vmatpush1.bf16.msra.mxu0 %v679
      %699 = vmatprep.subr.bf16.mxu0 0
      %700 = vmatpush1.bf16.msra.mxu0 %v680
      %701 = vmatprep.subr.bf16.mxu0 0
      %702 = vmatpush1.bf16.msra.mxu0 %v681
      %703 = vmatprep.subr.bf16.mxu0 0
      %704 = vmatpush1.bf16.msra.mxu0 %v682
      %705 = vmatprep.subr.bf16.mxu0 0
      %706 = vmatpush1.bf16.msra.mxu0 %v683
      %707 = vmatprep.subr.bf16.mxu0 0
      %708 = vmatpush1.bf16.msra.mxu0 %v684
      %709 = vmatprep.subr.bf16.mxu0 0
      %710 = vmatpush1.bf16.msra.mxu0 0
      %711 = vmatprep.subr.bf16.mxu0 0
      %712 = vmatpush1.bf16.msra.mxu0 0
      %713 = vmatprep.subr.bf16.mxu0 0
      %714 = vmatpush1.bf16.msra.mxu0 0
      %715 = vmatprep.subr.bf16.mxu0 0
      %716 = vmatpush1.bf16.msra.mxu0 0
      %717 = vmatprep.subr.bf16.mxu0 0
      %718 = vmatpush1.bf16.msra.mxu0 0
      %719 = vmatprep.subr.bf16.mxu0 0
      %720 = vmatpush1.bf16.msra.mxu0 0
      %721 = vmatprep.subr.bf16.mxu0 0
      %722 = vmatpush1.bf16.msra.mxu0 0
      %723 = vmatprep.subr.bf16.mxu0 0
      %724 = vmatpush1.bf16.msra.mxu0 0
      %725 = vmatprep.mubr.bf16.mxu0 0
      %726 = vmatmul.mubr.bf16.gmra.mrb[0].mxu0 %v612
      %v727 = vpop.f32.mrb[0].mxu0
      %v728 = vadd.f32 0.0, %v727
      %v729 = vpop.f32.mrb[0].mxu0
      %v730 = vpop.f32.mrb[0].mxu0
      %v731 = vadd.f32 0.0, %v730
      %v732 = vpop.f32.mrb[0].mxu0
      %733 = vmatprep.mubr.bf16.mxu0 0
      %734 = vmatmul.mubr.bf16.gmra.mrb[0].mxu0 %v613
      %v735 = vpop.f32.mrb[0].mxu0
      %v736 = vadd.f32 0.0, %v735
      %v737 = vpop.f32.mrb[0].mxu0
      %v738 = vpop.f32.mrb[0].mxu0
      %v739 = vadd.f32 0.0, %v738
      %v740 = vpop.f32.mrb[0].mxu0
      %741 = vmatprep.mubr.bf16.mxu0 0
      %742 = vmatmul.mubr.bf16.gmra.mrb[0].mxu0 %v614
      %v743 = vpop.f32.mrb[0].mxu0
      %v744 = vadd.f32 0.0, %v743
      %v745 = vpop.f32.mrb[0].mxu0
      %v746 = vpop.f32.mrb[0].mxu0
      %v747 = vadd.f32 0.0, %v746
      %v748 = vpop.f32.mrb[0].mxu0
      %749 = vmatprep.mubr.bf16.mxu0 0
      %750 = vmatmul.mubr.bf16.gmra.mrb[0].mxu0 %v615
      %v751 = vpop.f32.mrb[0].mxu0
      %v752 = vadd.f32 0.0, %v751
      %v753 = vpop.f32.mrb[0].mxu0
      %v754 = vpop.f32.mrb[0].mxu0
      %v755 = vadd.f32 0.0, %v754
      %v756 = vpop.f32.mrb[0].mxu0
      %757 = vmatprep.mubr.bf16.mxu0 0
      %758 = vmatmul.mubr.bf16.gmra.mrb[0].mxu0 %v616
      %v759 = vpop.f32.mrb[0].mxu0
      %v760 = vadd.f32 0.0, %v759
      %v761 = vpop.f32.mrb[0].mxu0
      %v762 = vpop.f32.mrb[0].mxu0
      %v763 = vadd.f32 0.0, %v762
      %v764 = vpop.f32.mrb[0].mxu0
      %765 = vmatprep.mubr.bf16.mxu0 0
      %766 = vmatmul.mubr.bf16.gmra.mrb[0].mxu0 %v617
      %v767 = vpop.f32.mrb[0].mxu0
      %v768 = vadd.f32 0.0, %v767
      %v769 = vpop.f32.mrb[0].mxu0
      %v770 = vpop.f32.mrb[0].mxu0
      %v771 = vadd.f32 0.0, %v770
      %v772 = vpop.f32.mrb[0].mxu0
      %773 = vmatprep.mubr.bf16.mxu0 0
      %774 = vmatmul.mubr.bf16.gmra.mrb[0].mxu0 %v618
      %v775 = vpop.f32.mrb[0].mxu0
      %v776 = vadd.f32 0.0, %v775
      %v777 = vpop.f32.mrb[0].mxu0
      %v778 = vpop.f32.mrb[0].mxu0
      %v779 = vadd.f32 0.0, %v778
      %v780 = vpop.f32.mrb[0].mxu0
      %781 = vmatprep.mubr.bf16.mxu0 0
      %782 = vmatmul.mubr.bf16.gmra.mrb[0].mxu0 %v619
      %v783 = vpop.f32.mrb[0].mxu0
      %v784 = vadd.f32 0.0, %v783
      %v785 = vpop.f32.mrb[0].mxu0
      %v786 = vpop.f32.mrb[0].mxu0
      %v787 = vadd.f32 0.0, %v786
      %v788 = vpop.f32.mrb[0].mxu0
      %789 = vmatprep.mubr.bf16.mxu0 0
      %790 = vmatmul.mubr.bf16.gmra.mrb[0].mxu0 %v620
      %v791 = vpop.f32.mrb[0].mxu0
      %v792 = vadd.f32 0.0, %v791
      %v793 = vpop.f32.mrb[0].mxu0
      %v794 = vpop.f32.mrb[0].mxu0
      %v795 = vadd.f32 0.0, %v794
      %v796 = vpop.f32.mrb[0].mxu0
      %797 = vmatprep.mubr.bf16.mxu0 0
      %798 = vmatmul.mubr.bf16.gmra.mrb[0].mxu0 %v621
      %v799 = vpop.f32.mrb[0].mxu0
      %v800 = vadd.f32 0.0, %v799
      %v801 = vpop.f32.mrb[0].mxu0
      %v802 = vpop.f32.mrb[0].mxu0
      %v803 = vadd.f32 0.0, %v802
      %v804 = vpop.f32.mrb[0].mxu0
      %805 = vmatprep.mubr.bf16.mxu0 0
      %806 = vmatmul.mubr.bf16.gmra.mrb[0].mxu0 %v622
      %v807 = vpop.f32.mrb[0].mxu0
      %v808 = vadd.f32 0.0, %v807
      %v809 = vpop.f32.mrb[0].mxu0
      %v810 = vpop.f32.mrb[0].mxu0
      %v811 = vadd.f32 0.0, %v810
      %v812 = vpop.f32.mrb[0].mxu0
      %813 = vmatprep.mubr.bf16.mxu0 0
      %814 = vmatmul.mubr.bf16.gmra.mrb[0].mxu0 %v623
      %v815 = vpop.f32.mrb[0].mxu0
      %v816 = vadd.f32 0.0, %v815
      %v817 = vpop.f32.mrb[0].mxu0
      %v818 = vpop.f32.mrb[0].mxu0
      %v819 = vadd.f32 0.0, %v818
      %v820 = vpop.f32.mrb[0].mxu0
      %821 = vmatprep.mubr.bf16.mxu0 0
      %822 = vmatmul.mubr.bf16.gmra.mrb[0].mxu0 %v624
      %v823 = vpop.f32.mrb[0].mxu0
      %v824 = vadd.f32 0.0, %v823
      %v825 = vpop.f32.mrb[0].mxu0
      %v826 = vpop.f32.mrb[0].mxu0
      %v827 = vadd.f32 0.0, %v826
      %v828 = vpop.f32.mrb[0].mxu0
      %829 = vmatprep.mubr.bf16.mxu0 0
      %830 = vmatmul.mubr.bf16.gmra.mrb[0].mxu0 %v625
      %v831 = vpop.f32.mrb[0].mxu0
      %v832 = vadd.f32 0.0, %v831
      %v833 = vpop.f32.mrb[0].mxu0
      %v834 = vpop.f32.mrb[0].mxu0
      %v835 = vadd.f32 0.0, %v834
      %v836 = vpop.f32.mrb[0].mxu0
      %837 = vmatprep.mubr.bf16.mxu0 0
      %838 = vmatmul.mubr.bf16.gmra.mrb[0].mxu0 %v626
      %v839 = vpop.f32.mrb[0].mxu0
      %v840 = vadd.f32 0.0, %v839
      %v841 = vpop.f32.mrb[0].mxu0
      %v842 = vpop.f32.mrb[0].mxu0
      %v843 = vadd.f32 0.0, %v842
      %v844 = vpop.f32.mrb[0].mxu0
      %845 = vmatprep.mubr.bf16.mxu0 0
      %846 = vmatmul.mubr.bf16.gmra.mrb[0].mxu0 %v627
      %v847 = vpop.f32.mrb[0].mxu0
      %v848 = vadd.f32 0.0, %v847
      %v849 = vpop.f32.mrb[0].mxu0
      %v850 = vpop.f32.mrb[0].mxu0
      %v851 = vadd.f32 0.0, %v850
      %v852 = vpop.f32.mrb[0].mxu0
      %853 = vdwg.mxu0
      %v870 = vunpack.c.l.b16 %v564
      %v871 = vunpack.c.l.b16 %v565
      %v872 = vunpack.c.l.b16 %v566
      %v873 = vunpack.c.l.b16 %v567
      %v874 = vunpack.c.l.b16 %v568
      %v875 = vunpack.c.l.b16 %v569
      %v876 = vunpack.c.l.b16 %v570
      %v877 = vunpack.c.l.b16 %v571
      %v878 = vunpack.c.l.b16 %v572
      %v879 = vunpack.c.l.b16 %v573
      %v880 = vunpack.c.l.b16 %v574
      %v881 = vunpack.c.l.b16 %v575
      %v882 = vunpack.c.l.b16 %v576
      %v883 = vunpack.c.l.b16 %v577
      %v884 = vunpack.c.l.b16 %v578
      %v885 = vunpack.c.l.b16 %v579
      %v886 = vpack.c.b16 %v871, %v870
      %v887 = vpack.c.b16 %v873, %v872
      %v888 = vpack.c.b16 %v875, %v874
      %v889 = vpack.c.b16 %v877, %v876
      %v890 = vpack.c.b16 %v879, %v878
      %v891 = vpack.c.b16 %v881, %v880
      %v892 = vpack.c.b16 %v883, %v882
      %v893 = vpack.c.b16 %v885, %v884
      %902 = vmatprep.subr.bf16.mxu0 0
      %903 = vmatpush1.bf16.msra.mxu0 %v886
      %904 = vmatprep.subr.bf16.mxu0 0
      %905 = vmatpush1.bf16.msra.mxu0 %v887
      %906 = vmatprep.subr.bf16.mxu0 0
      %907 = vmatpush1.bf16.msra.mxu0 %v888
      %908 = vmatprep.subr.bf16.mxu0 0
      %909 = vmatpush1.bf16.msra.mxu0 %v889
      %910 = vmatprep.subr.bf16.mxu0 0
      %911 = vmatpush1.bf16.msra.mxu0 %v890
      %912 = vmatprep.subr.bf16.mxu0 0
      %913 = vmatpush1.bf16.msra.mxu0 %v891
      %914 = vmatprep.subr.bf16.mxu0 0
      %915 = vmatpush1.bf16.msra.mxu0 %v892
      %916 = vmatprep.subr.bf16.mxu0 0
      %917 = vmatpush1.bf16.msra.mxu0 %v893
      %918 = vmatprep.subr.bf16.mxu0 0
      %919 = vmatpush1.bf16.msra.mxu0 0
      %920 = vmatprep.subr.bf16.mxu0 0
      %921 = vmatpush1.bf16.msra.mxu0 0
      %922 = vmatprep.subr.bf16.mxu0 0
      %923 = vmatpush1.bf16.msra.mxu0 0
      %924 = vmatprep.subr.bf16.mxu0 0
      %925 = vmatpush1.bf16.msra.mxu0 0
      %926 = vmatprep.subr.bf16.mxu0 0
      %927 = vmatpush1.bf16.msra.mxu0 0
      %928 = vmatprep.subr.bf16.mxu0 0
      %929 = vmatpush1.bf16.msra.mxu0 0
      %930 = vmatprep.subr.bf16.mxu0 0
      %931 = vmatpush1.bf16.msra.mxu0 0
      %932 = vmatprep.subr.bf16.mxu0 0
      %933 = vmatpush1.bf16.msra.mxu0 0
      %934 = vmatprep.mubr.bf16.mxu0 0
      %935 = vmatmul.mubr.bf16.gmra.mrb[0].mxu0 %v548
      %v936 = vpop.f32.mrb[0].mxu0
      %v937 = vadd.f32 %v728, %v936
      %v938 = vpop.f32.mrb[0].mxu0
      %v939 = vpop.f32.mrb[0].mxu0
      %v940 = vadd.f32 %v731, %v939
      %v941 = vpop.f32.mrb[0].mxu0
      %942 = vmatprep.mubr.bf16.mxu0 0
      %943 = vmatmul.mubr.bf16.gmra.mrb[0].mxu0 %v549
      %v944 = vpop.f32.mrb[0].mxu0
      %v945 = vadd.f32 %v736, %v944
      %v946 = vpop.f32.mrb[0].mxu0
      %v947 = vpop.f32.mrb[0].mxu0
      %v948 = vadd.f32 %v739, %v947
      %v949 = vpop.f32.mrb[0].mxu0
      %950 = vmatprep.mubr.bf16.mxu0 0
      %951 = vmatmul.mubr.bf16.gmra.mrb[0].mxu0 %v550
      %v952 = vpop.f32.mrb[0].mxu0
      %v953 = vadd.f32 %v744, %v952
      %v954 = vpop.f32.mrb[0].mxu0
      %v955 = vpop.f32.mrb[0].mxu0
      %v956 = vadd.f32 %v747, %v955
      %v957 = vpop.f32.mrb[0].mxu0
      %958 = vmatprep.mubr.bf16.mxu0 0
      %959 = vmatmul.mubr.bf16.gmra.mrb[0].mxu0 %v551
      %v960 = vpop.f32.mrb[0].mxu0
      %v961 = vadd.f32 %v752, %v960
      %v962 = vpop.f32.mrb[0].mxu0
      %v963 = vpop.f32.mrb[0].mxu0
      %v964 = vadd.f32 %v755, %v963
      %v965 = vpop.f32.mrb[0].mxu0
      %966 = vmatprep.mubr.bf16.mxu0 0
      %967 = vmatmul.mubr.bf16.gmra.mrb[0].mxu0 %v552
      %v968 = vpop.f32.mrb[0].mxu0
      %v969 = vadd.f32 %v760, %v968
      %v970 = vpop.f32.mrb[0].mxu0
      %v971 = vpop.f32.mrb[0].mxu0
      %v972 = vadd.f32 %v763, %v971
      %v973 = vpop.f32.mrb[0].mxu0
      %974 = vmatprep.mubr.bf16.mxu0 0
      %975 = vmatmul.mubr.bf16.gmra.mrb[0].mxu0 %v553
      %v976 = vpop.f32.mrb[0].mxu0
      %v977 = vadd.f32 %v768, %v976
      %v978 = vpop.f32.mrb[0].mxu0
      %v979 = vpop.f32.mrb[0].mxu0
      %v980 = vadd.f32 %v771, %v979
      %v981 = vpop.f32.mrb[0].mxu0
      %982 = vmatprep.mubr.bf16.mxu0 0
      %983 = vmatmul.mubr.bf16.gmra.mrb[0].mxu0 %v554
      %v984 = vpop.f32.mrb[0].mxu0
      %v985 = vadd.f32 %v776, %v984
      %v986 = vpop.f32.mrb[0].mxu0
      %v987 = vpop.f32.mrb[0].mxu0
      %v988 = vadd.f32 %v779, %v987
      %v989 = vpop.f32.mrb[0].mxu0
      %990 = vmatprep.mubr.bf16.mxu0 0
      %991 = vmatmul.mubr.bf16.gmra.mrb[0].mxu0 %v555
      %v992 = vpop.f32.mrb[0].mxu0
      %v993 = vadd.f32 %v784, %v992
      %v994 = vpop.f32.mrb[0].mxu0
      %v995 = vpop.f32.mrb[0].mxu0
      %v996 = vadd.f32 %v787, %v995
      %v997 = vpop.f32.mrb[0].mxu0
      %998 = vmatprep.mubr.bf16.mxu0 0
      %999 = vmatmul.mubr.bf16.gmra.mrb[0].mxu0 %v556
      %v1000 = vpop.f32.mrb[0].mxu0
      %v1001 = vadd.f32 %v792, %v1000
      %v1002 = vpop.f32.mrb[0].mxu0
      %v1003 = vpop.f32.mrb[0].mxu0
      %v1004 = vadd.f32 %v795, %v1003
      %v1005 = vpop.f32.mrb[0].mxu0
      %1006 = vmatprep.mubr.bf16.mxu0 0
      %1007 = vmatmul.mubr.bf16.gmra.mrb[0].mxu0 %v557
      %v1008 = vpop.f32.mrb[0].mxu0
      %v1009 = vadd.f32 %v800, %v1008
      %v1010 = vpop.f32.mrb[0].mxu0
      %v1011 = vpop.f32.mrb[0].mxu0
      %v1012 = vadd.f32 %v803, %v1011
      %v1013 = vpop.f32.mrb[0].mxu0
      %1014 = vmatprep.mubr.bf16.mxu0 0
      %1015 = vmatmul.mubr.bf16.gmra.mrb[0].mxu0 %v558
      %v1016 = vpop.f32.mrb[0].mxu0
      %v1017 = vadd.f32 %v808, %v1016
      %v1018 = vpop.f32.mrb[0].mxu0
      %v1019 = vpop.f32.mrb[0].mxu0
      %v1020 = vadd.f32 %v811, %v1019
      %v1021 = vpop.f32.mrb[0].mxu0
      %1022 = vmatprep.mubr.bf16.mxu0 0
      %1023 = vmatmul.mubr.bf16.gmra.mrb[0].mxu0 %v559
      %v1024 = vpop.f32.mrb[0].mxu0
      %v1025 = vadd.f32 %v816, %v1024
      %v1026 = vpop.f32.mrb[0].mxu0
      %v1027 = vpop.f32.mrb[0].mxu0
      %v1028 = vadd.f32 %v819, %v1027
      %v1029 = vpop.f32.mrb[0].mxu0
      %1030 = vmatprep.mubr.bf16.mxu0 0
      %1031 = vmatmul.mubr.bf16.gmra.mrb[0].mxu0 %v560
      %v1032 = vpop.f32.mrb[0].mxu0
      %v1033 = vadd.f32 %v824, %v1032
      %v1034 = vpop.f32.mrb[0].mxu0
      %v1035 = vpop.f32.mrb[0].mxu0
      %v1036 = vadd.f32 %v827, %v1035
      %v1037 = vpop.f32.mrb[0].mxu0
      %1038 = vmatprep.mubr.bf16.mxu0 0
      %1039 = vmatmul.mubr.bf16.gmra.mrb[0].mxu0 %v561
      %v1040 = vpop.f32.mrb[0].mxu0
      %v1041 = vadd.f32 %v832, %v1040
      %v1042 = vpop.f32.mrb[0].mxu0
      %v1043 = vpop.f32.mrb[0].mxu0
      %v1044 = vadd.f32 %v835, %v1043
      %v1045 = vpop.f32.mrb[0].mxu0
      %1046 = vmatprep.mubr.bf16.mxu0 0
      %1047 = vmatmul.mubr.bf16.gmra.mrb[0].mxu0 %v562
      %v1048 = vpop.f32.mrb[0].mxu0
      %v1049 = vadd.f32 %v840, %v1048
      %v1050 = vpop.f32.mrb[0].mxu0
      %v1051 = vpop.f32.mrb[0].mxu0
      %v1052 = vadd.f32 %v843, %v1051
      %v1053 = vpop.f32.mrb[0].mxu0
      %1054 = vmatprep.mubr.bf16.mxu0 0
      %1055 = vmatmul.mubr.bf16.gmra.mrb[0].mxu0 %v563
      %v1056 = vpop.f32.mrb[0].mxu0
      %v1057 = vadd.f32 %v848, %v1056
      %v1058 = vpop.f32.mrb[0].mxu0
      %v1059 = vpop.f32.mrb[0].mxu0
      %v1060 = vadd.f32 %v851, %v1059
      %v1061 = vpop.f32.mrb[0].mxu0
      %1062 = vdwg.mxu0
      %v1063 = vld [vmem:[#allocation2 + $0x9] sm:$0xff]
      %v1064 = vld [vmem:[#allocation2 + $0x11] sm:$0xff]
      %v1065 = vld [vmem:[#allocation2 + $0x29] sm:$0xff]
      %v1066 = vld [vmem:[#allocation2 + $0x31] sm:$0xff]
      %v1067 = vld [vmem:[#allocation2 + $0x49] sm:$0xff]
      %v1068 = vld [vmem:[#allocation2 + $0x51] sm:$0xff]
      %v1069 = vld [vmem:[#allocation2 + $0x69] sm:$0xff]
      %v1070 = vld [vmem:[#allocation2 + $0x71] sm:$0xff]
      %v1071 = vld [vmem:[#allocation2 + $0x89] sm:$0xff]
      %v1072 = vld [vmem:[#allocation2 + $0x91] sm:$0xff]
      %v1073 = vld [vmem:[#allocation2 + $0xa9] sm:$0xff]
      %v1074 = vld [vmem:[#allocation2 + $0xb1] sm:$0xff]
      %v1075 = vld [vmem:[#allocation2 + $0xc9] sm:$0xff]
      %v1076 = vld [vmem:[#allocation2 + $0xd1] sm:$0xff]
      %v1077 = vld [vmem:[#allocation2 + $0xe9] sm:$0xff]
      %v1078 = vld [vmem:[#allocation2 + $0xf1] sm:$0xff]
      %v1079 = vld [vmem:[#allocation2 + $0x109] sm:$0xff]
      %v1080 = vld [vmem:[#allocation2 + $0x111] sm:$0xff]
      %v1081 = vld [vmem:[#allocation2 + $0x129] sm:$0xff]
      %v1082 = vld [vmem:[#allocation2 + $0x131] sm:$0xff]
      %v1083 = vld [vmem:[#allocation2 + $0x149] sm:$0xff]
      %v1084 = vld [vmem:[#allocation2 + $0x151] sm:$0xff]
      %v1085 = vld [vmem:[#allocation2 + $0x169] sm:$0xff]
      %v1086 = vld [vmem:[#allocation2 + $0x171] sm:$0xff]
      %v1087 = vld [vmem:[#allocation2 + $0x189] sm:$0xff]
      %v1088 = vld [vmem:[#allocation2 + $0x191] sm:$0xff]
      %v1089 = vld [vmem:[#allocation2 + $0x1a9] sm:$0xff]
      %v1090 = vld [vmem:[#allocation2 + $0x1b1] sm:$0xff]
      %v1091 = vld [vmem:[#allocation2 + $0x1c9] sm:$0xff]
      %v1092 = vld [vmem:[#allocation2 + $0x1d1] sm:$0xff]
      %v1093 = vld [vmem:[#allocation2 + $0x1e9] sm:$0xff]
      %v1094 = vld [vmem:[#allocation2 + $0x1f1] sm:$0xff]
      %v1095 = vpack.c.bf16 %v1064, %v1063
      %v1096 = vpack.c.bf16 %v1066, %v1065
      %v1097 = vpack.c.bf16 %v1068, %v1067
      %v1098 = vpack.c.bf16 %v1070, %v1069
      %v1099 = vpack.c.bf16 %v1072, %v1071
      %v1100 = vpack.c.bf16 %v1074, %v1073
      %v1101 = vpack.c.bf16 %v1076, %v1075
      %v1102 = vpack.c.bf16 %v1078, %v1077
      %v1103 = vpack.c.bf16 %v1080, %v1079
      %v1104 = vpack.c.bf16 %v1082, %v1081
      %v1105 = vpack.c.bf16 %v1084, %v1083
      %v1106 = vpack.c.bf16 %v1086, %v1085
      %v1107 = vpack.c.bf16 %v1088, %v1087
      %v1108 = vpack.c.bf16 %v1090, %v1089
      %v1109 = vpack.c.bf16 %v1092, %v1091
      %v1110 = vpack.c.bf16 %v1094, %v1093
      %s1111 = scalar_lea.vmem %s3, 128
      %v1112 = vld [vmem:[%s1111] sm:$0xf]
      %v1113 = vld [vmem:[%s1111 + $0x4] sm:$0xf]
      %v1114 = vld [vmem:[%s1111 + $0x8] sm:$0xf]
      %v1115 = vld [vmem:[%s1111 + $0xc] sm:$0xf]
      %v1116 = vld [vmem:[%s1111 + $0x10] sm:$0xf]
      %v1117 = vld [vmem:[%s1111 + $0x14] sm:$0xf]
      %v1118 = vld [vmem:[%s1111 + $0x18] sm:$0xf]
      %v1119 = vld [vmem:[%s1111 + $0x1c] sm:$0xf]
      %v1120 = vld [vmem:[%s1111 + $0x20] sm:$0xf]
      %v1121 = vld [vmem:[%s1111 + $0x24] sm:$0xf]
      %v1122 = vld [vmem:[%s1111 + $0x28] sm:$0xf]
      %v1123 = vld [vmem:[%s1111 + $0x2c] sm:$0xf]
      %v1124 = vld [vmem:[%s1111 + $0x30] sm:$0xf]
      %v1125 = vld [vmem:[%s1111 + $0x34] sm:$0xf]
      %v1126 = vld [vmem:[%s1111 + $0x38] sm:$0xf]
      %v1127 = vld [vmem:[%s1111 + $0x3c] sm:$0xf]
      %v1144 = vunpack.c.l.b16 %v1112
      %v1145 = vunpack.c.l.b16 %v1113
      %v1146 = vunpack.c.l.b16 %v1114
      %v1147 = vunpack.c.l.b16 %v1115
      %v1148 = vunpack.c.l.b16 %v1116
      %v1149 = vunpack.c.l.b16 %v1117
      %v1150 = vunpack.c.l.b16 %v1118
      %v1151 = vunpack.c.l.b16 %v1119
      %v1152 = vunpack.c.l.b16 %v1120
      %v1153 = vunpack.c.l.b16 %v1121
      %v1154 = vunpack.c.l.b16 %v1122
      %v1155 = vunpack.c.l.b16 %v1123
      %v1156 = vunpack.c.l.b16 %v1124
      %v1157 = vunpack.c.l.b16 %v1125
      %v1158 = vunpack.c.l.b16 %v1126
      %v1159 = vunpack.c.l.b16 %v1127
      %v1160 = vpack.c.b16 %v1145, %v1144
      %v1161 = vpack.c.b16 %v1147, %v1146
      %v1162 = vpack.c.b16 %v1149, %v1148
      %v1163 = vpack.c.b16 %v1151, %v1150
      %v1164 = vpack.c.b16 %v1153, %v1152
      %v1165 = vpack.c.b16 %v1155, %v1154
      %v1166 = vpack.c.b16 %v1157, %v1156
      %v1167 = vpack.c.b16 %v1159, %v1158
      %1176 = vmatprep.subr.bf16.mxu0 0
      %1177 = vmatpush1.bf16.msra.mxu0 %v1160
      %1178 = vmatprep.subr.bf16.mxu0 0
      %1179 = vmatpush1.bf16.msra.mxu0 %v1161
      %1180 = vmatprep.subr.bf16.mxu0 0
      %1181 = vmatpush1.bf16.msra.mxu0 %v1162
      %1182 = vmatprep.subr.bf16.mxu0 0
      %1183 = vmatpush1.bf16.msra.mxu0 %v1163
      %1184 = vmatprep.subr.bf16.mxu0 0
      %1185 = vmatpush1.bf16.msra.mxu0 %v1164
      %1186 = vmatprep.subr.bf16.mxu0 0
      %1187 = vmatpush1.bf16.msra.mxu0 %v1165
      %1188 = vmatprep.subr.bf16.mxu0 0
      %1189 = vmatpush1.bf16.msra.mxu0 %v1166
      %1190 = vmatprep.subr.bf16.mxu0 0
      %1191 = vmatpush1.bf16.msra.mxu0 %v1167
      %1192 = vmatprep.subr.bf16.mxu0 0
      %1193 = vmatpush1.bf16.msra.mxu0 0
      %1194 = vmatprep.subr.bf16.mxu0 0
      %1195 = vmatpush1.bf16.msra.mxu0 0
      %1196 = vmatprep.subr.bf16.mxu0 0
      %1197 = vmatpush1.bf16.msra.mxu0 0
      %1198 = vmatprep.subr.bf16.mxu0 0
      %1199 = vmatpush1.bf16.msra.mxu0 0
      %1200 = vmatprep.subr.bf16.mxu0 0
      %1201 = vmatpush1.bf16.msra.mxu0 0
      %1202 = vmatprep.subr.bf16.mxu0 0
      %1203 = vmatpush1.bf16.msra.mxu0 0
      %1204 = vmatprep.subr.bf16.mxu0 0
      %1205 = vmatpush1.bf16.msra.mxu0 0
      %1206 = vmatprep.subr.bf16.mxu0 0
      %1207 = vmatpush1.bf16.msra.mxu0 0
      %1208 = vmatprep.mubr.bf16.mxu0 0
      %1209 = vmatmul.mubr.bf16.gmra.mrb[0].mxu0 %v1095
      %v1210 = vpop.f32.mrb[0].mxu0
      %v1211 = vadd.f32 0.0, %v1210
      %v1212 = vpop.f32.mrb[0].mxu0
      %v1213 = vpop.f32.mrb[0].mxu0
      %v1214 = vadd.f32 0.0, %v1213
      %v1215 = vpop.f32.mrb[0].mxu0
      %1216 = vmatprep.mubr.bf16.mxu0 0
      %1217 = vmatmul.mubr.bf16.gmra.mrb[0].mxu0 %v1096
      %v1218 = vpop.f32.mrb[0].mxu0
      %v1219 = vadd.f32 0.0, %v1218
      %v1220 = vpop.f32.mrb[0].mxu0
      %v1221 = vpop.f32.mrb[0].mxu0
      %v1222 = vadd.f32 0.0, %v1221
      %v1223 = vpop.f32.mrb[0].mxu0
      %1224 = vmatprep.mubr.bf16.mxu0 0
      %1225 = vmatmul.mubr.bf16.gmra.mrb[0].mxu0 %v1097
      %v1226 = vpop.f32.mrb[0].mxu0
      %v1227 = vadd.f32 0.0, %v1226
      %v1228 = vpop.f32.mrb[0].mxu0
      %v1229 = vpop.f32.mrb[0].mxu0
      %v1230 = vadd.f32 0.0, %v1229
      %v1231 = vpop.f32.mrb[0].mxu0
      %1232 = vmatprep.mubr.bf16.mxu0 0
      %1233 = vmatmul.mubr.bf16.gmra.mrb[0].mxu0 %v1098
      %v1234 = vpop.f32.mrb[0].mxu0
      %v1235 = vadd.f32 0.0, %v1234
      %v1236 = vpop.f32.mrb[0].mxu0
      %v1237 = vpop.f32.mrb[0].mxu0
      %v1238 = vadd.f32 0.0, %v1237
      %v1239 = vpop.f32.mrb[0].mxu0
      %1240 = vmatprep.mubr.bf16.mxu0 0
      %1241 = vmatmul.mubr.bf16.gmra.mrb[0].mxu0 %v1099
      %v1242 = vpop.f32.mrb[0].mxu0
      %v1243 = vadd.f32 0.0, %v1242
      %v1244 = vpop.f32.mrb[0].mxu0
      %v1245 = vpop.f32.mrb[0].mxu0
      %v1246 = vadd.f32 0.0, %v1245
      %v1247 = vpop.f32.mrb[0].mxu0
      %1248 = vmatprep.mubr.bf16.mxu0 0
      %1249 = vmatmul.mubr.bf16.gmra.mrb[0].mxu0 %v1100
      %v1250 = vpop.f32.mrb[0].mxu0
      %v1251 = vadd.f32 0.0, %v1250
      %v1252 = vpop.f32.mrb[0].mxu0
      %v1253 = vpop.f32.mrb[0].mxu0
      %v1254 = vadd.f32 0.0, %v1253
      %v1255 = vpop.f32.mrb[0].mxu0
      %1256 = vmatprep.mubr.bf16.mxu0 0
      %1257 = vmatmul.mubr.bf16.gmra.mrb[0].mxu0 %v1101
      %v1258 = vpop.f32.mrb[0].mxu0
      %v1259 = vadd.f32 0.0, %v1258
      %v1260 = vpop.f32.mrb[0].mxu0
      %v1261 = vpop.f32.mrb[0].mxu0
      %v1262 = vadd.f32 0.0, %v1261
      %v1263 = vpop.f32.mrb[0].mxu0
      %1264 = vmatprep.mubr.bf16.mxu0 0
      %1265 = vmatmul.mubr.bf16.gmra.mrb[0].mxu0 %v1102
      %v1266 = vpop.f32.mrb[0].mxu0
      %v1267 = vadd.f32 0.0, %v1266
      %v1268 = vpop.f32.mrb[0].mxu0
      %v1269 = vpop.f32.mrb[0].mxu0
      %v1270 = vadd.f32 0.0, %v1269
      %v1271 = vpop.f32.mrb[0].mxu0
      %1272 = vmatprep.mubr.bf16.mxu0 0
      %1273 = vmatmul.mubr.bf16.gmra.mrb[0].mxu0 %v1103
      %v1274 = vpop.f32.mrb[0].mxu0
      %v1275 = vadd.f32 0.0, %v1274
      %v1276 = vpop.f32.mrb[0].mxu0
      %v1277 = vpop.f32.mrb[0].mxu0
      %v1278 = vadd.f32 0.0, %v1277
      %v1279 = vpop.f32.mrb[0].mxu0
      %1280 = vmatprep.mubr.bf16.mxu0 0
      %1281 = vmatmul.mubr.bf16.gmra.mrb[0].mxu0 %v1104
      %v1282 = vpop.f32.mrb[0].mxu0
      %v1283 = vadd.f32 0.0, %v1282
      %v1284 = vpop.f32.mrb[0].mxu0
      %v1285 = vpop.f32.mrb[0].mxu0
      %v1286 = vadd.f32 0.0, %v1285
      %v1287 = vpop.f32.mrb[0].mxu0
      %1288 = vmatprep.mubr.bf16.mxu0 0
      %1289 = vmatmul.mubr.bf16.gmra.mrb[0].mxu0 %v1105
      %v1290 = vpop.f32.mrb[0].mxu0
      %v1291 = vadd.f32 0.0, %v1290
      %v1292 = vpop.f32.mrb[0].mxu0
      %v1293 = vpop.f32.mrb[0].mxu0
      %v1294 = vadd.f32 0.0, %v1293
      %v1295 = vpop.f32.mrb[0].mxu0
      %1296 = vmatprep.mubr.bf16.mxu0 0
      %1297 = vmatmul.mubr.bf16.gmra.mrb[0].mxu0 %v1106
      %v1298 = vpop.f32.mrb[0].mxu0
      %v1299 = vadd.f32 0.0, %v1298
      %v1300 = vpop.f32.mrb[0].mxu0
      %v1301 = vpop.f32.mrb[0].mxu0
      %v1302 = vadd.f32 0.0, %v1301
      %v1303 = vpop.f32.mrb[0].mxu0
      %1304 = vmatprep.mubr.bf16.mxu0 0
      %1305 = vmatmul.mubr.bf16.gmra.mrb[0].mxu0 %v1107
      %v1306 = vpop.f32.mrb[0].mxu0
      %v1307 = vadd.f32 0.0, %v1306
      %v1308 = vpop.f32.mrb[0].mxu0
      %v1309 = vpop.f32.mrb[0].mxu0
      %v1310 = vadd.f32 0.0, %v1309
      %v1311 = vpop.f32.mrb[0].mxu0
      %1312 = vmatprep.mubr.bf16.mxu0 0
      %1313 = vmatmul.mubr.bf16.gmra.mrb[0].mxu0 %v1108
      %v1314 = vpop.f32.mrb[0].mxu0
      %v1315 = vadd.f32 0.0, %v1314
      %v1316 = vpop.f32.mrb[0].mxu0
      %v1317 = vpop.f32.mrb[0].mxu0
      %v1318 = vadd.f32 0.0, %v1317
      %v1319 = vpop.f32.mrb[0].mxu0
      %1320 = vmatprep.mubr.bf16.mxu0 0
      %1321 = vmatmul.mubr.bf16.gmra.mrb[0].mxu0 %v1109
      %v1322 = vpop.f32.mrb[0].mxu0
      %v1323 = vadd.f32 0.0, %v1322
      %v1324 = vpop.f32.mrb[0].mxu0
      %v1325 = vpop.f32.mrb[0].mxu0
      %v1326 = vadd.f32 0.0, %v1325
      %v1327 = vpop.f32.mrb[0].mxu0
      %1328 = vmatprep.mubr.bf16.mxu0 0
      %1329 = vmatmul.mubr.bf16.gmra.mrb[0].mxu0 %v1110
      %v1330 = vpop.f32.mrb[0].mxu0
      %v1331 = vadd.f32 0.0, %v1330
      %v1332 = vpop.f32.mrb[0].mxu0
      %v1333 = vpop.f32.mrb[0].mxu0
      %v1334 = vadd.f32 0.0, %v1333
      %v1335 = vpop.f32.mrb[0].mxu0
      %1336 = vdwg.mxu0
      %v1337 = vadd.f32 %v937, %v1211
      %v1338 = vadd.f32 %v940, %v1214
      %v1339 = vadd.f32 %v945, %v1219
      %v1340 = vadd.f32 %v948, %v1222
      %v1341 = vadd.f32 %v953, %v1227
      %v1342 = vadd.f32 %v956, %v1230
      %v1343 = vadd.f32 %v961, %v1235
      %v1344 = vadd.f32 %v964, %v1238
      %v1345 = vadd.f32 %v969, %v1243
      %v1346 = vadd.f32 %v972, %v1246
      %v1347 = vadd.f32 %v977, %v1251
      %v1348 = vadd.f32 %v980, %v1254
      %v1349 = vadd.f32 %v985, %v1259
      %v1350 = vadd.f32 %v988, %v1262
      %v1351 = vadd.f32 %v993, %v1267
      %v1352 = vadd.f32 %v996, %v1270
      %v1353 = vadd.f32 %v1001, %v1275
      %v1354 = vadd.f32 %v1004, %v1278
      %v1355 = vadd.f32 %v1009, %v1283
      %v1356 = vadd.f32 %v1012, %v1286
      %v1357 = vadd.f32 %v1017, %v1291
      %v1358 = vadd.f32 %v1020, %v1294
      %v1359 = vadd.f32 %v1025, %v1299
      %v1360 = vadd.f32 %v1028, %v1302
      %v1361 = vadd.f32 %v1033, %v1307
      %v1362 = vadd.f32 %v1036, %v1310
      %v1363 = vadd.f32 %v1041, %v1315
      %v1364 = vadd.f32 %v1044, %v1318
      %v1365 = vadd.f32 %v1049, %v1323
      %v1366 = vadd.f32 %v1052, %v1326
      %v1367 = vadd.f32 %v1057, %v1331
      %v1368 = vadd.f32 %v1060, %v1334
      %v1369 = vld [vmem:[%s483 + $0x7] sm:$0xff]
      %v1370 = vld [vmem:[%s483 + $0xf] sm:$0xff]
      %v1371 = vld [vmem:[%s483 + $0x27] sm:$0xff]
      %v1372 = vld [vmem:[%s483 + $0x2f] sm:$0xff]
      %v1373 = vld [vmem:[%s483 + $0x47] sm:$0xff]
      %v1374 = vld [vmem:[%s483 + $0x4f] sm:$0xff]
      %v1375 = vld [vmem:[%s483 + $0x67] sm:$0xff]
      %v1376 = vld [vmem:[%s483 + $0x6f] sm:$0xff]
      %v1377 = vld [vmem:[%s483 + $0x87] sm:$0xff]
      %v1378 = vld [vmem:[%s483 + $0x8f] sm:$0xff]
      %v1379 = vld [vmem:[%s483 + $0xa7] sm:$0xff]
      %v1380 = vld [vmem:[%s483 + $0xaf] sm:$0xff]
      %v1381 = vld [vmem:[%s483 + $0xc7] sm:$0xff]
      %v1382 = vld [vmem:[%s483 + $0xcf] sm:$0xff]
      %v1383 = vld [vmem:[%s483 + $0xe7] sm:$0xff]
      %v1384 = vld [vmem:[%s483 + $0xef] sm:$0xff]
      %v1385 = vld [vmem:[%s483 + $0x107] sm:$0xff]
      %v1386 = vld [vmem:[%s483 + $0x10f] sm:$0xff]
      %v1387 = vld [vmem:[%s483 + $0x127] sm:$0xff]
      %v1388 = vld [vmem:[%s483 + $0x12f] sm:$0xff]
      %v1389 = vld [vmem:[%s483 + $0x147] sm:$0xff]
      %v1390 = vld [vmem:[%s483 + $0x14f] sm:$0xff]
      %v1391 = vld [vmem:[%s483 + $0x167] sm:$0xff]
      %v1392 = vld [vmem:[%s483 + $0x16f] sm:$0xff]
      %v1393 = vld [vmem:[%s483 + $0x187] sm:$0xff]
      %v1394 = vld [vmem:[%s483 + $0x18f] sm:$0xff]
      %v1395 = vld [vmem:[%s483 + $0x1a7] sm:$0xff]
      %v1396 = vld [vmem:[%s483 + $0x1af] sm:$0xff]
      %v1397 = vld [vmem:[%s483 + $0x1c7] sm:$0xff]
      %v1398 = vld [vmem:[%s483 + $0x1cf] sm:$0xff]
      %v1399 = vld [vmem:[%s483 + $0x1e7] sm:$0xff]
      %v1400 = vld [vmem:[%s483 + $0x1ef] sm:$0xff]
      %v1401 = vpack.c.bf16 %v1370, %v1369
      %v1402 = vpack.c.bf16 %v1372, %v1371
      %v1403 = vpack.c.bf16 %v1374, %v1373
      %v1404 = vpack.c.bf16 %v1376, %v1375
      %v1405 = vpack.c.bf16 %v1378, %v1377
      %v1406 = vpack.c.bf16 %v1380, %v1379
      %v1407 = vpack.c.bf16 %v1382, %v1381
      %v1408 = vpack.c.bf16 %v1384, %v1383
      %v1409 = vpack.c.bf16 %v1386, %v1385
      %v1410 = vpack.c.bf16 %v1388, %v1387
      %v1411 = vpack.c.bf16 %v1390, %v1389
      %v1412 = vpack.c.bf16 %v1392, %v1391
      %v1413 = vpack.c.bf16 %v1394, %v1393
      %v1414 = vpack.c.bf16 %v1396, %v1395
      %v1415 = vpack.c.bf16 %v1398, %v1397
      %v1416 = vpack.c.bf16 %v1400, %v1399
      %s1417 = scalar_lea.vmem %s3, 192
      %v1418 = vld [vmem:[%s1417] sm:$0xf]
      %v1419 = vld [vmem:[%s1417 + $0x4] sm:$0xf]
      %v1420 = vld [vmem:[%s1417 + $0x8] sm:$0xf]
      %v1421 = vld [vmem:[%s1417 + $0xc] sm:$0xf]
      %v1422 = vld [vmem:[%s1417 + $0x10] sm:$0xf]
      %v1423 = vld [vmem:[%s1417 + $0x14] sm:$0xf]
      %v1424 = vld [vmem:[%s1417 + $0x18] sm:$0xf]
      %v1425 = vld [vmem:[%s1417 + $0x1c] sm:$0xf]
      %v1426 = vld [vmem:[%s1417 + $0x20] sm:$0xf]
      %v1427 = vld [vmem:[%s1417 + $0x24] sm:$0xf]
      %v1428 = vld [vmem:[%s1417 + $0x28] sm:$0xf]
      %v1429 = vld [vmem:[%s1417 + $0x2c] sm:$0xf]
      %v1430 = vld [vmem:[%s1417 + $0x30] sm:$0xf]
      %v1431 = vld [vmem:[%s1417 + $0x34] sm:$0xf]
      %v1432 = vld [vmem:[%s1417 + $0x38] sm:$0xf]
      %v1433 = vld [vmem:[%s1417 + $0x3c] sm:$0xf]
      %v1450 = vunpack.c.l.b16 %v1418
      %v1451 = vunpack.c.l.b16 %v1419
      %v1452 = vunpack.c.l.b16 %v1420
      %v1453 = vunpack.c.l.b16 %v1421
      %v1454 = vunpack.c.l.b16 %v1422
      %v1455 = vunpack.c.l.b16 %v1423
      %v1456 = vunpack.c.l.b16 %v1424
      %v1457 = vunpack.c.l.b16 %v1425
      %v1458 = vunpack.c.l.b16 %v1426
      %v1459 = vunpack.c.l.b16 %v1427
      %v1460 = vunpack.c.l.b16 %v1428
      %v1461 = vunpack.c.l.b16 %v1429
      %v1462 = vunpack.c.l.b16 %v1430
      %v1463 = vunpack.c.l.b16 %v1431
      %v1464 = vunpack.c.l.b16 %v1432
      %v1465 = vunpack.c.l.b16 %v1433
      %v1466 = vpack.c.b16 %v1451, %v1450
      %v1467 = vpack.c.b16 %v1453, %v1452
      %v1468 = vpack.c.b16 %v1455, %v1454
      %v1469 = vpack.c.b16 %v1457, %v1456
      %v1470 = vpack.c.b16 %v1459, %v1458
      %v1471 = vpack.c.b16 %v1461, %v1460
      %v1472 = vpack.c.b16 %v1463, %v1462
      %v1473 = vpack.c.b16 %v1465, %v1464
      %1482 = vmatprep.subr.bf16.mxu0 0
      %1483 = vmatpush1.bf16.msra.mxu0 %v1466
      %1484 = vmatprep.subr.bf16.mxu0 0
      %1485 = vmatpush1.bf16.msra.mxu0 %v1467
      %1486 = vmatprep.subr.bf16.mxu0 0
      %1487 = vmatpush1.bf16.msra.mxu0 %v1468
      %1488 = vmatprep.subr.bf16.mxu0 0
      %1489 = vmatpush1.bf16.msra.mxu0 %v1469
      %1490 = vmatprep.subr.bf16.mxu0 0
      %1491 = vmatpush1.bf16.msra.mxu0 %v1470
      %1492 = vmatprep.subr.bf16.mxu0 0
      %1493 = vmatpush1.bf16.msra.mxu0 %v1471
      %1494 = vmatprep.subr.bf16.mxu0 0
      %1495 = vmatpush1.bf16.msra.mxu0 %v1472
      %1496 = vmatprep.subr.bf16.mxu0 0
      %1497 = vmatpush1.bf16.msra.mxu0 %v1473
      %1498 = vmatprep.subr.bf16.mxu0 0
      %1499 = vmatpush1.bf16.msra.mxu0 0
      %1500 = vmatprep.subr.bf16.mxu0 0
      %1501 = vmatpush1.bf16.msra.mxu0 0
      %1502 = vmatprep.subr.bf16.mxu0 0
      %1503 = vmatpush1.bf16.msra.mxu0 0
      %1504 = vmatprep.subr.bf16.mxu0 0
      %1505 = vmatpush1.bf16.msra.mxu0 0
      %1506 = vmatprep.subr.bf16.mxu0 0
      %1507 = vmatpush1.bf16.msra.mxu0 0
      %1508 = vmatprep.subr.bf16.mxu0 0
      %1509 = vmatpush1.bf16.msra.mxu0 0
      %1510 = vmatprep.subr.bf16.mxu0 0
      %1511 = vmatpush1.bf16.msra.mxu0 0
      %1512 = vmatprep.subr.bf16.mxu0 0
      %1513 = vmatpush1.bf16.msra.mxu0 0
      %1514 = vmatprep.mubr.bf16.mxu0 0
      %1515 = vmatmul.mubr.bf16.gmra.mrb[0].mxu0 %v1401
      %v1516 = vpop.f32.mrb[0].mxu0
      %v1517 = vadd.f32 0.0, %v1516
      %v1518 = vpop.f32.mrb[0].mxu0
      %v1519 = vpop.f32.mrb[0].mxu0
      %v1520 = vadd.f32 0.0, %v1519
      %v1521 = vpop.f32.mrb[0].mxu0
      %1522 = vmatprep.mubr.bf16.mxu0 0
      %1523 = vmatmul.mubr.bf16.gmra.mrb[0].mxu0 %v1402
      %v1524 = vpop.f32.mrb[0].mxu0
      %v1525 = vadd.f32 0.0, %v1524
      %v1526 = vpop.f32.mrb[0].mxu0
      %v1527 = vpop.f32.mrb[0].mxu0
      %v1528 = vadd.f32 0.0, %v1527
      %v1529 = vpop.f32.mrb[0].mxu0
      %1530 = vmatprep.mubr.bf16.mxu0 0
      %1531 = vmatmul.mubr.bf16.gmra.mrb[0].mxu0 %v1403
      %v1532 = vpop.f32.mrb[0].mxu0
      %v1533 = vadd.f32 0.0, %v1532
      %v1534 = vpop.f32.mrb[0].mxu0
      %v1535 = vpop.f32.mrb[0].mxu0
      %v1536 = vadd.f32 0.0, %v1535
      %v1537 = vpop.f32.mrb[0].mxu0
      %1538 = vmatprep.mubr.bf16.mxu0 0
      %1539 = vmatmul.mubr.bf16.gmra.mrb[0].mxu0 %v1404
      %v1540 = vpop.f32.mrb[0].mxu0
      %v1541 = vadd.f32 0.0, %v1540
      %v1542 = vpop.f32.mrb[0].mxu0
      %v1543 = vpop.f32.mrb[0].mxu0
      %v1544 = vadd.f32 0.0, %v1543
      %v1545 = vpop.f32.mrb[0].mxu0
      %1546 = vmatprep.mubr.bf16.mxu0 0
      %1547 = vmatmul.mubr.bf16.gmra.mrb[0].mxu0 %v1405
      %v1548 = vpop.f32.mrb[0].mxu0
      %v1549 = vadd.f32 0.0, %v1548
      %v1550 = vpop.f32.mrb[0].mxu0
      %v1551 = vpop.f32.mrb[0].mxu0
      %v1552 = vadd.f32 0.0, %v1551
      %v1553 = vpop.f32.mrb[0].mxu0
      %1554 = vmatprep.mubr.bf16.mxu0 0
      %1555 = vmatmul.mubr.bf16.gmra.mrb[0].mxu0 %v1406
      %v1556 = vpop.f32.mrb[0].mxu0
      %v1557 = vadd.f32 0.0, %v1556
      %v1558 = vpop.f32.mrb[0].mxu0
      %v1559 = vpop.f32.mrb[0].mxu0
      %v1560 = vadd.f32 0.0, %v1559
      %v1561 = vpop.f32.mrb[0].mxu0
      %1562 = vmatprep.mubr.bf16.mxu0 0
      %1563 = vmatmul.mubr.bf16.gmra.mrb[0].mxu0 %v1407
      %v1564 = vpop.f32.mrb[0].mxu0
      %v1565 = vadd.f32 0.0, %v1564
      %v1566 = vpop.f32.mrb[0].mxu0
      %v1567 = vpop.f32.mrb[0].mxu0
      %v1568 = vadd.f32 0.0, %v1567
      %v1569 = vpop.f32.mrb[0].mxu0
      %1570 = vmatprep.mubr.bf16.mxu0 0
      %1571 = vmatmul.mubr.bf16.gmra.mrb[0].mxu0 %v1408
      %v1572 = vpop.f32.mrb[0].mxu0
      %v1573 = vadd.f32 0.0, %v1572
      %v1574 = vpop.f32.mrb[0].mxu0
      %v1575 = vpop.f32.mrb[0].mxu0
      %v1576 = vadd.f32 0.0, %v1575
      %v1577 = vpop.f32.mrb[0].mxu0
      %1578 = vmatprep.mubr.bf16.mxu0 0
      %1579 = vmatmul.mubr.bf16.gmra.mrb[0].mxu0 %v1409
      %v1580 = vpop.f32.mrb[0].mxu0
      %v1581 = vadd.f32 0.0, %v1580
      %v1582 = vpop.f32.mrb[0].mxu0
      %v1583 = vpop.f32.mrb[0].mxu0
      %v1584 = vadd.f32 0.0, %v1583
      %v1585 = vpop.f32.mrb[0].mxu0
      %1586 = vmatprep.mubr.bf16.mxu0 0
      %1587 = vmatmul.mubr.bf16.gmra.mrb[0].mxu0 %v1410
      %v1588 = vpop.f32.mrb[0].mxu0
      %v1589 = vadd.f32 0.0, %v1588
      %v1590 = vpop.f32.mrb[0].mxu0
      %v1591 = vpop.f32.mrb[0].mxu0
      %v1592 = vadd.f32 0.0, %v1591
      %v1593 = vpop.f32.mrb[0].mxu0
      %1594 = vmatprep.mubr.bf16.mxu0 0
      %1595 = vmatmul.mubr.bf16.gmra.mrb[0].mxu0 %v1411
      %v1596 = vpop.f32.mrb[0].mxu0
      %v1597 = vadd.f32 0.0, %v1596
      %v1598 = vpop.f32.mrb[0].mxu0
      %v1599 = vpop.f32.mrb[0].mxu0
      %v1600 = vadd.f32 0.0, %v1599
      %v1601 = vpop.f32.mrb[0].mxu0
      %1602 = vmatprep.mubr.bf16.mxu0 0
      %1603 = vmatmul.mubr.bf16.gmra.mrb[0].mxu0 %v1412
      %v1604 = vpop.f32.mrb[0].mxu0
      %v1605 = vadd.f32 0.0, %v1604
      %v1606 = vpop.f32.mrb[0].mxu0
      %v1607 = vpop.f32.mrb[0].mxu0
      %v1608 = vadd.f32 0.0, %v1607
      %v1609 = vpop.f32.mrb[0].mxu0
      %1610 = vmatprep.mubr.bf16.mxu0 0
      %1611 = vmatmul.mubr.bf16.gmra.mrb[0].mxu0 %v1413
      %v1612 = vpop.f32.mrb[0].mxu0
      %v1613 = vadd.f32 0.0, %v1612
      %v1614 = vpop.f32.mrb[0].mxu0
      %v1615 = vpop.f32.mrb[0].mxu0
      %v1616 = vadd.f32 0.0, %v1615
      %v1617 = vpop.f32.mrb[0].mxu0
      %1618 = vmatprep.mubr.bf16.mxu0 0
      %1619 = vmatmul.mubr.bf16.gmra.mrb[0].mxu0 %v1414
      %v1620 = vpop.f32.mrb[0].mxu0
      %v1621 = vadd.f32 0.0, %v1620
      %v1622 = vpop.f32.mrb[0].mxu0
      %v1623 = vpop.f32.mrb[0].mxu0
      %v1624 = vadd.f32 0.0, %v1623
      %v1625 = vpop.f32.mrb[0].mxu0
      %1626 = vmatprep.mubr.bf16.mxu0 0
      %1627 = vmatmul.mubr.bf16.gmra.mrb[0].mxu0 %v1415
      %v1628 = vpop.f32.mrb[0].mxu0
      %v1629 = vadd.f32 0.0, %v1628
      %v1630 = vpop.f32.mrb[0].mxu0
      %v1631 = vpop.f32.mrb[0].mxu0
      %v1632 = vadd.f32 0.0, %v1631
      %v1633 = vpop.f32.mrb[0].mxu0
      %1634 = vmatprep.mubr.bf16.mxu0 0
      %1635 = vmatmul.mubr.bf16.gmra.mrb[0].mxu0 %v1416
      %v1636 = vpop.f32.mrb[0].mxu0
      %v1637 = vadd.f32 0.0, %v1636
      %v1638 = vpop.f32.mrb[0].mxu0
      %v1639 = vpop.f32.mrb[0].mxu0
      %v1640 = vadd.f32 0.0, %v1639
      %v1641 = vpop.f32.mrb[0].mxu0
      %1642 = vdwg.mxu0
      %v1643 = vadd.f32 %v1337, %v1517
      %v1644 = vadd.f32 %v1338, %v1520
      %v1645 = vadd.f32 %v1339, %v1525
      %v1646 = vadd.f32 %v1340, %v1528
      %v1647 = vadd.f32 %v1341, %v1533
      %v1648 = vadd.f32 %v1342, %v1536
      %v1649 = vadd.f32 %v1343, %v1541
      %v1650 = vadd.f32 %v1344, %v1544
      %v1651 = vadd.f32 %v1345, %v1549
      %v1652 = vadd.f32 %v1346, %v1552
      %v1653 = vadd.f32 %v1347, %v1557
      %v1654 = vadd.f32 %v1348, %v1560
      %v1655 = vadd.f32 %v1349, %v1565
      %v1656 = vadd.f32 %v1350, %v1568
      %v1657 = vadd.f32 %v1351, %v1573
      %v1658 = vadd.f32 %v1352, %v1576
      %v1659 = vadd.f32 %v1353, %v1581
      %v1660 = vadd.f32 %v1354, %v1584
      %v1661 = vadd.f32 %v1355, %v1589
      %v1662 = vadd.f32 %v1356, %v1592
      %v1663 = vadd.f32 %v1357, %v1597
      %v1664 = vadd.f32 %v1358, %v1600
      %v1665 = vadd.f32 %v1359, %v1605
      %v1666 = vadd.f32 %v1360, %v1608
      %v1667 = vadd.f32 %v1361, %v1613
      %v1668 = vadd.f32 %v1362, %v1616
      %v1669 = vadd.f32 %v1363, %v1621
      %v1670 = vadd.f32 %v1364, %v1624
      %v1671 = vadd.f32 %v1365, %v1629
      %v1672 = vadd.f32 %v1366, %v1632
      %v1673 = vadd.f32 %v1367, %v1637
      %v1674 = vadd.f32 %v1368, %v1640
      %v1675 = vld [vmem:[%s483 + $0x8] sm:$0xff]
      %v1676 = vld [vmem:[%s483 + $0x10] sm:$0xff]
      %v1677 = vld [vmem:[%s483 + $0x28] sm:$0xff]
      %v1678 = vld [vmem:[%s483 + $0x30] sm:$0xff]
      %v1679 = vld [vmem:[%s483 + $0x48] sm:$0xff]
      %v1680 = vld [vmem:[%s483 + $0x50] sm:$0xff]
      %v1681 = vld [vmem:[%s483 + $0x68] sm:$0xff]
      %v1682 = vld [vmem:[%s483 + $0x70] sm:$0xff]
      %v1683 = vld [vmem:[%s483 + $0x88] sm:$0xff]
      %v1684 = vld [vmem:[%s483 + $0x90] sm:$0xff]
      %v1685 = vld [vmem:[%s483 + $0xa8] sm:$0xff]
      %v1686 = vld [vmem:[%s483 + $0xb0] sm:$0xff]
      %v1687 = vld [vmem:[%s483 + $0xc8] sm:$0xff]
      %v1688 = vld [vmem:[%s483 + $0xd0] sm:$0xff]
      %v1689 = vld [vmem:[%s483 + $0xe8] sm:$0xff]
      %v1690 = vld [vmem:[%s483 + $0xf0] sm:$0xff]
      %v1691 = vld [vmem:[%s483 + $0x108] sm:$0xff]
      %v1692 = vld [vmem:[%s483 + $0x110] sm:$0xff]
      %v1693 = vld [vmem:[%s483 + $0x128] sm:$0xff]
      %v1694 = vld [vmem:[%s483 + $0x130] sm:$0xff]
      %v1695 = vld [vmem:[%s483 + $0x148] sm:$0xff]
      %v1696 = vld [vmem:[%s483 + $0x150] sm:$0xff]
      %v1697 = vld [vmem:[%s483 + $0x168] sm:$0xff]
      %v1698 = vld [vmem:[%s483 + $0x170] sm:$0xff]
      %v1699 = vld [vmem:[%s483 + $0x188] sm:$0xff]
      %v1700 = vld [vmem:[%s483 + $0x190] sm:$0xff]
      %v1701 = vld [vmem:[%s483 + $0x1a8] sm:$0xff]
      %v1702 = vld [vmem:[%s483 + $0x1b0] sm:$0xff]
      %v1703 = vld [vmem:[%s483 + $0x1c8] sm:$0xff]
      %v1704 = vld [vmem:[%s483 + $0x1d0] sm:$0xff]
      %v1705 = vld [vmem:[%s483 + $0x1e8] sm:$0xff]
      %v1706 = vld [vmem:[%s483 + $0x1f0] sm:$0xff]
      %v1707 = vpack.c.bf16 %v1676, %v1675
      %v1708 = vpack.c.bf16 %v1678, %v1677
      %v1709 = vpack.c.bf16 %v1680, %v1679
      %v1710 = vpack.c.bf16 %v1682, %v1681
      %v1711 = vpack.c.bf16 %v1684, %v1683
      %v1712 = vpack.c.bf16 %v1686, %v1685
      %v1713 = vpack.c.bf16 %v1688, %v1687
      %v1714 = vpack.c.bf16 %v1690, %v1689
      %v1715 = vpack.c.bf16 %v1692, %v1691
      %v1716 = vpack.c.bf16 %v1694, %v1693
      %v1717 = vpack.c.bf16 %v1696, %v1695
      %v1718 = vpack.c.bf16 %v1698, %v1697
      %v1719 = vpack.c.bf16 %v1700, %v1699
      %v1720 = vpack.c.bf16 %v1702, %v1701
      %v1721 = vpack.c.bf16 %v1704, %v1703
      %v1722 = vpack.c.bf16 %v1706, %v1705
      %s1723 = scalar_lea.vmem %s3, 256
      %v1724 = vld [vmem:[%s1723] sm:$0xf]
      %v1725 = vld [vmem:[%s1723 + $0x4] sm:$0xf]
      %v1726 = vld [vmem:[%s1723 + $0x8] sm:$0xf]
      %v1727 = vld [vmem:[%s1723 + $0xc] sm:$0xf]
      %v1728 = vld [vmem:[%s1723 + $0x10] sm:$0xf]
      %v1729 = vld [vmem:[%s1723 + $0x14] sm:$0xf]
      %v1730 = vld [vmem:[%s1723 + $0x18] sm:$0xf]
      %v1731 = vld [vmem:[%s1723 + $0x1c] sm:$0xf]
      %v1732 = vld [vmem:[%s1723 + $0x20] sm:$0xf]
      %v1733 = vld [vmem:[%s1723 + $0x24] sm:$0xf]
      %v1734 = vld [vmem:[%s1723 + $0x28] sm:$0xf]
      %v1735 = vld [vmem:[%s1723 + $0x2c] sm:$0xf]
      %v1736 = vld [vmem:[%s1723 + $0x30] sm:$0xf]
      %v1737 = vld [vmem:[%s1723 + $0x34] sm:$0xf]
      %v1738 = vld [vmem:[%s1723 + $0x38] sm:$0xf]
      %v1739 = vld [vmem:[%s1723 + $0x3c] sm:$0xf]
      %v1756 = vunpack.c.l.b16 %v1724
      %v1757 = vunpack.c.l.b16 %v1725
      %v1758 = vunpack.c.l.b16 %v1726
      %v1759 = vunpack.c.l.b16 %v1727
      %v1760 = vunpack.c.l.b16 %v1728
      %v1761 = vunpack.c.l.b16 %v1729
      %v1762 = vunpack.c.l.b16 %v1730
      %v1763 = vunpack.c.l.b16 %v1731
      %v1764 = vunpack.c.l.b16 %v1732
      %v1765 = vunpack.c.l.b16 %v1733
      %v1766 = vunpack.c.l.b16 %v1734
      %v1767 = vunpack.c.l.b16 %v1735
      %v1768 = vunpack.c.l.b16 %v1736
      %v1769 = vunpack.c.l.b16 %v1737
      %v1770 = vunpack.c.l.b16 %v1738
      %v1771 = vunpack.c.l.b16 %v1739
      %v1772 = vpack.c.b16 %v1757, %v1756
      %v1773 = vpack.c.b16 %v1759, %v1758
      %v1774 = vpack.c.b16 %v1761, %v1760
      %v1775 = vpack.c.b16 %v1763, %v1762
      %v1776 = vpack.c.b16 %v1765, %v1764
      %v1777 = vpack.c.b16 %v1767, %v1766
      %v1778 = vpack.c.b16 %v1769, %v1768
      %v1779 = vpack.c.b16 %v1771, %v1770
      %1788 = vmatprep.subr.bf16.mxu0 0
      %1789 = vmatpush1.bf16.msra.mxu0 %v1772
      %1790 = vmatprep.subr.bf16.mxu0 0
      %1791 = vmatpush1.bf16.msra.mxu0 %v1773
      %1792 = vmatprep.subr.bf16.mxu0 0
      %1793 = vmatpush1.bf16.msra.mxu0 %v1774
      %1794 = vmatprep.subr.bf16.mxu0 0
      %1795 = vmatpush1.bf16.msra.mxu0 %v1775
      %1796 = vmatprep.subr.bf16.mxu0 0
      %1797 = vmatpush1.bf16.msra.mxu0 %v1776
      %1798 = vmatprep.subr.bf16.mxu0 0
      %1799 = vmatpush1.bf16.msra.mxu0 %v1777
      %1800 = vmatprep.subr.bf16.mxu0 0
      %1801 = vmatpush1.bf16.msra.mxu0 %v1778
      %1802 = vmatprep.subr.bf16.mxu0 0
      %1803 = vmatpush1.bf16.msra.mxu0 %v1779
      %1804 = vmatprep.subr.bf16.mxu0 0
      %1805 = vmatpush1.bf16.msra.mxu0 0
      %1806 = vmatprep.subr.bf16.mxu0 0
      %1807 = vmatpush1.bf16.msra.mxu0 0
      %1808 = vmatprep.subr.bf16.mxu0 0
      %1809 = vmatpush1.bf16.msra.mxu0 0
      %1810 = vmatprep.subr.bf16.mxu0 0
      %1811 = vmatpush1.bf16.msra.mxu0 0
      %1812 = vmatprep.subr.bf16.mxu0 0
      %1813 = vmatpush1.bf16.msra.mxu0 0
      %1814 = vmatprep.subr.bf16.mxu0 0
      %1815 = vmatpush1.bf16.msra.mxu0 0
      %1816 = vmatprep.subr.bf16.mxu0 0
      %1817 = vmatpush1.bf16.msra.mxu0 0
      %1818 = vmatprep.subr.bf16.mxu0 0
      %1819 = vmatpush1.bf16.msra.mxu0 0
      %1820 = vmatprep.mubr.bf16.mxu0 0
      %1821 = vmatmul.mubr.bf16.gmra.mrb[0].mxu0 %v1707
      %v1822 = vpop.f32.mrb[0].mxu0
      %v1823 = vadd.f32 0.0, %v1822
      %v1824 = vpop.f32.mrb[0].mxu0
      %v1825 = vpop.f32.mrb[0].mxu0
      %v1826 = vadd.f32 0.0, %v1825
      %v1827 = vpop.f32.mrb[0].mxu0
      %1828 = vmatprep.mubr.bf16.mxu0 0
      %1829 = vmatmul.mubr.bf16.gmra.mrb[0].mxu0 %v1708
      %v1830 = vpop.f32.mrb[0].mxu0
      %v1831 = vadd.f32 0.0, %v1830
      %v1832 = vpop.f32.mrb[0].mxu0
      %v1833 = vpop.f32.mrb[0].mxu0
      %v1834 = vadd.f32 0.0, %v1833
      %v1835 = vpop.f32.mrb[0].mxu0
      %1836 = vmatprep.mubr.bf16.mxu0 0
      %1837 = vmatmul.mubr.bf16.gmra.mrb[0].mxu0 %v1709
      %v1838 = vpop.f32.mrb[0].mxu0
      %v1839 = vadd.f32 0.0, %v1838
      %v1840 = vpop.f32.mrb[0].mxu0
      %v1841 = vpop.f32.mrb[0].mxu0
      %v1842 = vadd.f32 0.0, %v1841
      %v1843 = vpop.f32.mrb[0].mxu0
      %1844 = vmatprep.mubr.bf16.mxu0 0
      %1845 = vmatmul.mubr.bf16.gmra.mrb[0].mxu0 %v1710
      %v1846 = vpop.f32.mrb[0].mxu0
      %v1847 = vadd.f32 0.0, %v1846
      %v1848 = vpop.f32.mrb[0].mxu0
      %v1849 = vpop.f32.mrb[0].mxu0
      %v1850 = vadd.f32 0.0, %v1849
      %v1851 = vpop.f32.mrb[0].mxu0
      %1852 = vmatprep.mubr.bf16.mxu0 0
      %1853 = vmatmul.mubr.bf16.gmra.mrb[0].mxu0 %v1711
      %v1854 = vpop.f32.mrb[0].mxu0
      %v1855 = vadd.f32 0.0, %v1854
      %v1856 = vpop.f32.mrb[0].mxu0
      %v1857 = vpop.f32.mrb[0].mxu0
      %v1858 = vadd.f32 0.0, %v1857
      %v1859 = vpop.f32.mrb[0].mxu0
      %1860 = vmatprep.mubr.bf16.mxu0 0
      %1861 = vmatmul.mubr.bf16.gmra.mrb[0].mxu0 %v1712
      %v1862 = vpop.f32.mrb[0].mxu0
      %v1863 = vadd.f32 0.0, %v1862
      %v1864 = vpop.f32.mrb[0].mxu0
      %v1865 = vpop.f32.mrb[0].mxu0
      %v1866 = vadd.f32 0.0, %v1865
      %v1867 = vpop.f32.mrb[0].mxu0
      %1868 = vmatprep.mubr.bf16.mxu0 0
      %1869 = vmatmul.mubr.bf16.gmra.mrb[0].mxu0 %v1713
      %v1870 = vpop.f32.mrb[0].mxu0
      %v1871 = vadd.f32 0.0, %v1870
      %v1872 = vpop.f32.mrb[0].mxu0
      %v1873 = vpop.f32.mrb[0].mxu0
      %v1874 = vadd.f32 0.0, %v1873
      %v1875 = vpop.f32.mrb[0].mxu0
      %1876 = vmatprep.mubr.bf16.mxu0 0
      %1877 = vmatmul.mubr.bf16.gmra.mrb[0].mxu0 %v1714
      %v1878 = vpop.f32.mrb[0].mxu0
      %v1879 = vadd.f32 0.0, %v1878
      %v1880 = vpop.f32.mrb[0].mxu0
      %v1881 = vpop.f32.mrb[0].mxu0
      %v1882 = vadd.f32 0.0, %v1881
      %v1883 = vpop.f32.mrb[0].mxu0
      %1884 = vmatprep.mubr.bf16.mxu0 0
      %1885 = vmatmul.mubr.bf16.gmra.mrb[0].mxu0 %v1715
      %v1886 = vpop.f32.mrb[0].mxu0
      %v1887 = vadd.f32 0.0, %v1886
      %v1888 = vpop.f32.mrb[0].mxu0
      %v1889 = vpop.f32.mrb[0].mxu0
      %v1890 = vadd.f32 0.0, %v1889
      %v1891 = vpop.f32.mrb[0].mxu0
      %1892 = vmatprep.mubr.bf16.mxu0 0
      %1893 = vmatmul.mubr.bf16.gmra.mrb[0].mxu0 %v1716
      %v1894 = vpop.f32.mrb[0].mxu0
      %v1895 = vadd.f32 0.0, %v1894
      %v1896 = vpop.f32.mrb[0].mxu0
      %v1897 = vpop.f32.mrb[0].mxu0
      %v1898 = vadd.f32 0.0, %v1897
      %v1899 = vpop.f32.mrb[0].mxu0
      %1900 = vmatprep.mubr.bf16.mxu0 0
      %1901 = vmatmul.mubr.bf16.gmra.mrb[0].mxu0 %v1717
      %v1902 = vpop.f32.mrb[0].mxu0
      %v1903 = vadd.f32 0.0, %v1902
      %v1904 = vpop.f32.mrb[0].mxu0
      %v1905 = vpop.f32.mrb[0].mxu0
      %v1906 = vadd.f32 0.0, %v1905
      %v1907 = vpop.f32.mrb[0].mxu0
      %1908 = vmatprep.mubr.bf16.mxu0 0
      %1909 = vmatmul.mubr.bf16.gmra.mrb[0].mxu0 %v1718
      %v1910 = vpop.f32.mrb[0].mxu0
      %v1911 = vadd.f32 0.0, %v1910
      %v1912 = vpop.f32.mrb[0].mxu0
      %v1913 = vpop.f32.mrb[0].mxu0
      %v1914 = vadd.f32 0.0, %v1913
      %v1915 = vpop.f32.mrb[0].mxu0
      %1916 = vmatprep.mubr.bf16.mxu0 0
      %1917 = vmatmul.mubr.bf16.gmra.mrb[0].mxu0 %v1719
      %v1918 = vpop.f32.mrb[0].mxu0
      %v1919 = vadd.f32 0.0, %v1918
      %v1920 = vpop.f32.mrb[0].mxu0
      %v1921 = vpop.f32.mrb[0].mxu0
      %v1922 = vadd.f32 0.0, %v1921
      %v1923 = vpop.f32.mrb[0].mxu0
      %1924 = vmatprep.mubr.bf16.mxu0 0
      %1925 = vmatmul.mubr.bf16.gmra.mrb[0].mxu0 %v1720
      %v1926 = vpop.f32.mrb[0].mxu0
      %v1927 = vadd.f32 0.0, %v1926
      %v1928 = vpop.f32.mrb[0].mxu0
      %v1929 = vpop.f32.mrb[0].mxu0
      %v1930 = vadd.f32 0.0, %v1929
      %v1931 = vpop.f32.mrb[0].mxu0
      %1932 = vmatprep.mubr.bf16.mxu0 0
      %1933 = vmatmul.mubr.bf16.gmra.mrb[0].mxu0 %v1721
      %v1934 = vpop.f32.mrb[0].mxu0
      %v1935 = vadd.f32 0.0, %v1934
      %v1936 = vpop.f32.mrb[0].mxu0
      %v1937 = vpop.f32.mrb[0].mxu0
      %v1938 = vadd.f32 0.0, %v1937
      %v1939 = vpop.f32.mrb[0].mxu0
      %1940 = vmatprep.mubr.bf16.mxu0 0
      %1941 = vmatmul.mubr.bf16.gmra.mrb[0].mxu0 %v1722
      %v1942 = vpop.f32.mrb[0].mxu0
      %v1943 = vadd.f32 0.0, %v1942
      %v1944 = vpop.f32.mrb[0].mxu0
      %v1945 = vpop.f32.mrb[0].mxu0
      %v1946 = vadd.f32 0.0, %v1945
      %v1947 = vpop.f32.mrb[0].mxu0
      %1948 = vdwg.mxu0
      %v1949 = vadd.f32 %v1643, %v1823
      %v1950 = vadd.f32 %v1644, %v1826
      %v1951 = vadd.f32 %v1645, %v1831
      %v1952 = vadd.f32 %v1646, %v1834
      %v1953 = vadd.f32 %v1647, %v1839
      %v1954 = vadd.f32 %v1648, %v1842
      %v1955 = vadd.f32 %v1649, %v1847
      %v1956 = vadd.f32 %v1650, %v1850
      %v1957 = vadd.f32 %v1651, %v1855
      %v1958 = vadd.f32 %v1652, %v1858
      %v1959 = vadd.f32 %v1653, %v1863
      %v1960 = vadd.f32 %v1654, %v1866
      %v1961 = vadd.f32 %v1655, %v1871
      %v1962 = vadd.f32 %v1656, %v1874
      %v1963 = vadd.f32 %v1657, %v1879
      %v1964 = vadd.f32 %v1658, %v1882
      %v1965 = vadd.f32 %v1659, %v1887
      %v1966 = vadd.f32 %v1660, %v1890
      %v1967 = vadd.f32 %v1661, %v1895
      %v1968 = vadd.f32 %v1662, %v1898
      %v1969 = vadd.f32 %v1663, %v1903
      %v1970 = vadd.f32 %v1664, %v1906
      %v1971 = vadd.f32 %v1665, %v1911
      %v1972 = vadd.f32 %v1666, %v1914
      %v1973 = vadd.f32 %v1667, %v1919
      %v1974 = vadd.f32 %v1668, %v1922
      %v1975 = vadd.f32 %v1669, %v1927
      %v1976 = vadd.f32 %v1670, %v1930
      %v1977 = vadd.f32 %v1671, %v1935
      %v1978 = vadd.f32 %v1672, %v1938
      %v1979 = vadd.f32 %v1673, %v1943
      %v1980 = vadd.f32 %v1674, %v1946
      %v1981 = vld [vmem:[%s483 + $0x9] sm:$0xff]
      %v1982 = vld [vmem:[%s483 + $0x11] sm:$0xff]
      %v1983 = vld [vmem:[%s483 + $0x29] sm:$0xff]
      %v1984 = vld [vmem:[%s483 + $0x31] sm:$0xff]
      %v1985 = vld [vmem:[%s483 + $0x49] sm:$0xff]
      %v1986 = vld [vmem:[%s483 + $0x51] sm:$0xff]
      %v1987 = vld [vmem:[%s483 + $0x69] sm:$0xff]
      %v1988 = vld [vmem:[%s483 + $0x71] sm:$0xff]
      %v1989 = vld [vmem:[%s483 + $0x89] sm:$0xff]
      %v1990 = vld [vmem:[%s483 + $0x91] sm:$0xff]
      %v1991 = vld [vmem:[%s483 + $0xa9] sm:$0xff]
      %v1992 = vld [vmem:[%s483 + $0xb1] sm:$0xff]
      %v1993 = vld [vmem:[%s483 + $0xc9] sm:$0xff]
      %v1994 = vld [vmem:[%s483 + $0xd1] sm:$0xff]
      %v1995 = vld [vmem:[%s483 + $0xe9] sm:$0xff]
      %v1996 = vld [vmem:[%s483 + $0xf1] sm:$0xff]
      %v1997 = vld [vmem:[%s483 + $0x109] sm:$0xff]
      %v1998 = vld [vmem:[%s483 + $0x111] sm:$0xff]
      %v1999 = vld [vmem:[%s483 + $0x129] sm:$0xff]
      %v2000 = vld [vmem:[%s483 + $0x131] sm:$0xff]
      %v2001 = vld [vmem:[%s483 + $0x149] sm:$0xff]
      %v2002 = vld [vmem:[%s483 + $0x151] sm:$0xff]
      %v2003 = vld [vmem:[%s483 + $0x169] sm:$0xff]
      %v2004 = vld [vmem:[%s483 + $0x171] sm:$0xff]
      %v2005 = vld [vmem:[%s483 + $0x189] sm:$0xff]
      %v2006 = vld [vmem:[%s483 + $0x191] sm:$0xff]
      %v2007 = vld [vmem:[%s483 + $0x1a9] sm:$0xff]
      %v2008 = vld [vmem:[%s483 + $0x1b1] sm:$0xff]
      %v2009 = vld [vmem:[%s483 + $0x1c9] sm:$0xff]
      %v2010 = vld [vmem:[%s483 + $0x1d1] sm:$0xff]
      %v2011 = vld [vmem:[%s483 + $0x1e9] sm:$0xff]
      %v2012 = vld [vmem:[%s483 + $0x1f1] sm:$0xff]
      %v2013 = vpack.c.bf16 %v1982, %v1981
      %v2014 = vpack.c.bf16 %v1984, %v1983
      %v2015 = vpack.c.bf16 %v1986, %v1985
      %v2016 = vpack.c.bf16 %v1988, %v1987
      %v2017 = vpack.c.bf16 %v1990, %v1989
      %v2018 = vpack.c.bf16 %v1992, %v1991
      %v2019 = vpack.c.bf16 %v1994, %v1993
      %v2020 = vpack.c.bf16 %v1996, %v1995
      %v2021 = vpack.c.bf16 %v1998, %v1997
      %v2022 = vpack.c.bf16 %v2000, %v1999
      %v2023 = vpack.c.bf16 %v2002, %v2001
      %v2024 = vpack.c.bf16 %v2004, %v2003
      %v2025 = vpack.c.bf16 %v2006, %v2005
      %v2026 = vpack.c.bf16 %v2008, %v2007
      %v2027 = vpack.c.bf16 %v2010, %v2009
      %v2028 = vpack.c.bf16 %v2012, %v2011
      %s2029 = scalar_lea.vmem %s3, 320
      %v2030 = vld [vmem:[%s2029] sm:$0xf]
      %v2031 = vld [vmem:[%s2029 + $0x4] sm:$0xf]
      %v2032 = vld [vmem:[%s2029 + $0x8] sm:$0xf]
      %v2033 = vld [vmem:[%s2029 + $0xc] sm:$0xf]
      %v2034 = vld [vmem:[%s2029 + $0x10] sm:$0xf]
      %v2035 = vld [vmem:[%s2029 + $0x14] sm:$0xf]
      %v2036 = vld [vmem:[%s2029 + $0x18] sm:$0xf]
      %v2037 = vld [vmem:[%s2029 + $0x1c] sm:$0xf]
      %v2038 = vld [vmem:[%s2029 + $0x20] sm:$0xf]
      %v2039 = vld [vmem:[%s2029 + $0x24] sm:$0xf]
      %v2040 = vld [vmem:[%s2029 + $0x28] sm:$0xf]
      %v2041 = vld [vmem:[%s2029 + $0x2c] sm:$0xf]
      %v2042 = vld [vmem:[%s2029 + $0x30] sm:$0xf]
      %v2043 = vld [vmem:[%s2029 + $0x34] sm:$0xf]
      %v2044 = vld [vmem:[%s2029 + $0x38] sm:$0xf]
      %v2045 = vld [vmem:[%s2029 + $0x3c] sm:$0xf]
      %v2062 = vunpack.c.l.b16 %v2030
      %v2063 = vunpack.c.l.b16 %v2031
      %v2064 = vunpack.c.l.b16 %v2032
      %v2065 = vunpack.c.l.b16 %v2033
      %v2066 = vunpack.c.l.b16 %v2034
      %v2067 = vunpack.c.l.b16 %v2035
      %v2068 = vunpack.c.l.b16 %v2036
      %v2069 = vunpack.c.l.b16 %v2037
      %v2070 = vunpack.c.l.b16 %v2038
      %v2071 = vunpack.c.l.b16 %v2039
      %v2072 = vunpack.c.l.b16 %v2040
      %v2073 = vunpack.c.l.b16 %v2041
      %v2074 = vunpack.c.l.b16 %v2042
      %v2075 = vunpack.c.l.b16 %v2043
      %v2076 = vunpack.c.l.b16 %v2044
      %v2077 = vunpack.c.l.b16 %v2045
      %v2078 = vpack.c.b16 %v2063, %v2062
      %v2079 = vpack.c.b16 %v2065, %v2064
      %v2080 = vpack.c.b16 %v2067, %v2066
      %v2081 = vpack.c.b16 %v2069, %v2068
      %v2082 = vpack.c.b16 %v2071, %v2070
      %v2083 = vpack.c.b16 %v2073, %v2072
      %v2084 = vpack.c.b16 %v2075, %v2074
      %v2085 = vpack.c.b16 %v2077, %v2076
      %2094 = vmatprep.subr.bf16.mxu0 0
      %2095 = vmatpush1.bf16.msra.mxu0 %v2078
      %2096 = vmatprep.subr.bf16.mxu0 0
      %2097 = vmatpush1.bf16.msra.mxu0 %v2079
      %2098 = vmatprep.subr.bf16.mxu0 0
      %2099 = vmatpush1.bf16.msra.mxu0 %v2080
      %2100 = vmatprep.subr.bf16.mxu0 0
      %2101 = vmatpush1.bf16.msra.mxu0 %v2081
      %2102 = vmatprep.subr.bf16.mxu0 0
      %2103 = vmatpush1.bf16.msra.mxu0 %v2082
      %2104 = vmatprep.subr.bf16.mxu0 0
      %2105 = vmatpush1.bf16.msra.mxu0 %v2083
      %2106 = vmatprep.subr.bf16.mxu0 0
      %2107 = vmatpush1.bf16.msra.mxu0 %v2084
      %2108 = vmatprep.subr.bf16.mxu0 0
      %2109 = vmatpush1.bf16.msra.mxu0 %v2085
      %2110 = vmatprep.subr.bf16.mxu0 0
      %2111 = vmatpush1.bf16.msra.mxu0 0
      %2112 = vmatprep.subr.bf16.mxu0 0
      %2113 = vmatpush1.bf16.msra.mxu0 0
      %2114 = vmatprep.subr.bf16.mxu0 0
      %2115 = vmatpush1.bf16.msra.mxu0 0
      %2116 = vmatprep.subr.bf16.mxu0 0
      %2117 = vmatpush1.bf16.msra.mxu0 0
      %2118 = vmatprep.subr.bf16.mxu0 0
      %2119 = vmatpush1.bf16.msra.mxu0 0
      %2120 = vmatprep.subr.bf16.mxu0 0
      %2121 = vmatpush1.bf16.msra.mxu0 0
      %2122 = vmatprep.subr.bf16.mxu0 0
      %2123 = vmatpush1.bf16.msra.mxu0 0
      %2124 = vmatprep.subr.bf16.mxu0 0
      %2125 = vmatpush1.bf16.msra.mxu0 0
      %2126 = vmatprep.mubr.bf16.mxu0 0
      %2127 = vmatmul.mubr.bf16.gmra.mrb[0].mxu0 %v2013
      %v2128 = vpop.f32.mrb[0].mxu0
      %v2129 = vadd.f32 0.0, %v2128
      %v2130 = vpop.f32.mrb[0].mxu0
      %v2131 = vpop.f32.mrb[0].mxu0
      %v2132 = vadd.f32 0.0, %v2131
      %v2133 = vpop.f32.mrb[0].mxu0
      %2134 = vmatprep.mubr.bf16.mxu0 0
      %2135 = vmatmul.mubr.bf16.gmra.mrb[0].mxu0 %v2014
      %v2136 = vpop.f32.mrb[0].mxu0
      %v2137 = vadd.f32 0.0, %v2136
      %v2138 = vpop.f32.mrb[0].mxu0
      %v2139 = vpop.f32.mrb[0].mxu0
      %v2140 = vadd.f32 0.0, %v2139
      %v2141 = vpop.f32.mrb[0].mxu0
      %2142 = vmatprep.mubr.bf16.mxu0 0
      %2143 = vmatmul.mubr.bf16.gmra.mrb[0].mxu0 %v2015
      %v2144 = vpop.f32.mrb[0].mxu0
      %v2145 = vadd.f32 0.0, %v2144
      %v2146 = vpop.f32.mrb[0].mxu0
      %v2147 = vpop.f32.mrb[0].mxu0
      %v2148 = vadd.f32 0.0, %v2147
      %v2149 = vpop.f32.mrb[0].mxu0
      %2150 = vmatprep.mubr.bf16.mxu0 0
      %2151 = vmatmul.mubr.bf16.gmra.mrb[0].mxu0 %v2016
      %v2152 = vpop.f32.mrb[0].mxu0
      %v2153 = vadd.f32 0.0, %v2152
      %v2154 = vpop.f32.mrb[0].mxu0
      %v2155 = vpop.f32.mrb[0].mxu0
      %v2156 = vadd.f32 0.0, %v2155
      %v2157 = vpop.f32.mrb[0].mxu0
      %2158 = vmatprep.mubr.bf16.mxu0 0
      %2159 = vmatmul.mubr.bf16.gmra.mrb[0].mxu0 %v2017
      %v2160 = vpop.f32.mrb[0].mxu0
      %v2161 = vadd.f32 0.0, %v2160
      %v2162 = vpop.f32.mrb[0].mxu0
      %v2163 = vpop.f32.mrb[0].mxu0
      %v2164 = vadd.f32 0.0, %v2163
      %v2165 = vpop.f32.mrb[0].mxu0
      %2166 = vmatprep.mubr.bf16.mxu0 0
      %2167 = vmatmul.mubr.bf16.gmra.mrb[0].mxu0 %v2018
      %v2168 = vpop.f32.mrb[0].mxu0
      %v2169 = vadd.f32 0.0, %v2168
      %v2170 = vpop.f32.mrb[0].mxu0
      %v2171 = vpop.f32.mrb[0].mxu0
      %v2172 = vadd.f32 0.0, %v2171
      %v2173 = vpop.f32.mrb[0].mxu0
      %2174 = vmatprep.mubr.bf16.mxu0 0
      %2175 = vmatmul.mubr.bf16.gmra.mrb[0].mxu0 %v2019
      %v2176 = vpop.f32.mrb[0].mxu0
      %v2177 = vadd.f32 0.0, %v2176
      %v2178 = vpop.f32.mrb[0].mxu0
      %v2179 = vpop.f32.mrb[0].mxu0
      %v2180 = vadd.f32 0.0, %v2179
      %v2181 = vpop.f32.mrb[0].mxu0
      %2182 = vmatprep.mubr.bf16.mxu0 0
      %2183 = vmatmul.mubr.bf16.gmra.mrb[0].mxu0 %v2020
      %v2184 = vpop.f32.mrb[0].mxu0
      %v2185 = vadd.f32 0.0, %v2184
      %v2186 = vpop.f32.mrb[0].mxu0
      %v2187 = vpop.f32.mrb[0].mxu0
      %v2188 = vadd.f32 0.0, %v2187
      %v2189 = vpop.f32.mrb[0].mxu0
      %2190 = vmatprep.mubr.bf16.mxu0 0
      %2191 = vmatmul.mubr.bf16.gmra.mrb[0].mxu0 %v2021
      %v2192 = vpop.f32.mrb[0].mxu0
      %v2193 = vadd.f32 0.0, %v2192
      %v2194 = vpop.f32.mrb[0].mxu0
      %v2195 = vpop.f32.mrb[0].mxu0
      %v2196 = vadd.f32 0.0, %v2195
      %v2197 = vpop.f32.mrb[0].mxu0
      %2198 = vmatprep.mubr.bf16.mxu0 0
      %2199 = vmatmul.mubr.bf16.gmra.mrb[0].mxu0 %v2022
      %v2200 = vpop.f32.mrb[0].mxu0
      %v2201 = vadd.f32 0.0, %v2200
      %v2202 = vpop.f32.mrb[0].mxu0
      %v2203 = vpop.f32.mrb[0].mxu0
      %v2204 = vadd.f32 0.0, %v2203
      %v2205 = vpop.f32.mrb[0].mxu0
      %2206 = vmatprep.mubr.bf16.mxu0 0
      %2207 = vmatmul.mubr.bf16.gmra.mrb[0].mxu0 %v2023
      %v2208 = vpop.f32.mrb[0].mxu0
      %v2209 = vadd.f32 0.0, %v2208
      %v2210 = vpop.f32.mrb[0].mxu0
      %v2211 = vpop.f32.mrb[0].mxu0
      %v2212 = vadd.f32 0.0, %v2211
      %v2213 = vpop.f32.mrb[0].mxu0
      %2214 = vmatprep.mubr.bf16.mxu0 0
      %2215 = vmatmul.mubr.bf16.gmra.mrb[0].mxu0 %v2024
      %v2216 = vpop.f32.mrb[0].mxu0
      %v2217 = vadd.f32 0.0, %v2216
      %v2218 = vpop.f32.mrb[0].mxu0
      %v2219 = vpop.f32.mrb[0].mxu0
      %v2220 = vadd.f32 0.0, %v2219
      %v2221 = vpop.f32.mrb[0].mxu0
      %2222 = vmatprep.mubr.bf16.mxu0 0
      %2223 = vmatmul.mubr.bf16.gmra.mrb[0].mxu0 %v2025
      %v2224 = vpop.f32.mrb[0].mxu0
      %v2225 = vadd.f32 0.0, %v2224
      %v2226 = vpop.f32.mrb[0].mxu0
      %v2227 = vpop.f32.mrb[0].mxu0
      %v2228 = vadd.f32 0.0, %v2227
      %v2229 = vpop.f32.mrb[0].mxu0
      %2230 = vmatprep.mubr.bf16.mxu0 0
      %2231 = vmatmul.mubr.bf16.gmra.mrb[0].mxu0 %v2026
      %v2232 = vpop.f32.mrb[0].mxu0
      %v2233 = vadd.f32 0.0, %v2232
      %v2234 = vpop.f32.mrb[0].mxu0
      %v2235 = vpop.f32.mrb[0].mxu0
      %v2236 = vadd.f32 0.0, %v2235
      %v2237 = vpop.f32.mrb[0].mxu0
      %2238 = vmatprep.mubr.bf16.mxu0 0
      %2239 = vmatmul.mubr.bf16.gmra.mrb[0].mxu0 %v2027
      %v2240 = vpop.f32.mrb[0].mxu0
      %v2241 = vadd.f32 0.0, %v2240
      %v2242 = vpop.f32.mrb[0].mxu0
      %v2243 = vpop.f32.mrb[0].mxu0
      %v2244 = vadd.f32 0.0, %v2243
      %v2245 = vpop.f32.mrb[0].mxu0
      %2246 = vmatprep.mubr.bf16.mxu0 0
      %2247 = vmatmul.mubr.bf16.gmra.mrb[0].mxu0 %v2028
      %v2248 = vpop.f32.mrb[0].mxu0
      %v2249 = vadd.f32 0.0, %v2248
      %v2250 = vpop.f32.mrb[0].mxu0
      %v2251 = vpop.f32.mrb[0].mxu0
      %v2252 = vadd.f32 0.0, %v2251
      %v2253 = vpop.f32.mrb[0].mxu0
      %2254 = vdwg.mxu0
      %v2255 = vadd.f32 %v1949, %v2129
      %v2256 = vadd.f32 %v1950, %v2132
      %v2257 = vadd.f32 %v1951, %v2137
      %v2258 = vadd.f32 %v1952, %v2140
      %v2259 = vadd.f32 %v1953, %v2145
      %v2260 = vadd.f32 %v1954, %v2148
      %v2261 = vadd.f32 %v1955, %v2153
      %v2262 = vadd.f32 %v1956, %v2156
      %v2263 = vadd.f32 %v1957, %v2161
      %v2264 = vadd.f32 %v1958, %v2164
      %v2265 = vadd.f32 %v1959, %v2169
      %v2266 = vadd.f32 %v1960, %v2172
      %v2267 = vadd.f32 %v1961, %v2177
      %v2268 = vadd.f32 %v1962, %v2180
      %v2269 = vadd.f32 %v1963, %v2185
      %v2270 = vadd.f32 %v1964, %v2188
      %v2271 = vadd.f32 %v1965, %v2193
      %v2272 = vadd.f32 %v1966, %v2196
      %v2273 = vadd.f32 %v1967, %v2201
      %v2274 = vadd.f32 %v1968, %v2204
      %v2275 = vadd.f32 %v1969, %v2209
      %v2276 = vadd.f32 %v1970, %v2212
      %v2277 = vadd.f32 %v1971, %v2217
      %v2278 = vadd.f32 %v1972, %v2220
      %v2279 = vadd.f32 %v1973, %v2225
      %v2280 = vadd.f32 %v1974, %v2228
      %v2281 = vadd.f32 %v1975, %v2233
      %v2282 = vadd.f32 %v1976, %v2236
      %v2283 = vadd.f32 %v1977, %v2241
      %v2284 = vadd.f32 %v1978, %v2244
      %v2285 = vadd.f32 %v1979, %v2249
      %v2286 = vadd.f32 %v1980, %v2252
      %s2287 = scalar_lea.vmem [#allocation2], 64
      %v2288 = vld [vmem:[%s2287 + $0x7] sm:$0xff]
      %v2289 = vld [vmem:[%s2287 + $0xf] sm:$0xff]
      %v2290 = vld [vmem:[%s2287 + $0x27] sm:$0xff]
      %v2291 = vld [vmem:[%s2287 + $0x2f] sm:$0xff]
      %v2292 = vld [vmem:[%s2287 + $0x47] sm:$0xff]
      %v2293 = vld [vmem:[%s2287 + $0x4f] sm:$0xff]
      %v2294 = vld [vmem:[%s2287 + $0x67] sm:$0xff]
      %v2295 = vld [vmem:[%s2287 + $0x6f] sm:$0xff]
      %v2296 = vld [vmem:[%s2287 + $0x87] sm:$0xff]
      %v2297 = vld [vmem:[%s2287 + $0x8f] sm:$0xff]
      %v2298 = vld [vmem:[%s2287 + $0xa7] sm:$0xff]
      %v2299 = vld [vmem:[%s2287 + $0xaf] sm:$0xff]
      %v2300 = vld [vmem:[%s2287 + $0xc7] sm:$0xff]
      %v2301 = vld [vmem:[%s2287 + $0xcf] sm:$0xff]
      %v2302 = vld [vmem:[%s2287 + $0xe7] sm:$0xff]
      %v2303 = vld [vmem:[%s2287 + $0xef] sm:$0xff]
      %v2304 = vld [vmem:[%s2287 + $0x107] sm:$0xff]
      %v2305 = vld [vmem:[%s2287 + $0x10f] sm:$0xff]
      %v2306 = vld [vmem:[%s2287 + $0x127] sm:$0xff]
      %v2307 = vld [vmem:[%s2287 + $0x12f] sm:$0xff]
      %v2308 = vld [vmem:[%s2287 + $0x147] sm:$0xff]
      %v2309 = vld [vmem:[%s2287 + $0x14f] sm:$0xff]
      %v2310 = vld [vmem:[%s2287 + $0x167] sm:$0xff]
      %v2311 = vld [vmem:[%s2287 + $0x16f] sm:$0xff]
      %v2312 = vld [vmem:[%s2287 + $0x187] sm:$0xff]
      %v2313 = vld [vmem:[%s2287 + $0x18f] sm:$0xff]
      %v2314 = vld [vmem:[%s2287 + $0x1a7] sm:$0xff]
      %v2315 = vld [vmem:[%s2287 + $0x1af] sm:$0xff]
      %v2316 = vld [vmem:[%s2287 + $0x1c7] sm:$0xff]
      %v2317 = vld [vmem:[%s2287 + $0x1cf] sm:$0xff]
      %v2318 = vld [vmem:[%s2287 + $0x1e7] sm:$0xff]
      %v2319 = vld [vmem:[%s2287 + $0x1ef] sm:$0xff]
      %v2320 = vpack.c.bf16 %v2289, %v2288
      %v2321 = vpack.c.bf16 %v2291, %v2290
      %v2322 = vpack.c.bf16 %v2293, %v2292
      %v2323 = vpack.c.bf16 %v2295, %v2294
      %v2324 = vpack.c.bf16 %v2297, %v2296
      %v2325 = vpack.c.bf16 %v2299, %v2298
      %v2326 = vpack.c.bf16 %v2301, %v2300
      %v2327 = vpack.c.bf16 %v2303, %v2302
      %v2328 = vpack.c.bf16 %v2305, %v2304
      %v2329 = vpack.c.bf16 %v2307, %v2306
      %v2330 = vpack.c.bf16 %v2309, %v2308
      %v2331 = vpack.c.bf16 %v2311, %v2310
      %v2332 = vpack.c.bf16 %v2313, %v2312
      %v2333 = vpack.c.bf16 %v2315, %v2314
      %v2334 = vpack.c.bf16 %v2317, %v2316
      %v2335 = vpack.c.bf16 %v2319, %v2318
      %s2336 = scalar_lea.vmem %s3, 384
      %v2337 = vld [vmem:[%s2336] sm:$0xf]
      %v2338 = vld [vmem:[%s2336 + $0x4] sm:$0xf]
      %v2339 = vld [vmem:[%s2336 + $0x8] sm:$0xf]
      %v2340 = vld [vmem:[%s2336 + $0xc] sm:$0xf]
      %v2341 = vld [vmem:[%s2336 + $0x10] sm:$0xf]
      %v2342 = vld [vmem:[%s2336 + $0x14] sm:$0xf]
      %v2343 = vld [vmem:[%s2336 + $0x18] sm:$0xf]
      %v2344 = vld [vmem:[%s2336 + $0x1c] sm:$0xf]
      %v2345 = vld [vmem:[%s2336 + $0x20] sm:$0xf]
      %v2346 = vld [vmem:[%s2336 + $0x24] sm:$0xf]
      %v2347 = vld [vmem:[%s2336 + $0x28] sm:$0xf]
      %v2348 = vld [vmem:[%s2336 + $0x2c] sm:$0xf]
      %v2349 = vld [vmem:[%s2336 + $0x30] sm:$0xf]
      %v2350 = vld [vmem:[%s2336 + $0x34] sm:$0xf]
      %v2351 = vld [vmem:[%s2336 + $0x38] sm:$0xf]
      %v2352 = vld [vmem:[%s2336 + $0x3c] sm:$0xf]
      %v2369 = vunpack.c.l.b16 %v2337
      %v2370 = vunpack.c.l.b16 %v2338
      %v2371 = vunpack.c.l.b16 %v2339
      %v2372 = vunpack.c.l.b16 %v2340
      %v2373 = vunpack.c.l.b16 %v2341
      %v2374 = vunpack.c.l.b16 %v2342
      %v2375 = vunpack.c.l.b16 %v2343
      %v2376 = vunpack.c.l.b16 %v2344
      %v2377 = vunpack.c.l.b16 %v2345
      %v2378 = vunpack.c.l.b16 %v2346
      %v2379 = vunpack.c.l.b16 %v2347
      %v2380 = vunpack.c.l.b16 %v2348
      %v2381 = vunpack.c.l.b16 %v2349
      %v2382 = vunpack.c.l.b16 %v2350
      %v2383 = vunpack.c.l.b16 %v2351
      %v2384 = vunpack.c.l.b16 %v2352
      %v2385 = vpack.c.b16 %v2370, %v2369
      %v2386 = vpack.c.b16 %v2372, %v2371
      %v2387 = vpack.c.b16 %v2374, %v2373
      %v2388 = vpack.c.b16 %v2376, %v2375
      %v2389 = vpack.c.b16 %v2378, %v2377
      %v2390 = vpack.c.b16 %v2380, %v2379
      %v2391 = vpack.c.b16 %v2382, %v2381
      %v2392 = vpack.c.b16 %v2384, %v2383
      %2401 = vmatprep.subr.bf16.mxu0 0
      %2402 = vmatpush1.bf16.msra.mxu0 %v2385
      %2403 = vmatprep.subr.bf16.mxu0 0
      %2404 = vmatpush1.bf16.msra.mxu0 %v2386
      %2405 = vmatprep.subr.bf16.mxu0 0
      %2406 = vmatpush1.bf16.msra.mxu0 %v2387
      %2407 = vmatprep.subr.bf16.mxu0 0
      %2408 = vmatpush1.bf16.msra.mxu0 %v2388
      %2409 = vmatprep.subr.bf16.mxu0 0
      %2410 = vmatpush1.bf16.msra.mxu0 %v2389
      %2411 = vmatprep.subr.bf16.mxu0 0
      %2412 = vmatpush1.bf16.msra.mxu0 %v2390
      %2413 = vmatprep.subr.bf16.mxu0 0
      %2414 = vmatpush1.bf16.msra.mxu0 %v2391
      %2415 = vmatprep.subr.bf16.mxu0 0
      %2416 = vmatpush1.bf16.msra.mxu0 %v2392
      %2417 = vmatprep.subr.bf16.mxu0 0
      %2418 = vmatpush1.bf16.msra.mxu0 0
      %2419 = vmatprep.subr.bf16.mxu0 0
      %2420 = vmatpush1.bf16.msra.mxu0 0
      %2421 = vmatprep.subr.bf16.mxu0 0
      %2422 = vmatpush1.bf16.msra.mxu0 0
      %2423 = vmatprep.subr.bf16.mxu0 0
      %2424 = vmatpush1.bf16.msra.mxu0 0
      %2425 = vmatprep.subr.bf16.mxu0 0
      %2426 = vmatpush1.bf16.msra.mxu0 0
      %2427 = vmatprep.subr.bf16.mxu0 0
      %2428 = vmatpush1.bf16.msra.mxu0 0
      %2429 = vmatprep.subr.bf16.mxu0 0
      %2430 = vmatpush1.bf16.msra.mxu0 0
      %2431 = vmatprep.subr.bf16.mxu0 0
      %2432 = vmatpush1.bf16.msra.mxu0 0
      %2433 = vmatprep.mubr.bf16.mxu0 0
      %2434 = vmatmul.mubr.bf16.gmra.mrb[0].mxu0 %v2320
      %v2435 = vpop.f32.mrb[0].mxu0
      %v2436 = vadd.f32 0.0, %v2435
      %v2437 = vpop.f32.mrb[0].mxu0
      %v2438 = vpop.f32.mrb[0].mxu0
      %v2439 = vadd.f32 0.0, %v2438
      %v2440 = vpop.f32.mrb[0].mxu0
      %2441 = vmatprep.mubr.bf16.mxu0 0
      %2442 = vmatmul.mubr.bf16.gmra.mrb[0].mxu0 %v2321
      %v2443 = vpop.f32.mrb[0].mxu0
      %v2444 = vadd.f32 0.0, %v2443
      %v2445 = vpop.f32.mrb[0].mxu0
      %v2446 = vpop.f32.mrb[0].mxu0
      %v2447 = vadd.f32 0.0, %v2446
      %v2448 = vpop.f32.mrb[0].mxu0
      %2449 = vmatprep.mubr.bf16.mxu0 0
      %2450 = vmatmul.mubr.bf16.gmra.mrb[0].mxu0 %v2322
      %v2451 = vpop.f32.mrb[0].mxu0
      %v2452 = vadd.f32 0.0, %v2451
      %v2453 = vpop.f32.mrb[0].mxu0
      %v2454 = vpop.f32.mrb[0].mxu0
      %v2455 = vadd.f32 0.0, %v2454
      %v2456 = vpop.f32.mrb[0].mxu0
      %2457 = vmatprep.mubr.bf16.mxu0 0
      %2458 = vmatmul.mubr.bf16.gmra.mrb[0].mxu0 %v2323
      %v2459 = vpop.f32.mrb[0].mxu0
      %v2460 = vadd.f32 0.0, %v2459
      %v2461 = vpop.f32.mrb[0].mxu0
      %v2462 = vpop.f32.mrb[0].mxu0
      %v2463 = vadd.f32 0.0, %v2462
      %v2464 = vpop.f32.mrb[0].mxu0
      %2465 = vmatprep.mubr.bf16.mxu0 0
      %2466 = vmatmul.mubr.bf16.gmra.mrb[0].mxu0 %v2324
      %v2467 = vpop.f32.mrb[0].mxu0
      %v2468 = vadd.f32 0.0, %v2467
      %v2469 = vpop.f32.mrb[0].mxu0
      %v2470 = vpop.f32.mrb[0].mxu0
      %v2471 = vadd.f32 0.0, %v2470
      %v2472 = vpop.f32.mrb[0].mxu0
      %2473 = vmatprep.mubr.bf16.mxu0 0
      %2474 = vmatmul.mubr.bf16.gmra.mrb[0].mxu0 %v2325
      %v2475 = vpop.f32.mrb[0].mxu0
      %v2476 = vadd.f32 0.0, %v2475
      %v2477 = vpop.f32.mrb[0].mxu0
      %v2478 = vpop.f32.mrb[0].mxu0
      %v2479 = vadd.f32 0.0, %v2478
      %v2480 = vpop.f32.mrb[0].mxu0
      %2481 = vmatprep.mubr.bf16.mxu0 0
      %2482 = vmatmul.mubr.bf16.gmra.mrb[0].mxu0 %v2326
      %v2483 = vpop.f32.mrb[0].mxu0
      %v2484 = vadd.f32 0.0, %v2483
      %v2485 = vpop.f32.mrb[0].mxu0
      %v2486 = vpop.f32.mrb[0].mxu0
      %v2487 = vadd.f32 0.0, %v2486
      %v2488 = vpop.f32.mrb[0].mxu0
      %2489 = vmatprep.mubr.bf16.mxu0 0
      %2490 = vmatmul.mubr.bf16.gmra.mrb[0].mxu0 %v2327
      %v2491 = vpop.f32.mrb[0].mxu0
      %v2492 = vadd.f32 0.0, %v2491
      %v2493 = vpop.f32.mrb[0].mxu0
      %v2494 = vpop.f32.mrb[0].mxu0
      %v2495 = vadd.f32 0.0, %v2494
      %v2496 = vpop.f32.mrb[0].mxu0
      %2497 = vmatprep.mubr.bf16.mxu0 0
      %2498 = vmatmul.mubr.bf16.gmra.mrb[0].mxu0 %v2328
      %v2499 = vpop.f32.mrb[0].mxu0
      %v2500 = vadd.f32 0.0, %v2499
      %v2501 = vpop.f32.mrb[0].mxu0
      %v2502 = vpop.f32.mrb[0].mxu0
      %v2503 = vadd.f32 0.0, %v2502
      %v2504 = vpop.f32.mrb[0].mxu0
      %2505 = vmatprep.mubr.bf16.mxu0 0
      %2506 = vmatmul.mubr.bf16.gmra.mrb[0].mxu0 %v2329
      %v2507 = vpop.f32.mrb[0].mxu0
      %v2508 = vadd.f32 0.0, %v2507
      %v2509 = vpop.f32.mrb[0].mxu0
      %v2510 = vpop.f32.mrb[0].mxu0
      %v2511 = vadd.f32 0.0, %v2510
      %v2512 = vpop.f32.mrb[0].mxu0
      %2513 = vmatprep.mubr.bf16.mxu0 0
      %2514 = vmatmul.mubr.bf16.gmra.mrb[0].mxu0 %v2330
      %v2515 = vpop.f32.mrb[0].mxu0
      %v2516 = vadd.f32 0.0, %v2515
      %v2517 = vpop.f32.mrb[0].mxu0
      %v2518 = vpop.f32.mrb[0].mxu0
      %v2519 = vadd.f32 0.0, %v2518
      %v2520 = vpop.f32.mrb[0].mxu0
      %2521 = vmatprep.mubr.bf16.mxu0 0
      %2522 = vmatmul.mubr.bf16.gmra.mrb[0].mxu0 %v2331
      %v2523 = vpop.f32.mrb[0].mxu0
      %v2524 = vadd.f32 0.0, %v2523
      %v2525 = vpop.f32.mrb[0].mxu0
      %v2526 = vpop.f32.mrb[0].mxu0
      %v2527 = vadd.f32 0.0, %v2526
      %v2528 = vpop.f32.mrb[0].mxu0
      %2529 = vmatprep.mubr.bf16.mxu0 0
      %2530 = vmatmul.mubr.bf16.gmra.mrb[0].mxu0 %v2332
      %v2531 = vpop.f32.mrb[0].mxu0
      %v2532 = vadd.f32 0.0, %v2531
      %v2533 = vpop.f32.mrb[0].mxu0
      %v2534 = vpop.f32.mrb[0].mxu0
      %v2535 = vadd.f32 0.0, %v2534
      %v2536 = vpop.f32.mrb[0].mxu0
      %2537 = vmatprep.mubr.bf16.mxu0 0
      %2538 = vmatmul.mubr.bf16.gmra.mrb[0].mxu0 %v2333
      %v2539 = vpop.f32.mrb[0].mxu0
      %v2540 = vadd.f32 0.0, %v2539
      %v2541 = vpop.f32.mrb[0].mxu0
      %v2542 = vpop.f32.mrb[0].mxu0
      %v2543 = vadd.f32 0.0, %v2542
      %v2544 = vpop.f32.mrb[0].mxu0
      %2545 = vmatprep.mubr.bf16.mxu0 0
      %2546 = vmatmul.mubr.bf16.gmra.mrb[0].mxu0 %v2334
      %v2547 = vpop.f32.mrb[0].mxu0
      %v2548 = vadd.f32 0.0, %v2547
      %v2549 = vpop.f32.mrb[0].mxu0
      %v2550 = vpop.f32.mrb[0].mxu0
      %v2551 = vadd.f32 0.0, %v2550
      %v2552 = vpop.f32.mrb[0].mxu0
      %2553 = vmatprep.mubr.bf16.mxu0 0
      %2554 = vmatmul.mubr.bf16.gmra.mrb[0].mxu0 %v2335
      %v2555 = vpop.f32.mrb[0].mxu0
      %v2556 = vadd.f32 0.0, %v2555
      %v2557 = vpop.f32.mrb[0].mxu0
      %v2558 = vpop.f32.mrb[0].mxu0
      %v2559 = vadd.f32 0.0, %v2558
      %v2560 = vpop.f32.mrb[0].mxu0
      %2561 = vdwg.mxu0
      %v2562 = vadd.f32 %v2255, %v2436
      %v2563 = vadd.f32 %v2256, %v2439
      %v2564 = vadd.f32 %v2257, %v2444
      %v2565 = vadd.f32 %v2258, %v2447
      %v2566 = vadd.f32 %v2259, %v2452
      %v2567 = vadd.f32 %v2260, %v2455
      %v2568 = vadd.f32 %v2261, %v2460
      %v2569 = vadd.f32 %v2262, %v2463
      %v2570 = vadd.f32 %v2263, %v2468
      %v2571 = vadd.f32 %v2264, %v2471
      %v2572 = vadd.f32 %v2265, %v2476
      %v2573 = vadd.f32 %v2266, %v2479
      %v2574 = vadd.f32 %v2267, %v2484
      %v2575 = vadd.f32 %v2268, %v2487
      %v2576 = vadd.f32 %v2269, %v2492
      %v2577 = vadd.f32 %v2270, %v2495
      %v2578 = vadd.f32 %v2271, %v2500
      %v2579 = vadd.f32 %v2272, %v2503
      %v2580 = vadd.f32 %v2273, %v2508
      %v2581 = vadd.f32 %v2274, %v2511
      %v2582 = vadd.f32 %v2275, %v2516
      %v2583 = vadd.f32 %v2276, %v2519
      %v2584 = vadd.f32 %v2277, %v2524
      %v2585 = vadd.f32 %v2278, %v2527
      %v2586 = vadd.f32 %v2279, %v2532
      %v2587 = vadd.f32 %v2280, %v2535
      %v2588 = vadd.f32 %v2281, %v2540
      %v2589 = vadd.f32 %v2282, %v2543
      %v2590 = vadd.f32 %v2283, %v2548
      %v2591 = vadd.f32 %v2284, %v2551
      %v2592 = vadd.f32 %v2285, %v2556
      %v2593 = vadd.f32 %v2286, %v2559
      %v2594 = vld [vmem:[%s2287 + $0x8] sm:$0xff]
      %v2595 = vld [vmem:[%s2287 + $0x10] sm:$0xff]
      %v2596 = vld [vmem:[%s2287 + $0x28] sm:$0xff]
      %v2597 = vld [vmem:[%s2287 + $0x30] sm:$0xff]
      %v2598 = vld [vmem:[%s2287 + $0x48] sm:$0xff]
      %v2599 = vld [vmem:[%s2287 + $0x50] sm:$0xff]
      %v2600 = vld [vmem:[%s2287 + $0x68] sm:$0xff]
      %v2601 = vld [vmem:[%s2287 + $0x70] sm:$0xff]
      %v2602 = vld [vmem:[%s2287 + $0x88] sm:$0xff]
      %v2603 = vld [vmem:[%s2287 + $0x90] sm:$0xff]
      %v2604 = vld [vmem:[%s2287 + $0xa8] sm:$0xff]
      %v2605 = vld [vmem:[%s2287 + $0xb0] sm:$0xff]
      %v2606 = vld [vmem:[%s2287 + $0xc8] sm:$0xff]
      %v2607 = vld [vmem:[%s2287 + $0xd0] sm:$0xff]
      %v2608 = vld [vmem:[%s2287 + $0xe8] sm:$0xff]
      %v2609 = vld [vmem:[%s2287 + $0xf0] sm:$0xff]
      %v2610 = vld [vmem:[%s2287 + $0x108] sm:$0xff]
      %v2611 = vld [vmem:[%s2287 + $0x110] sm:$0xff]
      %v2612 = vld [vmem:[%s2287 + $0x128] sm:$0xff]
      %v2613 = vld [vmem:[%s2287 + $0x130] sm:$0xff]
      %v2614 = vld [vmem:[%s2287 + $0x148] sm:$0xff]
      %v2615 = vld [vmem:[%s2287 + $0x150] sm:$0xff]
      %v2616 = vld [vmem:[%s2287 + $0x168] sm:$0xff]
      %v2617 = vld [vmem:[%s2287 + $0x170] sm:$0xff]
      %v2618 = vld [vmem:[%s2287 + $0x188] sm:$0xff]
      %v2619 = vld [vmem:[%s2287 + $0x190] sm:$0xff]
      %v2620 = vld [vmem:[%s2287 + $0x1a8] sm:$0xff]
      %v2621 = vld [vmem:[%s2287 + $0x1b0] sm:$0xff]
      %v2622 = vld [vmem:[%s2287 + $0x1c8] sm:$0xff]
      %v2623 = vld [vmem:[%s2287 + $0x1d0] sm:$0xff]
      %v2624 = vld [vmem:[%s2287 + $0x1e8] sm:$0xff]
      %v2625 = vld [vmem:[%s2287 + $0x1f0] sm:$0xff]
      %v2626 = vpack.c.bf16 %v2595, %v2594
      %v2627 = vpack.c.bf16 %v2597, %v2596
      %v2628 = vpack.c.bf16 %v2599, %v2598
      %v2629 = vpack.c.bf16 %v2601, %v2600
      %v2630 = vpack.c.bf16 %v2603, %v2602
      %v2631 = vpack.c.bf16 %v2605, %v2604
      %v2632 = vpack.c.bf16 %v2607, %v2606
      %v2633 = vpack.c.bf16 %v2609, %v2608
      %v2634 = vpack.c.bf16 %v2611, %v2610
      %v2635 = vpack.c.bf16 %v2613, %v2612
      %v2636 = vpack.c.bf16 %v2615, %v2614
      %v2637 = vpack.c.bf16 %v2617, %v2616
      %v2638 = vpack.c.bf16 %v2619, %v2618
      %v2639 = vpack.c.bf16 %v2621, %v2620
      %v2640 = vpack.c.bf16 %v2623, %v2622
      %v2641 = vpack.c.bf16 %v2625, %v2624
      %s2642 = scalar_lea.vmem %s3, 448
      %v2643 = vld [vmem:[%s2642] sm:$0xf]
      %v2644 = vld [vmem:[%s2642 + $0x4] sm:$0xf]
      %v2645 = vld [vmem:[%s2642 + $0x8] sm:$0xf]
      %v2646 = vld [vmem:[%s2642 + $0xc] sm:$0xf]
      %v2647 = vld [vmem:[%s2642 + $0x10] sm:$0xf]
      %v2648 = vld [vmem:[%s2642 + $0x14] sm:$0xf]
      %v2649 = vld [vmem:[%s2642 + $0x18] sm:$0xf]
      %v2650 = vld [vmem:[%s2642 + $0x1c] sm:$0xf]
      %v2651 = vld [vmem:[%s2642 + $0x20] sm:$0xf]
      %v2652 = vld [vmem:[%s2642 + $0x24] sm:$0xf]
      %v2653 = vld [vmem:[%s2642 + $0x28] sm:$0xf]
      %v2654 = vld [vmem:[%s2642 + $0x2c] sm:$0xf]
      %v2655 = vld [vmem:[%s2642 + $0x30] sm:$0xf]
      %v2656 = vld [vmem:[%s2642 + $0x34] sm:$0xf]
      %v2657 = vld [vmem:[%s2642 + $0x38] sm:$0xf]
      %v2658 = vld [vmem:[%s2642 + $0x3c] sm:$0xf]
      %v2675 = vunpack.c.l.b16 %v2643
      %v2676 = vunpack.c.l.b16 %v2644
      %v2677 = vunpack.c.l.b16 %v2645
      %v2678 = vunpack.c.l.b16 %v2646
      %v2679 = vunpack.c.l.b16 %v2647
      %v2680 = vunpack.c.l.b16 %v2648
      %v2681 = vunpack.c.l.b16 %v2649
      %v2682 = vunpack.c.l.b16 %v2650
      %v2683 = vunpack.c.l.b16 %v2651
      %v2684 = vunpack.c.l.b16 %v2652
      %v2685 = vunpack.c.l.b16 %v2653
      %v2686 = vunpack.c.l.b16 %v2654
      %v2687 = vunpack.c.l.b16 %v2655
      %v2688 = vunpack.c.l.b16 %v2656
      %v2689 = vunpack.c.l.b16 %v2657
      %v2690 = vunpack.c.l.b16 %v2658
      %v2691 = vpack.c.b16 %v2676, %v2675
      %v2692 = vpack.c.b16 %v2678, %v2677
      %v2693 = vpack.c.b16 %v2680, %v2679
      %v2694 = vpack.c.b16 %v2682, %v2681
      %v2695 = vpack.c.b16 %v2684, %v2683
      %v2696 = vpack.c.b16 %v2686, %v2685
      %v2697 = vpack.c.b16 %v2688, %v2687
      %v2698 = vpack.c.b16 %v2690, %v2689
      %2707 = vmatprep.subr.bf16.mxu0 0
      %2708 = vmatpush1.bf16.msra.mxu0 %v2691
      %2709 = vmatprep.subr.bf16.mxu0 0
      %2710 = vmatpush1.bf16.msra.mxu0 %v2692
      %2711 = vmatprep.subr.bf16.mxu0 0
      %2712 = vmatpush1.bf16.msra.mxu0 %v2693
      %2713 = vmatprep.subr.bf16.mxu0 0
      %2714 = vmatpush1.bf16.msra.mxu0 %v2694
      %2715 = vmatprep.subr.bf16.mxu0 0
      %2716 = vmatpush1.bf16.msra.mxu0 %v2695
      %2717 = vmatprep.subr.bf16.mxu0 0
      %2718 = vmatpush1.bf16.msra.mxu0 %v2696
      %2719 = vmatprep.subr.bf16.mxu0 0
      %2720 = vmatpush1.bf16.msra.mxu0 %v2697
      %2721 = vmatprep.subr.bf16.mxu0 0
      %2722 = vmatpush1.bf16.msra.mxu0 %v2698
      %2723 = vmatprep.subr.bf16.mxu0 0
      %2724 = vmatpush1.bf16.msra.mxu0 0
      %2725 = vmatprep.subr.bf16.mxu0 0
      %2726 = vmatpush1.bf16.msra.mxu0 0
      %2727 = vmatprep.subr.bf16.mxu0 0
      %2728 = vmatpush1.bf16.msra.mxu0 0
      %2729 = vmatprep.subr.bf16.mxu0 0
      %2730 = vmatpush1.bf16.msra.mxu0 0
      %2731 = vmatprep.subr.bf16.mxu0 0
      %2732 = vmatpush1.bf16.msra.mxu0 0
      %2733 = vmatprep.subr.bf16.mxu0 0
      %2734 = vmatpush1.bf16.msra.mxu0 0
      %2735 = vmatprep.subr.bf16.mxu0 0
      %2736 = vmatpush1.bf16.msra.mxu0 0
      %2737 = vmatprep.subr.bf16.mxu0 0
      %2738 = vmatpush1.bf16.msra.mxu0 0
      %2739 = vmatprep.mubr.bf16.mxu0 0
      %2740 = vmatmul.mubr.bf16.gmra.mrb[0].mxu0 %v2626
      %v2741 = vpop.f32.mrb[0].mxu0
      %v2742 = vadd.f32 0.0, %v2741
      %v2743 = vpop.f32.mrb[0].mxu0
      %v2744 = vpop.f32.mrb[0].mxu0
      %v2745 = vadd.f32 0.0, %v2744
      %v2746 = vpop.f32.mrb[0].mxu0
      %2747 = vmatprep.mubr.bf16.mxu0 0
      %2748 = vmatmul.mubr.bf16.gmra.mrb[0].mxu0 %v2627
      %v2749 = vpop.f32.mrb[0].mxu0
      %v2750 = vadd.f32 0.0, %v2749
      %v2751 = vpop.f32.mrb[0].mxu0
      %v2752 = vpop.f32.mrb[0].mxu0
      %v2753 = vadd.f32 0.0, %v2752
      %v2754 = vpop.f32.mrb[0].mxu0
      %2755 = vmatprep.mubr.bf16.mxu0 0
      %2756 = vmatmul.mubr.bf16.gmra.mrb[0].mxu0 %v2628
      %v2757 = vpop.f32.mrb[0].mxu0
      %v2758 = vadd.f32 0.0, %v2757
      %v2759 = vpop.f32.mrb[0].mxu0
      %v2760 = vpop.f32.mrb[0].mxu0
      %v2761 = vadd.f32 0.0, %v2760
      %v2762 = vpop.f32.mrb[0].mxu0
      %2763 = vmatprep.mubr.bf16.mxu0 0
      %2764 = vmatmul.mubr.bf16.gmra.mrb[0].mxu0 %v2629
      %v2765 = vpop.f32.mrb[0].mxu0
      %v2766 = vadd.f32 0.0, %v2765
      %v2767 = vpop.f32.mrb[0].mxu0
      %v2768 = vpop.f32.mrb[0].mxu0
      %v2769 = vadd.f32 0.0, %v2768
      %v2770 = vpop.f32.mrb[0].mxu0
      %2771 = vmatprep.mubr.bf16.mxu0 0
      %2772 = vmatmul.mubr.bf16.gmra.mrb[0].mxu0 %v2630
      %v2773 = vpop.f32.mrb[0].mxu0
      %v2774 = vadd.f32 0.0, %v2773
      %v2775 = vpop.f32.mrb[0].mxu0
      %v2776 = vpop.f32.mrb[0].mxu0
      %v2777 = vadd.f32 0.0, %v2776
      %v2778 = vpop.f32.mrb[0].mxu0
      %2779 = vmatprep.mubr.bf16.mxu0 0
      %2780 = vmatmul.mubr.bf16.gmra.mrb[0].mxu0 %v2631
      %v2781 = vpop.f32.mrb[0].mxu0
      %v2782 = vadd.f32 0.0, %v2781
      %v2783 = vpop.f32.mrb[0].mxu0
      %v2784 = vpop.f32.mrb[0].mxu0
      %v2785 = vadd.f32 0.0, %v2784
      %v2786 = vpop.f32.mrb[0].mxu0
      %2787 = vmatprep.mubr.bf16.mxu0 0
      %2788 = vmatmul.mubr.bf16.gmra.mrb[0].mxu0 %v2632
      %v2789 = vpop.f32.mrb[0].mxu0
      %v2790 = vadd.f32 0.0, %v2789
      %v2791 = vpop.f32.mrb[0].mxu0
      %v2792 = vpop.f32.mrb[0].mxu0
      %v2793 = vadd.f32 0.0, %v2792
      %v2794 = vpop.f32.mrb[0].mxu0
      %2795 = vmatprep.mubr.bf16.mxu0 0
      %2796 = vmatmul.mubr.bf16.gmra.mrb[0].mxu0 %v2633
      %v2797 = vpop.f32.mrb[0].mxu0
      %v2798 = vadd.f32 0.0, %v2797
      %v2799 = vpop.f32.mrb[0].mxu0
      %v2800 = vpop.f32.mrb[0].mxu0
      %v2801 = vadd.f32 0.0, %v2800
      %v2802 = vpop.f32.mrb[0].mxu0
      %2803 = vmatprep.mubr.bf16.mxu0 0
      %2804 = vmatmul.mubr.bf16.gmra.mrb[0].mxu0 %v2634
      %v2805 = vpop.f32.mrb[0].mxu0
      %v2806 = vadd.f32 0.0, %v2805
      %v2807 = vpop.f32.mrb[0].mxu0
      %v2808 = vpop.f32.mrb[0].mxu0
      %v2809 = vadd.f32 0.0, %v2808
      %v2810 = vpop.f32.mrb[0].mxu0
      %2811 = vmatprep.mubr.bf16.mxu0 0
      %2812 = vmatmul.mubr.bf16.gmra.mrb[0].mxu0 %v2635
      %v2813 = vpop.f32.mrb[0].mxu0
      %v2814 = vadd.f32 0.0, %v2813
      %v2815 = vpop.f32.mrb[0].mxu0
      %v2816 = vpop.f32.mrb[0].mxu0
      %v2817 = vadd.f32 0.0, %v2816
      %v2818 = vpop.f32.mrb[0].mxu0
      %2819 = vmatprep.mubr.bf16.mxu0 0
      %2820 = vmatmul.mubr.bf16.gmra.mrb[0].mxu0 %v2636
      %v2821 = vpop.f32.mrb[0].mxu0
      %v2822 = vadd.f32 0.0, %v2821
      %v2823 = vpop.f32.mrb[0].mxu0
      %v2824 = vpop.f32.mrb[0].mxu0
      %v2825 = vadd.f32 0.0, %v2824
      %v2826 = vpop.f32.mrb[0].mxu0
      %2827 = vmatprep.mubr.bf16.mxu0 0
      %2828 = vmatmul.mubr.bf16.gmra.mrb[0].mxu0 %v2637
      %v2829 = vpop.f32.mrb[0].mxu0
      %v2830 = vadd.f32 0.0, %v2829
      %v2831 = vpop.f32.mrb[0].mxu0
      %v2832 = vpop.f32.mrb[0].mxu0
      %v2833 = vadd.f32 0.0, %v2832
      %v2834 = vpop.f32.mrb[0].mxu0
      %2835 = vmatprep.mubr.bf16.mxu0 0
      %2836 = vmatmul.mubr.bf16.gmra.mrb[0].mxu0 %v2638
      %v2837 = vpop.f32.mrb[0].mxu0
      %v2838 = vadd.f32 0.0, %v2837
      %v2839 = vpop.f32.mrb[0].mxu0
      %v2840 = vpop.f32.mrb[0].mxu0
      %v2841 = vadd.f32 0.0, %v2840
      %v2842 = vpop.f32.mrb[0].mxu0
      %2843 = vmatprep.mubr.bf16.mxu0 0
      %2844 = vmatmul.mubr.bf16.gmra.mrb[0].mxu0 %v2639
      %v2845 = vpop.f32.mrb[0].mxu0
      %v2846 = vadd.f32 0.0, %v2845
      %v2847 = vpop.f32.mrb[0].mxu0
      %v2848 = vpop.f32.mrb[0].mxu0
      %v2849 = vadd.f32 0.0, %v2848
      %v2850 = vpop.f32.mrb[0].mxu0
      %2851 = vmatprep.mubr.bf16.mxu0 0
      %2852 = vmatmul.mubr.bf16.gmra.mrb[0].mxu0 %v2640
      %v2853 = vpop.f32.mrb[0].mxu0
      %v2854 = vadd.f32 0.0, %v2853
      %v2855 = vpop.f32.mrb[0].mxu0
      %v2856 = vpop.f32.mrb[0].mxu0
      %v2857 = vadd.f32 0.0, %v2856
      %v2858 = vpop.f32.mrb[0].mxu0
      %2859 = vmatprep.mubr.bf16.mxu0 0
      %2860 = vmatmul.mubr.bf16.gmra.mrb[0].mxu0 %v2641
      %v2861 = vpop.f32.mrb[0].mxu0
      %v2862 = vadd.f32 0.0, %v2861
      %v2863 = vpop.f32.mrb[0].mxu0
      %v2864 = vpop.f32.mrb[0].mxu0
      %v2865 = vadd.f32 0.0, %v2864
      %v2866 = vpop.f32.mrb[0].mxu0
      %2867 = vdwg.mxu0
      %v2868 = vadd.f32 %v2562, %v2742
      %v2869 = vadd.f32 %v2563, %v2745
      %v2870 = vadd.f32 %v2564, %v2750
      %v2871 = vadd.f32 %v2565, %v2753
      %v2872 = vadd.f32 %v2566, %v2758
      %v2873 = vadd.f32 %v2567, %v2761
      %v2874 = vadd.f32 %v2568, %v2766
      %v2875 = vadd.f32 %v2569, %v2769
      %v2876 = vadd.f32 %v2570, %v2774
      %v2877 = vadd.f32 %v2571, %v2777
      %v2878 = vadd.f32 %v2572, %v2782
      %v2879 = vadd.f32 %v2573, %v2785
      %v2880 = vadd.f32 %v2574, %v2790
      %v2881 = vadd.f32 %v2575, %v2793
      %v2882 = vadd.f32 %v2576, %v2798
      %v2883 = vadd.f32 %v2577, %v2801
      %v2884 = vadd.f32 %v2578, %v2806
      %v2885 = vadd.f32 %v2579, %v2809
      %v2886 = vadd.f32 %v2580, %v2814
      %v2887 = vadd.f32 %v2581, %v2817
      %v2888 = vadd.f32 %v2582, %v2822
      %v2889 = vadd.f32 %v2583, %v2825
      %v2890 = vadd.f32 %v2584, %v2830
      %v2891 = vadd.f32 %v2585, %v2833
      %v2892 = vadd.f32 %v2586, %v2838
      %v2893 = vadd.f32 %v2587, %v2841
      %v2894 = vadd.f32 %v2588, %v2846
      %v2895 = vadd.f32 %v2589, %v2849
      %v2896 = vadd.f32 %v2590, %v2854
      %v2897 = vadd.f32 %v2591, %v2857
      %v2898 = vadd.f32 %v2592, %v2862
      %v2899 = vadd.f32 %v2593, %v2865
      %v2900 = vld [vmem:[%s2287 + $0x9] sm:$0xff]
      %v2901 = vld [vmem:[%s2287 + $0x11] sm:$0xff]
      %v2902 = vld [vmem:[%s2287 + $0x29] sm:$0xff]
      %v2903 = vld [vmem:[%s2287 + $0x31] sm:$0xff]
      %v2904 = vld [vmem:[%s2287 + $0x49] sm:$0xff]
      %v2905 = vld [vmem:[%s2287 + $0x51] sm:$0xff]
      %v2906 = vld [vmem:[%s2287 + $0x69] sm:$0xff]
      %v2907 = vld [vmem:[%s2287 + $0x71] sm:$0xff]
      %v2908 = vld [vmem:[%s2287 + $0x89] sm:$0xff]
      %v2909 = vld [vmem:[%s2287 + $0x91] sm:$0xff]
      %v2910 = vld [vmem:[%s2287 + $0xa9] sm:$0xff]
      %v2911 = vld [vmem:[%s2287 + $0xb1] sm:$0xff]
      %v2912 = vld [vmem:[%s2287 + $0xc9] sm:$0xff]
      %v2913 = vld [vmem:[%s2287 + $0xd1] sm:$0xff]
      %v2914 = vld [vmem:[%s2287 + $0xe9] sm:$0xff]
      %v2915 = vld [vmem:[%s2287 + $0xf1] sm:$0xff]
      %v2916 = vld [vmem:[%s2287 + $0x109] sm:$0xff]
      %v2917 = vld [vmem:[%s2287 + $0x111] sm:$0xff]
      %v2918 = vld [vmem:[%s2287 + $0x129] sm:$0xff]
      %v2919 = vld [vmem:[%s2287 + $0x131] sm:$0xff]
      %v2920 = vld [vmem:[%s2287 + $0x149] sm:$0xff]
      %v2921 = vld [vmem:[%s2287 + $0x151] sm:$0xff]
      %v2922 = vld [vmem:[%s2287 + $0x169] sm:$0xff]
      %v2923 = vld [vmem:[%s2287 + $0x171] sm:$0xff]
      %v2924 = vld [vmem:[%s2287 + $0x189] sm:$0xff]
      %v2925 = vld [vmem:[%s2287 + $0x191] sm:$0xff]
      %v2926 = vld [vmem:[%s2287 + $0x1a9] sm:$0xff]
      %v2927 = vld [vmem:[%s2287 + $0x1b1] sm:$0xff]
      %v2928 = vld [vmem:[%s2287 + $0x1c9] sm:$0xff]
      %v2929 = vld [vmem:[%s2287 + $0x1d1] sm:$0xff]
      %v2930 = vld [vmem:[%s2287 + $0x1e9] sm:$0xff]
      %v2931 = vld [vmem:[%s2287 + $0x1f1] sm:$0xff]
      %v2932 = vpack.c.bf16 %v2901, %v2900
      %v2933 = vpack.c.bf16 %v2903, %v2902
      %v2934 = vpack.c.bf16 %v2905, %v2904
      %v2935 = vpack.c.bf16 %v2907, %v2906
      %v2936 = vpack.c.bf16 %v2909, %v2908
      %v2937 = vpack.c.bf16 %v2911, %v2910
      %v2938 = vpack.c.bf16 %v2913, %v2912
      %v2939 = vpack.c.bf16 %v2915, %v2914
      %v2940 = vpack.c.bf16 %v2917, %v2916
      %v2941 = vpack.c.bf16 %v2919, %v2918
      %v2942 = vpack.c.bf16 %v2921, %v2920
      %v2943 = vpack.c.bf16 %v2923, %v2922
      %v2944 = vpack.c.bf16 %v2925, %v2924
      %v2945 = vpack.c.bf16 %v2927, %v2926
      %v2946 = vpack.c.bf16 %v2929, %v2928
      %v2947 = vpack.c.bf16 %v2931, %v2930
      %s2948 = scalar_lea.vmem %s3, 512
      %v2949 = vld [vmem:[%s2948] sm:$0xf]
      %v2950 = vld [vmem:[%s2948 + $0x4] sm:$0xf]
      %v2951 = vld [vmem:[%s2948 + $0x8] sm:$0xf]
      %v2952 = vld [vmem:[%s2948 + $0xc] sm:$0xf]
      %v2953 = vld [vmem:[%s2948 + $0x10] sm:$0xf]
      %v2954 = vld [vmem:[%s2948 + $0x14] sm:$0xf]
      %v2955 = vld [vmem:[%s2948 + $0x18] sm:$0xf]
      %v2956 = vld [vmem:[%s2948 + $0x1c] sm:$0xf]
      %v2957 = vld [vmem:[%s2948 + $0x20] sm:$0xf]
      %v2958 = vld [vmem:[%s2948 + $0x24] sm:$0xf]
      %v2959 = vld [vmem:[%s2948 + $0x28] sm:$0xf]
      %v2960 = vld [vmem:[%s2948 + $0x2c] sm:$0xf]
      %v2961 = vld [vmem:[%s2948 + $0x30] sm:$0xf]
      %v2962 = vld [vmem:[%s2948 + $0x34] sm:$0xf]
      %v2963 = vld [vmem:[%s2948 + $0x38] sm:$0xf]
      %v2964 = vld [vmem:[%s2948 + $0x3c] sm:$0xf]
      %v2981 = vunpack.c.l.b16 %v2949
      %v2982 = vunpack.c.l.b16 %v2950
      %v2983 = vunpack.c.l.b16 %v2951
      %v2984 = vunpack.c.l.b16 %v2952
      %v2985 = vunpack.c.l.b16 %v2953
      %v2986 = vunpack.c.l.b16 %v2954
      %v2987 = vunpack.c.l.b16 %v2955
      %v2988 = vunpack.c.l.b16 %v2956
      %v2989 = vunpack.c.l.b16 %v2957
      %v2990 = vunpack.c.l.b16 %v2958
      %v2991 = vunpack.c.l.b16 %v2959
      %v2992 = vunpack.c.l.b16 %v2960
      %v2993 = vunpack.c.l.b16 %v2961
      %v2994 = vunpack.c.l.b16 %v2962
      %v2995 = vunpack.c.l.b16 %v2963
      %v2996 = vunpack.c.l.b16 %v2964
      %v2997 = vpack.c.b16 %v2982, %v2981
      %v2998 = vpack.c.b16 %v2984, %v2983
      %v2999 = vpack.c.b16 %v2986, %v2985
      %v3000 = vpack.c.b16 %v2988, %v2987
      %v3001 = vpack.c.b16 %v2990, %v2989
      %v3002 = vpack.c.b16 %v2992, %v2991
      %v3003 = vpack.c.b16 %v2994, %v2993
      %v3004 = vpack.c.b16 %v2996, %v2995
      %3013 = vmatprep.subr.bf16.mxu0 0
      %3014 = vmatpush1.bf16.msra.mxu0 %v2997
      %3015 = vmatprep.subr.bf16.mxu0 0
      %3016 = vmatpush1.bf16.msra.mxu0 %v2998
      %3017 = vmatprep.subr.bf16.mxu0 0
      %3018 = vmatpush1.bf16.msra.mxu0 %v2999
      %3019 = vmatprep.subr.bf16.mxu0 0
      %3020 = vmatpush1.bf16.msra.mxu0 %v3000
      %3021 = vmatprep.subr.bf16.mxu0 0
      %3022 = vmatpush1.bf16.msra.mxu0 %v3001
      %3023 = vmatprep.subr.bf16.mxu0 0
      %3024 = vmatpush1.bf16.msra.mxu0 %v3002
      %3025 = vmatprep.subr.bf16.mxu0 0
      %3026 = vmatpush1.bf16.msra.mxu0 %v3003
      %3027 = vmatprep.subr.bf16.mxu0 0
      %3028 = vmatpush1.bf16.msra.mxu0 %v3004
      %3029 = vmatprep.subr.bf16.mxu0 0
      %3030 = vmatpush1.bf16.msra.mxu0 0
      %3031 = vmatprep.subr.bf16.mxu0 0
      %3032 = vmatpush1.bf16.msra.mxu0 0
      %3033 = vmatprep.subr.bf16.mxu0 0
      %3034 = vmatpush1.bf16.msra.mxu0 0
      %3035 = vmatprep.subr.bf16.mxu0 0
      %3036 = vmatpush1.bf16.msra.mxu0 0
      %3037 = vmatprep.subr.bf16.mxu0 0
      %3038 = vmatpush1.bf16.msra.mxu0 0
      %3039 = vmatprep.subr.bf16.mxu0 0
      %3040 = vmatpush1.bf16.msra.mxu0 0
      %3041 = vmatprep.subr.bf16.mxu0 0
      %3042 = vmatpush1.bf16.msra.mxu0 0
      %3043 = vmatprep.subr.bf16.mxu0 0
      %3044 = vmatpush1.bf16.msra.mxu0 0
      %3045 = vmatprep.mubr.bf16.mxu0 0
      %3046 = vmatmul.mubr.bf16.gmra.mrb[0].mxu0 %v2932
      %v3047 = vpop.f32.mrb[0].mxu0
      %v3048 = vadd.f32 0.0, %v3047
      %v3049 = vpop.f32.mrb[0].mxu0
      %v3050 = vpop.f32.mrb[0].mxu0
      %v3051 = vadd.f32 0.0, %v3050
      %v3052 = vpop.f32.mrb[0].mxu0
      %3053 = vmatprep.mubr.bf16.mxu0 0
      %3054 = vmatmul.mubr.bf16.gmra.mrb[0].mxu0 %v2933
      %v3055 = vpop.f32.mrb[0].mxu0
      %v3056 = vadd.f32 0.0, %v3055
      %v3057 = vpop.f32.mrb[0].mxu0
      %v3058 = vpop.f32.mrb[0].mxu0
      %v3059 = vadd.f32 0.0, %v3058
      %v3060 = vpop.f32.mrb[0].mxu0
      %3061 = vmatprep.mubr.bf16.mxu0 0
      %3062 = vmatmul.mubr.bf16.gmra.mrb[0].mxu0 %v2934
      %v3063 = vpop.f32.mrb[0].mxu0
      %v3064 = vadd.f32 0.0, %v3063
      %v3065 = vpop.f32.mrb[0].mxu0
      %v3066 = vpop.f32.mrb[0].mxu0
      %v3067 = vadd.f32 0.0, %v3066
      %v3068 = vpop.f32.mrb[0].mxu0
      %3069 = vmatprep.mubr.bf16.mxu0 0
      %3070 = vmatmul.mubr.bf16.gmra.mrb[0].mxu0 %v2935
      %v3071 = vpop.f32.mrb[0].mxu0
      %v3072 = vadd.f32 0.0, %v3071
      %v3073 = vpop.f32.mrb[0].mxu0
      %v3074 = vpop.f32.mrb[0].mxu0
      %v3075 = vadd.f32 0.0, %v3074
      %v3076 = vpop.f32.mrb[0].mxu0
      %3077 = vmatprep.mubr.bf16.mxu0 0
      %3078 = vmatmul.mubr.bf16.gmra.mrb[0].mxu0 %v2936
      %v3079 = vpop.f32.mrb[0].mxu0
      %v3080 = vadd.f32 0.0, %v3079
      %v3081 = vpop.f32.mrb[0].mxu0
      %v3082 = vpop.f32.mrb[0].mxu0
      %v3083 = vadd.f32 0.0, %v3082
      %v3084 = vpop.f32.mrb[0].mxu0
      %3085 = vmatprep.mubr.bf16.mxu0 0
      %3086 = vmatmul.mubr.bf16.gmra.mrb[0].mxu0 %v2937
      %v3087 = vpop.f32.mrb[0].mxu0
      %v3088 = vadd.f32 0.0, %v3087
      %v3089 = vpop.f32.mrb[0].mxu0
      %v3090 = vpop.f32.mrb[0].mxu0
      %v3091 = vadd.f32 0.0, %v3090
      %v3092 = vpop.f32.mrb[0].mxu0
      %3093 = vmatprep.mubr.bf16.mxu0 0
      %3094 = vmatmul.mubr.bf16.gmra.mrb[0].mxu0 %v2938
      %v3095 = vpop.f32.mrb[0].mxu0
      %v3096 = vadd.f32 0.0, %v3095
      %v3097 = vpop.f32.mrb[0].mxu0
      %v3098 = vpop.f32.mrb[0].mxu0
      %v3099 = vadd.f32 0.0, %v3098
      %v3100 = vpop.f32.mrb[0].mxu0
      %3101 = vmatprep.mubr.bf16.mxu0 0
      %3102 = vmatmul.mubr.bf16.gmra.mrb[0].mxu0 %v2939
      %v3103 = vpop.f32.mrb[0].mxu0
      %v3104 = vadd.f32 0.0, %v3103
      %v3105 = vpop.f32.mrb[0].mxu0
      %v3106 = vpop.f32.mrb[0].mxu0
      %v3107 = vadd.f32 0.0, %v3106
      %v3108 = vpop.f32.mrb[0].mxu0
      %3109 = vmatprep.mubr.bf16.mxu0 0
      %3110 = vmatmul.mubr.bf16.gmra.mrb[0].mxu0 %v2940
      %v3111 = vpop.f32.mrb[0].mxu0
      %v3112 = vadd.f32 0.0, %v3111
      %v3113 = vpop.f32.mrb[0].mxu0
      %v3114 = vpop.f32.mrb[0].mxu0
      %v3115 = vadd.f32 0.0, %v3114
      %v3116 = vpop.f32.mrb[0].mxu0
      %3117 = vmatprep.mubr.bf16.mxu0 0
      %3118 = vmatmul.mubr.bf16.gmra.mrb[0].mxu0 %v2941
      %v3119 = vpop.f32.mrb[0].mxu0
      %v3120 = vadd.f32 0.0, %v3119
      %v3121 = vpop.f32.mrb[0].mxu0
      %v3122 = vpop.f32.mrb[0].mxu0
      %v3123 = vadd.f32 0.0, %v3122
      %v3124 = vpop.f32.mrb[0].mxu0
      %3125 = vmatprep.mubr.bf16.mxu0 0
      %3126 = vmatmul.mubr.bf16.gmra.mrb[0].mxu0 %v2942
      %v3127 = vpop.f32.mrb[0].mxu0
      %v3128 = vadd.f32 0.0, %v3127
      %v3129 = vpop.f32.mrb[0].mxu0
      %v3130 = vpop.f32.mrb[0].mxu0
      %v3131 = vadd.f32 0.0, %v3130
      %v3132 = vpop.f32.mrb[0].mxu0
      %3133 = vmatprep.mubr.bf16.mxu0 0
      %3134 = vmatmul.mubr.bf16.gmra.mrb[0].mxu0 %v2943
      %v3135 = vpop.f32.mrb[0].mxu0
      %v3136 = vadd.f32 0.0, %v3135
      %v3137 = vpop.f32.mrb[0].mxu0
      %v3138 = vpop.f32.mrb[0].mxu0
      %v3139 = vadd.f32 0.0, %v3138
      %v3140 = vpop.f32.mrb[0].mxu0
      %3141 = vmatprep.mubr.bf16.mxu0 0
      %3142 = vmatmul.mubr.bf16.gmra.mrb[0].mxu0 %v2944
      %v3143 = vpop.f32.mrb[0].mxu0
      %v3144 = vadd.f32 0.0, %v3143
      %v3145 = vpop.f32.mrb[0].mxu0
      %v3146 = vpop.f32.mrb[0].mxu0
      %v3147 = vadd.f32 0.0, %v3146
      %v3148 = vpop.f32.mrb[0].mxu0
      %3149 = vmatprep.mubr.bf16.mxu0 0
      %3150 = vmatmul.mubr.bf16.gmra.mrb[0].mxu0 %v2945
      %v3151 = vpop.f32.mrb[0].mxu0
      %v3152 = vadd.f32 0.0, %v3151
      %v3153 = vpop.f32.mrb[0].mxu0
      %v3154 = vpop.f32.mrb[0].mxu0
      %v3155 = vadd.f32 0.0, %v3154
      %v3156 = vpop.f32.mrb[0].mxu0
      %3157 = vmatprep.mubr.bf16.mxu0 0
      %3158 = vmatmul.mubr.bf16.gmra.mrb[0].mxu0 %v2946
      %v3159 = vpop.f32.mrb[0].mxu0
      %v3160 = vadd.f32 0.0, %v3159
      %v3161 = vpop.f32.mrb[0].mxu0
      %v3162 = vpop.f32.mrb[0].mxu0
      %v3163 = vadd.f32 0.0, %v3162
      %v3164 = vpop.f32.mrb[0].mxu0
      %3165 = vmatprep.mubr.bf16.mxu0 0
      %3166 = vmatmul.mubr.bf16.gmra.mrb[0].mxu0 %v2947
      %v3167 = vpop.f32.mrb[0].mxu0
      %v3168 = vadd.f32 0.0, %v3167
      %v3169 = vpop.f32.mrb[0].mxu0
      %v3170 = vpop.f32.mrb[0].mxu0
      %v3171 = vadd.f32 0.0, %v3170
      %v3172 = vpop.f32.mrb[0].mxu0
      %3173 = vdwg.mxu0
      %v3174 = vadd.f32 %v2868, %v3048
      %v3175 = vadd.f32 %v2869, %v3051
      %v3176 = vadd.f32 %v2870, %v3056
      %v3177 = vadd.f32 %v2871, %v3059
      %v3178 = vadd.f32 %v2872, %v3064
      %v3179 = vadd.f32 %v2873, %v3067
      %v3180 = vadd.f32 %v2874, %v3072
      %v3181 = vadd.f32 %v2875, %v3075
      %v3182 = vadd.f32 %v2876, %v3080
      %v3183 = vadd.f32 %v2877, %v3083
      %v3184 = vadd.f32 %v2878, %v3088
      %v3185 = vadd.f32 %v2879, %v3091
      %v3186 = vadd.f32 %v2880, %v3096
      %v3187 = vadd.f32 %v2881, %v3099
      %v3188 = vadd.f32 %v2882, %v3104
      %v3189 = vadd.f32 %v2883, %v3107
      %v3190 = vadd.f32 %v2884, %v3112
      %v3191 = vadd.f32 %v2885, %v3115
      %v3192 = vadd.f32 %v2886, %v3120
      %v3193 = vadd.f32 %v2887, %v3123
      %v3194 = vadd.f32 %v2888, %v3128
      %v3195 = vadd.f32 %v2889, %v3131
      %v3196 = vadd.f32 %v2890, %v3136
      %v3197 = vadd.f32 %v2891, %v3139
      %v3198 = vadd.f32 %v2892, %v3144
      %v3199 = vadd.f32 %v2893, %v3147
      %v3200 = vadd.f32 %v2894, %v3152
      %v3201 = vadd.f32 %v2895, %v3155
      %v3202 = vadd.f32 %v2896, %v3160
      %v3203 = vadd.f32 %v2897, %v3163
      %v3204 = vadd.f32 %v2898, %v3168
      %v3205 = vadd.f32 %v2899, %v3171
      %v3206 = vadd.f32 %v3174, %v3175
      %v3207 = vadd.f32 %v3206, %v3176
      %v3208 = vadd.f32 %v3207, %v3177
      %v3209 = vadd.f32 %v3208, %v3178
      %v3210 = vadd.f32 %v3209, %v3179
      %v3211 = vadd.f32 %v3210, %v3180
      %v3212 = vadd.f32 %v3211, %v3181
      %v3213 = vadd.f32 %v3212, %v3182
      %v3214 = vadd.f32 %v3213, %v3183
      %v3215 = vadd.f32 %v3214, %v3184
      %v3216 = vadd.f32 %v3215, %v3185
      %v3217 = vadd.f32 %v3216, %v3186
      %v3218 = vadd.f32 %v3217, %v3187
      %v3219 = vadd.f32 %v3218, %v3188
      %v3220 = vadd.f32 %v3219, %v3189
      %v3221 = vadd.f32 %v3220, %v3190
      %v3222 = vadd.f32 %v3221, %v3191
      %v3223 = vadd.f32 %v3222, %v3192
      %v3224 = vadd.f32 %v3223, %v3193
      %v3225 = vadd.f32 %v3224, %v3194
      %v3226 = vadd.f32 %v3225, %v3195
      %v3227 = vadd.f32 %v3226, %v3196
      %v3228 = vadd.f32 %v3227, %v3197
      %v3229 = vadd.f32 %v3228, %v3198
      %v3230 = vadd.f32 %v3229, %v3199
      %v3231 = vadd.f32 %v3230, %v3200
      %v3232 = vadd.f32 %v3231, %v3201
      %v3233 = vadd.f32 %v3232, %v3202
      %v3234 = vadd.f32 %v3233, %v3203
      %v3235 = vadd.f32 %v3234, %v3204
      %v3236 = vadd.f32 %v3235, %v3205
      %v3237 = vrot.slane %v3236, 4
      %v3238 = vadd.f32 %v3236, %v3237
      %v3239 = vrot.slane %v3238, 2
      %v3240 = vadd.f32 %v3238, %v3239
      %v3241 = vrot.slane %v3240, 1
      %v3242 = vadd.f32 %v3240, %v3241
      %v3243 = vmul.f32 %v3174, %v3174
      %v3244 = vmul.f32 %v3175, %v3175
      %v3245 = vmul.f32 %v3176, %v3176
      %v3246 = vmul.f32 %v3177, %v3177
      %v3247 = vmul.f32 %v3178, %v3178
      %v3248 = vmul.f32 %v3179, %v3179
      %v3249 = vmul.f32 %v3180, %v3180
      %v3250 = vmul.f32 %v3181, %v3181
      %v3251 = vmul.f32 %v3182, %v3182
      %v3252 = vmul.f32 %v3183, %v3183
      %v3253 = vmul.f32 %v3184, %v3184
      %v3254 = vmul.f32 %v3185, %v3185
      %v3255 = vmul.f32 %v3186, %v3186
      %v3256 = vmul.f32 %v3187, %v3187
      %v3257 = vmul.f32 %v3188, %v3188
      %v3258 = vmul.f32 %v3189, %v3189
      %v3259 = vmul.f32 %v3190, %v3190
      %v3260 = vmul.f32 %v3191, %v3191
      %v3261 = vmul.f32 %v3192, %v3192
      %v3262 = vmul.f32 %v3193, %v3193
      %v3263 = vmul.f32 %v3194, %v3194
      %v3264 = vmul.f32 %v3195, %v3195
      %v3265 = vmul.f32 %v3196, %v3196
      %v3266 = vmul.f32 %v3197, %v3197
      %v3267 = vmul.f32 %v3198, %v3198
      %v3268 = vmul.f32 %v3199, %v3199
      %v3269 = vmul.f32 %v3200, %v3200
      %v3270 = vmul.f32 %v3201, %v3201
      %v3271 = vmul.f32 %v3202, %v3202
      %v3272 = vmul.f32 %v3203, %v3203
      %v3273 = vmul.f32 %v3204, %v3204
      %v3274 = vmul.f32 %v3205, %v3205
      %v3275 = vadd.f32 %v3243, %v3244
      %v3276 = vadd.f32 %v3275, %v3245
      %v3277 = vadd.f32 %v3276, %v3246
      %v3278 = vadd.f32 %v3277, %v3247
      %v3279 = vadd.f32 %v3278, %v3248
      %v3280 = vadd.f32 %v3279, %v3249
      %v3281 = vadd.f32 %v3280, %v3250
      %v3282 = vadd.f32 %v3281, %v3251
      %v3283 = vadd.f32 %v3282, %v3252
      %v3284 = vadd.f32 %v3283, %v3253
      %v3285 = vadd.f32 %v3284, %v3254
      %v3286 = vadd.f32 %v3285, %v3255
      %v3287 = vadd.f32 %v3286, %v3256
      %v3288 = vadd.f32 %v3287, %v3257
      %v3289 = vadd.f32 %v3288, %v3258
      %v3290 = vadd.f32 %v3289, %v3259
      %v3291 = vadd.f32 %v3290, %v3260
      %v3292 = vadd.f32 %v3291, %v3261
      %v3293 = vadd.f32 %v3292, %v3262
      %v3294 = vadd.f32 %v3293, %v3263
      %v3295 = vadd.f32 %v3294, %v3264
      %v3296 = vadd.f32 %v3295, %v3265
      %v3297 = vadd.f32 %v3296, %v3266
      %v3298 = vadd.f32 %v3297, %v3267
      %v3299 = vadd.f32 %v3298, %v3268
      %v3300 = vadd.f32 %v3299, %v3269
      %v3301 = vadd.f32 %v3300, %v3270
      %v3302 = vadd.f32 %v3301, %v3271
      %v3303 = vadd.f32 %v3302, %v3272
      %v3304 = vadd.f32 %v3303, %v3273
      %v3305 = vadd.f32 %v3304, %v3274
      %v3306 = vrot.slane %v3305, 4
      %v3307 = vadd.f32 %v3305, %v3306
      %v3308 = vrot.slane %v3307, 2
      %v3309 = vadd.f32 %v3307, %v3308
      %v3310 = vrot.slane %v3309, 1
      %v3311 = vadd.f32 %v3309, %v3310
      %vm3312 = vcmask 1040384
      %v3313 = vsel %vm3312, %v3242, %v3311
      %3314 = vst [vmem:[%s235] sm:$0x3] %v3313
      %v3315 = vpack.c.bf16 %v3175, %v3174
      %v3316 = vpack.c.bf16 %v3177, %v3176
      %v3317 = vpack.c.bf16 %v3179, %v3178
      %v3318 = vpack.c.bf16 %v3181, %v3180
      %v3319 = vpack.c.bf16 %v3183, %v3182
      %v3320 = vpack.c.bf16 %v3185, %v3184
      %v3321 = vpack.c.bf16 %v3187, %v3186
      %v3322 = vpack.c.bf16 %v3189, %v3188
      %v3323 = vpack.c.bf16 %v3191, %v3190
      %v3324 = vpack.c.bf16 %v3193, %v3192
      %v3325 = vpack.c.bf16 %v3195, %v3194
      %v3326 = vpack.c.bf16 %v3197, %v3196
      %v3327 = vpack.c.bf16 %v3199, %v3198
      %v3328 = vpack.c.bf16 %v3201, %v3200
      %v3329 = vpack.c.bf16 %v3203, %v3202
      %v3330 = vpack.c.bf16 %v3205, %v3204
      %v3347 = vunpack.c.l.b16 %v3315
      %v3348 = vunpack.c.h.b16 %v3315
      %v3349 = vunpack.c.l.b16 %v3316
      %v3350 = vunpack.c.h.b16 %v3316
      %v3351 = vunpack.c.l.b16 %v3317
      %v3352 = vunpack.c.h.b16 %v3317
      %v3353 = vunpack.c.l.b16 %v3318
      %v3354 = vunpack.c.h.b16 %v3318
      %v3355 = vunpack.c.l.b16 %v3319
      %v3356 = vunpack.c.h.b16 %v3319
      %v3357 = vunpack.c.l.b16 %v3320
      %v3358 = vunpack.c.h.b16 %v3320
      %v3359 = vunpack.c.l.b16 %v3321
      %v3360 = vunpack.c.h.b16 %v3321
      %v3361 = vunpack.c.l.b16 %v3322
      %v3362 = vunpack.c.h.b16 %v3322
      %v3363 = vunpack.c.l.b16 %v3323
      %v3364 = vunpack.c.h.b16 %v3323
      %v3365 = vunpack.c.l.b16 %v3324
      %v3366 = vunpack.c.h.b16 %v3324
      %v3367 = vunpack.c.l.b16 %v3325
      %v3368 = vunpack.c.h.b16 %v3325
      %v3369 = vunpack.c.l.b16 %v3326
      %v3370 = vunpack.c.h.b16 %v3326
      %v3371 = vunpack.c.l.b16 %v3327
      %v3372 = vunpack.c.h.b16 %v3327
      %v3373 = vunpack.c.l.b16 %v3328
      %v3374 = vunpack.c.h.b16 %v3328
      %v3375 = vunpack.c.l.b16 %v3329
      %v3376 = vunpack.c.h.b16 %v3329
      %v3377 = vunpack.c.l.b16 %v3330
      %v3378 = vunpack.c.h.b16 %v3330
      %v3379 = vpack.c.b16 %v3347, %v3347
      %v3380 = vpack.c.b16 %v3348, %v3348
      %v3381 = vpack.c.b16 %v3349, %v3349
      %v3382 = vpack.c.b16 %v3350, %v3350
      %v3383 = vpack.c.b16 %v3351, %v3351
      %v3384 = vpack.c.b16 %v3352, %v3352
      %v3385 = vpack.c.b16 %v3353, %v3353
      %v3386 = vpack.c.b16 %v3354, %v3354
      %v3387 = vpack.c.b16 %v3355, %v3355
      %v3388 = vpack.c.b16 %v3356, %v3356
      %v3389 = vpack.c.b16 %v3357, %v3357
      %v3390 = vpack.c.b16 %v3358, %v3358
      %v3391 = vpack.c.b16 %v3359, %v3359
      %v3392 = vpack.c.b16 %v3360, %v3360
      %v3393 = vpack.c.b16 %v3361, %v3361
      %v3394 = vpack.c.b16 %v3362, %v3362
      %v3395 = vpack.c.b16 %v3363, %v3363
      %v3396 = vpack.c.b16 %v3364, %v3364
      %v3397 = vpack.c.b16 %v3365, %v3365
      %v3398 = vpack.c.b16 %v3366, %v3366
      %v3399 = vpack.c.b16 %v3367, %v3367
      %v3400 = vpack.c.b16 %v3368, %v3368
      %v3401 = vpack.c.b16 %v3369, %v3369
      %v3402 = vpack.c.b16 %v3370, %v3370
      %v3403 = vpack.c.b16 %v3371, %v3371
      %v3404 = vpack.c.b16 %v3372, %v3372
      %v3405 = vpack.c.b16 %v3373, %v3373
      %v3406 = vpack.c.b16 %v3374, %v3374
      %v3407 = vpack.c.b16 %v3375, %v3375
      %v3408 = vpack.c.b16 %v3376, %v3376
      %v3409 = vpack.c.b16 %v3377, %v3377
      %v3410 = vpack.c.b16 %v3378, %v3378
      %3443 = vst [vmem:[%s231] sm:$0xf] %v3379
      %3444 = vst [vmem:[%s231 + $0x4] sm:$0xf] %v3380
      %3445 = vst [vmem:[%s231 + $0x8] sm:$0xf] %v3381
      %3446 = vst [vmem:[%s231 + $0xc] sm:$0xf] %v3382
      %3447 = vst [vmem:[%s231 + $0x10] sm:$0xf] %v3383
      %3448 = vst [vmem:[%s231 + $0x14] sm:$0xf] %v3384
      %3449 = vst [vmem:[%s231 + $0x18] sm:$0xf] %v3385
      %3450 = vst [vmem:[%s231 + $0x1c] sm:$0xf] %v3386
      %3451 = vst [vmem:[%s231 + $0x20] sm:$0xf] %v3387
      %3452 = vst [vmem:[%s231 + $0x24] sm:$0xf] %v3388
      %3453 = vst [vmem:[%s231 + $0x28] sm:$0xf] %v3389
      %3454 = vst [vmem:[%s231 + $0x2c] sm:$0xf] %v3390
      %3455 = vst [vmem:[%s231 + $0x30] sm:$0xf] %v3391
      %3456 = vst [vmem:[%s231 + $0x34] sm:$0xf] %v3392
      %3457 = vst [vmem:[%s231 + $0x38] sm:$0xf] %v3393
      %3458 = vst [vmem:[%s231 + $0x3c] sm:$0xf] %v3394
      %3459 = vst [vmem:[%s231 + $0x40] sm:$0xf] %v3395
      %3460 = vst [vmem:[%s231 + $0x44] sm:$0xf] %v3396
      %3461 = vst [vmem:[%s231 + $0x48] sm:$0xf] %v3397
      %3462 = vst [vmem:[%s231 + $0x4c] sm:$0xf] %v3398
      %3463 = vst [vmem:[%s231 + $0x50] sm:$0xf] %v3399
      %3464 = vst [vmem:[%s231 + $0x54] sm:$0xf] %v3400
      %3465 = vst [vmem:[%s231 + $0x58] sm:$0xf] %v3401
      %3466 = vst [vmem:[%s231 + $0x5c] sm:$0xf] %v3402
      %3467 = vst [vmem:[%s231 + $0x60] sm:$0xf] %v3403
      %3468 = vst [vmem:[%s231 + $0x64] sm:$0xf] %v3404
      %3469 = vst [vmem:[%s231 + $0x68] sm:$0xf] %v3405
      %3470 = vst [vmem:[%s231 + $0x6c] sm:$0xf] %v3406
      %3471 = vst [vmem:[%s231 + $0x70] sm:$0xf] %v3407
      %3472 = vst [vmem:[%s231 + $0x74] sm:$0xf] %v3408
      %3473 = vst [vmem:[%s231 + $0x78] sm:$0xf] %v3409
      %3474 = vst [vmem:[%s231 + $0x7c] sm:$0xf] %v3410
      %p3475 = scmp.lt.s32.totalorder %s17, 1
      %s3476 = scalar_select %p3475, %s17, 1
      %s3477 = smul.addr %s3476, 32
      %s3478 = smul.addr %s3477, 4
      %s3479 = scalar_lea.vmem %s4, %s3478
      %p3480 = scmp.lt.s32.totalorder %s17, 1
      %s3481 = scalar_select %p3480, %s17, 1
      %s3482 = smul.addr %s3481, 2
      %s3483 = scalar_lea.vmem %s5, %s3482
      // Predicated region
      $region37: #{bottleneck_forward.5} parent=35 // pred_check
        %p3484 = pneg %p124
      $region38: #{bottleneck_forward.5} parent=35 // pred_check_branch
        %3486 = sbr.rel (%p3484) target = $region40
      $region39: #{bottleneck_forward.5} parent=35 // pred_region
        _
      $region40: #{bottleneck_forward.5} parent=35 // pred_fallthru
        _
      // Predicated region
      $region41: #{bottleneck_forward.5} parent=35 // pred_check
        %p3487 = pneg %p150
      $region42: #{bottleneck_forward.5} parent=35 // pred_check_branch
        %3489 = sbr.rel (%p3487) target = $region44
      $region43: #{bottleneck_forward.5} parent=35 // pred_region
        _
      $region44: #{bottleneck_forward.5} parent=35 // pred_fallthru
        _
    $region36: #{bottleneck_forward.5} parent=5 // pred_fallthru
      _
    %p3490 = scmp.le.s32.totalorder 2, %s12
    // Predicated region
    $region45: #{bottleneck_forward.5} parent=5 // pred_check
      %p3491 = pneg %p3490
    $region46: #{bottleneck_forward.5} parent=5 // pred_check_branch
      %3493 = sbr.rel (%p3491) target = $region48
    $region47: #{bottleneck_forward.5} parent=5 // pred_region
      %s3494 = ssub.s32 %s12, 2
      // Predicated region
      $region49: #{bottleneck_forward.5} parent=47 // pred_check
        %p3495 = pneg %p130
      $region50: #{bottleneck_forward.5} parent=47 // pred_check_branch
        %3497 = sbr.rel (%p3495) target = $region52
      $region51: #{bottleneck_forward.5} parent=47 // pred_region
        %p3498 = scmp.lt.s32.totalorder %s18, 1
        %s3499 = scalar_select %p3498, %s18, 1
        %s3500 = smul.addr %s3499, 32
        %s3501 = smul.addr %s3500, 4
        %s3502 = scalar_lea.vmem %s4, %s3501
      $region52: #{bottleneck_forward.5} parent=47 // pred_fallthru
        _
      // Predicated region
      $region53: #{bottleneck_forward.5} parent=47 // pred_check
        %p3503 = pneg %p156
      $region54: #{bottleneck_forward.5} parent=47 // pred_check_branch
        %3505 = sbr.rel (%p3503) target = $region56
      $region55: #{bottleneck_forward.5} parent=47 // pred_region
        %p3506 = scmp.lt.s32.totalorder %s18, 1
        %s3507 = scalar_select %p3506, %s18, 1
        %s3508 = smul.addr %s3507, 2
        %s3509 = scalar_lea.vmem %s5, %s3508
      $region56: #{bottleneck_forward.5} parent=47 // pred_fallthru
        _
    $region48: #{bottleneck_forward.5} parent=5 // pred_fallthru
      _
  $region6: #{bottleneck_forward.5} parent=0 // loop_footer
    %s16 = sadd.s32 1, %s12
  $region7: #{bottleneck_forward.5} parent=0 // loop_footer_branch
    %11 = sbr.rel target = $region3
  $region8: #{bottleneck_forward.5} parent=0 // loop_exit
    _

</llo_original>
